<compile_context>
chip_gen: v5e
topology: v5e:2x2
jax: 0.10.0
libtpu: 0.0.40
codegen_flags: <defaults>
</compile_context>

<pallas_src>
import functools
import math

import jax
import jax.numpy as jnp
from jax.experimental import pallas as pl
from jax.experimental.pallas import tpu as pltpu

# ---- constants from the reference script -----------------------------------
TS = 4            # args.ts
VTH = 0.5
VTH_QMAX = 32
VTH_QMIN = 8
V_QMAX = 32
V_QMIN = -32
KERNEL_SIZE = 4
IN_CHANNELS = 3
NUM_CLASSES = 6

LANES = 128       # pad Cout to the TPU lane width for dense stores
MAX_TILE_N = 512  # rows per grid step (sized well under v7x's 64 MiB VMEM)


def _round_up(x, m):
    return ((x + m - 1) // m) * m


# ---- weight-quantization helpers (plain JAX glue, mirror torch versions) ----
def compute_threshold(w):
    # w: (Cout, Cin, K, K)
    return jnp.mean(jnp.abs(w), axis=(1, 2, 3), keepdims=True) * 0.7


def compute_alpha(w):
    thr = compute_threshold(w)
    wa = jnp.abs(w)
    mask = wa > thr
    w_sum = jnp.sum(jnp.where(mask, wa, 0.0), axis=(1, 2, 3), keepdims=True)
    n = jnp.sum(jnp.where(mask, 1.0, 0.0), axis=(1, 2, 3), keepdims=True)
    # Guard n == 0 (torch would produce NaN alpha and the channel would
    # silently never fire); identical result whenever n > 0.
    return w_sum / jnp.maximum(n, 1.0)


def ternarize(w):
    thr = compute_threshold(w)
    return jnp.sign(jnp.sign(w + thr) + jnp.sign(w - thr))


# ---- Pallas kernel: hoisted im2col matmul + LIF dynamics over time ----------
def _snn_kernel(patches_ref, wt_ref, vthq_ref, out_ref, *, apply_round):
    # patches_ref: (TS, tile_n, KD)  wt_ref: (KD, CP)  vthq_ref: (1, CP)
    # out_ref    : (TS, tile_n, CP)  (CP = Cout padded to 128 lanes)
    ts, tile_n, kd = patches_ref.shape
    cp = out_ref.shape[2]

    # One hoisted MXU matmul for all time steps (dv does not depend on v).
    p = patches_ref[...].reshape(ts * tile_n, kd)
    dv = jnp.dot(p, wt_ref[...], preferred_element_type=jnp.float32)
    if apply_round:
        dv = jnp.round(dv)  # eval-mode get_dv; exact no-op for spike inputs

    vth = vthq_ref[...]                                   # (1, CP), broadcasts
    v = jnp.zeros((tile_n, cp), jnp.float32)
    for t in range(ts):                                   # TS=4: static, cheap VPU loop
        v = jnp.clip(v + dv[t * tile_n:(t + 1) * tile_n], V_QMIN, V_QMAX)  # vClamp
        s = (v >= vth).astype(jnp.float32)                # Fire
        v = v * (1.0 - s)                                 # reset
        out_ref[t] = s.astype(out_ref.dtype)


def _snn_pallas(patches, wt_mat, vthq, *, tile_n, apply_round):
    ts, n, kd = patches.shape
    cp = wt_mat.shape[1]
    grid = (n // tile_n,)
    kernel = functools.partial(_snn_kernel, apply_round=apply_round)
    return pl.pallas_call(
        kernel,
        out_shape=jax.ShapeDtypeStruct((ts, n, cp), jnp.bfloat16),
        grid=grid,
        in_specs=[
            pl.BlockSpec((ts, tile_n, kd), lambda i: (0, i, 0)),
            pl.BlockSpec((kd, cp), lambda i: (0, 0)),
            pl.BlockSpec((1, cp), lambda i: (0, 0)),
        ],
        out_specs=pl.BlockSpec((ts, tile_n, cp), lambda i: (0, i, 0)),
        compiler_params=pltpu.CompilerParams(
            dimension_semantics=("parallel",),      # megacore on v7x
            vmem_limit_bytes=32 * 1024 * 1024,
        ),
    )(patches, wt_mat, vthq)


# ---- one conv2d_layer forward (inference semantics) -------------------------
def snn_conv_layer(x, w, vth, *, first_layer, k=KERNEL_SIZE):
    # x: (TS, B, H, W, Cin); spikes (bf16 {0,1}) except possibly the net input.
    ts, b, h, wdim, cin = x.shape
    cout = w.shape[0]
    ho, wo = h - k + 1, wdim - k + 1

    alpha = compute_alpha(w).reshape(cout)                       # (Cout,)
    wt = ternarize(w)                                            # {-1,0,1}
    # match torch conv indexing: W_mat[(di*K+dj)*Cin + ci, co] = wt[co, ci, di, dj]
    wt_mat = jnp.transpose(wt, (2, 3, 1, 0)).reshape(k * k * cin, cout)
    vthq = jnp.clip(jnp.round(vth / alpha), VTH_QMIN, VTH_QMAX).reshape(1, cout)

    # pad Cout to the 128-lane width: lane-dense stores, zero weights + huge
    # vth on the padded channels so they never fire (spikes there stay 0).
    cp = _round_up(cout, LANES)
    wt_mat = jnp.pad(wt_mat, ((0, 0), (0, cp - cout)))
    vthq = jnp.pad(vthq, ((0, 0), (0, cp - cout)), constant_values=1e9)

    # im2col (XLA-fused slicing in the wrapper; see TODO at top of file).
    xi = x.reshape(ts * b, h, wdim, cin)
    cols = []
    for di in range(k):
        for dj in range(k):
            cols.append(xi[:, di:di + ho, dj:dj + wo, :])
    patches = jnp.stack(cols, axis=3)                            # (TS*B, Ho, Wo, K*K, Cin)
    patches = patches.reshape(ts, b * ho * wo, k * k * cin)

    # weights follow the patches dtype (bf16 for spike inputs: exact for
    # {0,1} x {-1,0,1}; layer 1 keeps the input dtype in case it is real-valued)
    wt_mat = wt_mat.astype(patches.dtype)

    n = b * ho * wo
    tile_n = MAX_TILE_N if n >= MAX_TILE_N else _round_up(n, 16)
    n_pad = _round_up(n, tile_n)
    if n_pad != n:
        patches = jnp.pad(patches, ((0, 0), (0, n_pad - n), (0, 0)))

    spikes = _snn_pallas(patches, wt_mat, vthq.astype(jnp.float32),
                         tile_n=tile_n, apply_round=first_layer)  # (TS, Npad, CP)
    spikes = spikes[:, :n, :cout]
    return spikes.reshape(ts, b, ho, wo, cout)


# ---- full Net forward --------------------------------------------------------
def net_forward(x_btchw, params):
    # x_btchw: (B, TS, C, H, W)  -- same convention as the PyTorch module input
    x = jnp.transpose(x_btchw, (1, 0, 3, 4, 2))   # -> (TS, B, H, W, C)
    for li, (w, vth) in enumerate(params):
        x = snn_conv_layer(x, w, vth, first_layer=(li == 0))
    # x: (TS, B, H', W', num_classes) ; torch mean over spatial dims (3,4)
    out = jnp.mean(x.astype(jnp.float32), axis=(2, 3))  # (TS, B, num_classes)
    out = jnp.transpose(out, (1, 0, 2))                  # (B, TS, num_classes)
    return out.reshape(out.shape[0], out.shape[1], -1)


# ---- deterministic parameter init (matches shapes of nn.Conv2d + vth) --------
def init_params(key):
    layer_dims = [
        (IN_CHANNELS, 16),
        (16, 16),
        (16, 16),
        (16, 16),
        (16, NUM_CLASSES),
    ]
    params = []
    for cin, cout in layer_dims:
        key, wk = jax.random.split(key)
        fan_in = cin * KERNEL_SIZE * KERNEL_SIZE
        bound = 1.0 / math.sqrt(fan_in)
        w = jax.random.uniform(wk, (cout, cin, KERNEL_SIZE, KERNEL_SIZE),
                               jnp.float32, minval=-bound, maxval=bound)
        vth = jnp.full((cout,), VTH, jnp.float32)
        params.append((w, vth))
    return params


if __name__ == "__main__":
    key = jax.random.PRNGKey(0)
    key, pk, xk = jax.random.split(key, 3)
    params = init_params(pk)

    # spatial=16 so that five valid 4x4 convs end at 1x1
    B, H, W = 2, 16, 16
    x = jax.random.bernoulli(xk, 0.5, (B, TS, IN_CHANNELS, H, W)).astype(jnp.float32)

    out = jax.jit(lambda xx: net_forward(xx, params))(x)
    out = jax.block_until_ready(out)
    assert out.shape == (B, TS, NUM_CLASSES), out.shape
    print("KERNEL_OK")
</pallas_src>

<mosaic_0001>
module attributes {stable_mosaic.version = 11 : i64} {
  func.func @_snn_kernel(%arg0: i32, %arg1: memref<4x352x48xf32, #tpu.memory_space<vmem>>, %arg2: memref<48x128xf32, #tpu.memory_space<vmem>>, %arg3: memref<1x128xf32, #tpu.memory_space<vmem>>, %arg4: memref<4x352x128xbf16, #tpu.memory_space<vmem>>) attributes {dimension_semantics = [#tpu.dimension_semantics<parallel>], iteration_bounds = array<i64: 1>, scalar_prefetch = 0 : i64, scratch_operands = 0 : i64, tpu.core_type = #tpu.core_type<tc>, window_params = [{transform_indices = @transform_0, window_bounds = array<i64: 4, 352, 48>}, {pipeline_mode = #tpu.pipeline_mode<synchronous>, transform_indices = @transform_1, window_bounds = array<i64: 48, 128>}, {pipeline_mode = #tpu.pipeline_mode<synchronous>, transform_indices = @transform_2, window_bounds = array<i64: 1, 128>}, {transform_indices = @transform_3, window_bounds = array<i64: 4, 352, 128>}]} {
    %c0 = arith.constant 0 : index
    %c0_0 = arith.constant 0 : index
    %c0_1 = arith.constant 0 : index
    %0 = vector.load %arg1[%c0, %c0_0, %c0_1] : memref<4x352x48xf32, #tpu.memory_space<vmem>>, vector<4x352x48xf32>
    %1 = vector.shape_cast %0 : vector<4x352x48xf32> to vector<1408x48xf32>
    %c0_2 = arith.constant 0 : index
    %c0_3 = arith.constant 0 : index
    %2 = vector.load %arg2[%c0_2, %c0_3] : memref<48x128xf32, #tpu.memory_space<vmem>>, vector<48x128xf32>
    %cst = arith.constant dense<0.000000e+00> : vector<1408x128xf32>
    %3 = tpu.matmul %1, %2, %cst {dimension_numbers = #tpu.dot_dimension_numbers<[1], [0], [0], [1], [0, 0, 1, 1], [], []>} : vector<1408x48xf32>, vector<48x128xf32>, vector<1408x128xf32> -> vector<1408x128xf32>
    %4 = math.roundeven %3 : vector<1408x128xf32>
    %c0_4 = arith.constant 0 : index
    %c0_5 = arith.constant 0 : index
    %5 = vector.load %arg3[%c0_4, %c0_5] : memref<1x128xf32, #tpu.memory_space<vmem>>, vector<1x128xf32>
    %cst_6 = arith.constant 0.000000e+00 : f32
    %6 = vector.broadcast %cst_6 : f32 to vector<352x128xf32>
    %7 = vector.extract_strided_slice %4 {offsets = [0, 0], sizes = [352, 128], strides = [1, 1]} : vector<1408x128xf32> to vector<352x128xf32>
    %8 = arith.addf %6, %7 : vector<352x128xf32>
    %c-32_i32 = arith.constant -32 : i32
    %c32_i32 = arith.constant 32 : i32
    %9 = arith.sitofp %c-32_i32 : i32 to f32
    %10 = vector.broadcast %9 : f32 to vector<352x128xf32>
    %11 = arith.maximumf %10, %8 : vector<352x128xf32>
    %12 = arith.sitofp %c32_i32 : i32 to f32
    %13 = vector.broadcast %12 : f32 to vector<352x128xf32>
    %14 = arith.minimumf %13, %11 : vector<352x128xf32>
    %15 = vector.broadcast %5 : vector<1x128xf32> to vector<352x128xf32>
    %16 = arith.cmpf oge, %14, %15 : vector<352x128xf32>
    %17 = arith.extui %16 : vector<352x128xi1> to vector<352x128xi32>
    %18 = arith.sitofp %17 : vector<352x128xi32> to vector<352x128xf32>
    %cst_7 = arith.constant 1.000000e+00 : f32
    %19 = vector.broadcast %cst_7 : f32 to vector<352x128xf32>
    %20 = arith.subf %19, %18 : vector<352x128xf32>
    %21 = arith.mulf %14, %20 : vector<352x128xf32>
    %22 = arith.truncf %18 : vector<352x128xf32> to vector<352x128xbf16>
    %c0_8 = arith.constant 0 : index
    %c0_9 = arith.constant 0 : index
    %c0_10 = arith.constant 0 : index
    %23 = vector.load %arg4[%c0_8, %c0_9, %c0_10] : memref<4x352x128xbf16, #tpu.memory_space<vmem>>, vector<1x352x128xbf16>
    %24 = vector.shape_cast %23 : vector<1x352x128xbf16> to vector<352x128xbf16>
    %25 = vector.shape_cast %22 : vector<352x128xbf16> to vector<1x352x128xbf16>
    tpu.vector_store %arg4[%c0_8, %c0_9, %c0_10], %25 {strides = array<i32>} : memref<4x352x128xbf16, #tpu.memory_space<vmem>>, vector<1x352x128xbf16>,
    %26 = vector.extract_strided_slice %4 {offsets = [352, 0], sizes = [352, 128], strides = [1, 1]} : vector<1408x128xf32> to vector<352x128xf32>
    %27 = arith.addf %21, %26 : vector<352x128xf32>
    %c-32_i32_11 = arith.constant -32 : i32
    %c32_i32_12 = arith.constant 32 : i32
    %28 = arith.sitofp %c-32_i32_11 : i32 to f32
    %29 = vector.broadcast %28 : f32 to vector<352x128xf32>
    %30 = arith.maximumf %29, %27 : vector<352x128xf32>
    %31 = arith.sitofp %c32_i32_12 : i32 to f32
    %32 = vector.broadcast %31 : f32 to vector<352x128xf32>
    %33 = arith.minimumf %32, %30 : vector<352x128xf32>
    %34 = vector.broadcast %5 : vector<1x128xf32> to vector<352x128xf32>
    %35 = arith.cmpf oge, %33, %34 : vector<352x128xf32>
    %36 = arith.extui %35 : vector<352x128xi1> to vector<352x128xi32>
    %37 = arith.sitofp %36 : vector<352x128xi32> to vector<352x128xf32>
    %cst_13 = arith.constant 1.000000e+00 : f32
    %38 = vector.broadcast %cst_13 : f32 to vector<352x128xf32>
    %39 = arith.subf %38, %37 : vector<352x128xf32>
    %40 = arith.mulf %33, %39 : vector<352x128xf32>
    %41 = arith.truncf %37 : vector<352x128xf32> to vector<352x128xbf16>
    %c1 = arith.constant 1 : index
    %c0_14 = arith.constant 0 : index
    %c0_15 = arith.constant 0 : index
    %42 = vector.load %arg4[%c1, %c0_14, %c0_15] : memref<4x352x128xbf16, #tpu.memory_space<vmem>>, vector<1x352x128xbf16>
    %43 = vector.shape_cast %42 : vector<1x352x128xbf16> to vector<352x128xbf16>
    %44 = vector.shape_cast %41 : vector<352x128xbf16> to vector<1x352x128xbf16>
    tpu.vector_store %arg4[%c1, %c0_14, %c0_15], %44 {strides = array<i32>} : memref<4x352x128xbf16, #tpu.memory_space<vmem>>, vector<1x352x128xbf16>,
    %45 = vector.extract_strided_slice %4 {offsets = [704, 0], sizes = [352, 128], strides = [1, 1]} : vector<1408x128xf32> to vector<352x128xf32>
    %46 = arith.addf %40, %45 : vector<352x128xf32>
    %c-32_i32_16 = arith.constant -32 : i32
    %c32_i32_17 = arith.constant 32 : i32
    %47 = arith.sitofp %c-32_i32_16 : i32 to f32
    %48 = vector.broadcast %47 : f32 to vector<352x128xf32>
    %49 = arith.maximumf %48, %46 : vector<352x128xf32>
    %50 = arith.sitofp %c32_i32_17 : i32 to f32
    %51 = vector.broadcast %50 : f32 to vector<352x128xf32>
    %52 = arith.minimumf %51, %49 : vector<352x128xf32>
    %53 = vector.broadcast %5 : vector<1x128xf32> to vector<352x128xf32>
    %54 = arith.cmpf oge, %52, %53 : vector<352x128xf32>
    %55 = arith.extui %54 : vector<352x128xi1> to vector<352x128xi32>
    %56 = arith.sitofp %55 : vector<352x128xi32> to vector<352x128xf32>
    %cst_18 = arith.constant 1.000000e+00 : f32
    %57 = vector.broadcast %cst_18 : f32 to vector<352x128xf32>
    %58 = arith.subf %57, %56 : vector<352x128xf32>
    %59 = arith.mulf %52, %58 : vector<352x128xf32>
    %60 = arith.truncf %56 : vector<352x128xf32> to vector<352x128xbf16>
    %c2 = arith.constant 2 : index
    %c0_19 = arith.constant 0 : index
    %c0_20 = arith.constant 0 : index
    %61 = vector.load %arg4[%c2, %c0_19, %c0_20] : memref<4x352x128xbf16, #tpu.memory_space<vmem>>, vector<1x352x128xbf16>
    %62 = vector.shape_cast %61 : vector<1x352x128xbf16> to vector<352x128xbf16>
    %63 = vector.shape_cast %60 : vector<352x128xbf16> to vector<1x352x128xbf16>
    tpu.vector_store %arg4[%c2, %c0_19, %c0_20], %63 {strides = array<i32>} : memref<4x352x128xbf16, #tpu.memory_space<vmem>>, vector<1x352x128xbf16>,
    %64 = vector.extract_strided_slice %4 {offsets = [1056, 0], sizes = [352, 128], strides = [1, 1]} : vector<1408x128xf32> to vector<352x128xf32>
    %65 = arith.addf %59, %64 : vector<352x128xf32>
    %c-32_i32_21 = arith.constant -32 : i32
    %c32_i32_22 = arith.constant 32 : i32
    %66 = arith.sitofp %c-32_i32_21 : i32 to f32
    %67 = vector.broadcast %66 : f32 to vector<352x128xf32>
    %68 = arith.maximumf %67, %65 : vector<352x128xf32>
    %69 = arith.sitofp %c32_i32_22 : i32 to f32
    %70 = vector.broadcast %69 : f32 to vector<352x128xf32>
    %71 = arith.minimumf %70, %68 : vector<352x128xf32>
    %72 = vector.broadcast %5 : vector<1x128xf32> to vector<352x128xf32>
    %73 = arith.cmpf oge, %71, %72 : vector<352x128xf32>
    %74 = arith.extui %73 : vector<352x128xi1> to vector<352x128xi32>
    %75 = arith.sitofp %74 : vector<352x128xi32> to vector<352x128xf32>
    %76 = arith.truncf %75 : vector<352x128xf32> to vector<352x128xbf16>
    %c3 = arith.constant 3 : index
    %c0_23 = arith.constant 0 : index
    %c0_24 = arith.constant 0 : index
    %77 = vector.load %arg4[%c3, %c0_23, %c0_24] : memref<4x352x128xbf16, #tpu.memory_space<vmem>>, vector<1x352x128xbf16>
    %78 = vector.shape_cast %77 : vector<1x352x128xbf16> to vector<352x128xbf16>
    %79 = vector.shape_cast %76 : vector<352x128xbf16> to vector<1x352x128xbf16>
    tpu.vector_store %arg4[%c3, %c0_23, %c0_24], %79 {strides = array<i32>} : memref<4x352x128xbf16, #tpu.memory_space<vmem>>, vector<1x352x128xbf16>,
    return
  }
  func.func @transform_0(%arg0: i32) -> (i32, i32, i32) {
    %c0_i32 = arith.constant 0 : i32
    %c0_i32_0 = arith.constant 0 : i32
    %c0_i32_1 = arith.constant 0 : i32
    return %c0_i32, %arg0, %c0_i32_0 : i32, i32, i32
  }
  func.func @transform_1(%arg0: i32) -> (i32, i32) {
    %c0_i32 = arith.constant 0 : i32
    %c0_i32_0 = arith.constant 0 : i32
    %c0_i32_1 = arith.constant 0 : i32
    return %c0_i32, %c0_i32_0 : i32, i32
  }
  func.func @transform_2(%arg0: i32) -> (i32, i32) {
    %c0_i32 = arith.constant 0 : i32
    %c0_i32_0 = arith.constant 0 : i32
    %c0_i32_1 = arith.constant 0 : i32
    return %c0_i32, %c0_i32_0 : i32, i32
  }
  func.func @transform_3(%arg0: i32) -> (i32, i32, i32) {
    %c0_i32 = arith.constant 0 : i32
    %c0_i32_0 = arith.constant 0 : i32
    %c0_i32_1 = arith.constant 0 : i32
    return %c0_i32, %arg0, %c0_i32_0 : i32, i32, i32
  }
}

module attributes {stable_mosaic.version = 11 : i64} {
  func.func @_snn_kernel(%arg0: i32, %arg1: memref<4x208x256xbf16, #tpu.memory_space<vmem>>, %arg2: memref<256x128xbf16, #tpu.memory_space<vmem>>, %arg3: memref<1x128xf32, #tpu.memory_space<vmem>>, %arg4: memref<4x208x128xbf16, #tpu.memory_space<vmem>>) attributes {dimension_semantics = [#tpu.dimension_semantics<parallel>], iteration_bounds = array<i64: 1>, scalar_prefetch = 0 : i64, scratch_operands = 0 : i64, tpu.core_type = #tpu.core_type<tc>, window_params = [{transform_indices = @transform_0, window_bounds = array<i64: 4, 208, 256>}, {pipeline_mode = #tpu.pipeline_mode<synchronous>, transform_indices = @transform_1, window_bounds = array<i64: 256, 128>}, {pipeline_mode = #tpu.pipeline_mode<synchronous>, transform_indices = @transform_2, window_bounds = array<i64: 1, 128>}, {transform_indices = @transform_3, window_bounds = array<i64: 4, 208, 128>}]} {
    %c0 = arith.constant 0 : index
    %c0_0 = arith.constant 0 : index
    %c0_1 = arith.constant 0 : index
    %0 = vector.load %arg1[%c0, %c0_0, %c0_1] : memref<4x208x256xbf16, #tpu.memory_space<vmem>>, vector<4x208x256xbf16>
    %1 = vector.shape_cast %0 : vector<4x208x256xbf16> to vector<832x256xbf16>
    %c0_2 = arith.constant 0 : index
    %c0_3 = arith.constant 0 : index
    %2 = vector.load %arg2[%c0_2, %c0_3] : memref<256x128xbf16, #tpu.memory_space<vmem>>, vector<256x128xbf16>
    %cst = arith.constant dense<0.000000e+00> : vector<832x128xf32>
    %3 = tpu.matmul %1, %2, %cst {dimension_numbers = #tpu.dot_dimension_numbers<[1], [0], [0], [1], [0, 0, 1, 1], [], []>} : vector<832x256xbf16>, vector<256x128xbf16>, vector<832x128xf32> -> vector<832x128xf32>
    %c0_4 = arith.constant 0 : index
    %c0_5 = arith.constant 0 : index
    %4 = vector.load %arg3[%c0_4, %c0_5] : memref<1x128xf32, #tpu.memory_space<vmem>>, vector<1x128xf32>
    %cst_6 = arith.constant 0.000000e+00 : f32
    %5 = vector.broadcast %cst_6 : f32 to vector<208x128xf32>
    %6 = vector.extract_strided_slice %3 {offsets = [0, 0], sizes = [208, 128], strides = [1, 1]} : vector<832x128xf32> to vector<208x128xf32>
    %7 = arith.addf %5, %6 : vector<208x128xf32>
    %c-32_i32 = arith.constant -32 : i32
    %c32_i32 = arith.constant 32 : i32
    %8 = arith.sitofp %c-32_i32 : i32 to f32
    %9 = vector.broadcast %8 : f32 to vector<208x128xf32>
    %10 = arith.maximumf %9, %7 : vector<208x128xf32>
    %11 = arith.sitofp %c32_i32 : i32 to f32
    %12 = vector.broadcast %11 : f32 to vector<208x128xf32>
    %13 = arith.minimumf %12, %10 : vector<208x128xf32>
    %14 = vector.broadcast %4 : vector<1x128xf32> to vector<208x128xf32>
    %15 = arith.cmpf oge, %13, %14 : vector<208x128xf32>
    %16 = arith.extui %15 : vector<208x128xi1> to vector<208x128xi32>
    %17 = arith.sitofp %16 : vector<208x128xi32> to vector<208x128xf32>
    %cst_7 = arith.constant 1.000000e+00 : f32
    %18 = vector.broadcast %cst_7 : f32 to vector<208x128xf32>
    %19 = arith.subf %18, %17 : vector<208x128xf32>
    %20 = arith.mulf %13, %19 : vector<208x128xf32>
    %21 = arith.truncf %17 : vector<208x128xf32> to vector<208x128xbf16>
    %c0_8 = arith.constant 0 : index
    %c0_9 = arith.constant 0 : index
    %c0_10 = arith.constant 0 : index
    %22 = vector.load %arg4[%c0_8, %c0_9, %c0_10] : memref<4x208x128xbf16, #tpu.memory_space<vmem>>, vector<1x208x128xbf16>
    %23 = vector.shape_cast %22 : vector<1x208x128xbf16> to vector<208x128xbf16>
    %24 = vector.shape_cast %21 : vector<208x128xbf16> to vector<1x208x128xbf16>
    tpu.vector_store %arg4[%c0_8, %c0_9, %c0_10], %24 {strides = array<i32>} : memref<4x208x128xbf16, #tpu.memory_space<vmem>>, vector<1x208x128xbf16>,
    %25 = vector.extract_strided_slice %3 {offsets = [208, 0], sizes = [208, 128], strides = [1, 1]} : vector<832x128xf32> to vector<208x128xf32>
    %26 = arith.addf %20, %25 : vector<208x128xf32>
    %c-32_i32_11 = arith.constant -32 : i32
    %c32_i32_12 = arith.constant 32 : i32
    %27 = arith.sitofp %c-32_i32_11 : i32 to f32
    %28 = vector.broadcast %27 : f32 to vector<208x128xf32>
    %29 = arith.maximumf %28, %26 : vector<208x128xf32>
    %30 = arith.sitofp %c32_i32_12 : i32 to f32
    %31 = vector.broadcast %30 : f32 to vector<208x128xf32>
    %32 = arith.minimumf %31, %29 : vector<208x128xf32>
    %33 = vector.broadcast %4 : vector<1x128xf32> to vector<208x128xf32>
    %34 = arith.cmpf oge, %32, %33 : vector<208x128xf32>
    %35 = arith.extui %34 : vector<208x128xi1> to vector<208x128xi32>
    %36 = arith.sitofp %35 : vector<208x128xi32> to vector<208x128xf32>
    %cst_13 = arith.constant 1.000000e+00 : f32
    %37 = vector.broadcast %cst_13 : f32 to vector<208x128xf32>
    %38 = arith.subf %37, %36 : vector<208x128xf32>
    %39 = arith.mulf %32, %38 : vector<208x128xf32>
    %40 = arith.truncf %36 : vector<208x128xf32> to vector<208x128xbf16>
    %c1 = arith.constant 1 : index
    %c0_14 = arith.constant 0 : index
    %c0_15 = arith.constant 0 : index
    %41 = vector.load %arg4[%c1, %c0_14, %c0_15] : memref<4x208x128xbf16, #tpu.memory_space<vmem>>, vector<1x208x128xbf16>
    %42 = vector.shape_cast %41 : vector<1x208x128xbf16> to vector<208x128xbf16>
    %43 = vector.shape_cast %40 : vector<208x128xbf16> to vector<1x208x128xbf16>
    tpu.vector_store %arg4[%c1, %c0_14, %c0_15], %43 {strides = array<i32>} : memref<4x208x128xbf16, #tpu.memory_space<vmem>>, vector<1x208x128xbf16>,
    %44 = vector.extract_strided_slice %3 {offsets = [416, 0], sizes = [208, 128], strides = [1, 1]} : vector<832x128xf32> to vector<208x128xf32>
    %45 = arith.addf %39, %44 : vector<208x128xf32>
    %c-32_i32_16 = arith.constant -32 : i32
    %c32_i32_17 = arith.constant 32 : i32
    %46 = arith.sitofp %c-32_i32_16 : i32 to f32
    %47 = vector.broadcast %46 : f32 to vector<208x128xf32>
    %48 = arith.maximumf %47, %45 : vector<208x128xf32>
    %49 = arith.sitofp %c32_i32_17 : i32 to f32
    %50 = vector.broadcast %49 : f32 to vector<208x128xf32>
    %51 = arith.minimumf %50, %48 : vector<208x128xf32>
    %52 = vector.broadcast %4 : vector<1x128xf32> to vector<208x128xf32>
    %53 = arith.cmpf oge, %51, %52 : vector<208x128xf32>
    %54 = arith.extui %53 : vector<208x128xi1> to vector<208x128xi32>
    %55 = arith.sitofp %54 : vector<208x128xi32> to vector<208x128xf32>
    %cst_18 = arith.constant 1.000000e+00 : f32
    %56 = vector.broadcast %cst_18 : f32 to vector<208x128xf32>
    %57 = arith.subf %56, %55 : vector<208x128xf32>
    %58 = arith.mulf %51, %57 : vector<208x128xf32>
    %59 = arith.truncf %55 : vector<208x128xf32> to vector<208x128xbf16>
    %c2 = arith.constant 2 : index
    %c0_19 = arith.constant 0 : index
    %c0_20 = arith.constant 0 : index
    %60 = vector.load %arg4[%c2, %c0_19, %c0_20] : memref<4x208x128xbf16, #tpu.memory_space<vmem>>, vector<1x208x128xbf16>
    %61 = vector.shape_cast %60 : vector<1x208x128xbf16> to vector<208x128xbf16>
    %62 = vector.shape_cast %59 : vector<208x128xbf16> to vector<1x208x128xbf16>
    tpu.vector_store %arg4[%c2, %c0_19, %c0_20], %62 {strides = array<i32>} : memref<4x208x128xbf16, #tpu.memory_space<vmem>>, vector<1x208x128xbf16>,
    %63 = vector.extract_strided_slice %3 {offsets = [624, 0], sizes = [208, 128], strides = [1, 1]} : vector<832x128xf32> to vector<208x128xf32>
    %64 = arith.addf %58, %63 : vector<208x128xf32>
    %c-32_i32_21 = arith.constant -32 : i32
    %c32_i32_22 = arith.constant 32 : i32
    %65 = arith.sitofp %c-32_i32_21 : i32 to f32
    %66 = vector.broadcast %65 : f32 to vector<208x128xf32>
    %67 = arith.maximumf %66, %64 : vector<208x128xf32>
    %68 = arith.sitofp %c32_i32_22 : i32 to f32
    %69 = vector.broadcast %68 : f32 to vector<208x128xf32>
    %70 = arith.minimumf %69, %67 : vector<208x128xf32>
    %71 = vector.broadcast %4 : vector<1x128xf32> to vector<208x128xf32>
    %72 = arith.cmpf oge, %70, %71 : vector<208x128xf32>
    %73 = arith.extui %72 : vector<208x128xi1> to vector<208x128xi32>
    %74 = arith.sitofp %73 : vector<208x128xi32> to vector<208x128xf32>
    %75 = arith.truncf %74 : vector<208x128xf32> to vector<208x128xbf16>
    %c3 = arith.constant 3 : index
    %c0_23 = arith.constant 0 : index
    %c0_24 = arith.constant 0 : index
    %76 = vector.load %arg4[%c3, %c0_23, %c0_24] : memref<4x208x128xbf16, #tpu.memory_space<vmem>>, vector<1x208x128xbf16>
    %77 = vector.shape_cast %76 : vector<1x208x128xbf16> to vector<208x128xbf16>
    %78 = vector.shape_cast %75 : vector<208x128xbf16> to vector<1x208x128xbf16>
    tpu.vector_store %arg4[%c3, %c0_23, %c0_24], %78 {strides = array<i32>} : memref<4x208x128xbf16, #tpu.memory_space<vmem>>, vector<1x208x128xbf16>,
    return
  }
  func.func @transform_0(%arg0: i32) -> (i32, i32, i32) {
    %c0_i32 = arith.constant 0 : i32
    %c0_i32_0 = arith.constant 0 : i32
    %c0_i32_1 = arith.constant 0 : i32
    return %c0_i32, %arg0, %c0_i32_0 : i32, i32, i32
  }
  func.func @transform_1(%arg0: i32) -> (i32, i32) {
    %c0_i32 = arith.constant 0 : i32
    %c0_i32_0 = arith.constant 0 : i32
    %c0_i32_1 = arith.constant 0 : i32
    return %c0_i32, %c0_i32_0 : i32, i32
  }
  func.func @transform_2(%arg0: i32) -> (i32, i32) {
    %c0_i32 = arith.constant 0 : i32
    %c0_i32_0 = arith.constant 0 : i32
    %c0_i32_1 = arith.constant 0 : i32
    return %c0_i32, %c0_i32_0 : i32, i32
  }
  func.func @transform_3(%arg0: i32) -> (i32, i32, i32) {
    %c0_i32 = arith.constant 0 : i32
    %c0_i32_0 = arith.constant 0 : i32
    %c0_i32_1 = arith.constant 0 : i32
    return %c0_i32, %arg0, %c0_i32_0 : i32, i32, i32
  }
}

module attributes {stable_mosaic.version = 11 : i64} {
  func.func @_snn_kernel(%arg0: i32, %arg1: memref<4x112x256xbf16, #tpu.memory_space<vmem>>, %arg2: memref<256x128xbf16, #tpu.memory_space<vmem>>, %arg3: memref<1x128xf32, #tpu.memory_space<vmem>>, %arg4: memref<4x112x128xbf16, #tpu.memory_space<vmem>>) attributes {dimension_semantics = [#tpu.dimension_semantics<parallel>], iteration_bounds = array<i64: 1>, scalar_prefetch = 0 : i64, scratch_operands = 0 : i64, tpu.core_type = #tpu.core_type<tc>, window_params = [{transform_indices = @transform_0, window_bounds = array<i64: 4, 112, 256>}, {pipeline_mode = #tpu.pipeline_mode<synchronous>, transform_indices = @transform_1, window_bounds = array<i64: 256, 128>}, {pipeline_mode = #tpu.pipeline_mode<synchronous>, transform_indices = @transform_2, window_bounds = array<i64: 1, 128>}, {transform_indices = @transform_3, window_bounds = array<i64: 4, 112, 128>}]} {
    %c0 = arith.constant 0 : index
    %c0_0 = arith.constant 0 : index
    %c0_1 = arith.constant 0 : index
    %0 = vector.load %arg1[%c0, %c0_0, %c0_1] : memref<4x112x256xbf16, #tpu.memory_space<vmem>>, vector<4x112x256xbf16>
    %1 = vector.shape_cast %0 : vector<4x112x256xbf16> to vector<448x256xbf16>
    %c0_2 = arith.constant 0 : index
    %c0_3 = arith.constant 0 : index
    %2 = vector.load %arg2[%c0_2, %c0_3] : memref<256x128xbf16, #tpu.memory_space<vmem>>, vector<256x128xbf16>
    %cst = arith.constant dense<0.000000e+00> : vector<448x128xf32>
    %3 = tpu.matmul %1, %2, %cst {dimension_numbers = #tpu.dot_dimension_numbers<[1], [0], [0], [1], [0, 0, 1, 1], [], []>} : vector<448x256xbf16>, vector<256x128xbf16>, vector<448x128xf32> -> vector<448x128xf32>
    %c0_4 = arith.constant 0 : index
    %c0_5 = arith.constant 0 : index
    %4 = vector.load %arg3[%c0_4, %c0_5] : memref<1x128xf32, #tpu.memory_space<vmem>>, vector<1x128xf32>
    %cst_6 = arith.constant 0.000000e+00 : f32
    %5 = vector.broadcast %cst_6 : f32 to vector<112x128xf32>
    %6 = vector.extract_strided_slice %3 {offsets = [0, 0], sizes = [112, 128], strides = [1, 1]} : vector<448x128xf32> to vector<112x128xf32>
    %7 = arith.addf %5, %6 : vector<112x128xf32>
    %c-32_i32 = arith.constant -32 : i32
    %c32_i32 = arith.constant 32 : i32
    %8 = arith.sitofp %c-32_i32 : i32 to f32
    %9 = vector.broadcast %8 : f32 to vector<112x128xf32>
    %10 = arith.maximumf %9, %7 : vector<112x128xf32>
    %11 = arith.sitofp %c32_i32 : i32 to f32
    %12 = vector.broadcast %11 : f32 to vector<112x128xf32>
    %13 = arith.minimumf %12, %10 : vector<112x128xf32>
    %14 = vector.broadcast %4 : vector<1x128xf32> to vector<112x128xf32>
    %15 = arith.cmpf oge, %13, %14 : vector<112x128xf32>
    %16 = arith.extui %15 : vector<112x128xi1> to vector<112x128xi32>
    %17 = arith.sitofp %16 : vector<112x128xi32> to vector<112x128xf32>
    %cst_7 = arith.constant 1.000000e+00 : f32
    %18 = vector.broadcast %cst_7 : f32 to vector<112x128xf32>
    %19 = arith.subf %18, %17 : vector<112x128xf32>
    %20 = arith.mulf %13, %19 : vector<112x128xf32>
    %21 = arith.truncf %17 : vector<112x128xf32> to vector<112x128xbf16>
    %c0_8 = arith.constant 0 : index
    %c0_9 = arith.constant 0 : index
    %c0_10 = arith.constant 0 : index
    %22 = vector.load %arg4[%c0_8, %c0_9, %c0_10] : memref<4x112x128xbf16, #tpu.memory_space<vmem>>, vector<1x112x128xbf16>
    %23 = vector.shape_cast %22 : vector<1x112x128xbf16> to vector<112x128xbf16>
    %24 = vector.shape_cast %21 : vector<112x128xbf16> to vector<1x112x128xbf16>
    tpu.vector_store %arg4[%c0_8, %c0_9, %c0_10], %24 {strides = array<i32>} : memref<4x112x128xbf16, #tpu.memory_space<vmem>>, vector<1x112x128xbf16>,
    %25 = vector.extract_strided_slice %3 {offsets = [112, 0], sizes = [112, 128], strides = [1, 1]} : vector<448x128xf32> to vector<112x128xf32>
    %26 = arith.addf %20, %25 : vector<112x128xf32>
    %c-32_i32_11 = arith.constant -32 : i32
    %c32_i32_12 = arith.constant 32 : i32
    %27 = arith.sitofp %c-32_i32_11 : i32 to f32
    %28 = vector.broadcast %27 : f32 to vector<112x128xf32>
    %29 = arith.maximumf %28, %26 : vector<112x128xf32>
    %30 = arith.sitofp %c32_i32_12 : i32 to f32
    %31 = vector.broadcast %30 : f32 to vector<112x128xf32>
    %32 = arith.minimumf %31, %29 : vector<112x128xf32>
    %33 = vector.broadcast %4 : vector<1x128xf32> to vector<112x128xf32>
    %34 = arith.cmpf oge, %32, %33 : vector<112x128xf32>
    %35 = arith.extui %34 : vector<112x128xi1> to vector<112x128xi32>
    %36 = arith.sitofp %35 : vector<112x128xi32> to vector<112x128xf32>
    %cst_13 = arith.constant 1.000000e+00 : f32
    %37 = vector.broadcast %cst_13 : f32 to vector<112x128xf32>
    %38 = arith.subf %37, %36 : vector<112x128xf32>
    %39 = arith.mulf %32, %38 : vector<112x128xf32>
    %40 = arith.truncf %36 : vector<112x128xf32> to vector<112x128xbf16>
    %c1 = arith.constant 1 : index
    %c0_14 = arith.constant 0 : index
    %c0_15 = arith.constant 0 : index
    %41 = vector.load %arg4[%c1, %c0_14, %c0_15] : memref<4x112x128xbf16, #tpu.memory_space<vmem>>, vector<1x112x128xbf16>
    %42 = vector.shape_cast %41 : vector<1x112x128xbf16> to vector<112x128xbf16>
    %43 = vector.shape_cast %40 : vector<112x128xbf16> to vector<1x112x128xbf16>
    tpu.vector_store %arg4[%c1, %c0_14, %c0_15], %43 {strides = array<i32>} : memref<4x112x128xbf16, #tpu.memory_space<vmem>>, vector<1x112x128xbf16>,
    %44 = vector.extract_strided_slice %3 {offsets = [224, 0], sizes = [112, 128], strides = [1, 1]} : vector<448x128xf32> to vector<112x128xf32>
    %45 = arith.addf %39, %44 : vector<112x128xf32>
    %c-32_i32_16 = arith.constant -32 : i32
    %c32_i32_17 = arith.constant 32 : i32
    %46 = arith.sitofp %c-32_i32_16 : i32 to f32
    %47 = vector.broadcast %46 : f32 to vector<112x128xf32>
    %48 = arith.maximumf %47, %45 : vector<112x128xf32>
    %49 = arith.sitofp %c32_i32_17 : i32 to f32
    %50 = vector.broadcast %49 : f32 to vector<112x128xf32>
    %51 = arith.minimumf %50, %48 : vector<112x128xf32>
    %52 = vector.broadcast %4 : vector<1x128xf32> to vector<112x128xf32>
    %53 = arith.cmpf oge, %51, %52 : vector<112x128xf32>
    %54 = arith.extui %53 : vector<112x128xi1> to vector<112x128xi32>
    %55 = arith.sitofp %54 : vector<112x128xi32> to vector<112x128xf32>
    %cst_18 = arith.constant 1.000000e+00 : f32
    %56 = vector.broadcast %cst_18 : f32 to vector<112x128xf32>
    %57 = arith.subf %56, %55 : vector<112x128xf32>
    %58 = arith.mulf %51, %57 : vector<112x128xf32>
    %59 = arith.truncf %55 : vector<112x128xf32> to vector<112x128xbf16>
    %c2 = arith.constant 2 : index
    %c0_19 = arith.constant 0 : index
    %c0_20 = arith.constant 0 : index
    %60 = vector.load %arg4[%c2, %c0_19, %c0_20] : memref<4x112x128xbf16, #tpu.memory_space<vmem>>, vector<1x112x128xbf16>
    %61 = vector.shape_cast %60 : vector<1x112x128xbf16> to vector<112x128xbf16>
    %62 = vector.shape_cast %59 : vector<112x128xbf16> to vector<1x112x128xbf16>
    tpu.vector_store %arg4[%c2, %c0_19, %c0_20], %62 {strides = array<i32>} : memref<4x112x128xbf16, #tpu.memory_space<vmem>>, vector<1x112x128xbf16>,
    %63 = vector.extract_strided_slice %3 {offsets = [336, 0], sizes = [112, 128], strides = [1, 1]} : vector<448x128xf32> to vector<112x128xf32>
    %64 = arith.addf %58, %63 : vector<112x128xf32>
    %c-32_i32_21 = arith.constant -32 : i32
    %c32_i32_22 = arith.constant 32 : i32
    %65 = arith.sitofp %c-32_i32_21 : i32 to f32
    %66 = vector.broadcast %65 : f32 to vector<112x128xf32>
    %67 = arith.maximumf %66, %64 : vector<112x128xf32>
    %68 = arith.sitofp %c32_i32_22 : i32 to f32
    %69 = vector.broadcast %68 : f32 to vector<112x128xf32>
    %70 = arith.minimumf %69, %67 : vector<112x128xf32>
    %71 = vector.broadcast %4 : vector<1x128xf32> to vector<112x128xf32>
    %72 = arith.cmpf oge, %70, %71 : vector<112x128xf32>
    %73 = arith.extui %72 : vector<112x128xi1> to vector<112x128xi32>
    %74 = arith.sitofp %73 : vector<112x128xi32> to vector<112x128xf32>
    %75 = arith.truncf %74 : vector<112x128xf32> to vector<112x128xbf16>
    %c3 = arith.constant 3 : index
    %c0_23 = arith.constant 0 : index
    %c0_24 = arith.constant 0 : index
    %76 = vector.load %arg4[%c3, %c0_23, %c0_24] : memref<4x112x128xbf16, #tpu.memory_space<vmem>>, vector<1x112x128xbf16>
    %77 = vector.shape_cast %76 : vector<1x112x128xbf16> to vector<112x128xbf16>
    %78 = vector.shape_cast %75 : vector<112x128xbf16> to vector<1x112x128xbf16>
    tpu.vector_store %arg4[%c3, %c0_23, %c0_24], %78 {strides = array<i32>} : memref<4x112x128xbf16, #tpu.memory_space<vmem>>, vector<1x112x128xbf16>,
    return
  }
  func.func @transform_0(%arg0: i32) -> (i32, i32, i32) {
    %c0_i32 = arith.constant 0 : i32
    %c0_i32_0 = arith.constant 0 : i32
    %c0_i32_1 = arith.constant 0 : i32
    return %c0_i32, %arg0, %c0_i32_0 : i32, i32, i32
  }
  func.func @transform_1(%arg0: i32) -> (i32, i32) {
    %c0_i32 = arith.constant 0 : i32
    %c0_i32_0 = arith.constant 0 : i32
    %c0_i32_1 = arith.constant 0 : i32
    return %c0_i32, %c0_i32_0 : i32, i32
  }
  func.func @transform_2(%arg0: i32) -> (i32, i32) {
    %c0_i32 = arith.constant 0 : i32
    %c0_i32_0 = arith.constant 0 : i32
    %c0_i32_1 = arith.constant 0 : i32
    return %c0_i32, %c0_i32_0 : i32, i32
  }
  func.func @transform_3(%arg0: i32) -> (i32, i32, i32) {
    %c0_i32 = arith.constant 0 : i32
    %c0_i32_0 = arith.constant 0 : i32
    %c0_i32_1 = arith.constant 0 : i32
    return %c0_i32, %arg0, %c0_i32_0 : i32, i32, i32
  }
}

module attributes {stable_mosaic.version = 11 : i64} {
  func.func @_snn_kernel(%arg0: i32, %arg1: memref<4x32x256xbf16, #tpu.memory_space<vmem>>, %arg2: memref<256x128xbf16, #tpu.memory_space<vmem>>, %arg3: memref<1x128xf32, #tpu.memory_space<vmem>>, %arg4: memref<4x32x128xbf16, #tpu.memory_space<vmem>>) attributes {dimension_semantics = [#tpu.dimension_semantics<parallel>], iteration_bounds = array<i64: 1>, scalar_prefetch = 0 : i64, scratch_operands = 0 : i64, tpu.core_type = #tpu.core_type<tc>, window_params = [{transform_indices = @transform_0, window_bounds = array<i64: 4, 32, 256>}, {pipeline_mode = #tpu.pipeline_mode<synchronous>, transform_indices = @transform_1, window_bounds = array<i64: 256, 128>}, {pipeline_mode = #tpu.pipeline_mode<synchronous>, transform_indices = @transform_2, window_bounds = array<i64: 1, 128>}, {transform_indices = @transform_3, window_bounds = array<i64: 4, 32, 128>}]} {
    %c0 = arith.constant 0 : index
    %c0_0 = arith.constant 0 : index
    %c0_1 = arith.constant 0 : index
    %0 = vector.load %arg1[%c0, %c0_0, %c0_1] : memref<4x32x256xbf16, #tpu.memory_space<vmem>>, vector<4x32x256xbf16>
    %1 = vector.shape_cast %0 : vector<4x32x256xbf16> to vector<128x256xbf16>
    %c0_2 = arith.constant 0 : index
    %c0_3 = arith.constant 0 : index
    %2 = vector.load %arg2[%c0_2, %c0_3] : memref<256x128xbf16, #tpu.memory_space<vmem>>, vector<256x128xbf16>
    %cst = arith.constant dense<0.000000e+00> : vector<128x128xf32>
    %3 = tpu.matmul %1, %2, %cst {dimension_numbers = #tpu.dot_dimension_numbers<[1], [0], [0], [1], [0, 0, 1, 1], [], []>} : vector<128x256xbf16>, vector<256x128xbf16>, vector<128x128xf32> -> vector<128x128xf32>
    %c0_4 = arith.constant 0 : index
    %c0_5 = arith.constant 0 : index
    %4 = vector.load %arg3[%c0_4, %c0_5] : memref<1x128xf32, #tpu.memory_space<vmem>>, vector<1x128xf32>
    %cst_6 = arith.constant 0.000000e+00 : f32
    %5 = vector.broadcast %cst_6 : f32 to vector<32x128xf32>
    %6 = vector.extract_strided_slice %3 {offsets = [0, 0], sizes = [32, 128], strides = [1, 1]} : vector<128x128xf32> to vector<32x128xf32>
    %7 = arith.addf %5, %6 : vector<32x128xf32>
    %c-32_i32 = arith.constant -32 : i32
    %c32_i32 = arith.constant 32 : i32
    %8 = arith.sitofp %c-32_i32 : i32 to f32
    %9 = vector.broadcast %8 : f32 to vector<32x128xf32>
    %10 = arith.maximumf %9, %7 : vector<32x128xf32>
    %11 = arith.sitofp %c32_i32 : i32 to f32
    %12 = vector.broadcast %11 : f32 to vector<32x128xf32>
    %13 = arith.minimumf %12, %10 : vector<32x128xf32>
    %14 = vector.broadcast %4 : vector<1x128xf32> to vector<32x128xf32>
    %15 = arith.cmpf oge, %13, %14 : vector<32x128xf32>
    %16 = arith.extui %15 : vector<32x128xi1> to vector<32x128xi32>
    %17 = arith.sitofp %16 : vector<32x128xi32> to vector<32x128xf32>
    %cst_7 = arith.constant 1.000000e+00 : f32
    %18 = vector.broadcast %cst_7 : f32 to vector<32x128xf32>
    %19 = arith.subf %18, %17 : vector<32x128xf32>
    %20 = arith.mulf %13, %19 : vector<32x128xf32>
    %21 = arith.truncf %17 : vector<32x128xf32> to vector<32x128xbf16>
    %c0_8 = arith.constant 0 : index
    %c0_9 = arith.constant 0 : index
    %c0_10 = arith.constant 0 : index
    %22 = vector.load %arg4[%c0_8, %c0_9, %c0_10] : memref<4x32x128xbf16, #tpu.memory_space<vmem>>, vector<1x32x128xbf16>
    %23 = vector.shape_cast %22 : vector<1x32x128xbf16> to vector<32x128xbf16>
    %24 = vector.shape_cast %21 : vector<32x128xbf16> to vector<1x32x128xbf16>
    tpu.vector_store %arg4[%c0_8, %c0_9, %c0_10], %24 {strides = array<i32>} : memref<4x32x128xbf16, #tpu.memory_space<vmem>>, vector<1x32x128xbf16>,
    %25 = vector.extract_strided_slice %3 {offsets = [32, 0], sizes = [32, 128], strides = [1, 1]} : vector<128x128xf32> to vector<32x128xf32>
    %26 = arith.addf %20, %25 : vector<32x128xf32>
    %c-32_i32_11 = arith.constant -32 : i32
    %c32_i32_12 = arith.constant 32 : i32
    %27 = arith.sitofp %c-32_i32_11 : i32 to f32
    %28 = vector.broadcast %27 : f32 to vector<32x128xf32>
    %29 = arith.maximumf %28, %26 : vector<32x128xf32>
    %30 = arith.sitofp %c32_i32_12 : i32 to f32
    %31 = vector.broadcast %30 : f32 to vector<32x128xf32>
    %32 = arith.minimumf %31, %29 : vector<32x128xf32>
    %33 = vector.broadcast %4 : vector<1x128xf32> to vector<32x128xf32>
    %34 = arith.cmpf oge, %32, %33 : vector<32x128xf32>
    %35 = arith.extui %34 : vector<32x128xi1> to vector<32x128xi32>
    %36 = arith.sitofp %35 : vector<32x128xi32> to vector<32x128xf32>
    %cst_13 = arith.constant 1.000000e+00 : f32
    %37 = vector.broadcast %cst_13 : f32 to vector<32x128xf32>
    %38 = arith.subf %37, %36 : vector<32x128xf32>
    %39 = arith.mulf %32, %38 : vector<32x128xf32>
    %40 = arith.truncf %36 : vector<32x128xf32> to vector<32x128xbf16>
    %c1 = arith.constant 1 : index
    %c0_14 = arith.constant 0 : index
    %c0_15 = arith.constant 0 : index
    %41 = vector.load %arg4[%c1, %c0_14, %c0_15] : memref<4x32x128xbf16, #tpu.memory_space<vmem>>, vector<1x32x128xbf16>
    %42 = vector.shape_cast %41 : vector<1x32x128xbf16> to vector<32x128xbf16>
    %43 = vector.shape_cast %40 : vector<32x128xbf16> to vector<1x32x128xbf16>
    tpu.vector_store %arg4[%c1, %c0_14, %c0_15], %43 {strides = array<i32>} : memref<4x32x128xbf16, #tpu.memory_space<vmem>>, vector<1x32x128xbf16>,
    %44 = vector.extract_strided_slice %3 {offsets = [64, 0], sizes = [32, 128], strides = [1, 1]} : vector<128x128xf32> to vector<32x128xf32>
    %45 = arith.addf %39, %44 : vector<32x128xf32>
    %c-32_i32_16 = arith.constant -32 : i32
    %c32_i32_17 = arith.constant 32 : i32
    %46 = arith.sitofp %c-32_i32_16 : i32 to f32
    %47 = vector.broadcast %46 : f32 to vector<32x128xf32>
    %48 = arith.maximumf %47, %45 : vector<32x128xf32>
    %49 = arith.sitofp %c32_i32_17 : i32 to f32
    %50 = vector.broadcast %49 : f32 to vector<32x128xf32>
    %51 = arith.minimumf %50, %48 : vector<32x128xf32>
    %52 = vector.broadcast %4 : vector<1x128xf32> to vector<32x128xf32>
    %53 = arith.cmpf oge, %51, %52 : vector<32x128xf32>
    %54 = arith.extui %53 : vector<32x128xi1> to vector<32x128xi32>
    %55 = arith.sitofp %54 : vector<32x128xi32> to vector<32x128xf32>
    %cst_18 = arith.constant 1.000000e+00 : f32
    %56 = vector.broadcast %cst_18 : f32 to vector<32x128xf32>
    %57 = arith.subf %56, %55 : vector<32x128xf32>
    %58 = arith.mulf %51, %57 : vector<32x128xf32>
    %59 = arith.truncf %55 : vector<32x128xf32> to vector<32x128xbf16>
    %c2 = arith.constant 2 : index
    %c0_19 = arith.constant 0 : index
    %c0_20 = arith.constant 0 : index
    %60 = vector.load %arg4[%c2, %c0_19, %c0_20] : memref<4x32x128xbf16, #tpu.memory_space<vmem>>, vector<1x32x128xbf16>
    %61 = vector.shape_cast %60 : vector<1x32x128xbf16> to vector<32x128xbf16>
    %62 = vector.shape_cast %59 : vector<32x128xbf16> to vector<1x32x128xbf16>
    tpu.vector_store %arg4[%c2, %c0_19, %c0_20], %62 {strides = array<i32>} : memref<4x32x128xbf16, #tpu.memory_space<vmem>>, vector<1x32x128xbf16>,
    %63 = vector.extract_strided_slice %3 {offsets = [96, 0], sizes = [32, 128], strides = [1, 1]} : vector<128x128xf32> to vector<32x128xf32>
    %64 = arith.addf %58, %63 : vector<32x128xf32>
    %c-32_i32_21 = arith.constant -32 : i32
    %c32_i32_22 = arith.constant 32 : i32
    %65 = arith.sitofp %c-32_i32_21 : i32 to f32
    %66 = vector.broadcast %65 : f32 to vector<32x128xf32>
    %67 = arith.maximumf %66, %64 : vector<32x128xf32>
    %68 = arith.sitofp %c32_i32_22 : i32 to f32
    %69 = vector.broadcast %68 : f32 to vector<32x128xf32>
    %70 = arith.minimumf %69, %67 : vector<32x128xf32>
    %71 = vector.broadcast %4 : vector<1x128xf32> to vector<32x128xf32>
    %72 = arith.cmpf oge, %70, %71 : vector<32x128xf32>
    %73 = arith.extui %72 : vector<32x128xi1> to vector<32x128xi32>
    %74 = arith.sitofp %73 : vector<32x128xi32> to vector<32x128xf32>
    %75 = arith.truncf %74 : vector<32x128xf32> to vector<32x128xbf16>
    %c3 = arith.constant 3 : index
    %c0_23 = arith.constant 0 : index
    %c0_24 = arith.constant 0 : index
    %76 = vector.load %arg4[%c3, %c0_23, %c0_24] : memref<4x32x128xbf16, #tpu.memory_space<vmem>>, vector<1x32x128xbf16>
    %77 = vector.shape_cast %76 : vector<1x32x128xbf16> to vector<32x128xbf16>
    %78 = vector.shape_cast %75 : vector<32x128xbf16> to vector<1x32x128xbf16>
    tpu.vector_store %arg4[%c3, %c0_23, %c0_24], %78 {strides = array<i32>} : memref<4x32x128xbf16, #tpu.memory_space<vmem>>, vector<1x32x128xbf16>,
    return
  }
  func.func @transform_0(%arg0: i32) -> (i32, i32, i32) {
    %c0_i32 = arith.constant 0 : i32
    %c0_i32_0 = arith.constant 0 : i32
    %c0_i32_1 = arith.constant 0 : i32
    return %c0_i32, %arg0, %c0_i32_0 : i32, i32, i32
  }
  func.func @transform_1(%arg0: i32) -> (i32, i32) {
    %c0_i32 = arith.constant 0 : i32
    %c0_i32_0 = arith.constant 0 : i32
    %c0_i32_1 = arith.constant 0 : i32
    return %c0_i32, %c0_i32_0 : i32, i32
  }
  func.func @transform_2(%arg0: i32) -> (i32, i32) {
    %c0_i32 = arith.constant 0 : i32
    %c0_i32_0 = arith.constant 0 : i32
    %c0_i32_1 = arith.constant 0 : i32
    return %c0_i32, %c0_i32_0 : i32, i32
  }
  func.func @transform_3(%arg0: i32) -> (i32, i32, i32) {
    %c0_i32 = arith.constant 0 : i32
    %c0_i32_0 = arith.constant 0 : i32
    %c0_i32_1 = arith.constant 0 : i32
    return %c0_i32, %arg0, %c0_i32_0 : i32, i32, i32
  }
}

module attributes {stable_mosaic.version = 11 : i64} {
  func.func @_snn_kernel(%arg0: i32, %arg1: memref<4x16x256xbf16, #tpu.memory_space<vmem>>, %arg2: memref<256x128xbf16, #tpu.memory_space<vmem>>, %arg3: memref<1x128xf32, #tpu.memory_space<vmem>>, %arg4: memref<4x16x128xbf16, #tpu.memory_space<vmem>>) attributes {dimension_semantics = [#tpu.dimension_semantics<parallel>], iteration_bounds = array<i64: 1>, scalar_prefetch = 0 : i64, scratch_operands = 0 : i64, tpu.core_type = #tpu.core_type<tc>, window_params = [{transform_indices = @transform_0, window_bounds = array<i64: 4, 16, 256>}, {pipeline_mode = #tpu.pipeline_mode<synchronous>, transform_indices = @transform_1, window_bounds = array<i64: 256, 128>}, {pipeline_mode = #tpu.pipeline_mode<synchronous>, transform_indices = @transform_2, window_bounds = array<i64: 1, 128>}, {transform_indices = @transform_3, window_bounds = array<i64: 4, 16, 128>}]} {
    %c0 = arith.constant 0 : index
    %c0_0 = arith.constant 0 : index
    %c0_1 = arith.constant 0 : index
    %0 = vector.load %arg1[%c0, %c0_0, %c0_1] : memref<4x16x256xbf16, #tpu.memory_space<vmem>>, vector<4x16x256xbf16>
    %1 = vector.shape_cast %0 : vector<4x16x256xbf16> to vector<64x256xbf16>
    %c0_2 = arith.constant 0 : index
    %c0_3 = arith.constant 0 : index
    %2 = vector.load %arg2[%c0_2, %c0_3] : memref<256x128xbf16, #tpu.memory_space<vmem>>, vector<256x128xbf16>
    %cst = arith.constant dense<0.000000e+00> : vector<64x128xf32>
    %3 = tpu.matmul %1, %2, %cst {dimension_numbers = #tpu.dot_dimension_numbers<[1], [0], [0], [1], [0, 0, 1, 1], [], []>} : vector<64x256xbf16>, vector<256x128xbf16>, vector<64x128xf32> -> vector<64x128xf32>
    %c0_4 = arith.constant 0 : index
    %c0_5 = arith.constant 0 : index
    %4 = vector.load %arg3[%c0_4, %c0_5] : memref<1x128xf32, #tpu.memory_space<vmem>>, vector<1x128xf32>
    %cst_6 = arith.constant 0.000000e+00 : f32
    %5 = vector.broadcast %cst_6 : f32 to vector<16x128xf32>
    %6 = vector.extract_strided_slice %3 {offsets = [0, 0], sizes = [16, 128], strides = [1, 1]} : vector<64x128xf32> to vector<16x128xf32>
    %7 = arith.addf %5, %6 : vector<16x128xf32>
    %c-32_i32 = arith.constant -32 : i32
    %c32_i32 = arith.constant 32 : i32
    %8 = arith.sitofp %c-32_i32 : i32 to f32
    %9 = vector.broadcast %8 : f32 to vector<16x128xf32>
    %10 = arith.maximumf %9, %7 : vector<16x128xf32>
    %11 = arith.sitofp %c32_i32 : i32 to f32
    %12 = vector.broadcast %11 : f32 to vector<16x128xf32>
    %13 = arith.minimumf %12, %10 : vector<16x128xf32>
    %14 = vector.broadcast %4 : vector<1x128xf32> to vector<16x128xf32>
    %15 = arith.cmpf oge, %13, %14 : vector<16x128xf32>
    %16 = arith.extui %15 : vector<16x128xi1> to vector<16x128xi32>
    %17 = arith.sitofp %16 : vector<16x128xi32> to vector<16x128xf32>
    %cst_7 = arith.constant 1.000000e+00 : f32
    %18 = vector.broadcast %cst_7 : f32 to vector<16x128xf32>
    %19 = arith.subf %18, %17 : vector<16x128xf32>
    %20 = arith.mulf %13, %19 : vector<16x128xf32>
    %21 = arith.truncf %17 : vector<16x128xf32> to vector<16x128xbf16>
    %c0_8 = arith.constant 0 : index
    %c0_9 = arith.constant 0 : index
    %c0_10 = arith.constant 0 : index
    %22 = vector.load %arg4[%c0_8, %c0_9, %c0_10] : memref<4x16x128xbf16, #tpu.memory_space<vmem>>, vector<1x16x128xbf16>
    %23 = vector.shape_cast %22 : vector<1x16x128xbf16> to vector<16x128xbf16>
    %24 = vector.shape_cast %21 : vector<16x128xbf16> to vector<1x16x128xbf16>
    tpu.vector_store %arg4[%c0_8, %c0_9, %c0_10], %24 {strides = array<i32>} : memref<4x16x128xbf16, #tpu.memory_space<vmem>>, vector<1x16x128xbf16>,
    %25 = vector.extract_strided_slice %3 {offsets = [16, 0], sizes = [16, 128], strides = [1, 1]} : vector<64x128xf32> to vector<16x128xf32>
    %26 = arith.addf %20, %25 : vector<16x128xf32>
    %c-32_i32_11 = arith.constant -32 : i32
    %c32_i32_12 = arith.constant 32 : i32
    %27 = arith.sitofp %c-32_i32_11 : i32 to f32
    %28 = vector.broadcast %27 : f32 to vector<16x128xf32>
    %29 = arith.maximumf %28, %26 : vector<16x128xf32>
    %30 = arith.sitofp %c32_i32_12 : i32 to f32
    %31 = vector.broadcast %30 : f32 to vector<16x128xf32>
    %32 = arith.minimumf %31, %29 : vector<16x128xf32>
    %33 = vector.broadcast %4 : vector<1x128xf32> to vector<16x128xf32>
    %34 = arith.cmpf oge, %32, %33 : vector<16x128xf32>
    %35 = arith.extui %34 : vector<16x128xi1> to vector<16x128xi32>
    %36 = arith.sitofp %35 : vector<16x128xi32> to vector<16x128xf32>
    %cst_13 = arith.constant 1.000000e+00 : f32
    %37 = vector.broadcast %cst_13 : f32 to vector<16x128xf32>
    %38 = arith.subf %37, %36 : vector<16x128xf32>
    %39 = arith.mulf %32, %38 : vector<16x128xf32>
    %40 = arith.truncf %36 : vector<16x128xf32> to vector<16x128xbf16>
    %c1 = arith.constant 1 : index
    %c0_14 = arith.constant 0 : index
    %c0_15 = arith.constant 0 : index
    %41 = vector.load %arg4[%c1, %c0_14, %c0_15] : memref<4x16x128xbf16, #tpu.memory_space<vmem>>, vector<1x16x128xbf16>
    %42 = vector.shape_cast %41 : vector<1x16x128xbf16> to vector<16x128xbf16>
    %43 = vector.shape_cast %40 : vector<16x128xbf16> to vector<1x16x128xbf16>
    tpu.vector_store %arg4[%c1, %c0_14, %c0_15], %43 {strides = array<i32>} : memref<4x16x128xbf16, #tpu.memory_space<vmem>>, vector<1x16x128xbf16>,
    %44 = vector.extract_strided_slice %3 {offsets = [32, 0], sizes = [16, 128], strides = [1, 1]} : vector<64x128xf32> to vector<16x128xf32>
    %45 = arith.addf %39, %44 : vector<16x128xf32>
    %c-32_i32_16 = arith.constant -32 : i32
    %c32_i32_17 = arith.constant 32 : i32
    %46 = arith.sitofp %c-32_i32_16 : i32 to f32
    %47 = vector.broadcast %46 : f32 to vector<16x128xf32>
    %48 = arith.maximumf %47, %45 : vector<16x128xf32>
    %49 = arith.sitofp %c32_i32_17 : i32 to f32
    %50 = vector.broadcast %49 : f32 to vector<16x128xf32>
    %51 = arith.minimumf %50, %48 : vector<16x128xf32>
    %52 = vector.broadcast %4 : vector<1x128xf32> to vector<16x128xf32>
    %53 = arith.cmpf oge, %51, %52 : vector<16x128xf32>
    %54 = arith.extui %53 : vector<16x128xi1> to vector<16x128xi32>
    %55 = arith.sitofp %54 : vector<16x128xi32> to vector<16x128xf32>
    %cst_18 = arith.constant 1.000000e+00 : f32
    %56 = vector.broadcast %cst_18 : f32 to vector<16x128xf32>
    %57 = arith.subf %56, %55 : vector<16x128xf32>
    %58 = arith.mulf %51, %57 : vector<16x128xf32>
    %59 = arith.truncf %55 : vector<16x128xf32> to vector<16x128xbf16>
    %c2 = arith.constant 2 : index
    %c0_19 = arith.constant 0 : index
    %c0_20 = arith.constant 0 : index
    %60 = vector.load %arg4[%c2, %c0_19, %c0_20] : memref<4x16x128xbf16, #tpu.memory_space<vmem>>, vector<1x16x128xbf16>
    %61 = vector.shape_cast %60 : vector<1x16x128xbf16> to vector<16x128xbf16>
    %62 = vector.shape_cast %59 : vector<16x128xbf16> to vector<1x16x128xbf16>
    tpu.vector_store %arg4[%c2, %c0_19, %c0_20], %62 {strides = array<i32>} : memref<4x16x128xbf16, #tpu.memory_space<vmem>>, vector<1x16x128xbf16>,
    %63 = vector.extract_strided_slice %3 {offsets = [48, 0], sizes = [16, 128], strides = [1, 1]} : vector<64x128xf32> to vector<16x128xf32>
    %64 = arith.addf %58, %63 : vector<16x128xf32>
    %c-32_i32_21 = arith.constant -32 : i32
    %c32_i32_22 = arith.constant 32 : i32
    %65 = arith.sitofp %c-32_i32_21 : i32 to f32
    %66 = vector.broadcast %65 : f32 to vector<16x128xf32>
    %67 = arith.maximumf %66, %64 : vector<16x128xf32>
    %68 = arith.sitofp %c32_i32_22 : i32 to f32
    %69 = vector.broadcast %68 : f32 to vector<16x128xf32>
    %70 = arith.minimumf %69, %67 : vector<16x128xf32>
    %71 = vector.broadcast %4 : vector<1x128xf32> to vector<16x128xf32>
    %72 = arith.cmpf oge, %70, %71 : vector<16x128xf32>
    %73 = arith.extui %72 : vector<16x128xi1> to vector<16x128xi32>
    %74 = arith.sitofp %73 : vector<16x128xi32> to vector<16x128xf32>
    %75 = arith.truncf %74 : vector<16x128xf32> to vector<16x128xbf16>
    %c3 = arith.constant 3 : index
    %c0_23 = arith.constant 0 : index
    %c0_24 = arith.constant 0 : index
    %76 = vector.load %arg4[%c3, %c0_23, %c0_24] : memref<4x16x128xbf16, #tpu.memory_space<vmem>>, vector<1x16x128xbf16>
    %77 = vector.shape_cast %76 : vector<1x16x128xbf16> to vector<16x128xbf16>
    %78 = vector.shape_cast %75 : vector<16x128xbf16> to vector<1x16x128xbf16>
    tpu.vector_store %arg4[%c3, %c0_23, %c0_24], %78 {strides = array<i32>} : memref<4x16x128xbf16, #tpu.memory_space<vmem>>, vector<1x16x128xbf16>,
    return
  }
  func.func @transform_0(%arg0: i32) -> (i32, i32, i32) {
    %c0_i32 = arith.constant 0 : i32
    %c0_i32_0 = arith.constant 0 : i32
    %c0_i32_1 = arith.constant 0 : i32
    return %c0_i32, %arg0, %c0_i32_0 : i32, i32, i32
  }
  func.func @transform_1(%arg0: i32) -> (i32, i32) {
    %c0_i32 = arith.constant 0 : i32
    %c0_i32_0 = arith.constant 0 : i32
    %c0_i32_1 = arith.constant 0 : i32
    return %c0_i32, %c0_i32_0 : i32, i32
  }
  func.func @transform_2(%arg0: i32) -> (i32, i32) {
    %c0_i32 = arith.constant 0 : i32
    %c0_i32_0 = arith.constant 0 : i32
    %c0_i32_1 = arith.constant 0 : i32
    return %c0_i32, %c0_i32_0 : i32, i32
  }
  func.func @transform_3(%arg0: i32) -> (i32, i32, i32) {
    %c0_i32 = arith.constant 0 : i32
    %c0_i32_0 = arith.constant 0 : i32
    %c0_i32_1 = arith.constant 0 : i32
    return %c0_i32, %arg0, %c0_i32_0 : i32, i32, i32
  }
}

</mosaic_0001>

<llo_original>
// kernel: _lambda_.5
$region0: #{_lambda_.5}
  #allocation0 [shape = 'u32[]', space=smem, size = 0x4, offset = 0x4, fixed_abs, tag = 'smem constant byte address 0x4 - core index']
  #allocation1 [shape = 'u32[72,128]{1,0:T(1,128)}', space=vmem, size = 0x9000, scoped, tag = 'internal scratch']
  %s0 = inlined_call_operand.vmem [shape: f32[4,352,48], index: 0, kind: input, shape index: {}]
  %s1 = inlined_call_operand.vmem [shape: f32[48,128], index: 1, kind: input, shape index: {}]
  %s2 = inlined_call_operand.vmem [shape: f32[1,128], index: 2, kind: input, shape index: {}]
  %s3 = inlined_call_operand.vmem [shape: bf16[4,352,128], index: 3, kind: output, shape index: {}]
  %s4 = sld [smem:[#allocation0]]
  $region22: #{_lambda_.5} parent=0
    _
  %s6 = ssub.s32 1, %s4
  %s7 = scalar_select 0, %s6, %s4
  // Predicated region
  $region2: #{_lambda_.5} parent=0 // pred_check
    _
  $region3: #{_lambda_.5} parent=0 // pred_check_branch
    %9 = sbr.rel (0) target = $region5
  $region4: #{_lambda_.5} parent=0 // pred_region
    _
  $region5: #{_lambda_.5} parent=0 // pred_fallthru
    _
  // Predicated region
  $region6: #{_lambda_.5} parent=0 // pred_check
    _
  $region7: #{_lambda_.5} parent=0 // pred_check_branch
    %11 = sbr.rel (0) target = $region9
  $region8: #{_lambda_.5} parent=0 // pred_region
    _
  $region9: #{_lambda_.5} parent=0 // pred_fallthru
    _
  // Predicated region
  $region10: #{_lambda_.5} parent=0 // pred_check
    _
  $region11: #{_lambda_.5} parent=0 // pred_check_branch
    %13 = sbr.rel (0) target = $region13
  $region12: #{_lambda_.5} parent=0 // pred_region
    _
  $region13: #{_lambda_.5} parent=0 // pred_fallthru
    _
  %v14 = vld [vmem:[%s0] sm:$0xff]
  %v15 = vld [vmem:[%s0 + $0x8] sm:$0xff]
  %v16 = vld [vmem:[%s0 + $0x10] sm:$0xff]
  %v17 = vld [vmem:[%s0 + $0x18] sm:$0xff]
  %v18 = vld [vmem:[%s0 + $0x20] sm:$0xff]
  %v19 = vld [vmem:[%s0 + $0x28] sm:$0xff]
  %v20 = vld [vmem:[%s0 + $0x30] sm:$0xff]
  %v21 = vld [vmem:[%s0 + $0x38] sm:$0xff]
  %v22 = vld [vmem:[%s0 + $0x40] sm:$0xff]
  %v23 = vld [vmem:[%s0 + $0x48] sm:$0xff]
  %v24 = vld [vmem:[%s0 + $0x50] sm:$0xff]
  %v25 = vld [vmem:[%s0 + $0x58] sm:$0xff]
  %v26 = vld [vmem:[%s0 + $0x60] sm:$0xff]
  %v27 = vld [vmem:[%s0 + $0x68] sm:$0xff]
  %v28 = vld [vmem:[%s0 + $0x70] sm:$0xff]
  %v29 = vld [vmem:[%s0 + $0x78] sm:$0xff]
  %v30 = vld [vmem:[%s0 + $0x80] sm:$0xff]
  %v31 = vld [vmem:[%s0 + $0x88] sm:$0xff]
  %v32 = vld [vmem:[%s0 + $0x90] sm:$0xff]
  %v33 = vld [vmem:[%s0 + $0x98] sm:$0xff]
  %v34 = vld [vmem:[%s0 + $0xa0] sm:$0xff]
  %v35 = vld [vmem:[%s0 + $0xa8] sm:$0xff]
  %v36 = vld [vmem:[%s0 + $0xb0] sm:$0xff]
  %v37 = vld [vmem:[%s0 + $0xb8] sm:$0xff]
  %v38 = vld [vmem:[%s0 + $0xc0] sm:$0xff]
  %v39 = vld [vmem:[%s0 + $0xc8] sm:$0xff]
  %v40 = vld [vmem:[%s0 + $0xd0] sm:$0xff]
  %v41 = vld [vmem:[%s0 + $0xd8] sm:$0xff]
  %v42 = vld [vmem:[%s0 + $0xe0] sm:$0xff]
  %v43 = vld [vmem:[%s0 + $0xe8] sm:$0xff]
  %v44 = vld [vmem:[%s0 + $0xf0] sm:$0xff]
  %v45 = vld [vmem:[%s0 + $0xf8] sm:$0xff]
  %v46 = vld [vmem:[%s0 + $0x100] sm:$0xff]
  %v47 = vld [vmem:[%s0 + $0x108] sm:$0xff]
  %v48 = vld [vmem:[%s0 + $0x110] sm:$0xff]
  %v49 = vld [vmem:[%s0 + $0x118] sm:$0xff]
  %v50 = vld [vmem:[%s0 + $0x120] sm:$0xff]
  %v51 = vld [vmem:[%s0 + $0x128] sm:$0xff]
  %v52 = vld [vmem:[%s0 + $0x130] sm:$0xff]
  %v53 = vld [vmem:[%s0 + $0x138] sm:$0xff]
  %v54 = vld [vmem:[%s0 + $0x140] sm:$0xff]
  %v55 = vld [vmem:[%s0 + $0x148] sm:$0xff]
  %v56 = vld [vmem:[%s0 + $0x150] sm:$0xff]
  %v57 = vld [vmem:[%s0 + $0x158] sm:$0xff]
  %v58 = vld [vmem:[%s0 + $0x160] sm:$0xff]
  %v59 = vld [vmem:[%s0 + $0x168] sm:$0xff]
  %v60 = vld [vmem:[%s0 + $0x170] sm:$0xff]
  %v61 = vld [vmem:[%s0 + $0x178] sm:$0xff]
  %v62 = vld [vmem:[%s0 + $0x180] sm:$0xff]
  %v63 = vld [vmem:[%s0 + $0x188] sm:$0xff]
  %v64 = vld [vmem:[%s0 + $0x190] sm:$0xff]
  %v65 = vld [vmem:[%s0 + $0x198] sm:$0xff]
  %v66 = vld [vmem:[%s0 + $0x1a0] sm:$0xff]
  %v67 = vld [vmem:[%s0 + $0x1a8] sm:$0xff]
  %v68 = vld [vmem:[%s0 + $0x1b0] sm:$0xff]
  %v69 = vld [vmem:[%s0 + $0x1b8] sm:$0xff]
  %v70 = vld [vmem:[%s0 + $0x1c0] sm:$0xff]
  %v71 = vld [vmem:[%s0 + $0x1c8] sm:$0xff]
  %v72 = vld [vmem:[%s0 + $0x1d0] sm:$0xff]
  %v73 = vld [vmem:[%s0 + $0x1d8] sm:$0xff]
  %v74 = vld [vmem:[%s0 + $0x1e0] sm:$0xff]
  %v75 = vld [vmem:[%s0 + $0x1e8] sm:$0xff]
  %v76 = vld [vmem:[%s0 + $0x1f0] sm:$0xff]
  %v77 = vld [vmem:[%s0 + $0x1f8] sm:$0xff]
  %v78 = vld [vmem:[%s0 + $0x200] sm:$0xff]
  %v79 = vld [vmem:[%s0 + $0x208] sm:$0xff]
  %v80 = vld [vmem:[%s0 + $0x210] sm:$0xff]
  %v81 = vld [vmem:[%s0 + $0x218] sm:$0xff]
  %v82 = vld [vmem:[%s0 + $0x220] sm:$0xff]
  %v83 = vld [vmem:[%s0 + $0x228] sm:$0xff]
  %v84 = vld [vmem:[%s0 + $0x230] sm:$0xff]
  %v85 = vld [vmem:[%s0 + $0x238] sm:$0xff]
  %v86 = vld [vmem:[%s0 + $0x240] sm:$0xff]
  %v87 = vld [vmem:[%s0 + $0x248] sm:$0xff]
  %v88 = vld [vmem:[%s0 + $0x250] sm:$0xff]
  %v89 = vld [vmem:[%s0 + $0x258] sm:$0xff]
  %v90 = vld [vmem:[%s0 + $0x260] sm:$0xff]
  %v91 = vld [vmem:[%s0 + $0x268] sm:$0xff]
  %v92 = vld [vmem:[%s0 + $0x270] sm:$0xff]
  %v93 = vld [vmem:[%s0 + $0x278] sm:$0xff]
  %v94 = vld [vmem:[%s0 + $0x280] sm:$0xff]
  %v95 = vld [vmem:[%s0 + $0x288] sm:$0xff]
  %v96 = vld [vmem:[%s0 + $0x290] sm:$0xff]
  %v97 = vld [vmem:[%s0 + $0x298] sm:$0xff]
  %v98 = vld [vmem:[%s0 + $0x2a0] sm:$0xff]
  %v99 = vld [vmem:[%s0 + $0x2a8] sm:$0xff]
  %v100 = vld [vmem:[%s0 + $0x2b0] sm:$0xff]
  %v101 = vld [vmem:[%s0 + $0x2b8] sm:$0xff]
  %v102 = vld [vmem:[%s0 + $0x2c0] sm:$0xff]
  %v103 = vld [vmem:[%s0 + $0x2c8] sm:$0xff]
  %v104 = vld [vmem:[%s0 + $0x2d0] sm:$0xff]
  %v105 = vld [vmem:[%s0 + $0x2d8] sm:$0xff]
  %v106 = vld [vmem:[%s0 + $0x2e0] sm:$0xff]
  %v107 = vld [vmem:[%s0 + $0x2e8] sm:$0xff]
  %v108 = vld [vmem:[%s0 + $0x2f0] sm:$0xff]
  %v109 = vld [vmem:[%s0 + $0x2f8] sm:$0xff]
  %v110 = vld [vmem:[%s0 + $0x300] sm:$0xff]
  %v111 = vld [vmem:[%s0 + $0x308] sm:$0xff]
  %v112 = vld [vmem:[%s0 + $0x310] sm:$0xff]
  %v113 = vld [vmem:[%s0 + $0x318] sm:$0xff]
  %v114 = vld [vmem:[%s0 + $0x320] sm:$0xff]
  %v115 = vld [vmem:[%s0 + $0x328] sm:$0xff]
  %v116 = vld [vmem:[%s0 + $0x330] sm:$0xff]
  %v117 = vld [vmem:[%s0 + $0x338] sm:$0xff]
  %v118 = vld [vmem:[%s0 + $0x340] sm:$0xff]
  %v119 = vld [vmem:[%s0 + $0x348] sm:$0xff]
  %v120 = vld [vmem:[%s0 + $0x350] sm:$0xff]
  %v121 = vld [vmem:[%s0 + $0x358] sm:$0xff]
  %v122 = vld [vmem:[%s0 + $0x360] sm:$0xff]
  %v123 = vld [vmem:[%s0 + $0x368] sm:$0xff]
  %v124 = vld [vmem:[%s0 + $0x370] sm:$0xff]
  %v125 = vld [vmem:[%s0 + $0x378] sm:$0xff]
  %v126 = vld [vmem:[%s0 + $0x380] sm:$0xff]
  %v127 = vld [vmem:[%s0 + $0x388] sm:$0xff]
  %v128 = vld [vmem:[%s0 + $0x390] sm:$0xff]
  %v129 = vld [vmem:[%s0 + $0x398] sm:$0xff]
  %v130 = vld [vmem:[%s0 + $0x3a0] sm:$0xff]
  %v131 = vld [vmem:[%s0 + $0x3a8] sm:$0xff]
  %v132 = vld [vmem:[%s0 + $0x3b0] sm:$0xff]
  %v133 = vld [vmem:[%s0 + $0x3b8] sm:$0xff]
  %v134 = vld [vmem:[%s0 + $0x3c0] sm:$0xff]
  %v135 = vld [vmem:[%s0 + $0x3c8] sm:$0xff]
  %v136 = vld [vmem:[%s0 + $0x3d0] sm:$0xff]
  %v137 = vld [vmem:[%s0 + $0x3d8] sm:$0xff]
  %v138 = vld [vmem:[%s0 + $0x3e0] sm:$0xff]
  %v139 = vld [vmem:[%s0 + $0x3e8] sm:$0xff]
  %v140 = vld [vmem:[%s0 + $0x3f0] sm:$0xff]
  %v141 = vld [vmem:[%s0 + $0x3f8] sm:$0xff]
  %v142 = vld [vmem:[%s0 + $0x400] sm:$0xff]
  %v143 = vld [vmem:[%s0 + $0x408] sm:$0xff]
  %v144 = vld [vmem:[%s0 + $0x410] sm:$0xff]
  %v145 = vld [vmem:[%s0 + $0x418] sm:$0xff]
  %v146 = vld [vmem:[%s0 + $0x420] sm:$0xff]
  %v147 = vld [vmem:[%s0 + $0x428] sm:$0xff]
  %v148 = vld [vmem:[%s0 + $0x430] sm:$0xff]
  %v149 = vld [vmem:[%s0 + $0x438] sm:$0xff]
  %v150 = vld [vmem:[%s0 + $0x440] sm:$0xff]
  %v151 = vld [vmem:[%s0 + $0x448] sm:$0xff]
  %v152 = vld [vmem:[%s0 + $0x450] sm:$0xff]
  %v153 = vld [vmem:[%s0 + $0x458] sm:$0xff]
  %v154 = vld [vmem:[%s0 + $0x460] sm:$0xff]
  %v155 = vld [vmem:[%s0 + $0x468] sm:$0xff]
  %v156 = vld [vmem:[%s0 + $0x470] sm:$0xff]
  %v157 = vld [vmem:[%s0 + $0x478] sm:$0xff]
  %v158 = vld [vmem:[%s0 + $0x480] sm:$0xff]
  %v159 = vld [vmem:[%s0 + $0x488] sm:$0xff]
  %v160 = vld [vmem:[%s0 + $0x490] sm:$0xff]
  %v161 = vld [vmem:[%s0 + $0x498] sm:$0xff]
  %v162 = vld [vmem:[%s0 + $0x4a0] sm:$0xff]
  %v163 = vld [vmem:[%s0 + $0x4a8] sm:$0xff]
  %v164 = vld [vmem:[%s0 + $0x4b0] sm:$0xff]
  %v165 = vld [vmem:[%s0 + $0x4b8] sm:$0xff]
  %v166 = vld [vmem:[%s0 + $0x4c0] sm:$0xff]
  %v167 = vld [vmem:[%s0 + $0x4c8] sm:$0xff]
  %v168 = vld [vmem:[%s0 + $0x4d0] sm:$0xff]
  %v169 = vld [vmem:[%s0 + $0x4d8] sm:$0xff]
  %v170 = vld [vmem:[%s0 + $0x4e0] sm:$0xff]
  %v171 = vld [vmem:[%s0 + $0x4e8] sm:$0xff]
  %v172 = vld [vmem:[%s0 + $0x4f0] sm:$0xff]
  %v173 = vld [vmem:[%s0 + $0x4f8] sm:$0xff]
  %v174 = vld [vmem:[%s0 + $0x500] sm:$0xff]
  %v175 = vld [vmem:[%s0 + $0x508] sm:$0xff]
  %v176 = vld [vmem:[%s0 + $0x510] sm:$0xff]
  %v177 = vld [vmem:[%s0 + $0x518] sm:$0xff]
  %v178 = vld [vmem:[%s0 + $0x520] sm:$0xff]
  %v179 = vld [vmem:[%s0 + $0x528] sm:$0xff]
  %v180 = vld [vmem:[%s0 + $0x530] sm:$0xff]
  %v181 = vld [vmem:[%s0 + $0x538] sm:$0xff]
  %v182 = vld [vmem:[%s0 + $0x540] sm:$0xff]
  %v183 = vld [vmem:[%s0 + $0x548] sm:$0xff]
  %v184 = vld [vmem:[%s0 + $0x550] sm:$0xff]
  %v185 = vld [vmem:[%s0 + $0x558] sm:$0xff]
  %v186 = vld [vmem:[%s0 + $0x560] sm:$0xff]
  %v187 = vld [vmem:[%s0 + $0x568] sm:$0xff]
  %v188 = vld [vmem:[%s0 + $0x570] sm:$0xff]
  %v189 = vld [vmem:[%s0 + $0x578] sm:$0xff]
  %v190 = vld [vmem:[%s1] sm:$0xff]
  %v191 = vld [vmem:[%s1 + $0x8] sm:$0xff]
  %v192 = vld [vmem:[%s1 + $0x10] sm:$0xff]
  %v193 = vld [vmem:[%s1 + $0x18] sm:$0xff]
  %v194 = vld [vmem:[%s1 + $0x20] sm:$0xff]
  %v195 = vld [vmem:[%s1 + $0x28] sm:$0xff]
  %vm196 = vcmask 392192
  %v198 = vsel %vm196, %v14, 0
  %v201 = vsel %vm196, %v15, 0
  %v204 = vsel %vm196, %v16, 0
  %v207 = vsel %vm196, %v17, 0
  %v210 = vsel %vm196, %v18, 0
  %v213 = vsel %vm196, %v19, 0
  %v216 = vsel %vm196, %v20, 0
  %v219 = vsel %vm196, %v21, 0
  %v222 = vsel %vm196, %v22, 0
  %v225 = vsel %vm196, %v23, 0
  %v228 = vsel %vm196, %v24, 0
  %v231 = vsel %vm196, %v25, 0
  %v234 = vsel %vm196, %v26, 0
  %v237 = vsel %vm196, %v27, 0
  %v240 = vsel %vm196, %v28, 0
  %v243 = vsel %vm196, %v29, 0
  %v246 = vsel %vm196, %v30, 0
  %v249 = vsel %vm196, %v31, 0
  %v252 = vsel %vm196, %v32, 0
  %v255 = vsel %vm196, %v33, 0
  %v258 = vsel %vm196, %v34, 0
  %v261 = vsel %vm196, %v35, 0
  %v264 = vsel %vm196, %v36, 0
  %v267 = vsel %vm196, %v37, 0
  %v270 = vsel %vm196, %v38, 0
  %v273 = vsel %vm196, %v39, 0
  %v276 = vsel %vm196, %v40, 0
  %v279 = vsel %vm196, %v41, 0
  %v282 = vsel %vm196, %v42, 0
  %v285 = vsel %vm196, %v43, 0
  %v288 = vsel %vm196, %v44, 0
  %v291 = vsel %vm196, %v45, 0
  %v294 = vsel %vm196, %v46, 0
  %v297 = vsel %vm196, %v47, 0
  %v300 = vsel %vm196, %v48, 0
  %v303 = vsel %vm196, %v49, 0
  %v306 = vsel %vm196, %v50, 0
  %v309 = vsel %vm196, %v51, 0
  %v312 = vsel %vm196, %v52, 0
  %v315 = vsel %vm196, %v53, 0
  %v318 = vsel %vm196, %v54, 0
  %v321 = vsel %vm196, %v55, 0
  %v324 = vsel %vm196, %v56, 0
  %v327 = vsel %vm196, %v57, 0
  %v330 = vsel %vm196, %v58, 0
  %v333 = vsel %vm196, %v59, 0
  %v336 = vsel %vm196, %v60, 0
  %v339 = vsel %vm196, %v61, 0
  %v342 = vsel %vm196, %v62, 0
  %v345 = vsel %vm196, %v63, 0
  %v348 = vsel %vm196, %v64, 0
  %v351 = vsel %vm196, %v65, 0
  %v354 = vsel %vm196, %v66, 0
  %v357 = vsel %vm196, %v67, 0
  %v360 = vsel %vm196, %v68, 0
  %v363 = vsel %vm196, %v69, 0
  %v366 = vsel %vm196, %v70, 0
  %v369 = vsel %vm196, %v71, 0
  %v372 = vsel %vm196, %v72, 0
  %v375 = vsel %vm196, %v73, 0
  %v378 = vsel %vm196, %v74, 0
  %v381 = vsel %vm196, %v75, 0
  %v384 = vsel %vm196, %v76, 0
  %v387 = vsel %vm196, %v77, 0
  %v390 = vsel %vm196, %v78, 0
  %v393 = vsel %vm196, %v79, 0
  %v396 = vsel %vm196, %v80, 0
  %v399 = vsel %vm196, %v81, 0
  %v402 = vsel %vm196, %v82, 0
  %v405 = vsel %vm196, %v83, 0
  %v408 = vsel %vm196, %v84, 0
  %v411 = vsel %vm196, %v85, 0
  %v414 = vsel %vm196, %v86, 0
  %v417 = vsel %vm196, %v87, 0
  %v420 = vsel %vm196, %v88, 0
  %v423 = vsel %vm196, %v89, 0
  %v426 = vsel %vm196, %v90, 0
  %v429 = vsel %vm196, %v91, 0
  %v432 = vsel %vm196, %v92, 0
  %v435 = vsel %vm196, %v93, 0
  %v438 = vsel %vm196, %v94, 0
  %v441 = vsel %vm196, %v95, 0
  %v444 = vsel %vm196, %v96, 0
  %v447 = vsel %vm196, %v97, 0
  %v450 = vsel %vm196, %v98, 0
  %v453 = vsel %vm196, %v99, 0
  %v456 = vsel %vm196, %v100, 0
  %v459 = vsel %vm196, %v101, 0
  %v462 = vsel %vm196, %v102, 0
  %v465 = vsel %vm196, %v103, 0
  %v468 = vsel %vm196, %v104, 0
  %v471 = vsel %vm196, %v105, 0
  %v474 = vsel %vm196, %v106, 0
  %v477 = vsel %vm196, %v107, 0
  %v480 = vsel %vm196, %v108, 0
  %v483 = vsel %vm196, %v109, 0
  %v486 = vsel %vm196, %v110, 0
  %v489 = vsel %vm196, %v111, 0
  %v492 = vsel %vm196, %v112, 0
  %v495 = vsel %vm196, %v113, 0
  %v498 = vsel %vm196, %v114, 0
  %v501 = vsel %vm196, %v115, 0
  %v504 = vsel %vm196, %v116, 0
  %v507 = vsel %vm196, %v117, 0
  %v510 = vsel %vm196, %v118, 0
  %v513 = vsel %vm196, %v119, 0
  %v516 = vsel %vm196, %v120, 0
  %v519 = vsel %vm196, %v121, 0
  %v522 = vsel %vm196, %v122, 0
  %v525 = vsel %vm196, %v123, 0
  %v528 = vsel %vm196, %v124, 0
  %v531 = vsel %vm196, %v125, 0
  %v534 = vsel %vm196, %v126, 0
  %v537 = vsel %vm196, %v127, 0
  %v540 = vsel %vm196, %v128, 0
  %v543 = vsel %vm196, %v129, 0
  %v546 = vsel %vm196, %v130, 0
  %v549 = vsel %vm196, %v131, 0
  %v552 = vsel %vm196, %v132, 0
  %v555 = vsel %vm196, %v133, 0
  %v558 = vsel %vm196, %v134, 0
  %v561 = vsel %vm196, %v135, 0
  %v564 = vsel %vm196, %v136, 0
  %v567 = vsel %vm196, %v137, 0
  %v570 = vsel %vm196, %v138, 0
  %v573 = vsel %vm196, %v139, 0
  %v576 = vsel %vm196, %v140, 0
  %v579 = vsel %vm196, %v141, 0
  %v582 = vsel %vm196, %v142, 0
  %v585 = vsel %vm196, %v143, 0
  %v588 = vsel %vm196, %v144, 0
  %v591 = vsel %vm196, %v145, 0
  %v594 = vsel %vm196, %v146, 0
  %v597 = vsel %vm196, %v147, 0
  %v600 = vsel %vm196, %v148, 0
  %v603 = vsel %vm196, %v149, 0
  %v606 = vsel %vm196, %v150, 0
  %v609 = vsel %vm196, %v151, 0
  %v612 = vsel %vm196, %v152, 0
  %v615 = vsel %vm196, %v153, 0
  %v618 = vsel %vm196, %v154, 0
  %v621 = vsel %vm196, %v155, 0
  %v624 = vsel %vm196, %v156, 0
  %v627 = vsel %vm196, %v157, 0
  %v630 = vsel %vm196, %v158, 0
  %v633 = vsel %vm196, %v159, 0
  %v636 = vsel %vm196, %v160, 0
  %v639 = vsel %vm196, %v161, 0
  %v642 = vsel %vm196, %v162, 0
  %v645 = vsel %vm196, %v163, 0
  %v648 = vsel %vm196, %v164, 0
  %v651 = vsel %vm196, %v165, 0
  %v654 = vsel %vm196, %v166, 0
  %v657 = vsel %vm196, %v167, 0
  %v660 = vsel %vm196, %v168, 0
  %v663 = vsel %vm196, %v169, 0
  %v666 = vsel %vm196, %v170, 0
  %v669 = vsel %vm196, %v171, 0
  %v672 = vsel %vm196, %v172, 0
  %v675 = vsel %vm196, %v173, 0
  %v678 = vsel %vm196, %v174, 0
  %v681 = vsel %vm196, %v175, 0
  %v684 = vsel %vm196, %v176, 0
  %v687 = vsel %vm196, %v177, 0
  %v690 = vsel %vm196, %v178, 0
  %v693 = vsel %vm196, %v179, 0
  %v696 = vsel %vm196, %v180, 0
  %v699 = vsel %vm196, %v181, 0
  %v702 = vsel %vm196, %v182, 0
  %v705 = vsel %vm196, %v183, 0
  %v708 = vsel %vm196, %v184, 0
  %v711 = vsel %vm196, %v185, 0
  %v714 = vsel %vm196, %v186, 0
  %v717 = vsel %vm196, %v187, 0
  %v720 = vsel %vm196, %v188, 0
  %v723 = vsel %vm196, %v189, 0
  %725 = vmatpush.msra.mxu0 0.0
  %726 = vmatpush.msra.mxu0 0.0
  %727 = vmatpush.msra.mxu0 0.0
  %728 = vmatpush.msra.mxu0 0.0
  %729 = vmatpush.msra.mxu0 0.0
  %730 = vmatpush.msra.mxu0 0.0
  %731 = vmatpush.msra.mxu0 0.0
  %732 = vmatpush.msra.mxu0 0.0
  %733 = vmatpush.msra.mxu0 0.0
  %734 = vmatpush.msra.mxu0 0.0
  %735 = vmatpush.msra.mxu0 %v195
  %736 = vmatpush.msra.mxu0 %v194
  %737 = vmatpush.msra.mxu0 %v193
  %738 = vmatpush.msra.mxu0 %v192
  %739 = vmatpush.msra.mxu0 %v191
  %740 = vmatpush.msra.mxu0 %v190
  %741 = vmatmul.f32.gmra.mxu0 %v198
  %v742 = vpop.f32.mrf.mxu0
  %v743 = vadd.f32 0.0, %v742
  %744 = vmatmul.f32.gmra.mxu0 %v201
  %v745 = vpop.f32.mrf.mxu0
  %v746 = vadd.f32 0.0, %v745
  %747 = vmatmul.f32.gmra.mxu0 %v204
  %v748 = vpop.f32.mrf.mxu0
  %v749 = vadd.f32 0.0, %v748
  %750 = vmatmul.f32.gmra.mxu0 %v207
  %v751 = vpop.f32.mrf.mxu0
  %v752 = vadd.f32 0.0, %v751
  %753 = vmatmul.f32.gmra.mxu0 %v210
  %v754 = vpop.f32.mrf.mxu0
  %v755 = vadd.f32 0.0, %v754
  %756 = vmatmul.f32.gmra.mxu0 %v213
  %v757 = vpop.f32.mrf.mxu0
  %v758 = vadd.f32 0.0, %v757
  %759 = vmatmul.f32.gmra.mxu0 %v216
  %v760 = vpop.f32.mrf.mxu0
  %v761 = vadd.f32 0.0, %v760
  %762 = vmatmul.f32.gmra.mxu0 %v219
  %v763 = vpop.f32.mrf.mxu0
  %v764 = vadd.f32 0.0, %v763
  %765 = vmatmul.f32.gmra.mxu0 %v222
  %v766 = vpop.f32.mrf.mxu0
  %v767 = vadd.f32 0.0, %v766
  %768 = vmatmul.f32.gmra.mxu0 %v225
  %v769 = vpop.f32.mrf.mxu0
  %v770 = vadd.f32 0.0, %v769
  %771 = vmatmul.f32.gmra.mxu0 %v228
  %v772 = vpop.f32.mrf.mxu0
  %v773 = vadd.f32 0.0, %v772
  %774 = vmatmul.f32.gmra.mxu0 %v231
  %v775 = vpop.f32.mrf.mxu0
  %v776 = vadd.f32 0.0, %v775
  %777 = vmatmul.f32.gmra.mxu0 %v234
  %v778 = vpop.f32.mrf.mxu0
  %v779 = vadd.f32 0.0, %v778
  %780 = vmatmul.f32.gmra.mxu0 %v237
  %v781 = vpop.f32.mrf.mxu0
  %v782 = vadd.f32 0.0, %v781
  %783 = vmatmul.f32.gmra.mxu0 %v240
  %v784 = vpop.f32.mrf.mxu0
  %v785 = vadd.f32 0.0, %v784
  %786 = vmatmul.f32.gmra.mxu0 %v243
  %v787 = vpop.f32.mrf.mxu0
  %v788 = vadd.f32 0.0, %v787
  %789 = vmatmul.f32.gmra.mxu0 %v246
  %v790 = vpop.f32.mrf.mxu0
  %v791 = vadd.f32 0.0, %v790
  %792 = vmatmul.f32.gmra.mxu0 %v249
  %v793 = vpop.f32.mrf.mxu0
  %v794 = vadd.f32 0.0, %v793
  %795 = vmatmul.f32.gmra.mxu0 %v252
  %v796 = vpop.f32.mrf.mxu0
  %v797 = vadd.f32 0.0, %v796
  %798 = vmatmul.f32.gmra.mxu0 %v255
  %v799 = vpop.f32.mrf.mxu0
  %v800 = vadd.f32 0.0, %v799
  %801 = vmatmul.f32.gmra.mxu0 %v258
  %v802 = vpop.f32.mrf.mxu0
  %v803 = vadd.f32 0.0, %v802
  %804 = vmatmul.f32.gmra.mxu0 %v261
  %v805 = vpop.f32.mrf.mxu0
  %v806 = vadd.f32 0.0, %v805
  %807 = vmatmul.f32.gmra.mxu0 %v264
  %v808 = vpop.f32.mrf.mxu0
  %v809 = vadd.f32 0.0, %v808
  %810 = vmatmul.f32.gmra.mxu0 %v267
  %v811 = vpop.f32.mrf.mxu0
  %v812 = vadd.f32 0.0, %v811
  %813 = vmatmul.f32.gmra.mxu0 %v270
  %v814 = vpop.f32.mrf.mxu0
  %v815 = vadd.f32 0.0, %v814
  %816 = vmatmul.f32.gmra.mxu0 %v273
  %v817 = vpop.f32.mrf.mxu0
  %v818 = vadd.f32 0.0, %v817
  %819 = vmatmul.f32.gmra.mxu0 %v276
  %v820 = vpop.f32.mrf.mxu0
  %v821 = vadd.f32 0.0, %v820
  %822 = vmatmul.f32.gmra.mxu0 %v279
  %v823 = vpop.f32.mrf.mxu0
  %v824 = vadd.f32 0.0, %v823
  %825 = vmatmul.f32.gmra.mxu0 %v282
  %v826 = vpop.f32.mrf.mxu0
  %v827 = vadd.f32 0.0, %v826
  %828 = vmatmul.f32.gmra.mxu0 %v285
  %v829 = vpop.f32.mrf.mxu0
  %v830 = vadd.f32 0.0, %v829
  %831 = vmatmul.f32.gmra.mxu0 %v288
  %v832 = vpop.f32.mrf.mxu0
  %v833 = vadd.f32 0.0, %v832
  %834 = vmatmul.f32.gmra.mxu0 %v291
  %v835 = vpop.f32.mrf.mxu0
  %v836 = vadd.f32 0.0, %v835
  %837 = vmatmul.f32.gmra.mxu0 %v294
  %v838 = vpop.f32.mrf.mxu0
  %v839 = vadd.f32 0.0, %v838
  %840 = vmatmul.f32.gmra.mxu0 %v297
  %v841 = vpop.f32.mrf.mxu0
  %v842 = vadd.f32 0.0, %v841
  %843 = vmatmul.f32.gmra.mxu0 %v300
  %v844 = vpop.f32.mrf.mxu0
  %v845 = vadd.f32 0.0, %v844
  %846 = vmatmul.f32.gmra.mxu0 %v303
  %v847 = vpop.f32.mrf.mxu0
  %v848 = vadd.f32 0.0, %v847
  %849 = vmatmul.f32.gmra.mxu0 %v306
  %v850 = vpop.f32.mrf.mxu0
  %v851 = vadd.f32 0.0, %v850
  %852 = vmatmul.f32.gmra.mxu0 %v309
  %v853 = vpop.f32.mrf.mxu0
  %v854 = vadd.f32 0.0, %v853
  %855 = vmatmul.f32.gmra.mxu0 %v312
  %v856 = vpop.f32.mrf.mxu0
  %v857 = vadd.f32 0.0, %v856
  %858 = vmatmul.f32.gmra.mxu0 %v315
  %v859 = vpop.f32.mrf.mxu0
  %v860 = vadd.f32 0.0, %v859
  %861 = vmatmul.f32.gmra.mxu0 %v318
  %v862 = vpop.f32.mrf.mxu0
  %v863 = vadd.f32 0.0, %v862
  %864 = vmatmul.f32.gmra.mxu0 %v321
  %v865 = vpop.f32.mrf.mxu0
  %v866 = vadd.f32 0.0, %v865
  %867 = vmatmul.f32.gmra.mxu0 %v324
  %v868 = vpop.f32.mrf.mxu0
  %v869 = vadd.f32 0.0, %v868
  %870 = vmatmul.f32.gmra.mxu0 %v327
  %v871 = vpop.f32.mrf.mxu0
  %v872 = vadd.f32 0.0, %v871
  %873 = vmatmul.f32.gmra.mxu0 %v330
  %v874 = vpop.f32.mrf.mxu0
  %v875 = vadd.f32 0.0, %v874
  %876 = vmatmul.f32.gmra.mxu0 %v333
  %v877 = vpop.f32.mrf.mxu0
  %v878 = vadd.f32 0.0, %v877
  %879 = vmatmul.f32.gmra.mxu0 %v336
  %v880 = vpop.f32.mrf.mxu0
  %v881 = vadd.f32 0.0, %v880
  %882 = vmatmul.f32.gmra.mxu0 %v339
  %v883 = vpop.f32.mrf.mxu0
  %v884 = vadd.f32 0.0, %v883
  %885 = vmatmul.f32.gmra.mxu0 %v342
  %v886 = vpop.f32.mrf.mxu0
  %v887 = vadd.f32 0.0, %v886
  %888 = vmatmul.f32.gmra.mxu0 %v345
  %v889 = vpop.f32.mrf.mxu0
  %v890 = vadd.f32 0.0, %v889
  %891 = vmatmul.f32.gmra.mxu0 %v348
  %v892 = vpop.f32.mrf.mxu0
  %v893 = vadd.f32 0.0, %v892
  %894 = vmatmul.f32.gmra.mxu0 %v351
  %v895 = vpop.f32.mrf.mxu0
  %v896 = vadd.f32 0.0, %v895
  %897 = vmatmul.f32.gmra.mxu0 %v354
  %v898 = vpop.f32.mrf.mxu0
  %v899 = vadd.f32 0.0, %v898
  %900 = vmatmul.f32.gmra.mxu0 %v357
  %v901 = vpop.f32.mrf.mxu0
  %v902 = vadd.f32 0.0, %v901
  %903 = vmatmul.f32.gmra.mxu0 %v360
  %v904 = vpop.f32.mrf.mxu0
  %v905 = vadd.f32 0.0, %v904
  %906 = vmatmul.f32.gmra.mxu0 %v363
  %v907 = vpop.f32.mrf.mxu0
  %v908 = vadd.f32 0.0, %v907
  %909 = vmatmul.f32.gmra.mxu0 %v366
  %v910 = vpop.f32.mrf.mxu0
  %v911 = vadd.f32 0.0, %v910
  %912 = vmatmul.f32.gmra.mxu0 %v369
  %v913 = vpop.f32.mrf.mxu0
  %v914 = vadd.f32 0.0, %v913
  %915 = vmatmul.f32.gmra.mxu0 %v372
  %v916 = vpop.f32.mrf.mxu0
  %v917 = vadd.f32 0.0, %v916
  %918 = vmatmul.f32.gmra.mxu0 %v375
  %v919 = vpop.f32.mrf.mxu0
  %v920 = vadd.f32 0.0, %v919
  %921 = vmatmul.f32.gmra.mxu0 %v378
  %v922 = vpop.f32.mrf.mxu0
  %v923 = vadd.f32 0.0, %v922
  %924 = vmatmul.f32.gmra.mxu0 %v381
  %v925 = vpop.f32.mrf.mxu0
  %v926 = vadd.f32 0.0, %v925
  %927 = vmatmul.f32.gmra.mxu0 %v384
  %v928 = vpop.f32.mrf.mxu0
  %v929 = vadd.f32 0.0, %v928
  %930 = vmatmul.f32.gmra.mxu0 %v387
  %v931 = vpop.f32.mrf.mxu0
  %v932 = vadd.f32 0.0, %v931
  %933 = vmatmul.f32.gmra.mxu0 %v390
  %v934 = vpop.f32.mrf.mxu0
  %v935 = vadd.f32 0.0, %v934
  %936 = vmatmul.f32.gmra.mxu0 %v393
  %v937 = vpop.f32.mrf.mxu0
  %v938 = vadd.f32 0.0, %v937
  %939 = vmatmul.f32.gmra.mxu0 %v396
  %v940 = vpop.f32.mrf.mxu0
  %v941 = vadd.f32 0.0, %v940
  %942 = vmatmul.f32.gmra.mxu0 %v399
  %v943 = vpop.f32.mrf.mxu0
  %v944 = vadd.f32 0.0, %v943
  %945 = vmatmul.f32.gmra.mxu0 %v402
  %v946 = vpop.f32.mrf.mxu0
  %v947 = vadd.f32 0.0, %v946
  %948 = vmatmul.f32.gmra.mxu0 %v405
  %v949 = vpop.f32.mrf.mxu0
  %v950 = vadd.f32 0.0, %v949
  %951 = vmatmul.f32.gmra.mxu0 %v408
  %v952 = vpop.f32.mrf.mxu0
  %v953 = vadd.f32 0.0, %v952
  %954 = vmatmul.f32.gmra.mxu0 %v411
  %v955 = vpop.f32.mrf.mxu0
  %v956 = vadd.f32 0.0, %v955
  %957 = vmatmul.f32.gmra.mxu0 %v414
  %v958 = vpop.f32.mrf.mxu0
  %v959 = vadd.f32 0.0, %v958
  %960 = vmatmul.f32.gmra.mxu0 %v417
  %v961 = vpop.f32.mrf.mxu0
  %v962 = vadd.f32 0.0, %v961
  %963 = vmatmul.f32.gmra.mxu0 %v420
  %v964 = vpop.f32.mrf.mxu0
  %v965 = vadd.f32 0.0, %v964
  %966 = vmatmul.f32.gmra.mxu0 %v423
  %v967 = vpop.f32.mrf.mxu0
  %v968 = vadd.f32 0.0, %v967
  %969 = vmatmul.f32.gmra.mxu0 %v426
  %v970 = vpop.f32.mrf.mxu0
  %v971 = vadd.f32 0.0, %v970
  %972 = vmatmul.f32.gmra.mxu0 %v429
  %v973 = vpop.f32.mrf.mxu0
  %v974 = vadd.f32 0.0, %v973
  %975 = vmatmul.f32.gmra.mxu0 %v432
  %v976 = vpop.f32.mrf.mxu0
  %v977 = vadd.f32 0.0, %v976
  %978 = vmatmul.f32.gmra.mxu0 %v435
  %v979 = vpop.f32.mrf.mxu0
  %v980 = vadd.f32 0.0, %v979
  %981 = vmatmul.f32.gmra.mxu0 %v438
  %v982 = vpop.f32.mrf.mxu0
  %v983 = vadd.f32 0.0, %v982
  %984 = vmatmul.f32.gmra.mxu0 %v441
  %v985 = vpop.f32.mrf.mxu0
  %v986 = vadd.f32 0.0, %v985
  %987 = vmatmul.f32.gmra.mxu0 %v444
  %v988 = vpop.f32.mrf.mxu0
  %v989 = vadd.f32 0.0, %v988
  %990 = vmatmul.f32.gmra.mxu0 %v447
  %v991 = vpop.f32.mrf.mxu0
  %v992 = vadd.f32 0.0, %v991
  %993 = vmatmul.f32.gmra.mxu0 %v450
  %v994 = vpop.f32.mrf.mxu0
  %v995 = vadd.f32 0.0, %v994
  %996 = vmatmul.f32.gmra.mxu0 %v453
  %v997 = vpop.f32.mrf.mxu0
  %v998 = vadd.f32 0.0, %v997
  %999 = vmatmul.f32.gmra.mxu0 %v456
  %v1000 = vpop.f32.mrf.mxu0
  %v1001 = vadd.f32 0.0, %v1000
  %1002 = vmatmul.f32.gmra.mxu0 %v459
  %v1003 = vpop.f32.mrf.mxu0
  %v1004 = vadd.f32 0.0, %v1003
  %1005 = vmatmul.f32.gmra.mxu0 %v462
  %v1006 = vpop.f32.mrf.mxu0
  %v1007 = vadd.f32 0.0, %v1006
  %1008 = vmatmul.f32.gmra.mxu0 %v465
  %v1009 = vpop.f32.mrf.mxu0
  %v1010 = vadd.f32 0.0, %v1009
  %1011 = vmatmul.f32.gmra.mxu0 %v468
  %v1012 = vpop.f32.mrf.mxu0
  %v1013 = vadd.f32 0.0, %v1012
  %1014 = vmatmul.f32.gmra.mxu0 %v471
  %v1015 = vpop.f32.mrf.mxu0
  %v1016 = vadd.f32 0.0, %v1015
  %1017 = vmatmul.f32.gmra.mxu0 %v474
  %v1018 = vpop.f32.mrf.mxu0
  %v1019 = vadd.f32 0.0, %v1018
  %1020 = vmatmul.f32.gmra.mxu0 %v477
  %v1021 = vpop.f32.mrf.mxu0
  %v1022 = vadd.f32 0.0, %v1021
  %1023 = vmatmul.f32.gmra.mxu0 %v480
  %v1024 = vpop.f32.mrf.mxu0
  %v1025 = vadd.f32 0.0, %v1024
  %1026 = vmatmul.f32.gmra.mxu0 %v483
  %v1027 = vpop.f32.mrf.mxu0
  %v1028 = vadd.f32 0.0, %v1027
  %1029 = vmatmul.f32.gmra.mxu0 %v486
  %v1030 = vpop.f32.mrf.mxu0
  %v1031 = vadd.f32 0.0, %v1030
  %1032 = vmatmul.f32.gmra.mxu0 %v489
  %v1033 = vpop.f32.mrf.mxu0
  %v1034 = vadd.f32 0.0, %v1033
  %1035 = vmatmul.f32.gmra.mxu0 %v492
  %v1036 = vpop.f32.mrf.mxu0
  %v1037 = vadd.f32 0.0, %v1036
  %1038 = vmatmul.f32.gmra.mxu0 %v495
  %v1039 = vpop.f32.mrf.mxu0
  %v1040 = vadd.f32 0.0, %v1039
  %1041 = vmatmul.f32.gmra.mxu0 %v498
  %v1042 = vpop.f32.mrf.mxu0
  %v1043 = vadd.f32 0.0, %v1042
  %1044 = vmatmul.f32.gmra.mxu0 %v501
  %v1045 = vpop.f32.mrf.mxu0
  %v1046 = vadd.f32 0.0, %v1045
  %1047 = vmatmul.f32.gmra.mxu0 %v504
  %v1048 = vpop.f32.mrf.mxu0
  %v1049 = vadd.f32 0.0, %v1048
  %1050 = vmatmul.f32.gmra.mxu0 %v507
  %v1051 = vpop.f32.mrf.mxu0
  %v1052 = vadd.f32 0.0, %v1051
  %1053 = vmatmul.f32.gmra.mxu0 %v510
  %v1054 = vpop.f32.mrf.mxu0
  %v1055 = vadd.f32 0.0, %v1054
  %1056 = vmatmul.f32.gmra.mxu0 %v513
  %v1057 = vpop.f32.mrf.mxu0
  %v1058 = vadd.f32 0.0, %v1057
  %1059 = vmatmul.f32.gmra.mxu0 %v516
  %v1060 = vpop.f32.mrf.mxu0
  %v1061 = vadd.f32 0.0, %v1060
  %1062 = vmatmul.f32.gmra.mxu0 %v519
  %v1063 = vpop.f32.mrf.mxu0
  %v1064 = vadd.f32 0.0, %v1063
  %1065 = vmatmul.f32.gmra.mxu0 %v522
  %v1066 = vpop.f32.mrf.mxu0
  %v1067 = vadd.f32 0.0, %v1066
  %1068 = vmatmul.f32.gmra.mxu0 %v525
  %v1069 = vpop.f32.mrf.mxu0
  %v1070 = vadd.f32 0.0, %v1069
  %1071 = vmatmul.f32.gmra.mxu0 %v528
  %v1072 = vpop.f32.mrf.mxu0
  %v1073 = vadd.f32 0.0, %v1072
  %1074 = vmatmul.f32.gmra.mxu0 %v531
  %v1075 = vpop.f32.mrf.mxu0
  %v1076 = vadd.f32 0.0, %v1075
  %1077 = vmatmul.f32.gmra.mxu0 %v534
  %v1078 = vpop.f32.mrf.mxu0
  %v1079 = vadd.f32 0.0, %v1078
  %1080 = vmatmul.f32.gmra.mxu0 %v537
  %v1081 = vpop.f32.mrf.mxu0
  %v1082 = vadd.f32 0.0, %v1081
  %1083 = vmatmul.f32.gmra.mxu0 %v540
  %v1084 = vpop.f32.mrf.mxu0
  %v1085 = vadd.f32 0.0, %v1084
  %1086 = vmatmul.f32.gmra.mxu0 %v543
  %v1087 = vpop.f32.mrf.mxu0
  %v1088 = vadd.f32 0.0, %v1087
  %1089 = vmatmul.f32.gmra.mxu0 %v546
  %v1090 = vpop.f32.mrf.mxu0
  %v1091 = vadd.f32 0.0, %v1090
  %1092 = vmatmul.f32.gmra.mxu0 %v549
  %v1093 = vpop.f32.mrf.mxu0
  %v1094 = vadd.f32 0.0, %v1093
  %1095 = vmatmul.f32.gmra.mxu0 %v552
  %v1096 = vpop.f32.mrf.mxu0
  %v1097 = vadd.f32 0.0, %v1096
  %1098 = vmatmul.f32.gmra.mxu0 %v555
  %v1099 = vpop.f32.mrf.mxu0
  %v1100 = vadd.f32 0.0, %v1099
  %1101 = vmatmul.f32.gmra.mxu0 %v558
  %v1102 = vpop.f32.mrf.mxu0
  %v1103 = vadd.f32 0.0, %v1102
  %1104 = vmatmul.f32.gmra.mxu0 %v561
  %v1105 = vpop.f32.mrf.mxu0
  %v1106 = vadd.f32 0.0, %v1105
  %1107 = vmatmul.f32.gmra.mxu0 %v564
  %v1108 = vpop.f32.mrf.mxu0
  %v1109 = vadd.f32 0.0, %v1108
  %1110 = vmatmul.f32.gmra.mxu0 %v567
  %v1111 = vpop.f32.mrf.mxu0
  %v1112 = vadd.f32 0.0, %v1111
  %1113 = vmatmul.f32.gmra.mxu0 %v570
  %v1114 = vpop.f32.mrf.mxu0
  %v1115 = vadd.f32 0.0, %v1114
  %1116 = vmatmul.f32.gmra.mxu0 %v573
  %v1117 = vpop.f32.mrf.mxu0
  %v1118 = vadd.f32 0.0, %v1117
  %1119 = vmatmul.f32.gmra.mxu0 %v576
  %v1120 = vpop.f32.mrf.mxu0
  %v1121 = vadd.f32 0.0, %v1120
  %1122 = vmatmul.f32.gmra.mxu0 %v579
  %v1123 = vpop.f32.mrf.mxu0
  %v1124 = vadd.f32 0.0, %v1123
  %1125 = vmatmul.f32.gmra.mxu0 %v582
  %v1126 = vpop.f32.mrf.mxu0
  %v1127 = vadd.f32 0.0, %v1126
  %1128 = vmatmul.f32.gmra.mxu0 %v585
  %v1129 = vpop.f32.mrf.mxu0
  %v1130 = vadd.f32 0.0, %v1129
  %1131 = vmatmul.f32.gmra.mxu0 %v588
  %v1132 = vpop.f32.mrf.mxu0
  %v1133 = vadd.f32 0.0, %v1132
  %1134 = vmatmul.f32.gmra.mxu0 %v591
  %v1135 = vpop.f32.mrf.mxu0
  %v1136 = vadd.f32 0.0, %v1135
  %1137 = vmatmul.f32.gmra.mxu0 %v594
  %v1138 = vpop.f32.mrf.mxu0
  %v1139 = vadd.f32 0.0, %v1138
  %1140 = vmatmul.f32.gmra.mxu0 %v597
  %v1141 = vpop.f32.mrf.mxu0
  %v1142 = vadd.f32 0.0, %v1141
  %1143 = vmatmul.f32.gmra.mxu0 %v600
  %v1144 = vpop.f32.mrf.mxu0
  %v1145 = vadd.f32 0.0, %v1144
  %1146 = vmatmul.f32.gmra.mxu0 %v603
  %v1147 = vpop.f32.mrf.mxu0
  %v1148 = vadd.f32 0.0, %v1147
  %1149 = vmatmul.f32.gmra.mxu0 %v606
  %v1150 = vpop.f32.mrf.mxu0
  %v1151 = vadd.f32 0.0, %v1150
  %1152 = vmatmul.f32.gmra.mxu0 %v609
  %v1153 = vpop.f32.mrf.mxu0
  %v1154 = vadd.f32 0.0, %v1153
  %1155 = vmatmul.f32.gmra.mxu0 %v612
  %v1156 = vpop.f32.mrf.mxu0
  %v1157 = vadd.f32 0.0, %v1156
  %1158 = vmatmul.f32.gmra.mxu0 %v615
  %v1159 = vpop.f32.mrf.mxu0
  %v1160 = vadd.f32 0.0, %v1159
  %1161 = vmatmul.f32.gmra.mxu0 %v618
  %v1162 = vpop.f32.mrf.mxu0
  %v1163 = vadd.f32 0.0, %v1162
  %1164 = vmatmul.f32.gmra.mxu0 %v621
  %v1165 = vpop.f32.mrf.mxu0
  %v1166 = vadd.f32 0.0, %v1165
  %1167 = vmatmul.f32.gmra.mxu0 %v624
  %v1168 = vpop.f32.mrf.mxu0
  %v1169 = vadd.f32 0.0, %v1168
  %1170 = vmatmul.f32.gmra.mxu0 %v627
  %v1171 = vpop.f32.mrf.mxu0
  %v1172 = vadd.f32 0.0, %v1171
  %1173 = vmatmul.f32.gmra.mxu0 %v630
  %v1174 = vpop.f32.mrf.mxu0
  %v1175 = vadd.f32 0.0, %v1174
  %1176 = vmatmul.f32.gmra.mxu0 %v633
  %v1177 = vpop.f32.mrf.mxu0
  %v1178 = vadd.f32 0.0, %v1177
  %1179 = vmatmul.f32.gmra.mxu0 %v636
  %v1180 = vpop.f32.mrf.mxu0
  %v1181 = vadd.f32 0.0, %v1180
  %1182 = vmatmul.f32.gmra.mxu0 %v639
  %v1183 = vpop.f32.mrf.mxu0
  %v1184 = vadd.f32 0.0, %v1183
  %1185 = vmatmul.f32.gmra.mxu0 %v642
  %v1186 = vpop.f32.mrf.mxu0
  %v1187 = vadd.f32 0.0, %v1186
  %1188 = vmatmul.f32.gmra.mxu0 %v645
  %v1189 = vpop.f32.mrf.mxu0
  %v1190 = vadd.f32 0.0, %v1189
  %1191 = vmatmul.f32.gmra.mxu0 %v648
  %v1192 = vpop.f32.mrf.mxu0
  %v1193 = vadd.f32 0.0, %v1192
  %1194 = vmatmul.f32.gmra.mxu0 %v651
  %v1195 = vpop.f32.mrf.mxu0
  %v1196 = vadd.f32 0.0, %v1195
  %1197 = vmatmul.f32.gmra.mxu0 %v654
  %v1198 = vpop.f32.mrf.mxu0
  %v1199 = vadd.f32 0.0, %v1198
  %1200 = vmatmul.f32.gmra.mxu0 %v657
  %v1201 = vpop.f32.mrf.mxu0
  %v1202 = vadd.f32 0.0, %v1201
  %1203 = vmatmul.f32.gmra.mxu0 %v660
  %v1204 = vpop.f32.mrf.mxu0
  %v1205 = vadd.f32 0.0, %v1204
  %1206 = vmatmul.f32.gmra.mxu0 %v663
  %v1207 = vpop.f32.mrf.mxu0
  %v1208 = vadd.f32 0.0, %v1207
  %1209 = vmatmul.f32.gmra.mxu0 %v666
  %v1210 = vpop.f32.mrf.mxu0
  %v1211 = vadd.f32 0.0, %v1210
  %1212 = vmatmul.f32.gmra.mxu0 %v669
  %v1213 = vpop.f32.mrf.mxu0
  %v1214 = vadd.f32 0.0, %v1213
  %1215 = vmatmul.f32.gmra.mxu0 %v672
  %v1216 = vpop.f32.mrf.mxu0
  %v1217 = vadd.f32 0.0, %v1216
  %1218 = vmatmul.f32.gmra.mxu0 %v675
  %v1219 = vpop.f32.mrf.mxu0
  %v1220 = vadd.f32 0.0, %v1219
  %1221 = vmatmul.f32.gmra.mxu0 %v678
  %v1222 = vpop.f32.mrf.mxu0
  %v1223 = vadd.f32 0.0, %v1222
  %1224 = vmatmul.f32.gmra.mxu0 %v681
  %v1225 = vpop.f32.mrf.mxu0
  %v1226 = vadd.f32 0.0, %v1225
  %1227 = vmatmul.f32.gmra.mxu0 %v684
  %v1228 = vpop.f32.mrf.mxu0
  %v1229 = vadd.f32 0.0, %v1228
  %1230 = vmatmul.f32.gmra.mxu0 %v687
  %v1231 = vpop.f32.mrf.mxu0
  %v1232 = vadd.f32 0.0, %v1231
  %1233 = vmatmul.f32.gmra.mxu0 %v690
  %v1234 = vpop.f32.mrf.mxu0
  %v1235 = vadd.f32 0.0, %v1234
  %1236 = vmatmul.f32.gmra.mxu0 %v693
  %v1237 = vpop.f32.mrf.mxu0
  %v1238 = vadd.f32 0.0, %v1237
  %1239 = vmatmul.f32.gmra.mxu0 %v696
  %v1240 = vpop.f32.mrf.mxu0
  %v1241 = vadd.f32 0.0, %v1240
  %1242 = vmatmul.f32.gmra.mxu0 %v699
  %v1243 = vpop.f32.mrf.mxu0
  %v1244 = vadd.f32 0.0, %v1243
  %1245 = vmatmul.f32.gmra.mxu0 %v702
  %v1246 = vpop.f32.mrf.mxu0
  %v1247 = vadd.f32 0.0, %v1246
  %1248 = vmatmul.f32.gmra.mxu0 %v705
  %v1249 = vpop.f32.mrf.mxu0
  %v1250 = vadd.f32 0.0, %v1249
  %1251 = vmatmul.f32.gmra.mxu0 %v708
  %v1252 = vpop.f32.mrf.mxu0
  %v1253 = vadd.f32 0.0, %v1252
  %1254 = vmatmul.f32.gmra.mxu0 %v711
  %v1255 = vpop.f32.mrf.mxu0
  %v1256 = vadd.f32 0.0, %v1255
  %1257 = vmatmul.f32.gmra.mxu0 %v714
  %v1258 = vpop.f32.mrf.mxu0
  %v1259 = vadd.f32 0.0, %v1258
  %1260 = vmatmul.f32.gmra.mxu0 %v717
  %v1261 = vpop.f32.mrf.mxu0
  %v1262 = vadd.f32 0.0, %v1261
  %1263 = vmatmul.f32.gmra.mxu0 %v720
  %v1264 = vpop.f32.mrf.mxu0
  %v1265 = vadd.f32 0.0, %v1264
  %1266 = vmatmul.f32.gmra.mxu0 %v723
  %v1267 = vpop.f32.mrf.mxu0
  %v1268 = vadd.f32 0.0, %v1267
  %1269 = vdwg.mxu0
  %v1270 = vround.ne.pseudo %v743
  %v1271 = vround.ne.pseudo %v746
  %v1272 = vround.ne.pseudo %v749
  %v1273 = vround.ne.pseudo %v752
  %v1274 = vround.ne.pseudo %v755
  %v1275 = vround.ne.pseudo %v758
  %v1276 = vround.ne.pseudo %v761
  %v1277 = vround.ne.pseudo %v764
  %v1278 = vround.ne.pseudo %v767
  %v1279 = vround.ne.pseudo %v770
  %v1280 = vround.ne.pseudo %v773
  %v1281 = vround.ne.pseudo %v776
  %v1282 = vround.ne.pseudo %v779
  %v1283 = vround.ne.pseudo %v782
  %v1284 = vround.ne.pseudo %v785
  %v1285 = vround.ne.pseudo %v788
  %v1286 = vround.ne.pseudo %v791
  %v1287 = vround.ne.pseudo %v794
  %v1288 = vround.ne.pseudo %v797
  %v1289 = vround.ne.pseudo %v800
  %v1290 = vround.ne.pseudo %v803
  %v1291 = vround.ne.pseudo %v806
  %v1292 = vround.ne.pseudo %v809
  %v1293 = vround.ne.pseudo %v812
  %v1294 = vround.ne.pseudo %v815
  %v1295 = vround.ne.pseudo %v818
  %v1296 = vround.ne.pseudo %v821
  %v1297 = vround.ne.pseudo %v824
  %v1298 = vround.ne.pseudo %v827
  %v1299 = vround.ne.pseudo %v830
  %v1300 = vround.ne.pseudo %v833
  %v1301 = vround.ne.pseudo %v836
  %v1302 = vround.ne.pseudo %v839
  %v1303 = vround.ne.pseudo %v842
  %v1304 = vround.ne.pseudo %v845
  %v1305 = vround.ne.pseudo %v848
  %v1306 = vround.ne.pseudo %v851
  %v1307 = vround.ne.pseudo %v854
  %v1308 = vround.ne.pseudo %v857
  %v1309 = vround.ne.pseudo %v860
  %v1310 = vround.ne.pseudo %v863
  %v1311 = vround.ne.pseudo %v866
  %v1312 = vround.ne.pseudo %v869
  %v1313 = vround.ne.pseudo %v872
  %v1314 = vround.ne.pseudo %v875
  %v1315 = vround.ne.pseudo %v878
  %v1316 = vround.ne.pseudo %v881
  %v1317 = vround.ne.pseudo %v884
  %v1318 = vround.ne.pseudo %v887
  %v1319 = vround.ne.pseudo %v890
  %v1320 = vround.ne.pseudo %v893
  %v1321 = vround.ne.pseudo %v896
  %v1322 = vround.ne.pseudo %v899
  %v1323 = vround.ne.pseudo %v902
  %v1324 = vround.ne.pseudo %v905
  %v1325 = vround.ne.pseudo %v908
  %v1326 = vround.ne.pseudo %v911
  %v1327 = vround.ne.pseudo %v914
  %v1328 = vround.ne.pseudo %v917
  %v1329 = vround.ne.pseudo %v920
  %v1330 = vround.ne.pseudo %v923
  %v1331 = vround.ne.pseudo %v926
  %v1332 = vround.ne.pseudo %v929
  %v1333 = vround.ne.pseudo %v932
  %v1334 = vround.ne.pseudo %v935
  %v1335 = vround.ne.pseudo %v938
  %v1336 = vround.ne.pseudo %v941
  %v1337 = vround.ne.pseudo %v944
  %v1338 = vround.ne.pseudo %v947
  %v1339 = vround.ne.pseudo %v950
  %v1340 = vround.ne.pseudo %v953
  %v1341 = vround.ne.pseudo %v956
  %v1342 = vround.ne.pseudo %v959
  %v1343 = vround.ne.pseudo %v962
  %v1344 = vround.ne.pseudo %v965
  %v1345 = vround.ne.pseudo %v968
  %v1346 = vround.ne.pseudo %v971
  %v1347 = vround.ne.pseudo %v974
  %v1348 = vround.ne.pseudo %v977
  %v1349 = vround.ne.pseudo %v980
  %v1350 = vround.ne.pseudo %v983
  %v1351 = vround.ne.pseudo %v986
  %v1352 = vround.ne.pseudo %v989
  %v1353 = vround.ne.pseudo %v992
  %v1354 = vround.ne.pseudo %v995
  %v1355 = vround.ne.pseudo %v998
  %v1356 = vround.ne.pseudo %v1001
  %v1357 = vround.ne.pseudo %v1004
  %v1358 = vround.ne.pseudo %v1007
  %v1359 = vround.ne.pseudo %v1010
  %v1360 = vround.ne.pseudo %v1013
  %v1361 = vround.ne.pseudo %v1016
  %v1362 = vround.ne.pseudo %v1019
  %v1363 = vround.ne.pseudo %v1022
  %v1364 = vround.ne.pseudo %v1025
  %v1365 = vround.ne.pseudo %v1028
  %v1366 = vround.ne.pseudo %v1031
  %v1367 = vround.ne.pseudo %v1034
  %v1368 = vround.ne.pseudo %v1037
  %v1369 = vround.ne.pseudo %v1040
  %v1370 = vround.ne.pseudo %v1043
  %v1371 = vround.ne.pseudo %v1046
  %v1372 = vround.ne.pseudo %v1049
  %v1373 = vround.ne.pseudo %v1052
  %v1374 = vround.ne.pseudo %v1055
  %v1375 = vround.ne.pseudo %v1058
  %v1376 = vround.ne.pseudo %v1061
  %v1377 = vround.ne.pseudo %v1064
  %v1378 = vround.ne.pseudo %v1067
  %v1379 = vround.ne.pseudo %v1070
  %v1380 = vround.ne.pseudo %v1073
  %v1381 = vround.ne.pseudo %v1076
  %v1382 = vround.ne.pseudo %v1079
  %v1383 = vround.ne.pseudo %v1082
  %v1384 = vround.ne.pseudo %v1085
  %v1385 = vround.ne.pseudo %v1088
  %v1386 = vround.ne.pseudo %v1091
  %v1387 = vround.ne.pseudo %v1094
  %v1388 = vround.ne.pseudo %v1097
  %v1389 = vround.ne.pseudo %v1100
  %v1390 = vround.ne.pseudo %v1103
  %v1391 = vround.ne.pseudo %v1106
  %v1392 = vround.ne.pseudo %v1109
  %v1393 = vround.ne.pseudo %v1112
  %v1394 = vround.ne.pseudo %v1115
  %v1395 = vround.ne.pseudo %v1118
  %v1396 = vround.ne.pseudo %v1121
  %v1397 = vround.ne.pseudo %v1124
  %v1398 = vround.ne.pseudo %v1127
  %v1399 = vround.ne.pseudo %v1130
  %v1400 = vround.ne.pseudo %v1133
  %v1401 = vround.ne.pseudo %v1136
  %v1402 = vround.ne.pseudo %v1139
  %v1403 = vround.ne.pseudo %v1142
  %v1404 = vround.ne.pseudo %v1145
  %v1405 = vround.ne.pseudo %v1148
  %v1406 = vround.ne.pseudo %v1151
  %v1407 = vround.ne.pseudo %v1154
  %v1408 = vround.ne.pseudo %v1157
  %v1409 = vround.ne.pseudo %v1160
  %v1410 = vround.ne.pseudo %v1163
  %v1411 = vround.ne.pseudo %v1166
  %v1412 = vround.ne.pseudo %v1169
  %v1413 = vround.ne.pseudo %v1172
  %v1414 = vround.ne.pseudo %v1175
  %v1415 = vround.ne.pseudo %v1178
  %v1416 = vround.ne.pseudo %v1181
  %v1417 = vround.ne.pseudo %v1184
  %v1418 = vround.ne.pseudo %v1187
  %v1419 = vround.ne.pseudo %v1190
  %v1420 = vround.ne.pseudo %v1193
  %v1421 = vround.ne.pseudo %v1196
  %v1422 = vround.ne.pseudo %v1199
  %v1423 = vround.ne.pseudo %v1202
  %v1424 = vround.ne.pseudo %v1205
  %v1425 = vround.ne.pseudo %v1208
  %v1426 = vround.ne.pseudo %v1211
  %v1427 = vround.ne.pseudo %v1214
  %v1428 = vround.ne.pseudo %v1217
  %v1429 = vround.ne.pseudo %v1220
  %v1430 = vround.ne.pseudo %v1223
  %v1431 = vround.ne.pseudo %v1226
  %v1432 = vround.ne.pseudo %v1229
  %v1433 = vround.ne.pseudo %v1232
  %v1434 = vround.ne.pseudo %v1235
  %v1435 = vround.ne.pseudo %v1238
  %v1436 = vround.ne.pseudo %v1241
  %v1437 = vround.ne.pseudo %v1244
  %v1438 = vround.ne.pseudo %v1247
  %v1439 = vround.ne.pseudo %v1250
  %v1440 = vround.ne.pseudo %v1253
  %v1441 = vround.ne.pseudo %v1256
  %v1442 = vround.ne.pseudo %v1259
  %v1443 = vround.ne.pseudo %v1262
  %v1444 = vround.ne.pseudo %v1265
  %v1445 = vround.ne.pseudo %v1268
  %v1446 = vld [vmem:[%s2] sm:$0x1]
  %v1447 = vadd.f32 %v1270, 0.0
  %v1448 = vadd.f32 %v1271, 0.0
  %v1449 = vadd.f32 %v1272, 0.0
  %v1450 = vadd.f32 %v1273, 0.0
  %v1451 = vadd.f32 %v1274, 0.0
  %v1452 = vadd.f32 %v1275, 0.0
  %v1453 = vadd.f32 %v1276, 0.0
  %v1454 = vadd.f32 %v1277, 0.0
  %v1455 = vadd.f32 %v1278, 0.0
  %v1456 = vadd.f32 %v1279, 0.0
  %v1457 = vadd.f32 %v1280, 0.0
  %v1458 = vadd.f32 %v1281, 0.0
  %v1459 = vadd.f32 %v1282, 0.0
  %v1460 = vadd.f32 %v1283, 0.0
  %v1461 = vadd.f32 %v1284, 0.0
  %v1462 = vadd.f32 %v1285, 0.0
  %v1463 = vadd.f32 %v1286, 0.0
  %v1464 = vadd.f32 %v1287, 0.0
  %v1465 = vadd.f32 %v1288, 0.0
  %v1466 = vadd.f32 %v1289, 0.0
  %v1467 = vadd.f32 %v1290, 0.0
  %v1468 = vadd.f32 %v1291, 0.0
  %v1469 = vadd.f32 %v1292, 0.0
  %v1470 = vadd.f32 %v1293, 0.0
  %v1471 = vadd.f32 %v1294, 0.0
  %v1472 = vadd.f32 %v1295, 0.0
  %v1473 = vadd.f32 %v1296, 0.0
  %v1474 = vadd.f32 %v1297, 0.0
  %v1475 = vadd.f32 %v1298, 0.0
  %v1476 = vadd.f32 %v1299, 0.0
  %v1477 = vadd.f32 %v1300, 0.0
  %v1478 = vadd.f32 %v1301, 0.0
  %v1479 = vadd.f32 %v1302, 0.0
  %v1480 = vadd.f32 %v1303, 0.0
  %v1481 = vadd.f32 %v1304, 0.0
  %v1482 = vadd.f32 %v1305, 0.0
  %v1483 = vadd.f32 %v1306, 0.0
  %v1484 = vadd.f32 %v1307, 0.0
  %v1485 = vadd.f32 %v1308, 0.0
  %v1486 = vadd.f32 %v1309, 0.0
  %v1487 = vadd.f32 %v1310, 0.0
  %v1488 = vadd.f32 %v1311, 0.0
  %v1489 = vadd.f32 %v1312, 0.0
  %v1490 = vadd.f32 %v1313, 0.0
  %v1491 = vmax.f32 %v1447, -32.0
  %v1492 = vmax.f32 %v1448, -32.0
  %v1493 = vmax.f32 %v1449, -32.0
  %v1494 = vmax.f32 %v1450, -32.0
  %v1495 = vmax.f32 %v1451, -32.0
  %v1496 = vmax.f32 %v1452, -32.0
  %v1497 = vmax.f32 %v1453, -32.0
  %v1498 = vmax.f32 %v1454, -32.0
  %v1499 = vmax.f32 %v1455, -32.0
  %v1500 = vmax.f32 %v1456, -32.0
  %v1501 = vmax.f32 %v1457, -32.0
  %v1502 = vmax.f32 %v1458, -32.0
  %v1503 = vmax.f32 %v1459, -32.0
  %v1504 = vmax.f32 %v1460, -32.0
  %v1505 = vmax.f32 %v1461, -32.0
  %v1506 = vmax.f32 %v1462, -32.0
  %v1507 = vmax.f32 %v1463, -32.0
  %v1508 = vmax.f32 %v1464, -32.0
  %v1509 = vmax.f32 %v1465, -32.0
  %v1510 = vmax.f32 %v1466, -32.0
  %v1511 = vmax.f32 %v1467, -32.0
  %v1512 = vmax.f32 %v1468, -32.0
  %v1513 = vmax.f32 %v1469, -32.0
  %v1514 = vmax.f32 %v1470, -32.0
  %v1515 = vmax.f32 %v1471, -32.0
  %v1516 = vmax.f32 %v1472, -32.0
  %v1517 = vmax.f32 %v1473, -32.0
  %v1518 = vmax.f32 %v1474, -32.0
  %v1519 = vmax.f32 %v1475, -32.0
  %v1520 = vmax.f32 %v1476, -32.0
  %v1521 = vmax.f32 %v1477, -32.0
  %v1522 = vmax.f32 %v1478, -32.0
  %v1523 = vmax.f32 %v1479, -32.0
  %v1524 = vmax.f32 %v1480, -32.0
  %v1525 = vmax.f32 %v1481, -32.0
  %v1526 = vmax.f32 %v1482, -32.0
  %v1527 = vmax.f32 %v1483, -32.0
  %v1528 = vmax.f32 %v1484, -32.0
  %v1529 = vmax.f32 %v1485, -32.0
  %v1530 = vmax.f32 %v1486, -32.0
  %v1531 = vmax.f32 %v1487, -32.0
  %v1532 = vmax.f32 %v1488, -32.0
  %v1533 = vmax.f32 %v1489, -32.0
  %v1534 = vmax.f32 %v1490, -32.0
  %v1535 = vmin.f32 %v1491, 32.0
  %v1536 = vmin.f32 %v1492, 32.0
  %v1537 = vmin.f32 %v1493, 32.0
  %v1538 = vmin.f32 %v1494, 32.0
  %v1539 = vmin.f32 %v1495, 32.0
  %v1540 = vmin.f32 %v1496, 32.0
  %v1541 = vmin.f32 %v1497, 32.0
  %v1542 = vmin.f32 %v1498, 32.0
  %v1543 = vmin.f32 %v1499, 32.0
  %v1544 = vmin.f32 %v1500, 32.0
  %v1545 = vmin.f32 %v1501, 32.0
  %v1546 = vmin.f32 %v1502, 32.0
  %v1547 = vmin.f32 %v1503, 32.0
  %v1548 = vmin.f32 %v1504, 32.0
  %v1549 = vmin.f32 %v1505, 32.0
  %v1550 = vmin.f32 %v1506, 32.0
  %v1551 = vmin.f32 %v1507, 32.0
  %v1552 = vmin.f32 %v1508, 32.0
  %v1553 = vmin.f32 %v1509, 32.0
  %v1554 = vmin.f32 %v1510, 32.0
  %v1555 = vmin.f32 %v1511, 32.0
  %v1556 = vmin.f32 %v1512, 32.0
  %v1557 = vmin.f32 %v1513, 32.0
  %v1558 = vmin.f32 %v1514, 32.0
  %v1559 = vmin.f32 %v1515, 32.0
  %v1560 = vmin.f32 %v1516, 32.0
  %v1561 = vmin.f32 %v1517, 32.0
  %v1562 = vmin.f32 %v1518, 32.0
  %v1563 = vmin.f32 %v1519, 32.0
  %v1564 = vmin.f32 %v1520, 32.0
  %v1565 = vmin.f32 %v1521, 32.0
  %v1566 = vmin.f32 %v1522, 32.0
  %v1567 = vmin.f32 %v1523, 32.0
  %v1568 = vmin.f32 %v1524, 32.0
  %v1569 = vmin.f32 %v1525, 32.0
  %v1570 = vmin.f32 %v1526, 32.0
  %v1571 = vmin.f32 %v1527, 32.0
  %v1572 = vmin.f32 %v1528, 32.0
  %v1573 = vmin.f32 %v1529, 32.0
  %v1574 = vmin.f32 %v1530, 32.0
  %v1575 = vmin.f32 %v1531, 32.0
  %v1576 = vmin.f32 %v1532, 32.0
  %v1577 = vmin.f32 %v1533, 32.0
  %v1578 = vmin.f32 %v1534, 32.0
  %v1580 = vperm.slane %v1446, 0
  %vm1582 = vcmp.ge.f32.partialorder %v1535, %v1580
  %vm1583 = vcmp.ge.f32.partialorder %v1536, %v1580
  %vm1584 = vcmp.ge.f32.partialorder %v1537, %v1580
  %vm1585 = vcmp.ge.f32.partialorder %v1538, %v1580
  %vm1586 = vcmp.ge.f32.partialorder %v1539, %v1580
  %vm1587 = vcmp.ge.f32.partialorder %v1540, %v1580
  %vm1588 = vcmp.ge.f32.partialorder %v1541, %v1580
  %vm1589 = vcmp.ge.f32.partialorder %v1542, %v1580
  %vm1590 = vcmp.ge.f32.partialorder %v1543, %v1580
  %vm1591 = vcmp.ge.f32.partialorder %v1544, %v1580
  %vm1592 = vcmp.ge.f32.partialorder %v1545, %v1580
  %vm1593 = vcmp.ge.f32.partialorder %v1546, %v1580
  %vm1594 = vcmp.ge.f32.partialorder %v1547, %v1580
  %vm1595 = vcmp.ge.f32.partialorder %v1548, %v1580
  %vm1596 = vcmp.ge.f32.partialorder %v1549, %v1580
  %vm1597 = vcmp.ge.f32.partialorder %v1550, %v1580
  %vm1598 = vcmp.ge.f32.partialorder %v1551, %v1580
  %vm1599 = vcmp.ge.f32.partialorder %v1552, %v1580
  %vm1600 = vcmp.ge.f32.partialorder %v1553, %v1580
  %vm1601 = vcmp.ge.f32.partialorder %v1554, %v1580
  %vm1602 = vcmp.ge.f32.partialorder %v1555, %v1580
  %vm1603 = vcmp.ge.f32.partialorder %v1556, %v1580
  %vm1604 = vcmp.ge.f32.partialorder %v1557, %v1580
  %vm1605 = vcmp.ge.f32.partialorder %v1558, %v1580
  %vm1606 = vcmp.ge.f32.partialorder %v1559, %v1580
  %vm1607 = vcmp.ge.f32.partialorder %v1560, %v1580
  %vm1608 = vcmp.ge.f32.partialorder %v1561, %v1580
  %vm1609 = vcmp.ge.f32.partialorder %v1562, %v1580
  %vm1610 = vcmp.ge.f32.partialorder %v1563, %v1580
  %vm1611 = vcmp.ge.f32.partialorder %v1564, %v1580
  %vm1612 = vcmp.ge.f32.partialorder %v1565, %v1580
  %vm1613 = vcmp.ge.f32.partialorder %v1566, %v1580
  %vm1614 = vcmp.ge.f32.partialorder %v1567, %v1580
  %vm1615 = vcmp.ge.f32.partialorder %v1568, %v1580
  %vm1616 = vcmp.ge.f32.partialorder %v1569, %v1580
  %vm1617 = vcmp.ge.f32.partialorder %v1570, %v1580
  %vm1618 = vcmp.ge.f32.partialorder %v1571, %v1580
  %vm1619 = vcmp.ge.f32.partialorder %v1572, %v1580
  %vm1620 = vcmp.ge.f32.partialorder %v1573, %v1580
  %vm1621 = vcmp.ge.f32.partialorder %v1574, %v1580
  %vm1622 = vcmp.ge.f32.partialorder %v1575, %v1580
  %vm1623 = vcmp.ge.f32.partialorder %v1576, %v1580
  %vm1624 = vcmp.ge.f32.partialorder %v1577, %v1580
  %vm1625 = vcmp.ge.f32.partialorder %v1578, %v1580
  %v1626 = vsel %vm1582, 1, 0
  %v1627 = vsel %vm1583, 1, 0
  %v1628 = vsel %vm1584, 1, 0
  %v1629 = vsel %vm1585, 1, 0
  %v1630 = vsel %vm1586, 1, 0
  %v1631 = vsel %vm1587, 1, 0
  %v1632 = vsel %vm1588, 1, 0
  %v1633 = vsel %vm1589, 1, 0
  %v1634 = vsel %vm1590, 1, 0
  %v1635 = vsel %vm1591, 1, 0
  %v1636 = vsel %vm1592, 1, 0
  %v1637 = vsel %vm1593, 1, 0
  %v1638 = vsel %vm1594, 1, 0
  %v1639 = vsel %vm1595, 1, 0
  %v1640 = vsel %vm1596, 1, 0
  %v1641 = vsel %vm1597, 1, 0
  %v1642 = vsel %vm1598, 1, 0
  %v1643 = vsel %vm1599, 1, 0
  %v1644 = vsel %vm1600, 1, 0
  %v1645 = vsel %vm1601, 1, 0
  %v1646 = vsel %vm1602, 1, 0
  %v1647 = vsel %vm1603, 1, 0
  %v1648 = vsel %vm1604, 1, 0
  %v1649 = vsel %vm1605, 1, 0
  %v1650 = vsel %vm1606, 1, 0
  %v1651 = vsel %vm1607, 1, 0
  %v1652 = vsel %vm1608, 1, 0
  %v1653 = vsel %vm1609, 1, 0
  %v1654 = vsel %vm1610, 1, 0
  %v1655 = vsel %vm1611, 1, 0
  %v1656 = vsel %vm1612, 1, 0
  %v1657 = vsel %vm1613, 1, 0
  %v1658 = vsel %vm1614, 1, 0
  %v1659 = vsel %vm1615, 1, 0
  %v1660 = vsel %vm1616, 1, 0
  %v1661 = vsel %vm1617, 1, 0
  %v1662 = vsel %vm1618, 1, 0
  %v1663 = vsel %vm1619, 1, 0
  %v1664 = vsel %vm1620, 1, 0
  %v1665 = vsel %vm1621, 1, 0
  %v1666 = vsel %vm1622, 1, 0
  %v1667 = vsel %vm1623, 1, 0
  %v1668 = vsel %vm1624, 1, 0
  %v1669 = vsel %vm1625, 1, 0
  %v1670 = vcvt.s32.f32 %v1626
  %v1671 = vcvt.s32.f32 %v1627
  %v1672 = vcvt.s32.f32 %v1628
  %v1673 = vcvt.s32.f32 %v1629
  %v1674 = vcvt.s32.f32 %v1630
  %v1675 = vcvt.s32.f32 %v1631
  %v1676 = vcvt.s32.f32 %v1632
  %v1677 = vcvt.s32.f32 %v1633
  %v1678 = vcvt.s32.f32 %v1634
  %v1679 = vcvt.s32.f32 %v1635
  %v1680 = vcvt.s32.f32 %v1636
  %v1681 = vcvt.s32.f32 %v1637
  %v1682 = vcvt.s32.f32 %v1638
  %v1683 = vcvt.s32.f32 %v1639
  %v1684 = vcvt.s32.f32 %v1640
  %v1685 = vcvt.s32.f32 %v1641
  %v1686 = vcvt.s32.f32 %v1642
  %v1687 = vcvt.s32.f32 %v1643
  %v1688 = vcvt.s32.f32 %v1644
  %v1689 = vcvt.s32.f32 %v1645
  %v1690 = vcvt.s32.f32 %v1646
  %v1691 = vcvt.s32.f32 %v1647
  %v1692 = vcvt.s32.f32 %v1648
  %v1693 = vcvt.s32.f32 %v1649
  %v1694 = vcvt.s32.f32 %v1650
  %v1695 = vcvt.s32.f32 %v1651
  %v1696 = vcvt.s32.f32 %v1652
  %v1697 = vcvt.s32.f32 %v1653
  %v1698 = vcvt.s32.f32 %v1654
  %v1699 = vcvt.s32.f32 %v1655
  %v1700 = vcvt.s32.f32 %v1656
  %v1701 = vcvt.s32.f32 %v1657
  %v1702 = vcvt.s32.f32 %v1658
  %v1703 = vcvt.s32.f32 %v1659
  %v1704 = vcvt.s32.f32 %v1660
  %v1705 = vcvt.s32.f32 %v1661
  %v1706 = vcvt.s32.f32 %v1662
  %v1707 = vcvt.s32.f32 %v1663
  %v1708 = vcvt.s32.f32 %v1664
  %v1709 = vcvt.s32.f32 %v1665
  %v1710 = vcvt.s32.f32 %v1666
  %v1711 = vcvt.s32.f32 %v1667
  %v1712 = vcvt.s32.f32 %v1668
  %v1713 = vcvt.s32.f32 %v1669
  %v1714 = vsub.f32 1.0, %v1670
  %v1715 = vsub.f32 1.0, %v1671
  %v1716 = vsub.f32 1.0, %v1672
  %v1717 = vsub.f32 1.0, %v1673
  %v1718 = vsub.f32 1.0, %v1674
  %v1719 = vsub.f32 1.0, %v1675
  %v1720 = vsub.f32 1.0, %v1676
  %v1721 = vsub.f32 1.0, %v1677
  %v1722 = vsub.f32 1.0, %v1678
  %v1723 = vsub.f32 1.0, %v1679
  %v1724 = vsub.f32 1.0, %v1680
  %v1725 = vsub.f32 1.0, %v1681
  %v1726 = vsub.f32 1.0, %v1682
  %v1727 = vsub.f32 1.0, %v1683
  %v1728 = vsub.f32 1.0, %v1684
  %v1729 = vsub.f32 1.0, %v1685
  %v1730 = vsub.f32 1.0, %v1686
  %v1731 = vsub.f32 1.0, %v1687
  %v1732 = vsub.f32 1.0, %v1688
  %v1733 = vsub.f32 1.0, %v1689
  %v1734 = vsub.f32 1.0, %v1690
  %v1735 = vsub.f32 1.0, %v1691
  %v1736 = vsub.f32 1.0, %v1692
  %v1737 = vsub.f32 1.0, %v1693
  %v1738 = vsub.f32 1.0, %v1694
  %v1739 = vsub.f32 1.0, %v1695
  %v1740 = vsub.f32 1.0, %v1696
  %v1741 = vsub.f32 1.0, %v1697
  %v1742 = vsub.f32 1.0, %v1698
  %v1743 = vsub.f32 1.0, %v1699
  %v1744 = vsub.f32 1.0, %v1700
  %v1745 = vsub.f32 1.0, %v1701
  %v1746 = vsub.f32 1.0, %v1702
  %v1747 = vsub.f32 1.0, %v1703
  %v1748 = vsub.f32 1.0, %v1704
  %v1749 = vsub.f32 1.0, %v1705
  %v1750 = vsub.f32 1.0, %v1706
  %v1751 = vsub.f32 1.0, %v1707
  %v1752 = vsub.f32 1.0, %v1708
  %v1753 = vsub.f32 1.0, %v1709
  %v1754 = vsub.f32 1.0, %v1710
  %v1755 = vsub.f32 1.0, %v1711
  %v1756 = vsub.f32 1.0, %v1712
  %v1757 = vsub.f32 1.0, %v1713
  %v1758 = vmul.f32 %v1535, %v1714
  %v1759 = vmul.f32 %v1536, %v1715
  %v1760 = vmul.f32 %v1537, %v1716
  %v1761 = vmul.f32 %v1538, %v1717
  %v1762 = vmul.f32 %v1539, %v1718
  %v1763 = vmul.f32 %v1540, %v1719
  %v1764 = vmul.f32 %v1541, %v1720
  %v1765 = vmul.f32 %v1542, %v1721
  %v1766 = vmul.f32 %v1543, %v1722
  %v1767 = vmul.f32 %v1544, %v1723
  %v1768 = vmul.f32 %v1545, %v1724
  %v1769 = vmul.f32 %v1546, %v1725
  %v1770 = vmul.f32 %v1547, %v1726
  %v1771 = vmul.f32 %v1548, %v1727
  %v1772 = vmul.f32 %v1549, %v1728
  %v1773 = vmul.f32 %v1550, %v1729
  %v1774 = vmul.f32 %v1551, %v1730
  %v1775 = vmul.f32 %v1552, %v1731
  %v1776 = vmul.f32 %v1553, %v1732
  %v1777 = vmul.f32 %v1554, %v1733
  %v1778 = vmul.f32 %v1555, %v1734
  %v1779 = vmul.f32 %v1556, %v1735
  %v1780 = vmul.f32 %v1557, %v1736
  %v1781 = vmul.f32 %v1558, %v1737
  %v1782 = vmul.f32 %v1559, %v1738
  %v1783 = vmul.f32 %v1560, %v1739
  %v1784 = vmul.f32 %v1561, %v1740
  %v1785 = vmul.f32 %v1562, %v1741
  %v1786 = vmul.f32 %v1563, %v1742
  %v1787 = vmul.f32 %v1564, %v1743
  %v1788 = vmul.f32 %v1565, %v1744
  %v1789 = vmul.f32 %v1566, %v1745
  %v1790 = vmul.f32 %v1567, %v1746
  %v1791 = vmul.f32 %v1568, %v1747
  %v1792 = vmul.f32 %v1569, %v1748
  %v1793 = vmul.f32 %v1570, %v1749
  %v1794 = vmul.f32 %v1571, %v1750
  %v1795 = vmul.f32 %v1572, %v1751
  %v1796 = vmul.f32 %v1573, %v1752
  %v1797 = vmul.f32 %v1574, %v1753
  %v1798 = vmul.f32 %v1575, %v1754
  %v1799 = vmul.f32 %v1576, %v1755
  %v1800 = vmul.f32 %v1577, %v1756
  %v1801 = vmul.f32 %v1578, %v1757
  %v1802 = vpack.c.bf16 %v1670, %v1670
  %v1803 = vpack.c.bf16 %v1671, %v1671
  %v1804 = vpack.c.bf16 %v1672, %v1672
  %v1805 = vpack.c.bf16 %v1673, %v1673
  %v1806 = vpack.c.bf16 %v1674, %v1674
  %v1807 = vpack.c.bf16 %v1675, %v1675
  %v1808 = vpack.c.bf16 %v1676, %v1676
  %v1809 = vpack.c.bf16 %v1677, %v1677
  %v1810 = vpack.c.bf16 %v1678, %v1678
  %v1811 = vpack.c.bf16 %v1679, %v1679
  %v1812 = vpack.c.bf16 %v1680, %v1680
  %v1813 = vpack.c.bf16 %v1681, %v1681
  %v1814 = vpack.c.bf16 %v1682, %v1682
  %v1815 = vpack.c.bf16 %v1683, %v1683
  %v1816 = vpack.c.bf16 %v1684, %v1684
  %v1817 = vpack.c.bf16 %v1685, %v1685
  %v1818 = vpack.c.bf16 %v1686, %v1686
  %v1819 = vpack.c.bf16 %v1687, %v1687
  %v1820 = vpack.c.bf16 %v1688, %v1688
  %v1821 = vpack.c.bf16 %v1689, %v1689
  %v1822 = vpack.c.bf16 %v1690, %v1690
  %v1823 = vpack.c.bf16 %v1691, %v1691
  %v1824 = vpack.c.bf16 %v1692, %v1692
  %v1825 = vpack.c.bf16 %v1693, %v1693
  %v1826 = vpack.c.bf16 %v1694, %v1694
  %v1827 = vpack.c.bf16 %v1695, %v1695
  %v1828 = vpack.c.bf16 %v1696, %v1696
  %v1829 = vpack.c.bf16 %v1697, %v1697
  %v1830 = vpack.c.bf16 %v1698, %v1698
  %v1831 = vpack.c.bf16 %v1699, %v1699
  %v1832 = vpack.c.bf16 %v1700, %v1700
  %v1833 = vpack.c.bf16 %v1701, %v1701
  %v1834 = vpack.c.bf16 %v1702, %v1702
  %v1835 = vpack.c.bf16 %v1703, %v1703
  %v1836 = vpack.c.bf16 %v1704, %v1704
  %v1837 = vpack.c.bf16 %v1705, %v1705
  %v1838 = vpack.c.bf16 %v1706, %v1706
  %v1839 = vpack.c.bf16 %v1707, %v1707
  %v1840 = vpack.c.bf16 %v1708, %v1708
  %v1841 = vpack.c.bf16 %v1709, %v1709
  %v1842 = vpack.c.bf16 %v1710, %v1710
  %v1843 = vpack.c.bf16 %v1711, %v1711
  %v1844 = vpack.c.bf16 %v1712, %v1712
  %v1845 = vpack.c.bf16 %v1713, %v1713
  %1846 = vst [vmem:[%s3] sm:$0xf] %v1802
  %1847 = vst [vmem:[%s3 + $0x4] sm:$0xf] %v1803
  %1848 = vst [vmem:[%s3 + $0x8] sm:$0xf] %v1804
  %1849 = vst [vmem:[%s3 + $0xc] sm:$0xf] %v1805
  %1850 = vst [vmem:[%s3 + $0x10] sm:$0xf] %v1806
  %1851 = vst [vmem:[%s3 + $0x14] sm:$0xf] %v1807
  %1852 = vst [vmem:[%s3 + $0x18] sm:$0xf] %v1808
  %1853 = vst [vmem:[%s3 + $0x1c] sm:$0xf] %v1809
  %1854 = vst [vmem:[%s3 + $0x20] sm:$0xf] %v1810
  %1855 = vst [vmem:[%s3 + $0x24] sm:$0xf] %v1811
  %1856 = vst [vmem:[%s3 + $0x28] sm:$0xf] %v1812
  %1857 = vst [vmem:[%s3 + $0x2c] sm:$0xf] %v1813
  %1858 = vst [vmem:[%s3 + $0x30] sm:$0xf] %v1814
  %1859 = vst [vmem:[%s3 + $0x34] sm:$0xf] %v1815
  %1860 = vst [vmem:[%s3 + $0x38] sm:$0xf] %v1816
  %1861 = vst [vmem:[%s3 + $0x3c] sm:$0xf] %v1817
  %1862 = vst [vmem:[%s3 + $0x40] sm:$0xf] %v1818
  %1863 = vst [vmem:[%s3 + $0x44] sm:$0xf] %v1819
  %1864 = vst [vmem:[%s3 + $0x48] sm:$0xf] %v1820
  %1865 = vst [vmem:[%s3 + $0x4c] sm:$0xf] %v1821
  %1866 = vst [vmem:[%s3 + $0x50] sm:$0xf] %v1822
  %1867 = vst [vmem:[%s3 + $0x54] sm:$0xf] %v1823
  %1868 = vst [vmem:[%s3 + $0x58] sm:$0xf] %v1824
  %1869 = vst [vmem:[%s3 + $0x5c] sm:$0xf] %v1825
  %1870 = vst [vmem:[%s3 + $0x60] sm:$0xf] %v1826
  %1871 = vst [vmem:[%s3 + $0x64] sm:$0xf] %v1827
  %1872 = vst [vmem:[%s3 + $0x68] sm:$0xf] %v1828
  %1873 = vst [vmem:[%s3 + $0x6c] sm:$0xf] %v1829
  %1874 = vst [vmem:[%s3 + $0x70] sm:$0xf] %v1830
  %1875 = vst [vmem:[%s3 + $0x74] sm:$0xf] %v1831
  %1876 = vst [vmem:[%s3 + $0x78] sm:$0xf] %v1832
  %1877 = vst [vmem:[%s3 + $0x7c] sm:$0xf] %v1833
  %1878 = vst [vmem:[%s3 + $0x80] sm:$0xf] %v1834
  %1879 = vst [vmem:[%s3 + $0x84] sm:$0xf] %v1835
  %1880 = vst [vmem:[%s3 + $0x88] sm:$0xf] %v1836
  %1881 = vst [vmem:[%s3 + $0x8c] sm:$0xf] %v1837
  %1882 = vst [vmem:[%s3 + $0x90] sm:$0xf] %v1838
  %1883 = vst [vmem:[%s3 + $0x94] sm:$0xf] %v1839
  %1884 = vst [vmem:[%s3 + $0x98] sm:$0xf] %v1840
  %1885 = vst [vmem:[%s3 + $0x9c] sm:$0xf] %v1841
  %1886 = vst [vmem:[%s3 + $0xa0] sm:$0xf] %v1842
  %1887 = vst [vmem:[%s3 + $0xa4] sm:$0xf] %v1843
  %1888 = vst [vmem:[%s3 + $0xa8] sm:$0xf] %v1844
  %1889 = vst [vmem:[%s3 + $0xac] sm:$0xf] %v1845
  %v1890 = vadd.f32 %v1758, %v1314
  %v1891 = vadd.f32 %v1759, %v1315
  %v1892 = vadd.f32 %v1760, %v1316
  %v1893 = vadd.f32 %v1761, %v1317
  %v1894 = vadd.f32 %v1762, %v1318
  %v1895 = vadd.f32 %v1763, %v1319
  %v1896 = vadd.f32 %v1764, %v1320
  %v1897 = vadd.f32 %v1765, %v1321
  %v1898 = vadd.f32 %v1766, %v1322
  %v1899 = vadd.f32 %v1767, %v1323
  %v1900 = vadd.f32 %v1768, %v1324
  %v1901 = vadd.f32 %v1769, %v1325
  %v1902 = vadd.f32 %v1770, %v1326
  %v1903 = vadd.f32 %v1771, %v1327
  %v1904 = vadd.f32 %v1772, %v1328
  %v1905 = vadd.f32 %v1773, %v1329
  %v1906 = vadd.f32 %v1774, %v1330
  %v1907 = vadd.f32 %v1775, %v1331
  %v1908 = vadd.f32 %v1776, %v1332
  %v1909 = vadd.f32 %v1777, %v1333
  %v1910 = vadd.f32 %v1778, %v1334
  %v1911 = vadd.f32 %v1779, %v1335
  %v1912 = vadd.f32 %v1780, %v1336
  %v1913 = vadd.f32 %v1781, %v1337
  %v1914 = vadd.f32 %v1782, %v1338
  %v1915 = vadd.f32 %v1783, %v1339
  %v1916 = vadd.f32 %v1784, %v1340
  %v1917 = vadd.f32 %v1785, %v1341
  %v1918 = vadd.f32 %v1786, %v1342
  %v1919 = vadd.f32 %v1787, %v1343
  %v1920 = vadd.f32 %v1788, %v1344
  %v1921 = vadd.f32 %v1789, %v1345
  %v1922 = vadd.f32 %v1790, %v1346
  %v1923 = vadd.f32 %v1791, %v1347
  %v1924 = vadd.f32 %v1792, %v1348
  %v1925 = vadd.f32 %v1793, %v1349
  %v1926 = vadd.f32 %v1794, %v1350
  %v1927 = vadd.f32 %v1795, %v1351
  %v1928 = vadd.f32 %v1796, %v1352
  %v1929 = vadd.f32 %v1797, %v1353
  %v1930 = vadd.f32 %v1798, %v1354
  %v1931 = vadd.f32 %v1799, %v1355
  %v1932 = vadd.f32 %v1800, %v1356
  %v1933 = vadd.f32 %v1801, %v1357
  %v1934 = vmax.f32 %v1890, -32.0
  %v1935 = vmax.f32 %v1891, -32.0
  %v1936 = vmax.f32 %v1892, -32.0
  %v1937 = vmax.f32 %v1893, -32.0
  %v1938 = vmax.f32 %v1894, -32.0
  %v1939 = vmax.f32 %v1895, -32.0
  %v1940 = vmax.f32 %v1896, -32.0
  %v1941 = vmax.f32 %v1897, -32.0
  %v1942 = vmax.f32 %v1898, -32.0
  %v1943 = vmax.f32 %v1899, -32.0
  %v1944 = vmax.f32 %v1900, -32.0
  %v1945 = vmax.f32 %v1901, -32.0
  %v1946 = vmax.f32 %v1902, -32.0
  %v1947 = vmax.f32 %v1903, -32.0
  %v1948 = vmax.f32 %v1904, -32.0
  %v1949 = vmax.f32 %v1905, -32.0
  %v1950 = vmax.f32 %v1906, -32.0
  %v1951 = vmax.f32 %v1907, -32.0
  %v1952 = vmax.f32 %v1908, -32.0
  %v1953 = vmax.f32 %v1909, -32.0
  %v1954 = vmax.f32 %v1910, -32.0
  %v1955 = vmax.f32 %v1911, -32.0
  %v1956 = vmax.f32 %v1912, -32.0
  %v1957 = vmax.f32 %v1913, -32.0
  %v1958 = vmax.f32 %v1914, -32.0
  %v1959 = vmax.f32 %v1915, -32.0
  %v1960 = vmax.f32 %v1916, -32.0
  %v1961 = vmax.f32 %v1917, -32.0
  %v1962 = vmax.f32 %v1918, -32.0
  %v1963 = vmax.f32 %v1919, -32.0
  %v1964 = vmax.f32 %v1920, -32.0
  %v1965 = vmax.f32 %v1921, -32.0
  %v1966 = vmax.f32 %v1922, -32.0
  %v1967 = vmax.f32 %v1923, -32.0
  %v1968 = vmax.f32 %v1924, -32.0
  %v1969 = vmax.f32 %v1925, -32.0
  %v1970 = vmax.f32 %v1926, -32.0
  %v1971 = vmax.f32 %v1927, -32.0
  %v1972 = vmax.f32 %v1928, -32.0
  %v1973 = vmax.f32 %v1929, -32.0
  %v1974 = vmax.f32 %v1930, -32.0
  %v1975 = vmax.f32 %v1931, -32.0
  %v1976 = vmax.f32 %v1932, -32.0
  %v1977 = vmax.f32 %v1933, -32.0
  %v1978 = vmin.f32 %v1934, 32.0
  %v1979 = vmin.f32 %v1935, 32.0
  %v1980 = vmin.f32 %v1936, 32.0
  %v1981 = vmin.f32 %v1937, 32.0
  %v1982 = vmin.f32 %v1938, 32.0
  %v1983 = vmin.f32 %v1939, 32.0
  %v1984 = vmin.f32 %v1940, 32.0
  %v1985 = vmin.f32 %v1941, 32.0
  %v1986 = vmin.f32 %v1942, 32.0
  %v1987 = vmin.f32 %v1943, 32.0
  %v1988 = vmin.f32 %v1944, 32.0
  %v1989 = vmin.f32 %v1945, 32.0
  %v1990 = vmin.f32 %v1946, 32.0
  %v1991 = vmin.f32 %v1947, 32.0
  %v1992 = vmin.f32 %v1948, 32.0
  %v1993 = vmin.f32 %v1949, 32.0
  %v1994 = vmin.f32 %v1950, 32.0
  %v1995 = vmin.f32 %v1951, 32.0
  %v1996 = vmin.f32 %v1952, 32.0
  %v1997 = vmin.f32 %v1953, 32.0
  %v1998 = vmin.f32 %v1954, 32.0
  %v1999 = vmin.f32 %v1955, 32.0
  %v2000 = vmin.f32 %v1956, 32.0
  %v2001 = vmin.f32 %v1957, 32.0
  %v2002 = vmin.f32 %v1958, 32.0
  %v2003 = vmin.f32 %v1959, 32.0
  %v2004 = vmin.f32 %v1960, 32.0
  %v2005 = vmin.f32 %v1961, 32.0
  %v2006 = vmin.f32 %v1962, 32.0
  %v2007 = vmin.f32 %v1963, 32.0
  %v2008 = vmin.f32 %v1964, 32.0
  %v2009 = vmin.f32 %v1965, 32.0
  %v2010 = vmin.f32 %v1966, 32.0
  %v2011 = vmin.f32 %v1967, 32.0
  %v2012 = vmin.f32 %v1968, 32.0
  %v2013 = vmin.f32 %v1969, 32.0
  %v2014 = vmin.f32 %v1970, 32.0
  %v2015 = vmin.f32 %v1971, 32.0
  %v2016 = vmin.f32 %v1972, 32.0
  %v2017 = vmin.f32 %v1973, 32.0
  %v2018 = vmin.f32 %v1974, 32.0
  %v2019 = vmin.f32 %v1975, 32.0
  %v2020 = vmin.f32 %v1976, 32.0
  %v2021 = vmin.f32 %v1977, 32.0
  %vm2022 = vcmp.ge.f32.partialorder %v1978, %v1580
  %vm2023 = vcmp.ge.f32.partialorder %v1979, %v1580
  %vm2024 = vcmp.ge.f32.partialorder %v1980, %v1580
  %vm2025 = vcmp.ge.f32.partialorder %v1981, %v1580
  %vm2026 = vcmp.ge.f32.partialorder %v1982, %v1580
  %vm2027 = vcmp.ge.f32.partialorder %v1983, %v1580
  %vm2028 = vcmp.ge.f32.partialorder %v1984, %v1580
  %vm2029 = vcmp.ge.f32.partialorder %v1985, %v1580
  %vm2030 = vcmp.ge.f32.partialorder %v1986, %v1580
  %vm2031 = vcmp.ge.f32.partialorder %v1987, %v1580
  %vm2032 = vcmp.ge.f32.partialorder %v1988, %v1580
  %vm2033 = vcmp.ge.f32.partialorder %v1989, %v1580
  %vm2034 = vcmp.ge.f32.partialorder %v1990, %v1580
  %vm2035 = vcmp.ge.f32.partialorder %v1991, %v1580
  %vm2036 = vcmp.ge.f32.partialorder %v1992, %v1580
  %vm2037 = vcmp.ge.f32.partialorder %v1993, %v1580
  %vm2038 = vcmp.ge.f32.partialorder %v1994, %v1580
  %vm2039 = vcmp.ge.f32.partialorder %v1995, %v1580
  %vm2040 = vcmp.ge.f32.partialorder %v1996, %v1580
  %vm2041 = vcmp.ge.f32.partialorder %v1997, %v1580
  %vm2042 = vcmp.ge.f32.partialorder %v1998, %v1580
  %vm2043 = vcmp.ge.f32.partialorder %v1999, %v1580
  %vm2044 = vcmp.ge.f32.partialorder %v2000, %v1580
  %vm2045 = vcmp.ge.f32.partialorder %v2001, %v1580
  %vm2046 = vcmp.ge.f32.partialorder %v2002, %v1580
  %vm2047 = vcmp.ge.f32.partialorder %v2003, %v1580
  %vm2048 = vcmp.ge.f32.partialorder %v2004, %v1580
  %vm2049 = vcmp.ge.f32.partialorder %v2005, %v1580
  %vm2050 = vcmp.ge.f32.partialorder %v2006, %v1580
  %vm2051 = vcmp.ge.f32.partialorder %v2007, %v1580
  %vm2052 = vcmp.ge.f32.partialorder %v2008, %v1580
  %vm2053 = vcmp.ge.f32.partialorder %v2009, %v1580
  %vm2054 = vcmp.ge.f32.partialorder %v2010, %v1580
  %vm2055 = vcmp.ge.f32.partialorder %v2011, %v1580
  %vm2056 = vcmp.ge.f32.partialorder %v2012, %v1580
  %vm2057 = vcmp.ge.f32.partialorder %v2013, %v1580
  %vm2058 = vcmp.ge.f32.partialorder %v2014, %v1580
  %vm2059 = vcmp.ge.f32.partialorder %v2015, %v1580
  %vm2060 = vcmp.ge.f32.partialorder %v2016, %v1580
  %vm2061 = vcmp.ge.f32.partialorder %v2017, %v1580
  %vm2062 = vcmp.ge.f32.partialorder %v2018, %v1580
  %vm2063 = vcmp.ge.f32.partialorder %v2019, %v1580
  %vm2064 = vcmp.ge.f32.partialorder %v2020, %v1580
  %vm2065 = vcmp.ge.f32.partialorder %v2021, %v1580
  %v2066 = vsel %vm2022, 1, 0
  %v2067 = vsel %vm2023, 1, 0
  %v2068 = vsel %vm2024, 1, 0
  %v2069 = vsel %vm2025, 1, 0
  %v2070 = vsel %vm2026, 1, 0
  %v2071 = vsel %vm2027, 1, 0
  %v2072 = vsel %vm2028, 1, 0
  %v2073 = vsel %vm2029, 1, 0
  %v2074 = vsel %vm2030, 1, 0
  %v2075 = vsel %vm2031, 1, 0
  %v2076 = vsel %vm2032, 1, 0
  %v2077 = vsel %vm2033, 1, 0
  %v2078 = vsel %vm2034, 1, 0
  %v2079 = vsel %vm2035, 1, 0
  %v2080 = vsel %vm2036, 1, 0
  %v2081 = vsel %vm2037, 1, 0
  %v2082 = vsel %vm2038, 1, 0
  %v2083 = vsel %vm2039, 1, 0
  %v2084 = vsel %vm2040, 1, 0
  %v2085 = vsel %vm2041, 1, 0
  %v2086 = vsel %vm2042, 1, 0
  %v2087 = vsel %vm2043, 1, 0
  %v2088 = vsel %vm2044, 1, 0
  %v2089 = vsel %vm2045, 1, 0
  %v2090 = vsel %vm2046, 1, 0
  %v2091 = vsel %vm2047, 1, 0
  %v2092 = vsel %vm2048, 1, 0
  %v2093 = vsel %vm2049, 1, 0
  %v2094 = vsel %vm2050, 1, 0
  %v2095 = vsel %vm2051, 1, 0
  %v2096 = vsel %vm2052, 1, 0
  %v2097 = vsel %vm2053, 1, 0
  %v2098 = vsel %vm2054, 1, 0
  %v2099 = vsel %vm2055, 1, 0
  %v2100 = vsel %vm2056, 1, 0
  %v2101 = vsel %vm2057, 1, 0
  %v2102 = vsel %vm2058, 1, 0
  %v2103 = vsel %vm2059, 1, 0
  %v2104 = vsel %vm2060, 1, 0
  %v2105 = vsel %vm2061, 1, 0
  %v2106 = vsel %vm2062, 1, 0
  %v2107 = vsel %vm2063, 1, 0
  %v2108 = vsel %vm2064, 1, 0
  %v2109 = vsel %vm2065, 1, 0
  %v2110 = vcvt.s32.f32 %v2066
  %v2111 = vcvt.s32.f32 %v2067
  %v2112 = vcvt.s32.f32 %v2068
  %v2113 = vcvt.s32.f32 %v2069
  %v2114 = vcvt.s32.f32 %v2070
  %v2115 = vcvt.s32.f32 %v2071
  %v2116 = vcvt.s32.f32 %v2072
  %v2117 = vcvt.s32.f32 %v2073
  %v2118 = vcvt.s32.f32 %v2074
  %v2119 = vcvt.s32.f32 %v2075
  %v2120 = vcvt.s32.f32 %v2076
  %v2121 = vcvt.s32.f32 %v2077
  %v2122 = vcvt.s32.f32 %v2078
  %v2123 = vcvt.s32.f32 %v2079
  %v2124 = vcvt.s32.f32 %v2080
  %v2125 = vcvt.s32.f32 %v2081
  %v2126 = vcvt.s32.f32 %v2082
  %v2127 = vcvt.s32.f32 %v2083
  %v2128 = vcvt.s32.f32 %v2084
  %v2129 = vcvt.s32.f32 %v2085
  %v2130 = vcvt.s32.f32 %v2086
  %v2131 = vcvt.s32.f32 %v2087
  %v2132 = vcvt.s32.f32 %v2088
  %v2133 = vcvt.s32.f32 %v2089
  %v2134 = vcvt.s32.f32 %v2090
  %v2135 = vcvt.s32.f32 %v2091
  %v2136 = vcvt.s32.f32 %v2092
  %v2137 = vcvt.s32.f32 %v2093
  %v2138 = vcvt.s32.f32 %v2094
  %v2139 = vcvt.s32.f32 %v2095
  %v2140 = vcvt.s32.f32 %v2096
  %v2141 = vcvt.s32.f32 %v2097
  %v2142 = vcvt.s32.f32 %v2098
  %v2143 = vcvt.s32.f32 %v2099
  %v2144 = vcvt.s32.f32 %v2100
  %v2145 = vcvt.s32.f32 %v2101
  %v2146 = vcvt.s32.f32 %v2102
  %v2147 = vcvt.s32.f32 %v2103
  %v2148 = vcvt.s32.f32 %v2104
  %v2149 = vcvt.s32.f32 %v2105
  %v2150 = vcvt.s32.f32 %v2106
  %v2151 = vcvt.s32.f32 %v2107
  %v2152 = vcvt.s32.f32 %v2108
  %v2153 = vcvt.s32.f32 %v2109
  %v2154 = vsub.f32 1.0, %v2110
  %v2155 = vsub.f32 1.0, %v2111
  %v2156 = vsub.f32 1.0, %v2112
  %v2157 = vsub.f32 1.0, %v2113
  %v2158 = vsub.f32 1.0, %v2114
  %v2159 = vsub.f32 1.0, %v2115
  %v2160 = vsub.f32 1.0, %v2116
  %v2161 = vsub.f32 1.0, %v2117
  %v2162 = vsub.f32 1.0, %v2118
  %v2163 = vsub.f32 1.0, %v2119
  %v2164 = vsub.f32 1.0, %v2120
  %v2165 = vsub.f32 1.0, %v2121
  %v2166 = vsub.f32 1.0, %v2122
  %v2167 = vsub.f32 1.0, %v2123
  %v2168 = vsub.f32 1.0, %v2124
  %v2169 = vsub.f32 1.0, %v2125
  %v2170 = vsub.f32 1.0, %v2126
  %v2171 = vsub.f32 1.0, %v2127
  %v2172 = vsub.f32 1.0, %v2128
  %v2173 = vsub.f32 1.0, %v2129
  %v2174 = vsub.f32 1.0, %v2130
  %v2175 = vsub.f32 1.0, %v2131
  %v2176 = vsub.f32 1.0, %v2132
  %v2177 = vsub.f32 1.0, %v2133
  %v2178 = vsub.f32 1.0, %v2134
  %v2179 = vsub.f32 1.0, %v2135
  %v2180 = vsub.f32 1.0, %v2136
  %v2181 = vsub.f32 1.0, %v2137
  %v2182 = vsub.f32 1.0, %v2138
  %v2183 = vsub.f32 1.0, %v2139
  %v2184 = vsub.f32 1.0, %v2140
  %v2185 = vsub.f32 1.0, %v2141
  %v2186 = vsub.f32 1.0, %v2142
  %v2187 = vsub.f32 1.0, %v2143
  %v2188 = vsub.f32 1.0, %v2144
  %v2189 = vsub.f32 1.0, %v2145
  %v2190 = vsub.f32 1.0, %v2146
  %v2191 = vsub.f32 1.0, %v2147
  %v2192 = vsub.f32 1.0, %v2148
  %v2193 = vsub.f32 1.0, %v2149
  %v2194 = vsub.f32 1.0, %v2150
  %v2195 = vsub.f32 1.0, %v2151
  %v2196 = vsub.f32 1.0, %v2152
  %v2197 = vsub.f32 1.0, %v2153
  %v2198 = vmul.f32 %v1978, %v2154
  %v2199 = vmul.f32 %v1979, %v2155
  %v2200 = vmul.f32 %v1980, %v2156
  %v2201 = vmul.f32 %v1981, %v2157
  %v2202 = vmul.f32 %v1982, %v2158
  %v2203 = vmul.f32 %v1983, %v2159
  %v2204 = vmul.f32 %v1984, %v2160
  %v2205 = vmul.f32 %v1985, %v2161
  %v2206 = vmul.f32 %v1986, %v2162
  %v2207 = vmul.f32 %v1987, %v2163
  %v2208 = vmul.f32 %v1988, %v2164
  %v2209 = vmul.f32 %v1989, %v2165
  %v2210 = vmul.f32 %v1990, %v2166
  %v2211 = vmul.f32 %v1991, %v2167
  %v2212 = vmul.f32 %v1992, %v2168
  %v2213 = vmul.f32 %v1993, %v2169
  %v2214 = vmul.f32 %v1994, %v2170
  %v2215 = vmul.f32 %v1995, %v2171
  %v2216 = vmul.f32 %v1996, %v2172
  %v2217 = vmul.f32 %v1997, %v2173
  %v2218 = vmul.f32 %v1998, %v2174
  %v2219 = vmul.f32 %v1999, %v2175
  %v2220 = vmul.f32 %v2000, %v2176
  %v2221 = vmul.f32 %v2001, %v2177
  %v2222 = vmul.f32 %v2002, %v2178
  %v2223 = vmul.f32 %v2003, %v2179
  %v2224 = vmul.f32 %v2004, %v2180
  %v2225 = vmul.f32 %v2005, %v2181
  %v2226 = vmul.f32 %v2006, %v2182
  %v2227 = vmul.f32 %v2007, %v2183
  %v2228 = vmul.f32 %v2008, %v2184
  %v2229 = vmul.f32 %v2009, %v2185
  %v2230 = vmul.f32 %v2010, %v2186
  %v2231 = vmul.f32 %v2011, %v2187
  %v2232 = vmul.f32 %v2012, %v2188
  %v2233 = vmul.f32 %v2013, %v2189
  %v2234 = vmul.f32 %v2014, %v2190
  %v2235 = vmul.f32 %v2015, %v2191
  %v2236 = vmul.f32 %v2016, %v2192
  %v2237 = vmul.f32 %v2017, %v2193
  %v2238 = vmul.f32 %v2018, %v2194
  %v2239 = vmul.f32 %v2019, %v2195
  %v2240 = vmul.f32 %v2020, %v2196
  %v2241 = vmul.f32 %v2021, %v2197
  %v2242 = vpack.c.bf16 %v2110, %v2110
  %v2243 = vpack.c.bf16 %v2111, %v2111
  %v2244 = vpack.c.bf16 %v2112, %v2112
  %v2245 = vpack.c.bf16 %v2113, %v2113
  %v2246 = vpack.c.bf16 %v2114, %v2114
  %v2247 = vpack.c.bf16 %v2115, %v2115
  %v2248 = vpack.c.bf16 %v2116, %v2116
  %v2249 = vpack.c.bf16 %v2117, %v2117
  %v2250 = vpack.c.bf16 %v2118, %v2118
  %v2251 = vpack.c.bf16 %v2119, %v2119
  %v2252 = vpack.c.bf16 %v2120, %v2120
  %v2253 = vpack.c.bf16 %v2121, %v2121
  %v2254 = vpack.c.bf16 %v2122, %v2122
  %v2255 = vpack.c.bf16 %v2123, %v2123
  %v2256 = vpack.c.bf16 %v2124, %v2124
  %v2257 = vpack.c.bf16 %v2125, %v2125
  %v2258 = vpack.c.bf16 %v2126, %v2126
  %v2259 = vpack.c.bf16 %v2127, %v2127
  %v2260 = vpack.c.bf16 %v2128, %v2128
  %v2261 = vpack.c.bf16 %v2129, %v2129
  %v2262 = vpack.c.bf16 %v2130, %v2130
  %v2263 = vpack.c.bf16 %v2131, %v2131
  %v2264 = vpack.c.bf16 %v2132, %v2132
  %v2265 = vpack.c.bf16 %v2133, %v2133
  %v2266 = vpack.c.bf16 %v2134, %v2134
  %v2267 = vpack.c.bf16 %v2135, %v2135
  %v2268 = vpack.c.bf16 %v2136, %v2136
  %v2269 = vpack.c.bf16 %v2137, %v2137
  %v2270 = vpack.c.bf16 %v2138, %v2138
  %v2271 = vpack.c.bf16 %v2139, %v2139
  %v2272 = vpack.c.bf16 %v2140, %v2140
  %v2273 = vpack.c.bf16 %v2141, %v2141
  %v2274 = vpack.c.bf16 %v2142, %v2142
  %v2275 = vpack.c.bf16 %v2143, %v2143
  %v2276 = vpack.c.bf16 %v2144, %v2144
  %v2277 = vpack.c.bf16 %v2145, %v2145
  %v2278 = vpack.c.bf16 %v2146, %v2146
  %v2279 = vpack.c.bf16 %v2147, %v2147
  %v2280 = vpack.c.bf16 %v2148, %v2148
  %v2281 = vpack.c.bf16 %v2149, %v2149
  %v2282 = vpack.c.bf16 %v2150, %v2150
  %v2283 = vpack.c.bf16 %v2151, %v2151
  %v2284 = vpack.c.bf16 %v2152, %v2152
  %v2285 = vpack.c.bf16 %v2153, %v2153
  %s2286 = scalar_lea.vmem %s3, 176
  %2287 = vst [vmem:[%s2286] sm:$0xf] %v2242
  %2288 = vst [vmem:[%s2286 + $0x4] sm:$0xf] %v2243
  %2289 = vst [vmem:[%s2286 + $0x8] sm:$0xf] %v2244
  %2290 = vst [vmem:[%s2286 + $0xc] sm:$0xf] %v2245
  %2291 = vst [vmem:[%s2286 + $0x10] sm:$0xf] %v2246
  %2292 = vst [vmem:[%s2286 + $0x14] sm:$0xf] %v2247
  %2293 = vst [vmem:[%s2286 + $0x18] sm:$0xf] %v2248
  %2294 = vst [vmem:[%s2286 + $0x1c] sm:$0xf] %v2249
  %2295 = vst [vmem:[%s2286 + $0x20] sm:$0xf] %v2250
  %2296 = vst [vmem:[%s2286 + $0x24] sm:$0xf] %v2251
  %2297 = vst [vmem:[%s2286 + $0x28] sm:$0xf] %v2252
  %2298 = vst [vmem:[%s2286 + $0x2c] sm:$0xf] %v2253
  %2299 = vst [vmem:[%s2286 + $0x30] sm:$0xf] %v2254
  %2300 = vst [vmem:[%s2286 + $0x34] sm:$0xf] %v2255
  %2301 = vst [vmem:[%s2286 + $0x38] sm:$0xf] %v2256
  %2302 = vst [vmem:[%s2286 + $0x3c] sm:$0xf] %v2257
  %2303 = vst [vmem:[%s2286 + $0x40] sm:$0xf] %v2258
  %2304 = vst [vmem:[%s2286 + $0x44] sm:$0xf] %v2259
  %2305 = vst [vmem:[%s2286 + $0x48] sm:$0xf] %v2260
  %2306 = vst [vmem:[%s2286 + $0x4c] sm:$0xf] %v2261
  %2307 = vst [vmem:[%s2286 + $0x50] sm:$0xf] %v2262
  %2308 = vst [vmem:[%s2286 + $0x54] sm:$0xf] %v2263
  %2309 = vst [vmem:[%s2286 + $0x58] sm:$0xf] %v2264
  %2310 = vst [vmem:[%s2286 + $0x5c] sm:$0xf] %v2265
  %2311 = vst [vmem:[%s2286 + $0x60] sm:$0xf] %v2266
  %2312 = vst [vmem:[%s2286 + $0x64] sm:$0xf] %v2267
  %2313 = vst [vmem:[%s2286 + $0x68] sm:$0xf] %v2268
  %2314 = vst [vmem:[%s2286 + $0x6c] sm:$0xf] %v2269
  %2315 = vst [vmem:[%s2286 + $0x70] sm:$0xf] %v2270
  %2316 = vst [vmem:[%s2286 + $0x74] sm:$0xf] %v2271
  %2317 = vst [vmem:[%s2286 + $0x78] sm:$0xf] %v2272
  %2318 = vst [vmem:[%s2286 + $0x7c] sm:$0xf] %v2273
  %2319 = vst [vmem:[%s2286 + $0x80] sm:$0xf] %v2274
  %2320 = vst [vmem:[%s2286 + $0x84] sm:$0xf] %v2275
  %2321 = vst [vmem:[%s2286 + $0x88] sm:$0xf] %v2276
  %2322 = vst [vmem:[%s2286 + $0x8c] sm:$0xf] %v2277
  %2323 = vst [vmem:[%s2286 + $0x90] sm:$0xf] %v2278
  %2324 = vst [vmem:[%s2286 + $0x94] sm:$0xf] %v2279
  %2325 = vst [vmem:[%s2286 + $0x98] sm:$0xf] %v2280
  %2326 = vst [vmem:[%s2286 + $0x9c] sm:$0xf] %v2281
  %2327 = vst [vmem:[%s2286 + $0xa0] sm:$0xf] %v2282
  %2328 = vst [vmem:[%s2286 + $0xa4] sm:$0xf] %v2283
  %2329 = vst [vmem:[%s2286 + $0xa8] sm:$0xf] %v2284
  %2330 = vst [vmem:[%s2286 + $0xac] sm:$0xf] %v2285
  %v2331 = vadd.f32 %v2198, %v1358
  %v2332 = vadd.f32 %v2199, %v1359
  %v2333 = vadd.f32 %v2200, %v1360
  %v2334 = vadd.f32 %v2201, %v1361
  %v2335 = vadd.f32 %v2202, %v1362
  %v2336 = vadd.f32 %v2203, %v1363
  %v2337 = vadd.f32 %v2204, %v1364
  %v2338 = vadd.f32 %v2205, %v1365
  %v2339 = vadd.f32 %v2206, %v1366
  %v2340 = vadd.f32 %v2207, %v1367
  %v2341 = vadd.f32 %v2208, %v1368
  %v2342 = vadd.f32 %v2209, %v1369
  %v2343 = vadd.f32 %v2210, %v1370
  %v2344 = vadd.f32 %v2211, %v1371
  %v2345 = vadd.f32 %v2212, %v1372
  %v2346 = vadd.f32 %v2213, %v1373
  %v2347 = vadd.f32 %v2214, %v1374
  %v2348 = vadd.f32 %v2215, %v1375
  %v2349 = vadd.f32 %v2216, %v1376
  %v2350 = vadd.f32 %v2217, %v1377
  %v2351 = vadd.f32 %v2218, %v1378
  %v2352 = vadd.f32 %v2219, %v1379
  %v2353 = vadd.f32 %v2220, %v1380
  %v2354 = vadd.f32 %v2221, %v1381
  %v2355 = vadd.f32 %v2222, %v1382
  %v2356 = vadd.f32 %v2223, %v1383
  %v2357 = vadd.f32 %v2224, %v1384
  %v2358 = vadd.f32 %v2225, %v1385
  %v2359 = vadd.f32 %v2226, %v1386
  %v2360 = vadd.f32 %v2227, %v1387
  %v2361 = vadd.f32 %v2228, %v1388
  %v2362 = vadd.f32 %v2229, %v1389
  %v2363 = vadd.f32 %v2230, %v1390
  %v2364 = vadd.f32 %v2231, %v1391
  %v2365 = vadd.f32 %v2232, %v1392
  %v2366 = vadd.f32 %v2233, %v1393
  %v2367 = vadd.f32 %v2234, %v1394
  %v2368 = vadd.f32 %v2235, %v1395
  %v2369 = vadd.f32 %v2236, %v1396
  %v2370 = vadd.f32 %v2237, %v1397
  %v2371 = vadd.f32 %v2238, %v1398
  %v2372 = vadd.f32 %v2239, %v1399
  %v2373 = vadd.f32 %v2240, %v1400
  %v2374 = vadd.f32 %v2241, %v1401
  %v2375 = vmax.f32 %v2331, -32.0
  %v2376 = vmax.f32 %v2332, -32.0
  %v2377 = vmax.f32 %v2333, -32.0
  %v2378 = vmax.f32 %v2334, -32.0
  %v2379 = vmax.f32 %v2335, -32.0
  %v2380 = vmax.f32 %v2336, -32.0
  %v2381 = vmax.f32 %v2337, -32.0
  %v2382 = vmax.f32 %v2338, -32.0
  %v2383 = vmax.f32 %v2339, -32.0
  %v2384 = vmax.f32 %v2340, -32.0
  %v2385 = vmax.f32 %v2341, -32.0
  %v2386 = vmax.f32 %v2342, -32.0
  %v2387 = vmax.f32 %v2343, -32.0
  %v2388 = vmax.f32 %v2344, -32.0
  %v2389 = vmax.f32 %v2345, -32.0
  %v2390 = vmax.f32 %v2346, -32.0
  %v2391 = vmax.f32 %v2347, -32.0
  %v2392 = vmax.f32 %v2348, -32.0
  %v2393 = vmax.f32 %v2349, -32.0
  %v2394 = vmax.f32 %v2350, -32.0
  %v2395 = vmax.f32 %v2351, -32.0
  %v2396 = vmax.f32 %v2352, -32.0
  %v2397 = vmax.f32 %v2353, -32.0
  %v2398 = vmax.f32 %v2354, -32.0
  %v2399 = vmax.f32 %v2355, -32.0
  %v2400 = vmax.f32 %v2356, -32.0
  %v2401 = vmax.f32 %v2357, -32.0
  %v2402 = vmax.f32 %v2358, -32.0
  %v2403 = vmax.f32 %v2359, -32.0
  %v2404 = vmax.f32 %v2360, -32.0
  %v2405 = vmax.f32 %v2361, -32.0
  %v2406 = vmax.f32 %v2362, -32.0
  %v2407 = vmax.f32 %v2363, -32.0
  %v2408 = vmax.f32 %v2364, -32.0
  %v2409 = vmax.f32 %v2365, -32.0
  %v2410 = vmax.f32 %v2366, -32.0
  %v2411 = vmax.f32 %v2367, -32.0
  %v2412 = vmax.f32 %v2368, -32.0
  %v2413 = vmax.f32 %v2369, -32.0
  %v2414 = vmax.f32 %v2370, -32.0
  %v2415 = vmax.f32 %v2371, -32.0
  %v2416 = vmax.f32 %v2372, -32.0
  %v2417 = vmax.f32 %v2373, -32.0
  %v2418 = vmax.f32 %v2374, -32.0
  %v2419 = vmin.f32 %v2375, 32.0
  %v2420 = vmin.f32 %v2376, 32.0
  %v2421 = vmin.f32 %v2377, 32.0
  %v2422 = vmin.f32 %v2378, 32.0
  %v2423 = vmin.f32 %v2379, 32.0
  %v2424 = vmin.f32 %v2380, 32.0
  %v2425 = vmin.f32 %v2381, 32.0
  %v2426 = vmin.f32 %v2382, 32.0
  %v2427 = vmin.f32 %v2383, 32.0
  %v2428 = vmin.f32 %v2384, 32.0
  %v2429 = vmin.f32 %v2385, 32.0
  %v2430 = vmin.f32 %v2386, 32.0
  %v2431 = vmin.f32 %v2387, 32.0
  %v2432 = vmin.f32 %v2388, 32.0
  %v2433 = vmin.f32 %v2389, 32.0
  %v2434 = vmin.f32 %v2390, 32.0
  %v2435 = vmin.f32 %v2391, 32.0
  %v2436 = vmin.f32 %v2392, 32.0
  %v2437 = vmin.f32 %v2393, 32.0
  %v2438 = vmin.f32 %v2394, 32.0
  %v2439 = vmin.f32 %v2395, 32.0
  %v2440 = vmin.f32 %v2396, 32.0
  %v2441 = vmin.f32 %v2397, 32.0
  %v2442 = vmin.f32 %v2398, 32.0
  %v2443 = vmin.f32 %v2399, 32.0
  %v2444 = vmin.f32 %v2400, 32.0
  %v2445 = vmin.f32 %v2401, 32.0
  %v2446 = vmin.f32 %v2402, 32.0
  %v2447 = vmin.f32 %v2403, 32.0
  %v2448 = vmin.f32 %v2404, 32.0
  %v2449 = vmin.f32 %v2405, 32.0
  %v2450 = vmin.f32 %v2406, 32.0
  %v2451 = vmin.f32 %v2407, 32.0
  %v2452 = vmin.f32 %v2408, 32.0
  %v2453 = vmin.f32 %v2409, 32.0
  %v2454 = vmin.f32 %v2410, 32.0
  %v2455 = vmin.f32 %v2411, 32.0
  %v2456 = vmin.f32 %v2412, 32.0
  %v2457 = vmin.f32 %v2413, 32.0
  %v2458 = vmin.f32 %v2414, 32.0
  %v2459 = vmin.f32 %v2415, 32.0
  %v2460 = vmin.f32 %v2416, 32.0
  %v2461 = vmin.f32 %v2417, 32.0
  %v2462 = vmin.f32 %v2418, 32.0
  %vm2463 = vcmp.ge.f32.partialorder %v2419, %v1580
  %vm2464 = vcmp.ge.f32.partialorder %v2420, %v1580
  %vm2465 = vcmp.ge.f32.partialorder %v2421, %v1580
  %vm2466 = vcmp.ge.f32.partialorder %v2422, %v1580
  %vm2467 = vcmp.ge.f32.partialorder %v2423, %v1580
  %vm2468 = vcmp.ge.f32.partialorder %v2424, %v1580
  %vm2469 = vcmp.ge.f32.partialorder %v2425, %v1580
  %vm2470 = vcmp.ge.f32.partialorder %v2426, %v1580
  %vm2471 = vcmp.ge.f32.partialorder %v2427, %v1580
  %vm2472 = vcmp.ge.f32.partialorder %v2428, %v1580
  %vm2473 = vcmp.ge.f32.partialorder %v2429, %v1580
  %vm2474 = vcmp.ge.f32.partialorder %v2430, %v1580
  %vm2475 = vcmp.ge.f32.partialorder %v2431, %v1580
  %vm2476 = vcmp.ge.f32.partialorder %v2432, %v1580
  %vm2477 = vcmp.ge.f32.partialorder %v2433, %v1580
  %vm2478 = vcmp.ge.f32.partialorder %v2434, %v1580
  %vm2479 = vcmp.ge.f32.partialorder %v2435, %v1580
  %vm2480 = vcmp.ge.f32.partialorder %v2436, %v1580
  %vm2481 = vcmp.ge.f32.partialorder %v2437, %v1580
  %vm2482 = vcmp.ge.f32.partialorder %v2438, %v1580
  %vm2483 = vcmp.ge.f32.partialorder %v2439, %v1580
  %vm2484 = vcmp.ge.f32.partialorder %v2440, %v1580
  %vm2485 = vcmp.ge.f32.partialorder %v2441, %v1580
  %vm2486 = vcmp.ge.f32.partialorder %v2442, %v1580
  %vm2487 = vcmp.ge.f32.partialorder %v2443, %v1580
  %vm2488 = vcmp.ge.f32.partialorder %v2444, %v1580
  %vm2489 = vcmp.ge.f32.partialorder %v2445, %v1580
  %vm2490 = vcmp.ge.f32.partialorder %v2446, %v1580
  %vm2491 = vcmp.ge.f32.partialorder %v2447, %v1580
  %vm2492 = vcmp.ge.f32.partialorder %v2448, %v1580
  %vm2493 = vcmp.ge.f32.partialorder %v2449, %v1580
  %vm2494 = vcmp.ge.f32.partialorder %v2450, %v1580
  %vm2495 = vcmp.ge.f32.partialorder %v2451, %v1580
  %vm2496 = vcmp.ge.f32.partialorder %v2452, %v1580
  %vm2497 = vcmp.ge.f32.partialorder %v2453, %v1580
  %vm2498 = vcmp.ge.f32.partialorder %v2454, %v1580
  %vm2499 = vcmp.ge.f32.partialorder %v2455, %v1580
  %vm2500 = vcmp.ge.f32.partialorder %v2456, %v1580
  %vm2501 = vcmp.ge.f32.partialorder %v2457, %v1580
  %vm2502 = vcmp.ge.f32.partialorder %v2458, %v1580
  %vm2503 = vcmp.ge.f32.partialorder %v2459, %v1580
  %vm2504 = vcmp.ge.f32.partialorder %v2460, %v1580
  %vm2505 = vcmp.ge.f32.partialorder %v2461, %v1580
  %vm2506 = vcmp.ge.f32.partialorder %v2462, %v1580
  %v2507 = vsel %vm2463, 1, 0
  %v2508 = vsel %vm2464, 1, 0
  %v2509 = vsel %vm2465, 1, 0
  %v2510 = vsel %vm2466, 1, 0
  %v2511 = vsel %vm2467, 1, 0
  %v2512 = vsel %vm2468, 1, 0
  %v2513 = vsel %vm2469, 1, 0
  %v2514 = vsel %vm2470, 1, 0
  %v2515 = vsel %vm2471, 1, 0
  %v2516 = vsel %vm2472, 1, 0
  %v2517 = vsel %vm2473, 1, 0
  %v2518 = vsel %vm2474, 1, 0
  %v2519 = vsel %vm2475, 1, 0
  %v2520 = vsel %vm2476, 1, 0
  %v2521 = vsel %vm2477, 1, 0
  %v2522 = vsel %vm2478, 1, 0
  %v2523 = vsel %vm2479, 1, 0
  %v2524 = vsel %vm2480, 1, 0
  %v2525 = vsel %vm2481, 1, 0
  %v2526 = vsel %vm2482, 1, 0
  %v2527 = vsel %vm2483, 1, 0
  %v2528 = vsel %vm2484, 1, 0
  %v2529 = vsel %vm2485, 1, 0
  %v2530 = vsel %vm2486, 1, 0
  %v2531 = vsel %vm2487, 1, 0
  %v2532 = vsel %vm2488, 1, 0
  %v2533 = vsel %vm2489, 1, 0
  %v2534 = vsel %vm2490, 1, 0
  %v2535 = vsel %vm2491, 1, 0
  %v2536 = vsel %vm2492, 1, 0
  %v2537 = vsel %vm2493, 1, 0
  %v2538 = vsel %vm2494, 1, 0
  %v2539 = vsel %vm2495, 1, 0
  %v2540 = vsel %vm2496, 1, 0
  %v2541 = vsel %vm2497, 1, 0
  %v2542 = vsel %vm2498, 1, 0
  %v2543 = vsel %vm2499, 1, 0
  %v2544 = vsel %vm2500, 1, 0
  %v2545 = vsel %vm2501, 1, 0
  %v2546 = vsel %vm2502, 1, 0
  %v2547 = vsel %vm2503, 1, 0
  %v2548 = vsel %vm2504, 1, 0
  %v2549 = vsel %vm2505, 1, 0
  %v2550 = vsel %vm2506, 1, 0
  %v2551 = vcvt.s32.f32 %v2507
  %v2552 = vcvt.s32.f32 %v2508
  %v2553 = vcvt.s32.f32 %v2509
  %v2554 = vcvt.s32.f32 %v2510
  %v2555 = vcvt.s32.f32 %v2511
  %v2556 = vcvt.s32.f32 %v2512
  %v2557 = vcvt.s32.f32 %v2513
  %v2558 = vcvt.s32.f32 %v2514
  %v2559 = vcvt.s32.f32 %v2515
  %v2560 = vcvt.s32.f32 %v2516
  %v2561 = vcvt.s32.f32 %v2517
  %v2562 = vcvt.s32.f32 %v2518
  %v2563 = vcvt.s32.f32 %v2519
  %v2564 = vcvt.s32.f32 %v2520
  %v2565 = vcvt.s32.f32 %v2521
  %v2566 = vcvt.s32.f32 %v2522
  %v2567 = vcvt.s32.f32 %v2523
  %v2568 = vcvt.s32.f32 %v2524
  %v2569 = vcvt.s32.f32 %v2525
  %v2570 = vcvt.s32.f32 %v2526
  %v2571 = vcvt.s32.f32 %v2527
  %v2572 = vcvt.s32.f32 %v2528
  %v2573 = vcvt.s32.f32 %v2529
  %v2574 = vcvt.s32.f32 %v2530
  %v2575 = vcvt.s32.f32 %v2531
  %v2576 = vcvt.s32.f32 %v2532
  %v2577 = vcvt.s32.f32 %v2533
  %v2578 = vcvt.s32.f32 %v2534
  %v2579 = vcvt.s32.f32 %v2535
  %v2580 = vcvt.s32.f32 %v2536
  %v2581 = vcvt.s32.f32 %v2537
  %v2582 = vcvt.s32.f32 %v2538
  %v2583 = vcvt.s32.f32 %v2539
  %v2584 = vcvt.s32.f32 %v2540
  %v2585 = vcvt.s32.f32 %v2541
  %v2586 = vcvt.s32.f32 %v2542
  %v2587 = vcvt.s32.f32 %v2543
  %v2588 = vcvt.s32.f32 %v2544
  %v2589 = vcvt.s32.f32 %v2545
  %v2590 = vcvt.s32.f32 %v2546
  %v2591 = vcvt.s32.f32 %v2547
  %v2592 = vcvt.s32.f32 %v2548
  %v2593 = vcvt.s32.f32 %v2549
  %v2594 = vcvt.s32.f32 %v2550
  %v2595 = vsub.f32 1.0, %v2551
  %v2596 = vsub.f32 1.0, %v2552
  %v2597 = vsub.f32 1.0, %v2553
  %v2598 = vsub.f32 1.0, %v2554
  %v2599 = vsub.f32 1.0, %v2555
  %v2600 = vsub.f32 1.0, %v2556
  %v2601 = vsub.f32 1.0, %v2557
  %v2602 = vsub.f32 1.0, %v2558
  %v2603 = vsub.f32 1.0, %v2559
  %v2604 = vsub.f32 1.0, %v2560
  %v2605 = vsub.f32 1.0, %v2561
  %v2606 = vsub.f32 1.0, %v2562
  %v2607 = vsub.f32 1.0, %v2563
  %v2608 = vsub.f32 1.0, %v2564
  %v2609 = vsub.f32 1.0, %v2565
  %v2610 = vsub.f32 1.0, %v2566
  %v2611 = vsub.f32 1.0, %v2567
  %v2612 = vsub.f32 1.0, %v2568
  %v2613 = vsub.f32 1.0, %v2569
  %v2614 = vsub.f32 1.0, %v2570
  %v2615 = vsub.f32 1.0, %v2571
  %v2616 = vsub.f32 1.0, %v2572
  %v2617 = vsub.f32 1.0, %v2573
  %v2618 = vsub.f32 1.0, %v2574
  %v2619 = vsub.f32 1.0, %v2575
  %v2620 = vsub.f32 1.0, %v2576
  %v2621 = vsub.f32 1.0, %v2577
  %v2622 = vsub.f32 1.0, %v2578
  %v2623 = vsub.f32 1.0, %v2579
  %v2624 = vsub.f32 1.0, %v2580
  %v2625 = vsub.f32 1.0, %v2581
  %v2626 = vsub.f32 1.0, %v2582
  %v2627 = vsub.f32 1.0, %v2583
  %v2628 = vsub.f32 1.0, %v2584
  %v2629 = vsub.f32 1.0, %v2585
  %v2630 = vsub.f32 1.0, %v2586
  %v2631 = vsub.f32 1.0, %v2587
  %v2632 = vsub.f32 1.0, %v2588
  %v2633 = vsub.f32 1.0, %v2589
  %v2634 = vsub.f32 1.0, %v2590
  %v2635 = vsub.f32 1.0, %v2591
  %v2636 = vsub.f32 1.0, %v2592
  %v2637 = vsub.f32 1.0, %v2593
  %v2638 = vsub.f32 1.0, %v2594
  %v2639 = vmul.f32 %v2419, %v2595
  %v2640 = vmul.f32 %v2420, %v2596
  %v2641 = vmul.f32 %v2421, %v2597
  %v2642 = vmul.f32 %v2422, %v2598
  %v2643 = vmul.f32 %v2423, %v2599
  %v2644 = vmul.f32 %v2424, %v2600
  %v2645 = vmul.f32 %v2425, %v2601
  %v2646 = vmul.f32 %v2426, %v2602
  %v2647 = vmul.f32 %v2427, %v2603
  %v2648 = vmul.f32 %v2428, %v2604
  %v2649 = vmul.f32 %v2429, %v2605
  %v2650 = vmul.f32 %v2430, %v2606
  %v2651 = vmul.f32 %v2431, %v2607
  %v2652 = vmul.f32 %v2432, %v2608
  %v2653 = vmul.f32 %v2433, %v2609
  %v2654 = vmul.f32 %v2434, %v2610
  %v2655 = vmul.f32 %v2435, %v2611
  %v2656 = vmul.f32 %v2436, %v2612
  %v2657 = vmul.f32 %v2437, %v2613
  %v2658 = vmul.f32 %v2438, %v2614
  %v2659 = vmul.f32 %v2439, %v2615
  %v2660 = vmul.f32 %v2440, %v2616
  %v2661 = vmul.f32 %v2441, %v2617
  %v2662 = vmul.f32 %v2442, %v2618
  %v2663 = vmul.f32 %v2443, %v2619
  %v2664 = vmul.f32 %v2444, %v2620
  %v2665 = vmul.f32 %v2445, %v2621
  %v2666 = vmul.f32 %v2446, %v2622
  %v2667 = vmul.f32 %v2447, %v2623
  %v2668 = vmul.f32 %v2448, %v2624
  %v2669 = vmul.f32 %v2449, %v2625
  %v2670 = vmul.f32 %v2450, %v2626
  %v2671 = vmul.f32 %v2451, %v2627
  %v2672 = vmul.f32 %v2452, %v2628
  %v2673 = vmul.f32 %v2453, %v2629
  %v2674 = vmul.f32 %v2454, %v2630
  %v2675 = vmul.f32 %v2455, %v2631
  %v2676 = vmul.f32 %v2456, %v2632
  %v2677 = vmul.f32 %v2457, %v2633
  %v2678 = vmul.f32 %v2458, %v2634
  %v2679 = vmul.f32 %v2459, %v2635
  %v2680 = vmul.f32 %v2460, %v2636
  %v2681 = vmul.f32 %v2461, %v2637
  %v2682 = vmul.f32 %v2462, %v2638
  %v2683 = vpack.c.bf16 %v2551, %v2551
  %v2684 = vpack.c.bf16 %v2552, %v2552
  %v2685 = vpack.c.bf16 %v2553, %v2553
  %v2686 = vpack.c.bf16 %v2554, %v2554
  %v2687 = vpack.c.bf16 %v2555, %v2555
  %v2688 = vpack.c.bf16 %v2556, %v2556
  %v2689 = vpack.c.bf16 %v2557, %v2557
  %v2690 = vpack.c.bf16 %v2558, %v2558
  %v2691 = vpack.c.bf16 %v2559, %v2559
  %v2692 = vpack.c.bf16 %v2560, %v2560
  %v2693 = vpack.c.bf16 %v2561, %v2561
  %v2694 = vpack.c.bf16 %v2562, %v2562
  %v2695 = vpack.c.bf16 %v2563, %v2563
  %v2696 = vpack.c.bf16 %v2564, %v2564
  %v2697 = vpack.c.bf16 %v2565, %v2565
  %v2698 = vpack.c.bf16 %v2566, %v2566
  %v2699 = vpack.c.bf16 %v2567, %v2567
  %v2700 = vpack.c.bf16 %v2568, %v2568
  %v2701 = vpack.c.bf16 %v2569, %v2569
  %v2702 = vpack.c.bf16 %v2570, %v2570
  %v2703 = vpack.c.bf16 %v2571, %v2571
  %v2704 = vpack.c.bf16 %v2572, %v2572
  %v2705 = vpack.c.bf16 %v2573, %v2573
  %v2706 = vpack.c.bf16 %v2574, %v2574
  %v2707 = vpack.c.bf16 %v2575, %v2575
  %v2708 = vpack.c.bf16 %v2576, %v2576
  %v2709 = vpack.c.bf16 %v2577, %v2577
  %v2710 = vpack.c.bf16 %v2578, %v2578
  %v2711 = vpack.c.bf16 %v2579, %v2579
  %v2712 = vpack.c.bf16 %v2580, %v2580
  %v2713 = vpack.c.bf16 %v2581, %v2581
  %v2714 = vpack.c.bf16 %v2582, %v2582
  %v2715 = vpack.c.bf16 %v2583, %v2583
  %v2716 = vpack.c.bf16 %v2584, %v2584
  %v2717 = vpack.c.bf16 %v2585, %v2585
  %v2718 = vpack.c.bf16 %v2586, %v2586
  %v2719 = vpack.c.bf16 %v2587, %v2587
  %v2720 = vpack.c.bf16 %v2588, %v2588
  %v2721 = vpack.c.bf16 %v2589, %v2589
  %v2722 = vpack.c.bf16 %v2590, %v2590
  %v2723 = vpack.c.bf16 %v2591, %v2591
  %v2724 = vpack.c.bf16 %v2592, %v2592
  %v2725 = vpack.c.bf16 %v2593, %v2593
  %v2726 = vpack.c.bf16 %v2594, %v2594
  %s2727 = scalar_lea.vmem %s3, 352
  %2728 = vst [vmem:[%s2727] sm:$0xf] %v2683
  %2729 = vst [vmem:[%s2727 + $0x4] sm:$0xf] %v2684
  %2730 = vst [vmem:[%s2727 + $0x8] sm:$0xf] %v2685
  %2731 = vst [vmem:[%s2727 + $0xc] sm:$0xf] %v2686
  %2732 = vst [vmem:[%s2727 + $0x10] sm:$0xf] %v2687
  %2733 = vst [vmem:[%s2727 + $0x14] sm:$0xf] %v2688
  %2734 = vst [vmem:[%s2727 + $0x18] sm:$0xf] %v2689
  %2735 = vst [vmem:[%s2727 + $0x1c] sm:$0xf] %v2690
  %2736 = vst [vmem:[%s2727 + $0x20] sm:$0xf] %v2691
  %2737 = vst [vmem:[%s2727 + $0x24] sm:$0xf] %v2692
  %2738 = vst [vmem:[%s2727 + $0x28] sm:$0xf] %v2693
  %2739 = vst [vmem:[%s2727 + $0x2c] sm:$0xf] %v2694
  %2740 = vst [vmem:[%s2727 + $0x30] sm:$0xf] %v2695
  %2741 = vst [vmem:[%s2727 + $0x34] sm:$0xf] %v2696
  %2742 = vst [vmem:[%s2727 + $0x38] sm:$0xf] %v2697
  %2743 = vst [vmem:[%s2727 + $0x3c] sm:$0xf] %v2698
  %2744 = vst [vmem:[%s2727 + $0x40] sm:$0xf] %v2699
  %2745 = vst [vmem:[%s2727 + $0x44] sm:$0xf] %v2700
  %2746 = vst [vmem:[%s2727 + $0x48] sm:$0xf] %v2701
  %2747 = vst [vmem:[%s2727 + $0x4c] sm:$0xf] %v2702
  %2748 = vst [vmem:[%s2727 + $0x50] sm:$0xf] %v2703
  %2749 = vst [vmem:[%s2727 + $0x54] sm:$0xf] %v2704
  %2750 = vst [vmem:[%s2727 + $0x58] sm:$0xf] %v2705
  %2751 = vst [vmem:[%s2727 + $0x5c] sm:$0xf] %v2706
  %2752 = vst [vmem:[%s2727 + $0x60] sm:$0xf] %v2707
  %2753 = vst [vmem:[%s2727 + $0x64] sm:$0xf] %v2708
  %2754 = vst [vmem:[%s2727 + $0x68] sm:$0xf] %v2709
  %2755 = vst [vmem:[%s2727 + $0x6c] sm:$0xf] %v2710
  %2756 = vst [vmem:[%s2727 + $0x70] sm:$0xf] %v2711
  %2757 = vst [vmem:[%s2727 + $0x74] sm:$0xf] %v2712
  %2758 = vst [vmem:[%s2727 + $0x78] sm:$0xf] %v2713
  %2759 = vst [vmem:[%s2727 + $0x7c] sm:$0xf] %v2714
  %2760 = vst [vmem:[%s2727 + $0x80] sm:$0xf] %v2715
  %2761 = vst [vmem:[%s2727 + $0x84] sm:$0xf] %v2716
  %2762 = vst [vmem:[%s2727 + $0x88] sm:$0xf] %v2717
  %2763 = vst [vmem:[%s2727 + $0x8c] sm:$0xf] %v2718
  %2764 = vst [vmem:[%s2727 + $0x90] sm:$0xf] %v2719
  %2765 = vst [vmem:[%s2727 + $0x94] sm:$0xf] %v2720
  %2766 = vst [vmem:[%s2727 + $0x98] sm:$0xf] %v2721
  %2767 = vst [vmem:[%s2727 + $0x9c] sm:$0xf] %v2722
  %2768 = vst [vmem:[%s2727 + $0xa0] sm:$0xf] %v2723
  %2769 = vst [vmem:[%s2727 + $0xa4] sm:$0xf] %v2724
  %2770 = vst [vmem:[%s2727 + $0xa8] sm:$0xf] %v2725
  %2771 = vst [vmem:[%s2727 + $0xac] sm:$0xf] %v2726
  %v2772 = vadd.f32 %v2639, %v1402
  %v2773 = vadd.f32 %v2640, %v1403
  %v2774 = vadd.f32 %v2641, %v1404
  %v2775 = vadd.f32 %v2642, %v1405
  %v2776 = vadd.f32 %v2643, %v1406
  %v2777 = vadd.f32 %v2644, %v1407
  %v2778 = vadd.f32 %v2645, %v1408
  %v2779 = vadd.f32 %v2646, %v1409
  %v2780 = vadd.f32 %v2647, %v1410
  %v2781 = vadd.f32 %v2648, %v1411
  %v2782 = vadd.f32 %v2649, %v1412
  %v2783 = vadd.f32 %v2650, %v1413
  %v2784 = vadd.f32 %v2651, %v1414
  %v2785 = vadd.f32 %v2652, %v1415
  %v2786 = vadd.f32 %v2653, %v1416
  %v2787 = vadd.f32 %v2654, %v1417
  %v2788 = vadd.f32 %v2655, %v1418
  %v2789 = vadd.f32 %v2656, %v1419
  %v2790 = vadd.f32 %v2657, %v1420
  %v2791 = vadd.f32 %v2658, %v1421
  %v2792 = vadd.f32 %v2659, %v1422
  %v2793 = vadd.f32 %v2660, %v1423
  %v2794 = vadd.f32 %v2661, %v1424
  %v2795 = vadd.f32 %v2662, %v1425
  %v2796 = vadd.f32 %v2663, %v1426
  %v2797 = vadd.f32 %v2664, %v1427
  %v2798 = vadd.f32 %v2665, %v1428
  %v2799 = vadd.f32 %v2666, %v1429
  %v2800 = vadd.f32 %v2667, %v1430
  %v2801 = vadd.f32 %v2668, %v1431
  %v2802 = vadd.f32 %v2669, %v1432
  %v2803 = vadd.f32 %v2670, %v1433
  %v2804 = vadd.f32 %v2671, %v1434
  %v2805 = vadd.f32 %v2672, %v1435
  %v2806 = vadd.f32 %v2673, %v1436
  %v2807 = vadd.f32 %v2674, %v1437
  %v2808 = vadd.f32 %v2675, %v1438
  %v2809 = vadd.f32 %v2676, %v1439
  %v2810 = vadd.f32 %v2677, %v1440
  %v2811 = vadd.f32 %v2678, %v1441
  %v2812 = vadd.f32 %v2679, %v1442
  %v2813 = vadd.f32 %v2680, %v1443
  %v2814 = vadd.f32 %v2681, %v1444
  %v2815 = vadd.f32 %v2682, %v1445
  %v2816 = vmax.f32 %v2772, -32.0
  %v2817 = vmax.f32 %v2773, -32.0
  %v2818 = vmax.f32 %v2774, -32.0
  %v2819 = vmax.f32 %v2775, -32.0
  %v2820 = vmax.f32 %v2776, -32.0
  %v2821 = vmax.f32 %v2777, -32.0
  %v2822 = vmax.f32 %v2778, -32.0
  %v2823 = vmax.f32 %v2779, -32.0
  %v2824 = vmax.f32 %v2780, -32.0
  %v2825 = vmax.f32 %v2781, -32.0
  %v2826 = vmax.f32 %v2782, -32.0
  %v2827 = vmax.f32 %v2783, -32.0
  %v2828 = vmax.f32 %v2784, -32.0
  %v2829 = vmax.f32 %v2785, -32.0
  %v2830 = vmax.f32 %v2786, -32.0
  %v2831 = vmax.f32 %v2787, -32.0
  %v2832 = vmax.f32 %v2788, -32.0
  %v2833 = vmax.f32 %v2789, -32.0
  %v2834 = vmax.f32 %v2790, -32.0
  %v2835 = vmax.f32 %v2791, -32.0
  %v2836 = vmax.f32 %v2792, -32.0
  %v2837 = vmax.f32 %v2793, -32.0
  %v2838 = vmax.f32 %v2794, -32.0
  %v2839 = vmax.f32 %v2795, -32.0
  %v2840 = vmax.f32 %v2796, -32.0
  %v2841 = vmax.f32 %v2797, -32.0
  %v2842 = vmax.f32 %v2798, -32.0
  %v2843 = vmax.f32 %v2799, -32.0
  %v2844 = vmax.f32 %v2800, -32.0
  %v2845 = vmax.f32 %v2801, -32.0
  %v2846 = vmax.f32 %v2802, -32.0
  %v2847 = vmax.f32 %v2803, -32.0
  %v2848 = vmax.f32 %v2804, -32.0
  %v2849 = vmax.f32 %v2805, -32.0
  %v2850 = vmax.f32 %v2806, -32.0
  %v2851 = vmax.f32 %v2807, -32.0
  %v2852 = vmax.f32 %v2808, -32.0
  %v2853 = vmax.f32 %v2809, -32.0
  %v2854 = vmax.f32 %v2810, -32.0
  %v2855 = vmax.f32 %v2811, -32.0
  %v2856 = vmax.f32 %v2812, -32.0
  %v2857 = vmax.f32 %v2813, -32.0
  %v2858 = vmax.f32 %v2814, -32.0
  %v2859 = vmax.f32 %v2815, -32.0
  %v2860 = vmin.f32 %v2816, 32.0
  %v2861 = vmin.f32 %v2817, 32.0
  %v2862 = vmin.f32 %v2818, 32.0
  %v2863 = vmin.f32 %v2819, 32.0
  %v2864 = vmin.f32 %v2820, 32.0
  %v2865 = vmin.f32 %v2821, 32.0
  %v2866 = vmin.f32 %v2822, 32.0
  %v2867 = vmin.f32 %v2823, 32.0
  %v2868 = vmin.f32 %v2824, 32.0
  %v2869 = vmin.f32 %v2825, 32.0
  %v2870 = vmin.f32 %v2826, 32.0
  %v2871 = vmin.f32 %v2827, 32.0
  %v2872 = vmin.f32 %v2828, 32.0
  %v2873 = vmin.f32 %v2829, 32.0
  %v2874 = vmin.f32 %v2830, 32.0
  %v2875 = vmin.f32 %v2831, 32.0
  %v2876 = vmin.f32 %v2832, 32.0
  %v2877 = vmin.f32 %v2833, 32.0
  %v2878 = vmin.f32 %v2834, 32.0
  %v2879 = vmin.f32 %v2835, 32.0
  %v2880 = vmin.f32 %v2836, 32.0
  %v2881 = vmin.f32 %v2837, 32.0
  %v2882 = vmin.f32 %v2838, 32.0
  %v2883 = vmin.f32 %v2839, 32.0
  %v2884 = vmin.f32 %v2840, 32.0
  %v2885 = vmin.f32 %v2841, 32.0
  %v2886 = vmin.f32 %v2842, 32.0
  %v2887 = vmin.f32 %v2843, 32.0
  %v2888 = vmin.f32 %v2844, 32.0
  %v2889 = vmin.f32 %v2845, 32.0
  %v2890 = vmin.f32 %v2846, 32.0
  %v2891 = vmin.f32 %v2847, 32.0
  %v2892 = vmin.f32 %v2848, 32.0
  %v2893 = vmin.f32 %v2849, 32.0
  %v2894 = vmin.f32 %v2850, 32.0
  %v2895 = vmin.f32 %v2851, 32.0
  %v2896 = vmin.f32 %v2852, 32.0
  %v2897 = vmin.f32 %v2853, 32.0
  %v2898 = vmin.f32 %v2854, 32.0
  %v2899 = vmin.f32 %v2855, 32.0
  %v2900 = vmin.f32 %v2856, 32.0
  %v2901 = vmin.f32 %v2857, 32.0
  %v2902 = vmin.f32 %v2858, 32.0
  %v2903 = vmin.f32 %v2859, 32.0
  %vm2904 = vcmp.ge.f32.partialorder %v2860, %v1580
  %vm2905 = vcmp.ge.f32.partialorder %v2861, %v1580
  %vm2906 = vcmp.ge.f32.partialorder %v2862, %v1580
  %vm2907 = vcmp.ge.f32.partialorder %v2863, %v1580
  %vm2908 = vcmp.ge.f32.partialorder %v2864, %v1580
  %vm2909 = vcmp.ge.f32.partialorder %v2865, %v1580
  %vm2910 = vcmp.ge.f32.partialorder %v2866, %v1580
  %vm2911 = vcmp.ge.f32.partialorder %v2867, %v1580
  %vm2912 = vcmp.ge.f32.partialorder %v2868, %v1580
  %vm2913 = vcmp.ge.f32.partialorder %v2869, %v1580
  %vm2914 = vcmp.ge.f32.partialorder %v2870, %v1580
  %vm2915 = vcmp.ge.f32.partialorder %v2871, %v1580
  %vm2916 = vcmp.ge.f32.partialorder %v2872, %v1580
  %vm2917 = vcmp.ge.f32.partialorder %v2873, %v1580
  %vm2918 = vcmp.ge.f32.partialorder %v2874, %v1580
  %vm2919 = vcmp.ge.f32.partialorder %v2875, %v1580
  %vm2920 = vcmp.ge.f32.partialorder %v2876, %v1580
  %vm2921 = vcmp.ge.f32.partialorder %v2877, %v1580
  %vm2922 = vcmp.ge.f32.partialorder %v2878, %v1580
  %vm2923 = vcmp.ge.f32.partialorder %v2879, %v1580
  %vm2924 = vcmp.ge.f32.partialorder %v2880, %v1580
  %vm2925 = vcmp.ge.f32.partialorder %v2881, %v1580
  %vm2926 = vcmp.ge.f32.partialorder %v2882, %v1580
  %vm2927 = vcmp.ge.f32.partialorder %v2883, %v1580
  %vm2928 = vcmp.ge.f32.partialorder %v2884, %v1580
  %vm2929 = vcmp.ge.f32.partialorder %v2885, %v1580
  %vm2930 = vcmp.ge.f32.partialorder %v2886, %v1580
  %vm2931 = vcmp.ge.f32.partialorder %v2887, %v1580
  %vm2932 = vcmp.ge.f32.partialorder %v2888, %v1580
  %vm2933 = vcmp.ge.f32.partialorder %v2889, %v1580
  %vm2934 = vcmp.ge.f32.partialorder %v2890, %v1580
  %vm2935 = vcmp.ge.f32.partialorder %v2891, %v1580
  %vm2936 = vcmp.ge.f32.partialorder %v2892, %v1580
  %vm2937 = vcmp.ge.f32.partialorder %v2893, %v1580
  %vm2938 = vcmp.ge.f32.partialorder %v2894, %v1580
  %vm2939 = vcmp.ge.f32.partialorder %v2895, %v1580
  %vm2940 = vcmp.ge.f32.partialorder %v2896, %v1580
  %vm2941 = vcmp.ge.f32.partialorder %v2897, %v1580
  %vm2942 = vcmp.ge.f32.partialorder %v2898, %v1580
  %vm2943 = vcmp.ge.f32.partialorder %v2899, %v1580
  %vm2944 = vcmp.ge.f32.partialorder %v2900, %v1580
  %vm2945 = vcmp.ge.f32.partialorder %v2901, %v1580
  %vm2946 = vcmp.ge.f32.partialorder %v2902, %v1580
  %vm2947 = vcmp.ge.f32.partialorder %v2903, %v1580
  %v2948 = vsel %vm2904, 1, 0
  %v2949 = vsel %vm2905, 1, 0
  %v2950 = vsel %vm2906, 1, 0
  %v2951 = vsel %vm2907, 1, 0
  %v2952 = vsel %vm2908, 1, 0
  %v2953 = vsel %vm2909, 1, 0
  %v2954 = vsel %vm2910, 1, 0
  %v2955 = vsel %vm2911, 1, 0
  %v2956 = vsel %vm2912, 1, 0
  %v2957 = vsel %vm2913, 1, 0
  %v2958 = vsel %vm2914, 1, 0
  %v2959 = vsel %vm2915, 1, 0
  %v2960 = vsel %vm2916, 1, 0
  %v2961 = vsel %vm2917, 1, 0
  %v2962 = vsel %vm2918, 1, 0
  %v2963 = vsel %vm2919, 1, 0
  %v2964 = vsel %vm2920, 1, 0
  %v2965 = vsel %vm2921, 1, 0
  %v2966 = vsel %vm2922, 1, 0
  %v2967 = vsel %vm2923, 1, 0
  %v2968 = vsel %vm2924, 1, 0
  %v2969 = vsel %vm2925, 1, 0
  %v2970 = vsel %vm2926, 1, 0
  %v2971 = vsel %vm2927, 1, 0
  %v2972 = vsel %vm2928, 1, 0
  %v2973 = vsel %vm2929, 1, 0
  %v2974 = vsel %vm2930, 1, 0
  %v2975 = vsel %vm2931, 1, 0
  %v2976 = vsel %vm2932, 1, 0
  %v2977 = vsel %vm2933, 1, 0
  %v2978 = vsel %vm2934, 1, 0
  %v2979 = vsel %vm2935, 1, 0
  %v2980 = vsel %vm2936, 1, 0
  %v2981 = vsel %vm2937, 1, 0
  %v2982 = vsel %vm2938, 1, 0
  %v2983 = vsel %vm2939, 1, 0
  %v2984 = vsel %vm2940, 1, 0
  %v2985 = vsel %vm2941, 1, 0
  %v2986 = vsel %vm2942, 1, 0
  %v2987 = vsel %vm2943, 1, 0
  %v2988 = vsel %vm2944, 1, 0
  %v2989 = vsel %vm2945, 1, 0
  %v2990 = vsel %vm2946, 1, 0
  %v2991 = vsel %vm2947, 1, 0
  %v2992 = vcvt.s32.f32 %v2948
  %v2993 = vcvt.s32.f32 %v2949
  %v2994 = vcvt.s32.f32 %v2950
  %v2995 = vcvt.s32.f32 %v2951
  %v2996 = vcvt.s32.f32 %v2952
  %v2997 = vcvt.s32.f32 %v2953
  %v2998 = vcvt.s32.f32 %v2954
  %v2999 = vcvt.s32.f32 %v2955
  %v3000 = vcvt.s32.f32 %v2956
  %v3001 = vcvt.s32.f32 %v2957
  %v3002 = vcvt.s32.f32 %v2958
  %v3003 = vcvt.s32.f32 %v2959
  %v3004 = vcvt.s32.f32 %v2960
  %v3005 = vcvt.s32.f32 %v2961
  %v3006 = vcvt.s32.f32 %v2962
  %v3007 = vcvt.s32.f32 %v2963
  %v3008 = vcvt.s32.f32 %v2964
  %v3009 = vcvt.s32.f32 %v2965
  %v3010 = vcvt.s32.f32 %v2966
  %v3011 = vcvt.s32.f32 %v2967
  %v3012 = vcvt.s32.f32 %v2968
  %v3013 = vcvt.s32.f32 %v2969
  %v3014 = vcvt.s32.f32 %v2970
  %v3015 = vcvt.s32.f32 %v2971
  %v3016 = vcvt.s32.f32 %v2972
  %v3017 = vcvt.s32.f32 %v2973
  %v3018 = vcvt.s32.f32 %v2974
  %v3019 = vcvt.s32.f32 %v2975
  %v3020 = vcvt.s32.f32 %v2976
  %v3021 = vcvt.s32.f32 %v2977
  %v3022 = vcvt.s32.f32 %v2978
  %v3023 = vcvt.s32.f32 %v2979
  %v3024 = vcvt.s32.f32 %v2980
  %v3025 = vcvt.s32.f32 %v2981
  %v3026 = vcvt.s32.f32 %v2982
  %v3027 = vcvt.s32.f32 %v2983
  %v3028 = vcvt.s32.f32 %v2984
  %v3029 = vcvt.s32.f32 %v2985
  %v3030 = vcvt.s32.f32 %v2986
  %v3031 = vcvt.s32.f32 %v2987
  %v3032 = vcvt.s32.f32 %v2988
  %v3033 = vcvt.s32.f32 %v2989
  %v3034 = vcvt.s32.f32 %v2990
  %v3035 = vcvt.s32.f32 %v2991
  %v3036 = vpack.c.bf16 %v2992, %v2992
  %v3037 = vpack.c.bf16 %v2993, %v2993
  %v3038 = vpack.c.bf16 %v2994, %v2994
  %v3039 = vpack.c.bf16 %v2995, %v2995
  %v3040 = vpack.c.bf16 %v2996, %v2996
  %v3041 = vpack.c.bf16 %v2997, %v2997
  %v3042 = vpack.c.bf16 %v2998, %v2998
  %v3043 = vpack.c.bf16 %v2999, %v2999
  %v3044 = vpack.c.bf16 %v3000, %v3000
  %v3045 = vpack.c.bf16 %v3001, %v3001
  %v3046 = vpack.c.bf16 %v3002, %v3002
  %v3047 = vpack.c.bf16 %v3003, %v3003
  %v3048 = vpack.c.bf16 %v3004, %v3004
  %v3049 = vpack.c.bf16 %v3005, %v3005
  %v3050 = vpack.c.bf16 %v3006, %v3006
  %v3051 = vpack.c.bf16 %v3007, %v3007
  %v3052 = vpack.c.bf16 %v3008, %v3008
  %v3053 = vpack.c.bf16 %v3009, %v3009
  %v3054 = vpack.c.bf16 %v3010, %v3010
  %v3055 = vpack.c.bf16 %v3011, %v3011
  %v3056 = vpack.c.bf16 %v3012, %v3012
  %v3057 = vpack.c.bf16 %v3013, %v3013
  %v3058 = vpack.c.bf16 %v3014, %v3014
  %v3059 = vpack.c.bf16 %v3015, %v3015
  %v3060 = vpack.c.bf16 %v3016, %v3016
  %v3061 = vpack.c.bf16 %v3017, %v3017
  %v3062 = vpack.c.bf16 %v3018, %v3018
  %v3063 = vpack.c.bf16 %v3019, %v3019
  %v3064 = vpack.c.bf16 %v3020, %v3020
  %v3065 = vpack.c.bf16 %v3021, %v3021
  %v3066 = vpack.c.bf16 %v3022, %v3022
  %v3067 = vpack.c.bf16 %v3023, %v3023
  %v3068 = vpack.c.bf16 %v3024, %v3024
  %v3069 = vpack.c.bf16 %v3025, %v3025
  %v3070 = vpack.c.bf16 %v3026, %v3026
  %v3071 = vpack.c.bf16 %v3027, %v3027
  %v3072 = vpack.c.bf16 %v3028, %v3028
  %v3073 = vpack.c.bf16 %v3029, %v3029
  %v3074 = vpack.c.bf16 %v3030, %v3030
  %v3075 = vpack.c.bf16 %v3031, %v3031
  %v3076 = vpack.c.bf16 %v3032, %v3032
  %v3077 = vpack.c.bf16 %v3033, %v3033
  %v3078 = vpack.c.bf16 %v3034, %v3034
  %v3079 = vpack.c.bf16 %v3035, %v3035
  %s3080 = scalar_lea.vmem %s3, 528
  %3081 = vst [vmem:[%s3080] sm:$0xf] %v3036
  %3082 = vst [vmem:[%s3080 + $0x4] sm:$0xf] %v3037
  %3083 = vst [vmem:[%s3080 + $0x8] sm:$0xf] %v3038
  %3084 = vst [vmem:[%s3080 + $0xc] sm:$0xf] %v3039
  %3085 = vst [vmem:[%s3080 + $0x10] sm:$0xf] %v3040
  %3086 = vst [vmem:[%s3080 + $0x14] sm:$0xf] %v3041
  %3087 = vst [vmem:[%s3080 + $0x18] sm:$0xf] %v3042
  %3088 = vst [vmem:[%s3080 + $0x1c] sm:$0xf] %v3043
  %3089 = vst [vmem:[%s3080 + $0x20] sm:$0xf] %v3044
  %3090 = vst [vmem:[%s3080 + $0x24] sm:$0xf] %v3045
  %3091 = vst [vmem:[%s3080 + $0x28] sm:$0xf] %v3046
  %3092 = vst [vmem:[%s3080 + $0x2c] sm:$0xf] %v3047
  %3093 = vst [vmem:[%s3080 + $0x30] sm:$0xf] %v3048
  %3094 = vst [vmem:[%s3080 + $0x34] sm:$0xf] %v3049
  %3095 = vst [vmem:[%s3080 + $0x38] sm:$0xf] %v3050
  %3096 = vst [vmem:[%s3080 + $0x3c] sm:$0xf] %v3051
  %3097 = vst [vmem:[%s3080 + $0x40] sm:$0xf] %v3052
  %3098 = vst [vmem:[%s3080 + $0x44] sm:$0xf] %v3053
  %3099 = vst [vmem:[%s3080 + $0x48] sm:$0xf] %v3054
  %3100 = vst [vmem:[%s3080 + $0x4c] sm:$0xf] %v3055
  %3101 = vst [vmem:[%s3080 + $0x50] sm:$0xf] %v3056
  %3102 = vst [vmem:[%s3080 + $0x54] sm:$0xf] %v3057
  %3103 = vst [vmem:[%s3080 + $0x58] sm:$0xf] %v3058
  %3104 = vst [vmem:[%s3080 + $0x5c] sm:$0xf] %v3059
  %3105 = vst [vmem:[%s3080 + $0x60] sm:$0xf] %v3060
  %3106 = vst [vmem:[%s3080 + $0x64] sm:$0xf] %v3061
  %3107 = vst [vmem:[%s3080 + $0x68] sm:$0xf] %v3062
  %3108 = vst [vmem:[%s3080 + $0x6c] sm:$0xf] %v3063
  %3109 = vst [vmem:[%s3080 + $0x70] sm:$0xf] %v3064
  %3110 = vst [vmem:[%s3080 + $0x74] sm:$0xf] %v3065
  %3111 = vst [vmem:[%s3080 + $0x78] sm:$0xf] %v3066
  %3112 = vst [vmem:[%s3080 + $0x7c] sm:$0xf] %v3067
  %3113 = vst [vmem:[%s3080 + $0x80] sm:$0xf] %v3068
  %3114 = vst [vmem:[%s3080 + $0x84] sm:$0xf] %v3069
  %3115 = vst [vmem:[%s3080 + $0x88] sm:$0xf] %v3070
  %3116 = vst [vmem:[%s3080 + $0x8c] sm:$0xf] %v3071
  %3117 = vst [vmem:[%s3080 + $0x90] sm:$0xf] %v3072
  %3118 = vst [vmem:[%s3080 + $0x94] sm:$0xf] %v3073
  %3119 = vst [vmem:[%s3080 + $0x98] sm:$0xf] %v3074
  %3120 = vst [vmem:[%s3080 + $0x9c] sm:$0xf] %v3075
  %3121 = vst [vmem:[%s3080 + $0xa0] sm:$0xf] %v3076
  %3122 = vst [vmem:[%s3080 + $0xa4] sm:$0xf] %v3077
  %3123 = vst [vmem:[%s3080 + $0xa8] sm:$0xf] %v3078
  %3124 = vst [vmem:[%s3080 + $0xac] sm:$0xf] %v3079
  // Predicated region
  $region14: #{_lambda_.5} parent=0 // pred_check
    _
  $region15: #{_lambda_.5} parent=0 // pred_check_branch
    %3126 = sbr.rel (0) target = $region17
  $region16: #{_lambda_.5} parent=0 // pred_region
    _
  $region17: #{_lambda_.5} parent=0 // pred_fallthru
    _
  // Predicated region
  $region18: #{_lambda_.5} parent=0 // pred_check
    _
  $region19: #{_lambda_.5} parent=0 // pred_check_branch
    %3128 = sbr.rel (0) target = $region21
  $region20: #{_lambda_.5} parent=0 // pred_region
    _
  $region21: #{_lambda_.5} parent=0 // pred_fallthru
    _

// kernel: _lambda_.6
$region0: #{_lambda_.6}
  #allocation0 [shape = 'u32[]', space=smem, size = 0x4, offset = 0x4, fixed_abs, tag = 'smem constant byte address 0x4 - core index']
  #allocation1 [shape = 'u32[72,128]{1,0:T(1,128)}', space=vmem, size = 0x9000, scoped, tag = 'internal scratch']
  %s0 = inlined_call_operand.vmem [shape: bf16[4,208,256], index: 0, kind: input, shape index: {}]
  %s1 = inlined_call_operand.vmem [shape: bf16[256,128], index: 1, kind: input, shape index: {}]
  %s2 = inlined_call_operand.vmem [shape: f32[1,128], index: 2, kind: input, shape index: {}]
  %s3 = inlined_call_operand.vmem [shape: bf16[4,208,128], index: 3, kind: output, shape index: {}]
  %s4 = sld [smem:[#allocation0]]
  $region22: #{_lambda_.6} parent=0
    _
  %s6 = ssub.s32 1, %s4
  %s7 = scalar_select 0, %s6, %s4
  // Predicated region
  $region2: #{_lambda_.6} parent=0 // pred_check
    _
  $region3: #{_lambda_.6} parent=0 // pred_check_branch
    %9 = sbr.rel (0) target = $region5
  $region4: #{_lambda_.6} parent=0 // pred_region
    _
  $region5: #{_lambda_.6} parent=0 // pred_fallthru
    _
  // Predicated region
  $region6: #{_lambda_.6} parent=0 // pred_check
    _
  $region7: #{_lambda_.6} parent=0 // pred_check_branch
    %11 = sbr.rel (0) target = $region9
  $region8: #{_lambda_.6} parent=0 // pred_region
    _
  $region9: #{_lambda_.6} parent=0 // pred_fallthru
    _
  // Predicated region
  $region10: #{_lambda_.6} parent=0 // pred_check
    _
  $region11: #{_lambda_.6} parent=0 // pred_check_branch
    %13 = sbr.rel (0) target = $region13
  $region12: #{_lambda_.6} parent=0 // pred_region
    _
  $region13: #{_lambda_.6} parent=0 // pred_fallthru
    _
  %v14 = vld [vmem:[%s0] sm:$0xff]
  %v15 = vld [vmem:[%s0 + $0x8] sm:$0xff]
  %v16 = vld [vmem:[%s0 + $0x10] sm:$0xff]
  %v17 = vld [vmem:[%s0 + $0x18] sm:$0xff]
  %v18 = vld [vmem:[%s0 + $0x20] sm:$0xff]
  %v19 = vld [vmem:[%s0 + $0x28] sm:$0xff]
  %v20 = vld [vmem:[%s0 + $0x30] sm:$0xff]
  %v21 = vld [vmem:[%s0 + $0x38] sm:$0xff]
  %v22 = vld [vmem:[%s0 + $0x40] sm:$0xff]
  %v23 = vld [vmem:[%s0 + $0x48] sm:$0xff]
  %v24 = vld [vmem:[%s0 + $0x50] sm:$0xff]
  %v25 = vld [vmem:[%s0 + $0x58] sm:$0xff]
  %v26 = vld [vmem:[%s0 + $0x60] sm:$0xff]
  %v27 = vld [vmem:[%s0 + $0x68] sm:$0xff]
  %v28 = vld [vmem:[%s0 + $0x70] sm:$0xff]
  %v29 = vld [vmem:[%s0 + $0x78] sm:$0xff]
  %v30 = vld [vmem:[%s0 + $0x80] sm:$0xff]
  %v31 = vld [vmem:[%s0 + $0x88] sm:$0xff]
  %v32 = vld [vmem:[%s0 + $0x90] sm:$0xff]
  %v33 = vld [vmem:[%s0 + $0x98] sm:$0xff]
  %v34 = vld [vmem:[%s0 + $0xa0] sm:$0xff]
  %v35 = vld [vmem:[%s0 + $0xa8] sm:$0xff]
  %v36 = vld [vmem:[%s0 + $0xb0] sm:$0xff]
  %v37 = vld [vmem:[%s0 + $0xb8] sm:$0xff]
  %v38 = vld [vmem:[%s0 + $0xc0] sm:$0xff]
  %v39 = vld [vmem:[%s0 + $0xc8] sm:$0xff]
  %v40 = vld [vmem:[%s0 + $0xd0] sm:$0xff]
  %v41 = vld [vmem:[%s0 + $0xd8] sm:$0xff]
  %v42 = vld [vmem:[%s0 + $0xe0] sm:$0xff]
  %v43 = vld [vmem:[%s0 + $0xe8] sm:$0xff]
  %v44 = vld [vmem:[%s0 + $0xf0] sm:$0xff]
  %v45 = vld [vmem:[%s0 + $0xf8] sm:$0xff]
  %v46 = vld [vmem:[%s0 + $0x100] sm:$0xff]
  %v47 = vld [vmem:[%s0 + $0x108] sm:$0xff]
  %v48 = vld [vmem:[%s0 + $0x110] sm:$0xff]
  %v49 = vld [vmem:[%s0 + $0x118] sm:$0xff]
  %v50 = vld [vmem:[%s0 + $0x120] sm:$0xff]
  %v51 = vld [vmem:[%s0 + $0x128] sm:$0xff]
  %v52 = vld [vmem:[%s0 + $0x130] sm:$0xff]
  %v53 = vld [vmem:[%s0 + $0x138] sm:$0xff]
  %v54 = vld [vmem:[%s0 + $0x140] sm:$0xff]
  %v55 = vld [vmem:[%s0 + $0x148] sm:$0xff]
  %v56 = vld [vmem:[%s0 + $0x150] sm:$0xff]
  %v57 = vld [vmem:[%s0 + $0x158] sm:$0xff]
  %v58 = vld [vmem:[%s0 + $0x160] sm:$0xff]
  %v59 = vld [vmem:[%s0 + $0x168] sm:$0xff]
  %v60 = vld [vmem:[%s0 + $0x170] sm:$0xff]
  %v61 = vld [vmem:[%s0 + $0x178] sm:$0xff]
  %v62 = vld [vmem:[%s0 + $0x180] sm:$0xff]
  %v63 = vld [vmem:[%s0 + $0x188] sm:$0xff]
  %v64 = vld [vmem:[%s0 + $0x190] sm:$0xff]
  %v65 = vld [vmem:[%s0 + $0x198] sm:$0xff]
  %v66 = vld [vmem:[%s0 + $0x1a0] sm:$0xff]
  %v67 = vld [vmem:[%s0 + $0x1a8] sm:$0xff]
  %v68 = vld [vmem:[%s0 + $0x1b0] sm:$0xff]
  %v69 = vld [vmem:[%s0 + $0x1b8] sm:$0xff]
  %v70 = vld [vmem:[%s0 + $0x1c0] sm:$0xff]
  %v71 = vld [vmem:[%s0 + $0x1c8] sm:$0xff]
  %v72 = vld [vmem:[%s0 + $0x1d0] sm:$0xff]
  %v73 = vld [vmem:[%s0 + $0x1d8] sm:$0xff]
  %v74 = vld [vmem:[%s0 + $0x1e0] sm:$0xff]
  %v75 = vld [vmem:[%s0 + $0x1e8] sm:$0xff]
  %v76 = vld [vmem:[%s0 + $0x1f0] sm:$0xff]
  %v77 = vld [vmem:[%s0 + $0x1f8] sm:$0xff]
  %v78 = vld [vmem:[%s0 + $0x200] sm:$0xff]
  %v79 = vld [vmem:[%s0 + $0x208] sm:$0xff]
  %v80 = vld [vmem:[%s0 + $0x210] sm:$0xff]
  %v81 = vld [vmem:[%s0 + $0x218] sm:$0xff]
  %v82 = vld [vmem:[%s0 + $0x220] sm:$0xff]
  %v83 = vld [vmem:[%s0 + $0x228] sm:$0xff]
  %v84 = vld [vmem:[%s0 + $0x230] sm:$0xff]
  %v85 = vld [vmem:[%s0 + $0x238] sm:$0xff]
  %v86 = vld [vmem:[%s0 + $0x240] sm:$0xff]
  %v87 = vld [vmem:[%s0 + $0x248] sm:$0xff]
  %v88 = vld [vmem:[%s0 + $0x250] sm:$0xff]
  %v89 = vld [vmem:[%s0 + $0x258] sm:$0xff]
  %v90 = vld [vmem:[%s0 + $0x260] sm:$0xff]
  %v91 = vld [vmem:[%s0 + $0x268] sm:$0xff]
  %v92 = vld [vmem:[%s0 + $0x270] sm:$0xff]
  %v93 = vld [vmem:[%s0 + $0x278] sm:$0xff]
  %v94 = vld [vmem:[%s0 + $0x280] sm:$0xff]
  %v95 = vld [vmem:[%s0 + $0x288] sm:$0xff]
  %v96 = vld [vmem:[%s0 + $0x290] sm:$0xff]
  %v97 = vld [vmem:[%s0 + $0x298] sm:$0xff]
  %v98 = vld [vmem:[%s0 + $0x2a0] sm:$0xff]
  %v99 = vld [vmem:[%s0 + $0x2a8] sm:$0xff]
  %v100 = vld [vmem:[%s0 + $0x2b0] sm:$0xff]
  %v101 = vld [vmem:[%s0 + $0x2b8] sm:$0xff]
  %v102 = vld [vmem:[%s0 + $0x2c0] sm:$0xff]
  %v103 = vld [vmem:[%s0 + $0x2c8] sm:$0xff]
  %v104 = vld [vmem:[%s0 + $0x2d0] sm:$0xff]
  %v105 = vld [vmem:[%s0 + $0x2d8] sm:$0xff]
  %v106 = vld [vmem:[%s0 + $0x2e0] sm:$0xff]
  %v107 = vld [vmem:[%s0 + $0x2e8] sm:$0xff]
  %v108 = vld [vmem:[%s0 + $0x2f0] sm:$0xff]
  %v109 = vld [vmem:[%s0 + $0x2f8] sm:$0xff]
  %v110 = vld [vmem:[%s0 + $0x300] sm:$0xff]
  %v111 = vld [vmem:[%s0 + $0x308] sm:$0xff]
  %v112 = vld [vmem:[%s0 + $0x310] sm:$0xff]
  %v113 = vld [vmem:[%s0 + $0x318] sm:$0xff]
  %v114 = vld [vmem:[%s0 + $0x320] sm:$0xff]
  %v115 = vld [vmem:[%s0 + $0x328] sm:$0xff]
  %v116 = vld [vmem:[%s0 + $0x330] sm:$0xff]
  %v117 = vld [vmem:[%s0 + $0x338] sm:$0xff]
  %v118 = vld [vmem:[%s1] sm:$0xf]
  %v119 = vld [vmem:[%s1 + $0x4] sm:$0xf]
  %v120 = vld [vmem:[%s1 + $0x8] sm:$0xf]
  %v121 = vld [vmem:[%s1 + $0xc] sm:$0xf]
  %v122 = vld [vmem:[%s1 + $0x10] sm:$0xf]
  %v123 = vld [vmem:[%s1 + $0x14] sm:$0xf]
  %v124 = vld [vmem:[%s1 + $0x18] sm:$0xf]
  %v125 = vld [vmem:[%s1 + $0x1c] sm:$0xf]
  %v126 = vld [vmem:[%s1 + $0x20] sm:$0xf]
  %v127 = vld [vmem:[%s1 + $0x24] sm:$0xf]
  %v128 = vld [vmem:[%s1 + $0x28] sm:$0xf]
  %v129 = vld [vmem:[%s1 + $0x2c] sm:$0xf]
  %v130 = vld [vmem:[%s1 + $0x30] sm:$0xf]
  %v131 = vld [vmem:[%s1 + $0x34] sm:$0xf]
  %v132 = vld [vmem:[%s1 + $0x38] sm:$0xf]
  %v133 = vld [vmem:[%s1 + $0x3c] sm:$0xf]
  %v134 = vld [vmem:[%s1 + $0x40] sm:$0xf]
  %v135 = vld [vmem:[%s1 + $0x44] sm:$0xf]
  %v136 = vld [vmem:[%s1 + $0x48] sm:$0xf]
  %v137 = vld [vmem:[%s1 + $0x4c] sm:$0xf]
  %v138 = vld [vmem:[%s1 + $0x50] sm:$0xf]
  %v139 = vld [vmem:[%s1 + $0x54] sm:$0xf]
  %v140 = vld [vmem:[%s1 + $0x58] sm:$0xf]
  %v141 = vld [vmem:[%s1 + $0x5c] sm:$0xf]
  %v142 = vld [vmem:[%s1 + $0x60] sm:$0xf]
  %v143 = vld [vmem:[%s1 + $0x64] sm:$0xf]
  %v144 = vld [vmem:[%s1 + $0x68] sm:$0xf]
  %v145 = vld [vmem:[%s1 + $0x6c] sm:$0xf]
  %v146 = vld [vmem:[%s1 + $0x70] sm:$0xf]
  %v147 = vld [vmem:[%s1 + $0x74] sm:$0xf]
  %v148 = vld [vmem:[%s1 + $0x78] sm:$0xf]
  %v149 = vld [vmem:[%s1 + $0x7c] sm:$0xf]
  %v254 = vunpack.c.l.b16 %v14
  %v255 = vunpack.c.h.b16 %v14
  %v256 = vunpack.c.l.b16 %v15
  %v257 = vunpack.c.h.b16 %v15
  %v258 = vunpack.c.l.b16 %v16
  %v259 = vunpack.c.h.b16 %v16
  %v260 = vunpack.c.l.b16 %v17
  %v261 = vunpack.c.h.b16 %v17
  %v262 = vunpack.c.l.b16 %v18
  %v263 = vunpack.c.h.b16 %v18
  %v264 = vunpack.c.l.b16 %v19
  %v265 = vunpack.c.h.b16 %v19
  %v266 = vunpack.c.l.b16 %v20
  %v267 = vunpack.c.h.b16 %v20
  %v268 = vunpack.c.l.b16 %v21
  %v269 = vunpack.c.h.b16 %v21
  %v270 = vunpack.c.l.b16 %v22
  %v271 = vunpack.c.h.b16 %v22
  %v272 = vunpack.c.l.b16 %v23
  %v273 = vunpack.c.h.b16 %v23
  %v274 = vunpack.c.l.b16 %v24
  %v275 = vunpack.c.h.b16 %v24
  %v276 = vunpack.c.l.b16 %v25
  %v277 = vunpack.c.h.b16 %v25
  %v278 = vunpack.c.l.b16 %v26
  %v279 = vunpack.c.h.b16 %v26
  %v280 = vunpack.c.l.b16 %v27
  %v281 = vunpack.c.h.b16 %v27
  %v282 = vunpack.c.l.b16 %v28
  %v283 = vunpack.c.h.b16 %v28
  %v284 = vunpack.c.l.b16 %v29
  %v285 = vunpack.c.h.b16 %v29
  %v286 = vunpack.c.l.b16 %v30
  %v287 = vunpack.c.h.b16 %v30
  %v288 = vunpack.c.l.b16 %v31
  %v289 = vunpack.c.h.b16 %v31
  %v290 = vunpack.c.l.b16 %v32
  %v291 = vunpack.c.h.b16 %v32
  %v292 = vunpack.c.l.b16 %v33
  %v293 = vunpack.c.h.b16 %v33
  %v294 = vunpack.c.l.b16 %v34
  %v295 = vunpack.c.h.b16 %v34
  %v296 = vunpack.c.l.b16 %v35
  %v297 = vunpack.c.h.b16 %v35
  %v298 = vunpack.c.l.b16 %v36
  %v299 = vunpack.c.h.b16 %v36
  %v300 = vunpack.c.l.b16 %v37
  %v301 = vunpack.c.h.b16 %v37
  %v302 = vunpack.c.l.b16 %v38
  %v303 = vunpack.c.h.b16 %v38
  %v304 = vunpack.c.l.b16 %v39
  %v305 = vunpack.c.h.b16 %v39
  %v306 = vunpack.c.l.b16 %v40
  %v307 = vunpack.c.h.b16 %v40
  %v308 = vunpack.c.l.b16 %v41
  %v309 = vunpack.c.h.b16 %v41
  %v310 = vunpack.c.l.b16 %v42
  %v311 = vunpack.c.h.b16 %v42
  %v312 = vunpack.c.l.b16 %v43
  %v313 = vunpack.c.h.b16 %v43
  %v314 = vunpack.c.l.b16 %v44
  %v315 = vunpack.c.h.b16 %v44
  %v316 = vunpack.c.l.b16 %v45
  %v317 = vunpack.c.h.b16 %v45
  %v318 = vunpack.c.l.b16 %v46
  %v319 = vunpack.c.h.b16 %v46
  %v320 = vunpack.c.l.b16 %v47
  %v321 = vunpack.c.h.b16 %v47
  %v322 = vunpack.c.l.b16 %v48
  %v323 = vunpack.c.h.b16 %v48
  %v324 = vunpack.c.l.b16 %v49
  %v325 = vunpack.c.h.b16 %v49
  %v326 = vunpack.c.l.b16 %v50
  %v327 = vunpack.c.h.b16 %v50
  %v328 = vunpack.c.l.b16 %v51
  %v329 = vunpack.c.h.b16 %v51
  %v330 = vunpack.c.l.b16 %v52
  %v331 = vunpack.c.h.b16 %v52
  %v332 = vunpack.c.l.b16 %v53
  %v333 = vunpack.c.h.b16 %v53
  %v334 = vunpack.c.l.b16 %v54
  %v335 = vunpack.c.h.b16 %v54
  %v336 = vunpack.c.l.b16 %v55
  %v337 = vunpack.c.h.b16 %v55
  %v338 = vunpack.c.l.b16 %v56
  %v339 = vunpack.c.h.b16 %v56
  %v340 = vunpack.c.l.b16 %v57
  %v341 = vunpack.c.h.b16 %v57
  %v342 = vunpack.c.l.b16 %v58
  %v343 = vunpack.c.h.b16 %v58
  %v344 = vunpack.c.l.b16 %v59
  %v345 = vunpack.c.h.b16 %v59
  %v346 = vunpack.c.l.b16 %v60
  %v347 = vunpack.c.h.b16 %v60
  %v348 = vunpack.c.l.b16 %v61
  %v349 = vunpack.c.h.b16 %v61
  %v350 = vunpack.c.l.b16 %v62
  %v351 = vunpack.c.h.b16 %v62
  %v352 = vunpack.c.l.b16 %v63
  %v353 = vunpack.c.h.b16 %v63
  %v354 = vunpack.c.l.b16 %v64
  %v355 = vunpack.c.h.b16 %v64
  %v356 = vunpack.c.l.b16 %v65
  %v357 = vunpack.c.h.b16 %v65
  %v358 = vunpack.c.l.b16 %v66
  %v359 = vunpack.c.h.b16 %v66
  %v360 = vunpack.c.l.b16 %v67
  %v361 = vunpack.c.h.b16 %v67
  %v362 = vunpack.c.l.b16 %v68
  %v363 = vunpack.c.h.b16 %v68
  %v364 = vunpack.c.l.b16 %v69
  %v365 = vunpack.c.h.b16 %v69
  %v366 = vunpack.c.l.b16 %v70
  %v367 = vunpack.c.h.b16 %v70
  %v368 = vunpack.c.l.b16 %v71
  %v369 = vunpack.c.h.b16 %v71
  %v370 = vunpack.c.l.b16 %v72
  %v371 = vunpack.c.h.b16 %v72
  %v372 = vunpack.c.l.b16 %v73
  %v373 = vunpack.c.h.b16 %v73
  %v374 = vunpack.c.l.b16 %v74
  %v375 = vunpack.c.h.b16 %v74
  %v376 = vunpack.c.l.b16 %v75
  %v377 = vunpack.c.h.b16 %v75
  %v378 = vunpack.c.l.b16 %v76
  %v379 = vunpack.c.h.b16 %v76
  %v380 = vunpack.c.l.b16 %v77
  %v381 = vunpack.c.h.b16 %v77
  %v382 = vunpack.c.l.b16 %v78
  %v383 = vunpack.c.h.b16 %v78
  %v384 = vunpack.c.l.b16 %v79
  %v385 = vunpack.c.h.b16 %v79
  %v386 = vunpack.c.l.b16 %v80
  %v387 = vunpack.c.h.b16 %v80
  %v388 = vunpack.c.l.b16 %v81
  %v389 = vunpack.c.h.b16 %v81
  %v390 = vunpack.c.l.b16 %v82
  %v391 = vunpack.c.h.b16 %v82
  %v392 = vunpack.c.l.b16 %v83
  %v393 = vunpack.c.h.b16 %v83
  %v394 = vunpack.c.l.b16 %v84
  %v395 = vunpack.c.h.b16 %v84
  %v396 = vunpack.c.l.b16 %v85
  %v397 = vunpack.c.h.b16 %v85
  %v398 = vunpack.c.l.b16 %v86
  %v399 = vunpack.c.h.b16 %v86
  %v400 = vunpack.c.l.b16 %v87
  %v401 = vunpack.c.h.b16 %v87
  %v402 = vunpack.c.l.b16 %v88
  %v403 = vunpack.c.h.b16 %v88
  %v404 = vunpack.c.l.b16 %v89
  %v405 = vunpack.c.h.b16 %v89
  %v406 = vunpack.c.l.b16 %v90
  %v407 = vunpack.c.h.b16 %v90
  %v408 = vunpack.c.l.b16 %v91
  %v409 = vunpack.c.h.b16 %v91
  %v410 = vunpack.c.l.b16 %v92
  %v411 = vunpack.c.h.b16 %v92
  %v412 = vunpack.c.l.b16 %v93
  %v413 = vunpack.c.h.b16 %v93
  %v414 = vunpack.c.l.b16 %v94
  %v415 = vunpack.c.h.b16 %v94
  %v416 = vunpack.c.l.b16 %v95
  %v417 = vunpack.c.h.b16 %v95
  %v418 = vunpack.c.l.b16 %v96
  %v419 = vunpack.c.h.b16 %v96
  %v420 = vunpack.c.l.b16 %v97
  %v421 = vunpack.c.h.b16 %v97
  %v422 = vunpack.c.l.b16 %v98
  %v423 = vunpack.c.h.b16 %v98
  %v424 = vunpack.c.l.b16 %v99
  %v425 = vunpack.c.h.b16 %v99
  %v426 = vunpack.c.l.b16 %v100
  %v427 = vunpack.c.h.b16 %v100
  %v428 = vunpack.c.l.b16 %v101
  %v429 = vunpack.c.h.b16 %v101
  %v430 = vunpack.c.l.b16 %v102
  %v431 = vunpack.c.h.b16 %v102
  %v432 = vunpack.c.l.b16 %v103
  %v433 = vunpack.c.h.b16 %v103
  %v434 = vunpack.c.l.b16 %v104
  %v435 = vunpack.c.h.b16 %v104
  %v436 = vunpack.c.l.b16 %v105
  %v437 = vunpack.c.h.b16 %v105
  %v438 = vunpack.c.l.b16 %v106
  %v439 = vunpack.c.h.b16 %v106
  %v440 = vunpack.c.l.b16 %v107
  %v441 = vunpack.c.h.b16 %v107
  %v442 = vunpack.c.l.b16 %v108
  %v443 = vunpack.c.h.b16 %v108
  %v444 = vunpack.c.l.b16 %v109
  %v445 = vunpack.c.h.b16 %v109
  %v446 = vunpack.c.l.b16 %v110
  %v447 = vunpack.c.h.b16 %v110
  %v448 = vunpack.c.l.b16 %v111
  %v449 = vunpack.c.h.b16 %v111
  %v450 = vunpack.c.l.b16 %v112
  %v451 = vunpack.c.h.b16 %v112
  %v452 = vunpack.c.l.b16 %v113
  %v453 = vunpack.c.h.b16 %v113
  %v454 = vunpack.c.l.b16 %v114
  %v455 = vunpack.c.h.b16 %v114
  %v456 = vunpack.c.l.b16 %v115
  %v457 = vunpack.c.h.b16 %v115
  %v458 = vunpack.c.l.b16 %v116
  %v459 = vunpack.c.h.b16 %v116
  %v460 = vunpack.c.l.b16 %v117
  %v461 = vunpack.c.h.b16 %v117
  %v462 = vpack.c.b16 %v256, %v254
  %v463 = vpack.c.b16 %v257, %v255
  %v464 = vpack.c.b16 %v260, %v258
  %v465 = vpack.c.b16 %v261, %v259
  %v466 = vpack.c.b16 %v264, %v262
  %v467 = vpack.c.b16 %v265, %v263
  %v468 = vpack.c.b16 %v268, %v266
  %v469 = vpack.c.b16 %v269, %v267
  %v470 = vpack.c.b16 %v272, %v270
  %v471 = vpack.c.b16 %v273, %v271
  %v472 = vpack.c.b16 %v276, %v274
  %v473 = vpack.c.b16 %v277, %v275
  %v474 = vpack.c.b16 %v280, %v278
  %v475 = vpack.c.b16 %v281, %v279
  %v476 = vpack.c.b16 %v284, %v282
  %v477 = vpack.c.b16 %v285, %v283
  %v478 = vpack.c.b16 %v288, %v286
  %v479 = vpack.c.b16 %v289, %v287
  %v480 = vpack.c.b16 %v292, %v290
  %v481 = vpack.c.b16 %v293, %v291
  %v482 = vpack.c.b16 %v296, %v294
  %v483 = vpack.c.b16 %v297, %v295
  %v484 = vpack.c.b16 %v300, %v298
  %v485 = vpack.c.b16 %v301, %v299
  %v486 = vpack.c.b16 %v304, %v302
  %v487 = vpack.c.b16 %v305, %v303
  %v488 = vpack.c.b16 %v308, %v306
  %v489 = vpack.c.b16 %v309, %v307
  %v490 = vpack.c.b16 %v312, %v310
  %v491 = vpack.c.b16 %v313, %v311
  %v492 = vpack.c.b16 %v316, %v314
  %v493 = vpack.c.b16 %v317, %v315
  %v494 = vpack.c.b16 %v320, %v318
  %v495 = vpack.c.b16 %v321, %v319
  %v496 = vpack.c.b16 %v324, %v322
  %v497 = vpack.c.b16 %v325, %v323
  %v498 = vpack.c.b16 %v328, %v326
  %v499 = vpack.c.b16 %v329, %v327
  %v500 = vpack.c.b16 %v332, %v330
  %v501 = vpack.c.b16 %v333, %v331
  %v502 = vpack.c.b16 %v336, %v334
  %v503 = vpack.c.b16 %v337, %v335
  %v504 = vpack.c.b16 %v340, %v338
  %v505 = vpack.c.b16 %v341, %v339
  %v506 = vpack.c.b16 %v344, %v342
  %v507 = vpack.c.b16 %v345, %v343
  %v508 = vpack.c.b16 %v348, %v346
  %v509 = vpack.c.b16 %v349, %v347
  %v510 = vpack.c.b16 %v352, %v350
  %v511 = vpack.c.b16 %v353, %v351
  %v512 = vpack.c.b16 %v356, %v354
  %v513 = vpack.c.b16 %v357, %v355
  %v514 = vpack.c.b16 %v360, %v358
  %v515 = vpack.c.b16 %v361, %v359
  %v516 = vpack.c.b16 %v364, %v362
  %v517 = vpack.c.b16 %v365, %v363
  %v518 = vpack.c.b16 %v368, %v366
  %v519 = vpack.c.b16 %v369, %v367
  %v520 = vpack.c.b16 %v372, %v370
  %v521 = vpack.c.b16 %v373, %v371
  %v522 = vpack.c.b16 %v376, %v374
  %v523 = vpack.c.b16 %v377, %v375
  %v524 = vpack.c.b16 %v380, %v378
  %v525 = vpack.c.b16 %v381, %v379
  %v526 = vpack.c.b16 %v384, %v382
  %v527 = vpack.c.b16 %v385, %v383
  %v528 = vpack.c.b16 %v388, %v386
  %v529 = vpack.c.b16 %v389, %v387
  %v530 = vpack.c.b16 %v392, %v390
  %v531 = vpack.c.b16 %v393, %v391
  %v532 = vpack.c.b16 %v396, %v394
  %v533 = vpack.c.b16 %v397, %v395
  %v534 = vpack.c.b16 %v400, %v398
  %v535 = vpack.c.b16 %v401, %v399
  %v536 = vpack.c.b16 %v404, %v402
  %v537 = vpack.c.b16 %v405, %v403
  %v538 = vpack.c.b16 %v408, %v406
  %v539 = vpack.c.b16 %v409, %v407
  %v540 = vpack.c.b16 %v412, %v410
  %v541 = vpack.c.b16 %v413, %v411
  %v542 = vpack.c.b16 %v416, %v414
  %v543 = vpack.c.b16 %v417, %v415
  %v544 = vpack.c.b16 %v420, %v418
  %v545 = vpack.c.b16 %v421, %v419
  %v546 = vpack.c.b16 %v424, %v422
  %v547 = vpack.c.b16 %v425, %v423
  %v548 = vpack.c.b16 %v428, %v426
  %v549 = vpack.c.b16 %v429, %v427
  %v550 = vpack.c.b16 %v432, %v430
  %v551 = vpack.c.b16 %v433, %v431
  %v552 = vpack.c.b16 %v436, %v434
  %v553 = vpack.c.b16 %v437, %v435
  %v554 = vpack.c.b16 %v440, %v438
  %v555 = vpack.c.b16 %v441, %v439
  %v556 = vpack.c.b16 %v444, %v442
  %v557 = vpack.c.b16 %v445, %v443
  %v558 = vpack.c.b16 %v448, %v446
  %v559 = vpack.c.b16 %v449, %v447
  %v560 = vpack.c.b16 %v452, %v450
  %v561 = vpack.c.b16 %v453, %v451
  %v562 = vpack.c.b16 %v456, %v454
  %v563 = vpack.c.b16 %v457, %v455
  %v564 = vpack.c.b16 %v460, %v458
  %v565 = vpack.c.b16 %v461, %v459
  %v702 = vunpack.c.l.b16 %v118
  %v703 = vunpack.c.l.b16 %v119
  %v704 = vunpack.c.l.b16 %v120
  %v705 = vunpack.c.l.b16 %v121
  %v706 = vunpack.c.l.b16 %v122
  %v707 = vunpack.c.l.b16 %v123
  %v708 = vunpack.c.l.b16 %v124
  %v709 = vunpack.c.l.b16 %v125
  %v710 = vunpack.c.l.b16 %v126
  %v711 = vunpack.c.l.b16 %v127
  %v712 = vunpack.c.l.b16 %v128
  %v713 = vunpack.c.l.b16 %v129
  %v714 = vunpack.c.l.b16 %v130
  %v715 = vunpack.c.l.b16 %v131
  %v716 = vunpack.c.l.b16 %v132
  %v717 = vunpack.c.l.b16 %v133
  %v718 = vunpack.c.l.b16 %v134
  %v719 = vunpack.c.l.b16 %v135
  %v720 = vunpack.c.l.b16 %v136
  %v721 = vunpack.c.l.b16 %v137
  %v722 = vunpack.c.l.b16 %v138
  %v723 = vunpack.c.l.b16 %v139
  %v724 = vunpack.c.l.b16 %v140
  %v725 = vunpack.c.l.b16 %v141
  %v726 = vunpack.c.l.b16 %v142
  %v727 = vunpack.c.l.b16 %v143
  %v728 = vunpack.c.l.b16 %v144
  %v729 = vunpack.c.l.b16 %v145
  %v730 = vunpack.c.l.b16 %v146
  %v731 = vunpack.c.l.b16 %v147
  %v732 = vunpack.c.l.b16 %v148
  %v733 = vunpack.c.l.b16 %v149
  %v734 = vpack.c.b16 %v703, %v702
  %v735 = vpack.c.b16 %v705, %v704
  %v736 = vpack.c.b16 %v707, %v706
  %v737 = vpack.c.b16 %v709, %v708
  %v738 = vpack.c.b16 %v711, %v710
  %v739 = vpack.c.b16 %v713, %v712
  %v740 = vpack.c.b16 %v715, %v714
  %v741 = vpack.c.b16 %v717, %v716
  %v742 = vpack.c.b16 %v719, %v718
  %v743 = vpack.c.b16 %v721, %v720
  %v744 = vpack.c.b16 %v723, %v722
  %v745 = vpack.c.b16 %v725, %v724
  %v746 = vpack.c.b16 %v727, %v726
  %v747 = vpack.c.b16 %v729, %v728
  %v748 = vpack.c.b16 %v731, %v730
  %v749 = vpack.c.b16 %v733, %v732
  %766 = vmatpush.bf16.msra.mxu0 %v741
  %767 = vmatpush.bf16.msra.mxu0 %v740
  %768 = vmatpush.bf16.msra.mxu0 %v739
  %769 = vmatpush.bf16.msra.mxu0 %v738
  %770 = vmatpush.bf16.msra.mxu0 %v737
  %771 = vmatpush.bf16.msra.mxu0 %v736
  %772 = vmatpush.bf16.msra.mxu0 %v735
  %773 = vmatpush.bf16.msra.mxu0 %v734
  %774 = vmatmul.bf16.gmra.mxu0 %v462
  %v775 = vpop.f32.mrf.mxu0
  %v776 = vadd.f32 0.0, %v775
  %v777 = vpop.f32.mrf.mxu0
  %v778 = vadd.f32 0.0, %v777
  %779 = vmatmul.bf16.gmra.mxu0 %v464
  %v780 = vpop.f32.mrf.mxu0
  %v781 = vadd.f32 0.0, %v780
  %v782 = vpop.f32.mrf.mxu0
  %v783 = vadd.f32 0.0, %v782
  %784 = vmatmul.bf16.gmra.mxu0 %v466
  %v785 = vpop.f32.mrf.mxu0
  %v786 = vadd.f32 0.0, %v785
  %v787 = vpop.f32.mrf.mxu0
  %v788 = vadd.f32 0.0, %v787
  %789 = vmatmul.bf16.gmra.mxu0 %v468
  %v790 = vpop.f32.mrf.mxu0
  %v791 = vadd.f32 0.0, %v790
  %v792 = vpop.f32.mrf.mxu0
  %v793 = vadd.f32 0.0, %v792
  %794 = vmatmul.bf16.gmra.mxu0 %v470
  %v795 = vpop.f32.mrf.mxu0
  %v796 = vadd.f32 0.0, %v795
  %v797 = vpop.f32.mrf.mxu0
  %v798 = vadd.f32 0.0, %v797
  %799 = vmatmul.bf16.gmra.mxu0 %v472
  %v800 = vpop.f32.mrf.mxu0
  %v801 = vadd.f32 0.0, %v800
  %v802 = vpop.f32.mrf.mxu0
  %v803 = vadd.f32 0.0, %v802
  %804 = vmatmul.bf16.gmra.mxu0 %v474
  %v805 = vpop.f32.mrf.mxu0
  %v806 = vadd.f32 0.0, %v805
  %v807 = vpop.f32.mrf.mxu0
  %v808 = vadd.f32 0.0, %v807
  %809 = vmatmul.bf16.gmra.mxu0 %v476
  %v810 = vpop.f32.mrf.mxu0
  %v811 = vadd.f32 0.0, %v810
  %v812 = vpop.f32.mrf.mxu0
  %v813 = vadd.f32 0.0, %v812
  %814 = vmatmul.bf16.gmra.mxu0 %v478
  %v815 = vpop.f32.mrf.mxu0
  %v816 = vadd.f32 0.0, %v815
  %v817 = vpop.f32.mrf.mxu0
  %v818 = vadd.f32 0.0, %v817
  %819 = vmatmul.bf16.gmra.mxu0 %v480
  %v820 = vpop.f32.mrf.mxu0
  %v821 = vadd.f32 0.0, %v820
  %v822 = vpop.f32.mrf.mxu0
  %v823 = vadd.f32 0.0, %v822
  %824 = vmatmul.bf16.gmra.mxu0 %v482
  %v825 = vpop.f32.mrf.mxu0
  %v826 = vadd.f32 0.0, %v825
  %v827 = vpop.f32.mrf.mxu0
  %v828 = vadd.f32 0.0, %v827
  %829 = vmatmul.bf16.gmra.mxu0 %v484
  %v830 = vpop.f32.mrf.mxu0
  %v831 = vadd.f32 0.0, %v830
  %v832 = vpop.f32.mrf.mxu0
  %v833 = vadd.f32 0.0, %v832
  %834 = vmatmul.bf16.gmra.mxu0 %v486
  %v835 = vpop.f32.mrf.mxu0
  %v836 = vadd.f32 0.0, %v835
  %v837 = vpop.f32.mrf.mxu0
  %v838 = vadd.f32 0.0, %v837
  %839 = vmatmul.bf16.gmra.mxu0 %v488
  %v840 = vpop.f32.mrf.mxu0
  %v841 = vadd.f32 0.0, %v840
  %v842 = vpop.f32.mrf.mxu0
  %v843 = vadd.f32 0.0, %v842
  %844 = vmatmul.bf16.gmra.mxu0 %v490
  %v845 = vpop.f32.mrf.mxu0
  %v846 = vadd.f32 0.0, %v845
  %v847 = vpop.f32.mrf.mxu0
  %v848 = vadd.f32 0.0, %v847
  %849 = vmatmul.bf16.gmra.mxu0 %v492
  %v850 = vpop.f32.mrf.mxu0
  %v851 = vadd.f32 0.0, %v850
  %v852 = vpop.f32.mrf.mxu0
  %v853 = vadd.f32 0.0, %v852
  %854 = vmatmul.bf16.gmra.mxu0 %v494
  %v855 = vpop.f32.mrf.mxu0
  %v856 = vadd.f32 0.0, %v855
  %v857 = vpop.f32.mrf.mxu0
  %v858 = vadd.f32 0.0, %v857
  %859 = vmatmul.bf16.gmra.mxu0 %v496
  %v860 = vpop.f32.mrf.mxu0
  %v861 = vadd.f32 0.0, %v860
  %v862 = vpop.f32.mrf.mxu0
  %v863 = vadd.f32 0.0, %v862
  %864 = vmatmul.bf16.gmra.mxu0 %v498
  %v865 = vpop.f32.mrf.mxu0
  %v866 = vadd.f32 0.0, %v865
  %v867 = vpop.f32.mrf.mxu0
  %v868 = vadd.f32 0.0, %v867
  %869 = vmatmul.bf16.gmra.mxu0 %v500
  %v870 = vpop.f32.mrf.mxu0
  %v871 = vadd.f32 0.0, %v870
  %v872 = vpop.f32.mrf.mxu0
  %v873 = vadd.f32 0.0, %v872
  %874 = vmatmul.bf16.gmra.mxu0 %v502
  %v875 = vpop.f32.mrf.mxu0
  %v876 = vadd.f32 0.0, %v875
  %v877 = vpop.f32.mrf.mxu0
  %v878 = vadd.f32 0.0, %v877
  %879 = vmatmul.bf16.gmra.mxu0 %v504
  %v880 = vpop.f32.mrf.mxu0
  %v881 = vadd.f32 0.0, %v880
  %v882 = vpop.f32.mrf.mxu0
  %v883 = vadd.f32 0.0, %v882
  %884 = vmatmul.bf16.gmra.mxu0 %v506
  %v885 = vpop.f32.mrf.mxu0
  %v886 = vadd.f32 0.0, %v885
  %v887 = vpop.f32.mrf.mxu0
  %v888 = vadd.f32 0.0, %v887
  %889 = vmatmul.bf16.gmra.mxu0 %v508
  %v890 = vpop.f32.mrf.mxu0
  %v891 = vadd.f32 0.0, %v890
  %v892 = vpop.f32.mrf.mxu0
  %v893 = vadd.f32 0.0, %v892
  %894 = vmatmul.bf16.gmra.mxu0 %v510
  %v895 = vpop.f32.mrf.mxu0
  %v896 = vadd.f32 0.0, %v895
  %v897 = vpop.f32.mrf.mxu0
  %v898 = vadd.f32 0.0, %v897
  %899 = vmatmul.bf16.gmra.mxu0 %v512
  %v900 = vpop.f32.mrf.mxu0
  %v901 = vadd.f32 0.0, %v900
  %v902 = vpop.f32.mrf.mxu0
  %v903 = vadd.f32 0.0, %v902
  %904 = vmatmul.bf16.gmra.mxu0 %v514
  %v905 = vpop.f32.mrf.mxu0
  %v906 = vadd.f32 0.0, %v905
  %v907 = vpop.f32.mrf.mxu0
  %v908 = vadd.f32 0.0, %v907
  %909 = vmatmul.bf16.gmra.mxu0 %v516
  %v910 = vpop.f32.mrf.mxu0
  %v911 = vadd.f32 0.0, %v910
  %v912 = vpop.f32.mrf.mxu0
  %v913 = vadd.f32 0.0, %v912
  %914 = vmatmul.bf16.gmra.mxu0 %v518
  %v915 = vpop.f32.mrf.mxu0
  %v916 = vadd.f32 0.0, %v915
  %v917 = vpop.f32.mrf.mxu0
  %v918 = vadd.f32 0.0, %v917
  %919 = vmatmul.bf16.gmra.mxu0 %v520
  %v920 = vpop.f32.mrf.mxu0
  %v921 = vadd.f32 0.0, %v920
  %v922 = vpop.f32.mrf.mxu0
  %v923 = vadd.f32 0.0, %v922
  %924 = vmatmul.bf16.gmra.mxu0 %v522
  %v925 = vpop.f32.mrf.mxu0
  %v926 = vadd.f32 0.0, %v925
  %v927 = vpop.f32.mrf.mxu0
  %v928 = vadd.f32 0.0, %v927
  %929 = vmatmul.bf16.gmra.mxu0 %v524
  %v930 = vpop.f32.mrf.mxu0
  %v931 = vadd.f32 0.0, %v930
  %v932 = vpop.f32.mrf.mxu0
  %v933 = vadd.f32 0.0, %v932
  %934 = vmatmul.bf16.gmra.mxu0 %v526
  %v935 = vpop.f32.mrf.mxu0
  %v936 = vadd.f32 0.0, %v935
  %v937 = vpop.f32.mrf.mxu0
  %v938 = vadd.f32 0.0, %v937
  %939 = vmatmul.bf16.gmra.mxu0 %v528
  %v940 = vpop.f32.mrf.mxu0
  %v941 = vadd.f32 0.0, %v940
  %v942 = vpop.f32.mrf.mxu0
  %v943 = vadd.f32 0.0, %v942
  %944 = vmatmul.bf16.gmra.mxu0 %v530
  %v945 = vpop.f32.mrf.mxu0
  %v946 = vadd.f32 0.0, %v945
  %v947 = vpop.f32.mrf.mxu0
  %v948 = vadd.f32 0.0, %v947
  %949 = vmatmul.bf16.gmra.mxu0 %v532
  %v950 = vpop.f32.mrf.mxu0
  %v951 = vadd.f32 0.0, %v950
  %v952 = vpop.f32.mrf.mxu0
  %v953 = vadd.f32 0.0, %v952
  %954 = vmatmul.bf16.gmra.mxu0 %v534
  %v955 = vpop.f32.mrf.mxu0
  %v956 = vadd.f32 0.0, %v955
  %v957 = vpop.f32.mrf.mxu0
  %v958 = vadd.f32 0.0, %v957
  %959 = vmatmul.bf16.gmra.mxu0 %v536
  %v960 = vpop.f32.mrf.mxu0
  %v961 = vadd.f32 0.0, %v960
  %v962 = vpop.f32.mrf.mxu0
  %v963 = vadd.f32 0.0, %v962
  %964 = vmatmul.bf16.gmra.mxu0 %v538
  %v965 = vpop.f32.mrf.mxu0
  %v966 = vadd.f32 0.0, %v965
  %v967 = vpop.f32.mrf.mxu0
  %v968 = vadd.f32 0.0, %v967
  %969 = vmatmul.bf16.gmra.mxu0 %v540
  %v970 = vpop.f32.mrf.mxu0
  %v971 = vadd.f32 0.0, %v970
  %v972 = vpop.f32.mrf.mxu0
  %v973 = vadd.f32 0.0, %v972
  %974 = vmatmul.bf16.gmra.mxu0 %v542
  %v975 = vpop.f32.mrf.mxu0
  %v976 = vadd.f32 0.0, %v975
  %v977 = vpop.f32.mrf.mxu0
  %v978 = vadd.f32 0.0, %v977
  %979 = vmatmul.bf16.gmra.mxu0 %v544
  %v980 = vpop.f32.mrf.mxu0
  %v981 = vadd.f32 0.0, %v980
  %v982 = vpop.f32.mrf.mxu0
  %v983 = vadd.f32 0.0, %v982
  %984 = vmatmul.bf16.gmra.mxu0 %v546
  %v985 = vpop.f32.mrf.mxu0
  %v986 = vadd.f32 0.0, %v985
  %v987 = vpop.f32.mrf.mxu0
  %v988 = vadd.f32 0.0, %v987
  %989 = vmatmul.bf16.gmra.mxu0 %v548
  %v990 = vpop.f32.mrf.mxu0
  %v991 = vadd.f32 0.0, %v990
  %v992 = vpop.f32.mrf.mxu0
  %v993 = vadd.f32 0.0, %v992
  %994 = vmatmul.bf16.gmra.mxu0 %v550
  %v995 = vpop.f32.mrf.mxu0
  %v996 = vadd.f32 0.0, %v995
  %v997 = vpop.f32.mrf.mxu0
  %v998 = vadd.f32 0.0, %v997
  %999 = vmatmul.bf16.gmra.mxu0 %v552
  %v1000 = vpop.f32.mrf.mxu0
  %v1001 = vadd.f32 0.0, %v1000
  %v1002 = vpop.f32.mrf.mxu0
  %v1003 = vadd.f32 0.0, %v1002
  %1004 = vmatmul.bf16.gmra.mxu0 %v554
  %v1005 = vpop.f32.mrf.mxu0
  %v1006 = vadd.f32 0.0, %v1005
  %v1007 = vpop.f32.mrf.mxu0
  %v1008 = vadd.f32 0.0, %v1007
  %1009 = vmatmul.bf16.gmra.mxu0 %v556
  %v1010 = vpop.f32.mrf.mxu0
  %v1011 = vadd.f32 0.0, %v1010
  %v1012 = vpop.f32.mrf.mxu0
  %v1013 = vadd.f32 0.0, %v1012
  %1014 = vmatmul.bf16.gmra.mxu0 %v558
  %v1015 = vpop.f32.mrf.mxu0
  %v1016 = vadd.f32 0.0, %v1015
  %v1017 = vpop.f32.mrf.mxu0
  %v1018 = vadd.f32 0.0, %v1017
  %1019 = vmatmul.bf16.gmra.mxu0 %v560
  %v1020 = vpop.f32.mrf.mxu0
  %v1021 = vadd.f32 0.0, %v1020
  %v1022 = vpop.f32.mrf.mxu0
  %v1023 = vadd.f32 0.0, %v1022
  %1024 = vmatmul.bf16.gmra.mxu0 %v562
  %v1025 = vpop.f32.mrf.mxu0
  %v1026 = vadd.f32 0.0, %v1025
  %v1027 = vpop.f32.mrf.mxu0
  %v1028 = vadd.f32 0.0, %v1027
  %1029 = vmatmul.bf16.gmra.mxu0 %v564
  %v1030 = vpop.f32.mrf.mxu0
  %v1031 = vadd.f32 0.0, %v1030
  %v1032 = vpop.f32.mrf.mxu0
  %v1033 = vadd.f32 0.0, %v1032
  %1034 = vdwg.mxu0
  %1035 = vmatpush.bf16.msra.mxu0 %v749
  %1036 = vmatpush.bf16.msra.mxu0 %v748
  %1037 = vmatpush.bf16.msra.mxu0 %v747
  %1038 = vmatpush.bf16.msra.mxu0 %v746
  %1039 = vmatpush.bf16.msra.mxu0 %v745
  %1040 = vmatpush.bf16.msra.mxu0 %v744
  %1041 = vmatpush.bf16.msra.mxu0 %v743
  %1042 = vmatpush.bf16.msra.mxu0 %v742
  %1043 = vmatmul.bf16.gmra.mxu0 %v463
  %v1044 = vpop.f32.mrf.mxu0
  %v1045 = vadd.f32 %v776, %v1044
  %v1046 = vpop.f32.mrf.mxu0
  %v1047 = vadd.f32 %v778, %v1046
  %1048 = vmatmul.bf16.gmra.mxu0 %v465
  %v1049 = vpop.f32.mrf.mxu0
  %v1050 = vadd.f32 %v781, %v1049
  %v1051 = vpop.f32.mrf.mxu0
  %v1052 = vadd.f32 %v783, %v1051
  %1053 = vmatmul.bf16.gmra.mxu0 %v467
  %v1054 = vpop.f32.mrf.mxu0
  %v1055 = vadd.f32 %v786, %v1054
  %v1056 = vpop.f32.mrf.mxu0
  %v1057 = vadd.f32 %v788, %v1056
  %1058 = vmatmul.bf16.gmra.mxu0 %v469
  %v1059 = vpop.f32.mrf.mxu0
  %v1060 = vadd.f32 %v791, %v1059
  %v1061 = vpop.f32.mrf.mxu0
  %v1062 = vadd.f32 %v793, %v1061
  %1063 = vmatmul.bf16.gmra.mxu0 %v471
  %v1064 = vpop.f32.mrf.mxu0
  %v1065 = vadd.f32 %v796, %v1064
  %v1066 = vpop.f32.mrf.mxu0
  %v1067 = vadd.f32 %v798, %v1066
  %1068 = vmatmul.bf16.gmra.mxu0 %v473
  %v1069 = vpop.f32.mrf.mxu0
  %v1070 = vadd.f32 %v801, %v1069
  %v1071 = vpop.f32.mrf.mxu0
  %v1072 = vadd.f32 %v803, %v1071
  %1073 = vmatmul.bf16.gmra.mxu0 %v475
  %v1074 = vpop.f32.mrf.mxu0
  %v1075 = vadd.f32 %v806, %v1074
  %v1076 = vpop.f32.mrf.mxu0
  %v1077 = vadd.f32 %v808, %v1076
  %1078 = vmatmul.bf16.gmra.mxu0 %v477
  %v1079 = vpop.f32.mrf.mxu0
  %v1080 = vadd.f32 %v811, %v1079
  %v1081 = vpop.f32.mrf.mxu0
  %v1082 = vadd.f32 %v813, %v1081
  %1083 = vmatmul.bf16.gmra.mxu0 %v479
  %v1084 = vpop.f32.mrf.mxu0
  %v1085 = vadd.f32 %v816, %v1084
  %v1086 = vpop.f32.mrf.mxu0
  %v1087 = vadd.f32 %v818, %v1086
  %1088 = vmatmul.bf16.gmra.mxu0 %v481
  %v1089 = vpop.f32.mrf.mxu0
  %v1090 = vadd.f32 %v821, %v1089
  %v1091 = vpop.f32.mrf.mxu0
  %v1092 = vadd.f32 %v823, %v1091
  %1093 = vmatmul.bf16.gmra.mxu0 %v483
  %v1094 = vpop.f32.mrf.mxu0
  %v1095 = vadd.f32 %v826, %v1094
  %v1096 = vpop.f32.mrf.mxu0
  %v1097 = vadd.f32 %v828, %v1096
  %1098 = vmatmul.bf16.gmra.mxu0 %v485
  %v1099 = vpop.f32.mrf.mxu0
  %v1100 = vadd.f32 %v831, %v1099
  %v1101 = vpop.f32.mrf.mxu0
  %v1102 = vadd.f32 %v833, %v1101
  %1103 = vmatmul.bf16.gmra.mxu0 %v487
  %v1104 = vpop.f32.mrf.mxu0
  %v1105 = vadd.f32 %v836, %v1104
  %v1106 = vpop.f32.mrf.mxu0
  %v1107 = vadd.f32 %v838, %v1106
  %1108 = vmatmul.bf16.gmra.mxu0 %v489
  %v1109 = vpop.f32.mrf.mxu0
  %v1110 = vadd.f32 %v841, %v1109
  %v1111 = vpop.f32.mrf.mxu0
  %v1112 = vadd.f32 %v843, %v1111
  %1113 = vmatmul.bf16.gmra.mxu0 %v491
  %v1114 = vpop.f32.mrf.mxu0
  %v1115 = vadd.f32 %v846, %v1114
  %v1116 = vpop.f32.mrf.mxu0
  %v1117 = vadd.f32 %v848, %v1116
  %1118 = vmatmul.bf16.gmra.mxu0 %v493
  %v1119 = vpop.f32.mrf.mxu0
  %v1120 = vadd.f32 %v851, %v1119
  %v1121 = vpop.f32.mrf.mxu0
  %v1122 = vadd.f32 %v853, %v1121
  %1123 = vmatmul.bf16.gmra.mxu0 %v495
  %v1124 = vpop.f32.mrf.mxu0
  %v1125 = vadd.f32 %v856, %v1124
  %v1126 = vpop.f32.mrf.mxu0
  %v1127 = vadd.f32 %v858, %v1126
  %1128 = vmatmul.bf16.gmra.mxu0 %v497
  %v1129 = vpop.f32.mrf.mxu0
  %v1130 = vadd.f32 %v861, %v1129
  %v1131 = vpop.f32.mrf.mxu0
  %v1132 = vadd.f32 %v863, %v1131
  %1133 = vmatmul.bf16.gmra.mxu0 %v499
  %v1134 = vpop.f32.mrf.mxu0
  %v1135 = vadd.f32 %v866, %v1134
  %v1136 = vpop.f32.mrf.mxu0
  %v1137 = vadd.f32 %v868, %v1136
  %1138 = vmatmul.bf16.gmra.mxu0 %v501
  %v1139 = vpop.f32.mrf.mxu0
  %v1140 = vadd.f32 %v871, %v1139
  %v1141 = vpop.f32.mrf.mxu0
  %v1142 = vadd.f32 %v873, %v1141
  %1143 = vmatmul.bf16.gmra.mxu0 %v503
  %v1144 = vpop.f32.mrf.mxu0
  %v1145 = vadd.f32 %v876, %v1144
  %v1146 = vpop.f32.mrf.mxu0
  %v1147 = vadd.f32 %v878, %v1146
  %1148 = vmatmul.bf16.gmra.mxu0 %v505
  %v1149 = vpop.f32.mrf.mxu0
  %v1150 = vadd.f32 %v881, %v1149
  %v1151 = vpop.f32.mrf.mxu0
  %v1152 = vadd.f32 %v883, %v1151
  %1153 = vmatmul.bf16.gmra.mxu0 %v507
  %v1154 = vpop.f32.mrf.mxu0
  %v1155 = vadd.f32 %v886, %v1154
  %v1156 = vpop.f32.mrf.mxu0
  %v1157 = vadd.f32 %v888, %v1156
  %1158 = vmatmul.bf16.gmra.mxu0 %v509
  %v1159 = vpop.f32.mrf.mxu0
  %v1160 = vadd.f32 %v891, %v1159
  %v1161 = vpop.f32.mrf.mxu0
  %v1162 = vadd.f32 %v893, %v1161
  %1163 = vmatmul.bf16.gmra.mxu0 %v511
  %v1164 = vpop.f32.mrf.mxu0
  %v1165 = vadd.f32 %v896, %v1164
  %v1166 = vpop.f32.mrf.mxu0
  %v1167 = vadd.f32 %v898, %v1166
  %1168 = vmatmul.bf16.gmra.mxu0 %v513
  %v1169 = vpop.f32.mrf.mxu0
  %v1170 = vadd.f32 %v901, %v1169
  %v1171 = vpop.f32.mrf.mxu0
  %v1172 = vadd.f32 %v903, %v1171
  %1173 = vmatmul.bf16.gmra.mxu0 %v515
  %v1174 = vpop.f32.mrf.mxu0
  %v1175 = vadd.f32 %v906, %v1174
  %v1176 = vpop.f32.mrf.mxu0
  %v1177 = vadd.f32 %v908, %v1176
  %1178 = vmatmul.bf16.gmra.mxu0 %v517
  %v1179 = vpop.f32.mrf.mxu0
  %v1180 = vadd.f32 %v911, %v1179
  %v1181 = vpop.f32.mrf.mxu0
  %v1182 = vadd.f32 %v913, %v1181
  %1183 = vmatmul.bf16.gmra.mxu0 %v519
  %v1184 = vpop.f32.mrf.mxu0
  %v1185 = vadd.f32 %v916, %v1184
  %v1186 = vpop.f32.mrf.mxu0
  %v1187 = vadd.f32 %v918, %v1186
  %1188 = vmatmul.bf16.gmra.mxu0 %v521
  %v1189 = vpop.f32.mrf.mxu0
  %v1190 = vadd.f32 %v921, %v1189
  %v1191 = vpop.f32.mrf.mxu0
  %v1192 = vadd.f32 %v923, %v1191
  %1193 = vmatmul.bf16.gmra.mxu0 %v523
  %v1194 = vpop.f32.mrf.mxu0
  %v1195 = vadd.f32 %v926, %v1194
  %v1196 = vpop.f32.mrf.mxu0
  %v1197 = vadd.f32 %v928, %v1196
  %1198 = vmatmul.bf16.gmra.mxu0 %v525
  %v1199 = vpop.f32.mrf.mxu0
  %v1200 = vadd.f32 %v931, %v1199
  %v1201 = vpop.f32.mrf.mxu0
  %v1202 = vadd.f32 %v933, %v1201
  %1203 = vmatmul.bf16.gmra.mxu0 %v527
  %v1204 = vpop.f32.mrf.mxu0
  %v1205 = vadd.f32 %v936, %v1204
  %v1206 = vpop.f32.mrf.mxu0
  %v1207 = vadd.f32 %v938, %v1206
  %1208 = vmatmul.bf16.gmra.mxu0 %v529
  %v1209 = vpop.f32.mrf.mxu0
  %v1210 = vadd.f32 %v941, %v1209
  %v1211 = vpop.f32.mrf.mxu0
  %v1212 = vadd.f32 %v943, %v1211
  %1213 = vmatmul.bf16.gmra.mxu0 %v531
  %v1214 = vpop.f32.mrf.mxu0
  %v1215 = vadd.f32 %v946, %v1214
  %v1216 = vpop.f32.mrf.mxu0
  %v1217 = vadd.f32 %v948, %v1216
  %1218 = vmatmul.bf16.gmra.mxu0 %v533
  %v1219 = vpop.f32.mrf.mxu0
  %v1220 = vadd.f32 %v951, %v1219
  %v1221 = vpop.f32.mrf.mxu0
  %v1222 = vadd.f32 %v953, %v1221
  %1223 = vmatmul.bf16.gmra.mxu0 %v535
  %v1224 = vpop.f32.mrf.mxu0
  %v1225 = vadd.f32 %v956, %v1224
  %v1226 = vpop.f32.mrf.mxu0
  %v1227 = vadd.f32 %v958, %v1226
  %1228 = vmatmul.bf16.gmra.mxu0 %v537
  %v1229 = vpop.f32.mrf.mxu0
  %v1230 = vadd.f32 %v961, %v1229
  %v1231 = vpop.f32.mrf.mxu0
  %v1232 = vadd.f32 %v963, %v1231
  %1233 = vmatmul.bf16.gmra.mxu0 %v539
  %v1234 = vpop.f32.mrf.mxu0
  %v1235 = vadd.f32 %v966, %v1234
  %v1236 = vpop.f32.mrf.mxu0
  %v1237 = vadd.f32 %v968, %v1236
  %1238 = vmatmul.bf16.gmra.mxu0 %v541
  %v1239 = vpop.f32.mrf.mxu0
  %v1240 = vadd.f32 %v971, %v1239
  %v1241 = vpop.f32.mrf.mxu0
  %v1242 = vadd.f32 %v973, %v1241
  %1243 = vmatmul.bf16.gmra.mxu0 %v543
  %v1244 = vpop.f32.mrf.mxu0
  %v1245 = vadd.f32 %v976, %v1244
  %v1246 = vpop.f32.mrf.mxu0
  %v1247 = vadd.f32 %v978, %v1246
  %1248 = vmatmul.bf16.gmra.mxu0 %v545
  %v1249 = vpop.f32.mrf.mxu0
  %v1250 = vadd.f32 %v981, %v1249
  %v1251 = vpop.f32.mrf.mxu0
  %v1252 = vadd.f32 %v983, %v1251
  %1253 = vmatmul.bf16.gmra.mxu0 %v547
  %v1254 = vpop.f32.mrf.mxu0
  %v1255 = vadd.f32 %v986, %v1254
  %v1256 = vpop.f32.mrf.mxu0
  %v1257 = vadd.f32 %v988, %v1256
  %1258 = vmatmul.bf16.gmra.mxu0 %v549
  %v1259 = vpop.f32.mrf.mxu0
  %v1260 = vadd.f32 %v991, %v1259
  %v1261 = vpop.f32.mrf.mxu0
  %v1262 = vadd.f32 %v993, %v1261
  %1263 = vmatmul.bf16.gmra.mxu0 %v551
  %v1264 = vpop.f32.mrf.mxu0
  %v1265 = vadd.f32 %v996, %v1264
  %v1266 = vpop.f32.mrf.mxu0
  %v1267 = vadd.f32 %v998, %v1266
  %1268 = vmatmul.bf16.gmra.mxu0 %v553
  %v1269 = vpop.f32.mrf.mxu0
  %v1270 = vadd.f32 %v1001, %v1269
  %v1271 = vpop.f32.mrf.mxu0
  %v1272 = vadd.f32 %v1003, %v1271
  %1273 = vmatmul.bf16.gmra.mxu0 %v555
  %v1274 = vpop.f32.mrf.mxu0
  %v1275 = vadd.f32 %v1006, %v1274
  %v1276 = vpop.f32.mrf.mxu0
  %v1277 = vadd.f32 %v1008, %v1276
  %1278 = vmatmul.bf16.gmra.mxu0 %v557
  %v1279 = vpop.f32.mrf.mxu0
  %v1280 = vadd.f32 %v1011, %v1279
  %v1281 = vpop.f32.mrf.mxu0
  %v1282 = vadd.f32 %v1013, %v1281
  %1283 = vmatmul.bf16.gmra.mxu0 %v559
  %v1284 = vpop.f32.mrf.mxu0
  %v1285 = vadd.f32 %v1016, %v1284
  %v1286 = vpop.f32.mrf.mxu0
  %v1287 = vadd.f32 %v1018, %v1286
  %1288 = vmatmul.bf16.gmra.mxu0 %v561
  %v1289 = vpop.f32.mrf.mxu0
  %v1290 = vadd.f32 %v1021, %v1289
  %v1291 = vpop.f32.mrf.mxu0
  %v1292 = vadd.f32 %v1023, %v1291
  %1293 = vmatmul.bf16.gmra.mxu0 %v563
  %v1294 = vpop.f32.mrf.mxu0
  %v1295 = vadd.f32 %v1026, %v1294
  %v1296 = vpop.f32.mrf.mxu0
  %v1297 = vadd.f32 %v1028, %v1296
  %1298 = vmatmul.bf16.gmra.mxu0 %v565
  %v1299 = vpop.f32.mrf.mxu0
  %v1300 = vadd.f32 %v1031, %v1299
  %v1301 = vpop.f32.mrf.mxu0
  %v1302 = vadd.f32 %v1033, %v1301
  %1303 = vdwg.mxu0
  %v1304 = vld [vmem:[%s2] sm:$0x1]
  %v1305 = vadd.f32 %v1045, 0.0
  %v1306 = vadd.f32 %v1047, 0.0
  %v1307 = vadd.f32 %v1050, 0.0
  %v1308 = vadd.f32 %v1052, 0.0
  %v1309 = vadd.f32 %v1055, 0.0
  %v1310 = vadd.f32 %v1057, 0.0
  %v1311 = vadd.f32 %v1060, 0.0
  %v1312 = vadd.f32 %v1062, 0.0
  %v1313 = vadd.f32 %v1065, 0.0
  %v1314 = vadd.f32 %v1067, 0.0
  %v1315 = vadd.f32 %v1070, 0.0
  %v1316 = vadd.f32 %v1072, 0.0
  %v1317 = vadd.f32 %v1075, 0.0
  %v1318 = vadd.f32 %v1077, 0.0
  %v1319 = vadd.f32 %v1080, 0.0
  %v1320 = vadd.f32 %v1082, 0.0
  %v1321 = vadd.f32 %v1085, 0.0
  %v1322 = vadd.f32 %v1087, 0.0
  %v1323 = vadd.f32 %v1090, 0.0
  %v1324 = vadd.f32 %v1092, 0.0
  %v1325 = vadd.f32 %v1095, 0.0
  %v1326 = vadd.f32 %v1097, 0.0
  %v1327 = vadd.f32 %v1100, 0.0
  %v1328 = vadd.f32 %v1102, 0.0
  %v1329 = vadd.f32 %v1105, 0.0
  %v1330 = vadd.f32 %v1107, 0.0
  %v1331 = vmax.f32 %v1305, -32.0
  %v1332 = vmax.f32 %v1306, -32.0
  %v1333 = vmax.f32 %v1307, -32.0
  %v1334 = vmax.f32 %v1308, -32.0
  %v1335 = vmax.f32 %v1309, -32.0
  %v1336 = vmax.f32 %v1310, -32.0
  %v1337 = vmax.f32 %v1311, -32.0
  %v1338 = vmax.f32 %v1312, -32.0
  %v1339 = vmax.f32 %v1313, -32.0
  %v1340 = vmax.f32 %v1314, -32.0
  %v1341 = vmax.f32 %v1315, -32.0
  %v1342 = vmax.f32 %v1316, -32.0
  %v1343 = vmax.f32 %v1317, -32.0
  %v1344 = vmax.f32 %v1318, -32.0
  %v1345 = vmax.f32 %v1319, -32.0
  %v1346 = vmax.f32 %v1320, -32.0
  %v1347 = vmax.f32 %v1321, -32.0
  %v1348 = vmax.f32 %v1322, -32.0
  %v1349 = vmax.f32 %v1323, -32.0
  %v1350 = vmax.f32 %v1324, -32.0
  %v1351 = vmax.f32 %v1325, -32.0
  %v1352 = vmax.f32 %v1326, -32.0
  %v1353 = vmax.f32 %v1327, -32.0
  %v1354 = vmax.f32 %v1328, -32.0
  %v1355 = vmax.f32 %v1329, -32.0
  %v1356 = vmax.f32 %v1330, -32.0
  %v1357 = vmin.f32 %v1331, 32.0
  %v1358 = vmin.f32 %v1332, 32.0
  %v1359 = vmin.f32 %v1333, 32.0
  %v1360 = vmin.f32 %v1334, 32.0
  %v1361 = vmin.f32 %v1335, 32.0
  %v1362 = vmin.f32 %v1336, 32.0
  %v1363 = vmin.f32 %v1337, 32.0
  %v1364 = vmin.f32 %v1338, 32.0
  %v1365 = vmin.f32 %v1339, 32.0
  %v1366 = vmin.f32 %v1340, 32.0
  %v1367 = vmin.f32 %v1341, 32.0
  %v1368 = vmin.f32 %v1342, 32.0
  %v1369 = vmin.f32 %v1343, 32.0
  %v1370 = vmin.f32 %v1344, 32.0
  %v1371 = vmin.f32 %v1345, 32.0
  %v1372 = vmin.f32 %v1346, 32.0
  %v1373 = vmin.f32 %v1347, 32.0
  %v1374 = vmin.f32 %v1348, 32.0
  %v1375 = vmin.f32 %v1349, 32.0
  %v1376 = vmin.f32 %v1350, 32.0
  %v1377 = vmin.f32 %v1351, 32.0
  %v1378 = vmin.f32 %v1352, 32.0
  %v1379 = vmin.f32 %v1353, 32.0
  %v1380 = vmin.f32 %v1354, 32.0
  %v1381 = vmin.f32 %v1355, 32.0
  %v1382 = vmin.f32 %v1356, 32.0
  %v1384 = vperm.slane %v1304, 0
  %vm1386 = vcmp.ge.f32.partialorder %v1357, %v1384
  %vm1387 = vcmp.ge.f32.partialorder %v1358, %v1384
  %vm1388 = vcmp.ge.f32.partialorder %v1359, %v1384
  %vm1389 = vcmp.ge.f32.partialorder %v1360, %v1384
  %vm1390 = vcmp.ge.f32.partialorder %v1361, %v1384
  %vm1391 = vcmp.ge.f32.partialorder %v1362, %v1384
  %vm1392 = vcmp.ge.f32.partialorder %v1363, %v1384
  %vm1393 = vcmp.ge.f32.partialorder %v1364, %v1384
  %vm1394 = vcmp.ge.f32.partialorder %v1365, %v1384
  %vm1395 = vcmp.ge.f32.partialorder %v1366, %v1384
  %vm1396 = vcmp.ge.f32.partialorder %v1367, %v1384
  %vm1397 = vcmp.ge.f32.partialorder %v1368, %v1384
  %vm1398 = vcmp.ge.f32.partialorder %v1369, %v1384
  %vm1399 = vcmp.ge.f32.partialorder %v1370, %v1384
  %vm1400 = vcmp.ge.f32.partialorder %v1371, %v1384
  %vm1401 = vcmp.ge.f32.partialorder %v1372, %v1384
  %vm1402 = vcmp.ge.f32.partialorder %v1373, %v1384
  %vm1403 = vcmp.ge.f32.partialorder %v1374, %v1384
  %vm1404 = vcmp.ge.f32.partialorder %v1375, %v1384
  %vm1405 = vcmp.ge.f32.partialorder %v1376, %v1384
  %vm1406 = vcmp.ge.f32.partialorder %v1377, %v1384
  %vm1407 = vcmp.ge.f32.partialorder %v1378, %v1384
  %vm1408 = vcmp.ge.f32.partialorder %v1379, %v1384
  %vm1409 = vcmp.ge.f32.partialorder %v1380, %v1384
  %vm1410 = vcmp.ge.f32.partialorder %v1381, %v1384
  %vm1411 = vcmp.ge.f32.partialorder %v1382, %v1384
  %v1412 = vsel %vm1386, 1, 0
  %v1413 = vsel %vm1387, 1, 0
  %v1414 = vsel %vm1388, 1, 0
  %v1415 = vsel %vm1389, 1, 0
  %v1416 = vsel %vm1390, 1, 0
  %v1417 = vsel %vm1391, 1, 0
  %v1418 = vsel %vm1392, 1, 0
  %v1419 = vsel %vm1393, 1, 0
  %v1420 = vsel %vm1394, 1, 0
  %v1421 = vsel %vm1395, 1, 0
  %v1422 = vsel %vm1396, 1, 0
  %v1423 = vsel %vm1397, 1, 0
  %v1424 = vsel %vm1398, 1, 0
  %v1425 = vsel %vm1399, 1, 0
  %v1426 = vsel %vm1400, 1, 0
  %v1427 = vsel %vm1401, 1, 0
  %v1428 = vsel %vm1402, 1, 0
  %v1429 = vsel %vm1403, 1, 0
  %v1430 = vsel %vm1404, 1, 0
  %v1431 = vsel %vm1405, 1, 0
  %v1432 = vsel %vm1406, 1, 0
  %v1433 = vsel %vm1407, 1, 0
  %v1434 = vsel %vm1408, 1, 0
  %v1435 = vsel %vm1409, 1, 0
  %v1436 = vsel %vm1410, 1, 0
  %v1437 = vsel %vm1411, 1, 0
  %v1438 = vcvt.s32.f32 %v1412
  %v1439 = vcvt.s32.f32 %v1413
  %v1440 = vcvt.s32.f32 %v1414
  %v1441 = vcvt.s32.f32 %v1415
  %v1442 = vcvt.s32.f32 %v1416
  %v1443 = vcvt.s32.f32 %v1417
  %v1444 = vcvt.s32.f32 %v1418
  %v1445 = vcvt.s32.f32 %v1419
  %v1446 = vcvt.s32.f32 %v1420
  %v1447 = vcvt.s32.f32 %v1421
  %v1448 = vcvt.s32.f32 %v1422
  %v1449 = vcvt.s32.f32 %v1423
  %v1450 = vcvt.s32.f32 %v1424
  %v1451 = vcvt.s32.f32 %v1425
  %v1452 = vcvt.s32.f32 %v1426
  %v1453 = vcvt.s32.f32 %v1427
  %v1454 = vcvt.s32.f32 %v1428
  %v1455 = vcvt.s32.f32 %v1429
  %v1456 = vcvt.s32.f32 %v1430
  %v1457 = vcvt.s32.f32 %v1431
  %v1458 = vcvt.s32.f32 %v1432
  %v1459 = vcvt.s32.f32 %v1433
  %v1460 = vcvt.s32.f32 %v1434
  %v1461 = vcvt.s32.f32 %v1435
  %v1462 = vcvt.s32.f32 %v1436
  %v1463 = vcvt.s32.f32 %v1437
  %v1464 = vsub.f32 1.0, %v1438
  %v1465 = vsub.f32 1.0, %v1439
  %v1466 = vsub.f32 1.0, %v1440
  %v1467 = vsub.f32 1.0, %v1441
  %v1468 = vsub.f32 1.0, %v1442
  %v1469 = vsub.f32 1.0, %v1443
  %v1470 = vsub.f32 1.0, %v1444
  %v1471 = vsub.f32 1.0, %v1445
  %v1472 = vsub.f32 1.0, %v1446
  %v1473 = vsub.f32 1.0, %v1447
  %v1474 = vsub.f32 1.0, %v1448
  %v1475 = vsub.f32 1.0, %v1449
  %v1476 = vsub.f32 1.0, %v1450
  %v1477 = vsub.f32 1.0, %v1451
  %v1478 = vsub.f32 1.0, %v1452
  %v1479 = vsub.f32 1.0, %v1453
  %v1480 = vsub.f32 1.0, %v1454
  %v1481 = vsub.f32 1.0, %v1455
  %v1482 = vsub.f32 1.0, %v1456
  %v1483 = vsub.f32 1.0, %v1457
  %v1484 = vsub.f32 1.0, %v1458
  %v1485 = vsub.f32 1.0, %v1459
  %v1486 = vsub.f32 1.0, %v1460
  %v1487 = vsub.f32 1.0, %v1461
  %v1488 = vsub.f32 1.0, %v1462
  %v1489 = vsub.f32 1.0, %v1463
  %v1490 = vmul.f32 %v1357, %v1464
  %v1491 = vmul.f32 %v1358, %v1465
  %v1492 = vmul.f32 %v1359, %v1466
  %v1493 = vmul.f32 %v1360, %v1467
  %v1494 = vmul.f32 %v1361, %v1468
  %v1495 = vmul.f32 %v1362, %v1469
  %v1496 = vmul.f32 %v1363, %v1470
  %v1497 = vmul.f32 %v1364, %v1471
  %v1498 = vmul.f32 %v1365, %v1472
  %v1499 = vmul.f32 %v1366, %v1473
  %v1500 = vmul.f32 %v1367, %v1474
  %v1501 = vmul.f32 %v1368, %v1475
  %v1502 = vmul.f32 %v1369, %v1476
  %v1503 = vmul.f32 %v1370, %v1477
  %v1504 = vmul.f32 %v1371, %v1478
  %v1505 = vmul.f32 %v1372, %v1479
  %v1506 = vmul.f32 %v1373, %v1480
  %v1507 = vmul.f32 %v1374, %v1481
  %v1508 = vmul.f32 %v1375, %v1482
  %v1509 = vmul.f32 %v1376, %v1483
  %v1510 = vmul.f32 %v1377, %v1484
  %v1511 = vmul.f32 %v1378, %v1485
  %v1512 = vmul.f32 %v1379, %v1486
  %v1513 = vmul.f32 %v1380, %v1487
  %v1514 = vmul.f32 %v1381, %v1488
  %v1515 = vmul.f32 %v1382, %v1489
  %v1516 = vpack.c.bf16 %v1438, %v1438
  %v1517 = vpack.c.bf16 %v1439, %v1439
  %v1518 = vpack.c.bf16 %v1440, %v1440
  %v1519 = vpack.c.bf16 %v1441, %v1441
  %v1520 = vpack.c.bf16 %v1442, %v1442
  %v1521 = vpack.c.bf16 %v1443, %v1443
  %v1522 = vpack.c.bf16 %v1444, %v1444
  %v1523 = vpack.c.bf16 %v1445, %v1445
  %v1524 = vpack.c.bf16 %v1446, %v1446
  %v1525 = vpack.c.bf16 %v1447, %v1447
  %v1526 = vpack.c.bf16 %v1448, %v1448
  %v1527 = vpack.c.bf16 %v1449, %v1449
  %v1528 = vpack.c.bf16 %v1450, %v1450
  %v1529 = vpack.c.bf16 %v1451, %v1451
  %v1530 = vpack.c.bf16 %v1452, %v1452
  %v1531 = vpack.c.bf16 %v1453, %v1453
  %v1532 = vpack.c.bf16 %v1454, %v1454
  %v1533 = vpack.c.bf16 %v1455, %v1455
  %v1534 = vpack.c.bf16 %v1456, %v1456
  %v1535 = vpack.c.bf16 %v1457, %v1457
  %v1536 = vpack.c.bf16 %v1458, %v1458
  %v1537 = vpack.c.bf16 %v1459, %v1459
  %v1538 = vpack.c.bf16 %v1460, %v1460
  %v1539 = vpack.c.bf16 %v1461, %v1461
  %v1540 = vpack.c.bf16 %v1462, %v1462
  %v1541 = vpack.c.bf16 %v1463, %v1463
  %1542 = vst [vmem:[%s3] sm:$0xf] %v1516
  %1543 = vst [vmem:[%s3 + $0x4] sm:$0xf] %v1517
  %1544 = vst [vmem:[%s3 + $0x8] sm:$0xf] %v1518
  %1545 = vst [vmem:[%s3 + $0xc] sm:$0xf] %v1519
  %1546 = vst [vmem:[%s3 + $0x10] sm:$0xf] %v1520
  %1547 = vst [vmem:[%s3 + $0x14] sm:$0xf] %v1521
  %1548 = vst [vmem:[%s3 + $0x18] sm:$0xf] %v1522
  %1549 = vst [vmem:[%s3 + $0x1c] sm:$0xf] %v1523
  %1550 = vst [vmem:[%s3 + $0x20] sm:$0xf] %v1524
  %1551 = vst [vmem:[%s3 + $0x24] sm:$0xf] %v1525
  %1552 = vst [vmem:[%s3 + $0x28] sm:$0xf] %v1526
  %1553 = vst [vmem:[%s3 + $0x2c] sm:$0xf] %v1527
  %1554 = vst [vmem:[%s3 + $0x30] sm:$0xf] %v1528
  %1555 = vst [vmem:[%s3 + $0x34] sm:$0xf] %v1529
  %1556 = vst [vmem:[%s3 + $0x38] sm:$0xf] %v1530
  %1557 = vst [vmem:[%s3 + $0x3c] sm:$0xf] %v1531
  %1558 = vst [vmem:[%s3 + $0x40] sm:$0xf] %v1532
  %1559 = vst [vmem:[%s3 + $0x44] sm:$0xf] %v1533
  %1560 = vst [vmem:[%s3 + $0x48] sm:$0xf] %v1534
  %1561 = vst [vmem:[%s3 + $0x4c] sm:$0xf] %v1535
  %1562 = vst [vmem:[%s3 + $0x50] sm:$0xf] %v1536
  %1563 = vst [vmem:[%s3 + $0x54] sm:$0xf] %v1537
  %1564 = vst [vmem:[%s3 + $0x58] sm:$0xf] %v1538
  %1565 = vst [vmem:[%s3 + $0x5c] sm:$0xf] %v1539
  %1566 = vst [vmem:[%s3 + $0x60] sm:$0xf] %v1540
  %1567 = vst [vmem:[%s3 + $0x64] sm:$0xf] %v1541
  %v1568 = vadd.f32 %v1490, %v1110
  %v1569 = vadd.f32 %v1491, %v1112
  %v1570 = vadd.f32 %v1492, %v1115
  %v1571 = vadd.f32 %v1493, %v1117
  %v1572 = vadd.f32 %v1494, %v1120
  %v1573 = vadd.f32 %v1495, %v1122
  %v1574 = vadd.f32 %v1496, %v1125
  %v1575 = vadd.f32 %v1497, %v1127
  %v1576 = vadd.f32 %v1498, %v1130
  %v1577 = vadd.f32 %v1499, %v1132
  %v1578 = vadd.f32 %v1500, %v1135
  %v1579 = vadd.f32 %v1501, %v1137
  %v1580 = vadd.f32 %v1502, %v1140
  %v1581 = vadd.f32 %v1503, %v1142
  %v1582 = vadd.f32 %v1504, %v1145
  %v1583 = vadd.f32 %v1505, %v1147
  %v1584 = vadd.f32 %v1506, %v1150
  %v1585 = vadd.f32 %v1507, %v1152
  %v1586 = vadd.f32 %v1508, %v1155
  %v1587 = vadd.f32 %v1509, %v1157
  %v1588 = vadd.f32 %v1510, %v1160
  %v1589 = vadd.f32 %v1511, %v1162
  %v1590 = vadd.f32 %v1512, %v1165
  %v1591 = vadd.f32 %v1513, %v1167
  %v1592 = vadd.f32 %v1514, %v1170
  %v1593 = vadd.f32 %v1515, %v1172
  %v1594 = vmax.f32 %v1568, -32.0
  %v1595 = vmax.f32 %v1569, -32.0
  %v1596 = vmax.f32 %v1570, -32.0
  %v1597 = vmax.f32 %v1571, -32.0
  %v1598 = vmax.f32 %v1572, -32.0
  %v1599 = vmax.f32 %v1573, -32.0
  %v1600 = vmax.f32 %v1574, -32.0
  %v1601 = vmax.f32 %v1575, -32.0
  %v1602 = vmax.f32 %v1576, -32.0
  %v1603 = vmax.f32 %v1577, -32.0
  %v1604 = vmax.f32 %v1578, -32.0
  %v1605 = vmax.f32 %v1579, -32.0
  %v1606 = vmax.f32 %v1580, -32.0
  %v1607 = vmax.f32 %v1581, -32.0
  %v1608 = vmax.f32 %v1582, -32.0
  %v1609 = vmax.f32 %v1583, -32.0
  %v1610 = vmax.f32 %v1584, -32.0
  %v1611 = vmax.f32 %v1585, -32.0
  %v1612 = vmax.f32 %v1586, -32.0
  %v1613 = vmax.f32 %v1587, -32.0
  %v1614 = vmax.f32 %v1588, -32.0
  %v1615 = vmax.f32 %v1589, -32.0
  %v1616 = vmax.f32 %v1590, -32.0
  %v1617 = vmax.f32 %v1591, -32.0
  %v1618 = vmax.f32 %v1592, -32.0
  %v1619 = vmax.f32 %v1593, -32.0
  %v1620 = vmin.f32 %v1594, 32.0
  %v1621 = vmin.f32 %v1595, 32.0
  %v1622 = vmin.f32 %v1596, 32.0
  %v1623 = vmin.f32 %v1597, 32.0
  %v1624 = vmin.f32 %v1598, 32.0
  %v1625 = vmin.f32 %v1599, 32.0
  %v1626 = vmin.f32 %v1600, 32.0
  %v1627 = vmin.f32 %v1601, 32.0
  %v1628 = vmin.f32 %v1602, 32.0
  %v1629 = vmin.f32 %v1603, 32.0
  %v1630 = vmin.f32 %v1604, 32.0
  %v1631 = vmin.f32 %v1605, 32.0
  %v1632 = vmin.f32 %v1606, 32.0
  %v1633 = vmin.f32 %v1607, 32.0
  %v1634 = vmin.f32 %v1608, 32.0
  %v1635 = vmin.f32 %v1609, 32.0
  %v1636 = vmin.f32 %v1610, 32.0
  %v1637 = vmin.f32 %v1611, 32.0
  %v1638 = vmin.f32 %v1612, 32.0
  %v1639 = vmin.f32 %v1613, 32.0
  %v1640 = vmin.f32 %v1614, 32.0
  %v1641 = vmin.f32 %v1615, 32.0
  %v1642 = vmin.f32 %v1616, 32.0
  %v1643 = vmin.f32 %v1617, 32.0
  %v1644 = vmin.f32 %v1618, 32.0
  %v1645 = vmin.f32 %v1619, 32.0
  %vm1646 = vcmp.ge.f32.partialorder %v1620, %v1384
  %vm1647 = vcmp.ge.f32.partialorder %v1621, %v1384
  %vm1648 = vcmp.ge.f32.partialorder %v1622, %v1384
  %vm1649 = vcmp.ge.f32.partialorder %v1623, %v1384
  %vm1650 = vcmp.ge.f32.partialorder %v1624, %v1384
  %vm1651 = vcmp.ge.f32.partialorder %v1625, %v1384
  %vm1652 = vcmp.ge.f32.partialorder %v1626, %v1384
  %vm1653 = vcmp.ge.f32.partialorder %v1627, %v1384
  %vm1654 = vcmp.ge.f32.partialorder %v1628, %v1384
  %vm1655 = vcmp.ge.f32.partialorder %v1629, %v1384
  %vm1656 = vcmp.ge.f32.partialorder %v1630, %v1384
  %vm1657 = vcmp.ge.f32.partialorder %v1631, %v1384
  %vm1658 = vcmp.ge.f32.partialorder %v1632, %v1384
  %vm1659 = vcmp.ge.f32.partialorder %v1633, %v1384
  %vm1660 = vcmp.ge.f32.partialorder %v1634, %v1384
  %vm1661 = vcmp.ge.f32.partialorder %v1635, %v1384
  %vm1662 = vcmp.ge.f32.partialorder %v1636, %v1384
  %vm1663 = vcmp.ge.f32.partialorder %v1637, %v1384
  %vm1664 = vcmp.ge.f32.partialorder %v1638, %v1384
  %vm1665 = vcmp.ge.f32.partialorder %v1639, %v1384
  %vm1666 = vcmp.ge.f32.partialorder %v1640, %v1384
  %vm1667 = vcmp.ge.f32.partialorder %v1641, %v1384
  %vm1668 = vcmp.ge.f32.partialorder %v1642, %v1384
  %vm1669 = vcmp.ge.f32.partialorder %v1643, %v1384
  %vm1670 = vcmp.ge.f32.partialorder %v1644, %v1384
  %vm1671 = vcmp.ge.f32.partialorder %v1645, %v1384
  %v1672 = vsel %vm1646, 1, 0
  %v1673 = vsel %vm1647, 1, 0
  %v1674 = vsel %vm1648, 1, 0
  %v1675 = vsel %vm1649, 1, 0
  %v1676 = vsel %vm1650, 1, 0
  %v1677 = vsel %vm1651, 1, 0
  %v1678 = vsel %vm1652, 1, 0
  %v1679 = vsel %vm1653, 1, 0
  %v1680 = vsel %vm1654, 1, 0
  %v1681 = vsel %vm1655, 1, 0
  %v1682 = vsel %vm1656, 1, 0
  %v1683 = vsel %vm1657, 1, 0
  %v1684 = vsel %vm1658, 1, 0
  %v1685 = vsel %vm1659, 1, 0
  %v1686 = vsel %vm1660, 1, 0
  %v1687 = vsel %vm1661, 1, 0
  %v1688 = vsel %vm1662, 1, 0
  %v1689 = vsel %vm1663, 1, 0
  %v1690 = vsel %vm1664, 1, 0
  %v1691 = vsel %vm1665, 1, 0
  %v1692 = vsel %vm1666, 1, 0
  %v1693 = vsel %vm1667, 1, 0
  %v1694 = vsel %vm1668, 1, 0
  %v1695 = vsel %vm1669, 1, 0
  %v1696 = vsel %vm1670, 1, 0
  %v1697 = vsel %vm1671, 1, 0
  %v1698 = vcvt.s32.f32 %v1672
  %v1699 = vcvt.s32.f32 %v1673
  %v1700 = vcvt.s32.f32 %v1674
  %v1701 = vcvt.s32.f32 %v1675
  %v1702 = vcvt.s32.f32 %v1676
  %v1703 = vcvt.s32.f32 %v1677
  %v1704 = vcvt.s32.f32 %v1678
  %v1705 = vcvt.s32.f32 %v1679
  %v1706 = vcvt.s32.f32 %v1680
  %v1707 = vcvt.s32.f32 %v1681
  %v1708 = vcvt.s32.f32 %v1682
  %v1709 = vcvt.s32.f32 %v1683
  %v1710 = vcvt.s32.f32 %v1684
  %v1711 = vcvt.s32.f32 %v1685
  %v1712 = vcvt.s32.f32 %v1686
  %v1713 = vcvt.s32.f32 %v1687
  %v1714 = vcvt.s32.f32 %v1688
  %v1715 = vcvt.s32.f32 %v1689
  %v1716 = vcvt.s32.f32 %v1690
  %v1717 = vcvt.s32.f32 %v1691
  %v1718 = vcvt.s32.f32 %v1692
  %v1719 = vcvt.s32.f32 %v1693
  %v1720 = vcvt.s32.f32 %v1694
  %v1721 = vcvt.s32.f32 %v1695
  %v1722 = vcvt.s32.f32 %v1696
  %v1723 = vcvt.s32.f32 %v1697
  %v1724 = vsub.f32 1.0, %v1698
  %v1725 = vsub.f32 1.0, %v1699
  %v1726 = vsub.f32 1.0, %v1700
  %v1727 = vsub.f32 1.0, %v1701
  %v1728 = vsub.f32 1.0, %v1702
  %v1729 = vsub.f32 1.0, %v1703
  %v1730 = vsub.f32 1.0, %v1704
  %v1731 = vsub.f32 1.0, %v1705
  %v1732 = vsub.f32 1.0, %v1706
  %v1733 = vsub.f32 1.0, %v1707
  %v1734 = vsub.f32 1.0, %v1708
  %v1735 = vsub.f32 1.0, %v1709
  %v1736 = vsub.f32 1.0, %v1710
  %v1737 = vsub.f32 1.0, %v1711
  %v1738 = vsub.f32 1.0, %v1712
  %v1739 = vsub.f32 1.0, %v1713
  %v1740 = vsub.f32 1.0, %v1714
  %v1741 = vsub.f32 1.0, %v1715
  %v1742 = vsub.f32 1.0, %v1716
  %v1743 = vsub.f32 1.0, %v1717
  %v1744 = vsub.f32 1.0, %v1718
  %v1745 = vsub.f32 1.0, %v1719
  %v1746 = vsub.f32 1.0, %v1720
  %v1747 = vsub.f32 1.0, %v1721
  %v1748 = vsub.f32 1.0, %v1722
  %v1749 = vsub.f32 1.0, %v1723
  %v1750 = vmul.f32 %v1620, %v1724
  %v1751 = vmul.f32 %v1621, %v1725
  %v1752 = vmul.f32 %v1622, %v1726
  %v1753 = vmul.f32 %v1623, %v1727
  %v1754 = vmul.f32 %v1624, %v1728
  %v1755 = vmul.f32 %v1625, %v1729
  %v1756 = vmul.f32 %v1626, %v1730
  %v1757 = vmul.f32 %v1627, %v1731
  %v1758 = vmul.f32 %v1628, %v1732
  %v1759 = vmul.f32 %v1629, %v1733
  %v1760 = vmul.f32 %v1630, %v1734
  %v1761 = vmul.f32 %v1631, %v1735
  %v1762 = vmul.f32 %v1632, %v1736
  %v1763 = vmul.f32 %v1633, %v1737
  %v1764 = vmul.f32 %v1634, %v1738
  %v1765 = vmul.f32 %v1635, %v1739
  %v1766 = vmul.f32 %v1636, %v1740
  %v1767 = vmul.f32 %v1637, %v1741
  %v1768 = vmul.f32 %v1638, %v1742
  %v1769 = vmul.f32 %v1639, %v1743
  %v1770 = vmul.f32 %v1640, %v1744
  %v1771 = vmul.f32 %v1641, %v1745
  %v1772 = vmul.f32 %v1642, %v1746
  %v1773 = vmul.f32 %v1643, %v1747
  %v1774 = vmul.f32 %v1644, %v1748
  %v1775 = vmul.f32 %v1645, %v1749
  %v1776 = vpack.c.bf16 %v1698, %v1698
  %v1777 = vpack.c.bf16 %v1699, %v1699
  %v1778 = vpack.c.bf16 %v1700, %v1700
  %v1779 = vpack.c.bf16 %v1701, %v1701
  %v1780 = vpack.c.bf16 %v1702, %v1702
  %v1781 = vpack.c.bf16 %v1703, %v1703
  %v1782 = vpack.c.bf16 %v1704, %v1704
  %v1783 = vpack.c.bf16 %v1705, %v1705
  %v1784 = vpack.c.bf16 %v1706, %v1706
  %v1785 = vpack.c.bf16 %v1707, %v1707
  %v1786 = vpack.c.bf16 %v1708, %v1708
  %v1787 = vpack.c.bf16 %v1709, %v1709
  %v1788 = vpack.c.bf16 %v1710, %v1710
  %v1789 = vpack.c.bf16 %v1711, %v1711
  %v1790 = vpack.c.bf16 %v1712, %v1712
  %v1791 = vpack.c.bf16 %v1713, %v1713
  %v1792 = vpack.c.bf16 %v1714, %v1714
  %v1793 = vpack.c.bf16 %v1715, %v1715
  %v1794 = vpack.c.bf16 %v1716, %v1716
  %v1795 = vpack.c.bf16 %v1717, %v1717
  %v1796 = vpack.c.bf16 %v1718, %v1718
  %v1797 = vpack.c.bf16 %v1719, %v1719
  %v1798 = vpack.c.bf16 %v1720, %v1720
  %v1799 = vpack.c.bf16 %v1721, %v1721
  %v1800 = vpack.c.bf16 %v1722, %v1722
  %v1801 = vpack.c.bf16 %v1723, %v1723
  %s1802 = scalar_lea.vmem %s3, 104
  %1803 = vst [vmem:[%s1802] sm:$0xf] %v1776
  %1804 = vst [vmem:[%s1802 + $0x4] sm:$0xf] %v1777
  %1805 = vst [vmem:[%s1802 + $0x8] sm:$0xf] %v1778
  %1806 = vst [vmem:[%s1802 + $0xc] sm:$0xf] %v1779
  %1807 = vst [vmem:[%s1802 + $0x10] sm:$0xf] %v1780
  %1808 = vst [vmem:[%s1802 + $0x14] sm:$0xf] %v1781
  %1809 = vst [vmem:[%s1802 + $0x18] sm:$0xf] %v1782
  %1810 = vst [vmem:[%s1802 + $0x1c] sm:$0xf] %v1783
  %1811 = vst [vmem:[%s1802 + $0x20] sm:$0xf] %v1784
  %1812 = vst [vmem:[%s1802 + $0x24] sm:$0xf] %v1785
  %1813 = vst [vmem:[%s1802 + $0x28] sm:$0xf] %v1786
  %1814 = vst [vmem:[%s1802 + $0x2c] sm:$0xf] %v1787
  %1815 = vst [vmem:[%s1802 + $0x30] sm:$0xf] %v1788
  %1816 = vst [vmem:[%s1802 + $0x34] sm:$0xf] %v1789
  %1817 = vst [vmem:[%s1802 + $0x38] sm:$0xf] %v1790
  %1818 = vst [vmem:[%s1802 + $0x3c] sm:$0xf] %v1791
  %1819 = vst [vmem:[%s1802 + $0x40] sm:$0xf] %v1792
  %1820 = vst [vmem:[%s1802 + $0x44] sm:$0xf] %v1793
  %1821 = vst [vmem:[%s1802 + $0x48] sm:$0xf] %v1794
  %1822 = vst [vmem:[%s1802 + $0x4c] sm:$0xf] %v1795
  %1823 = vst [vmem:[%s1802 + $0x50] sm:$0xf] %v1796
  %1824 = vst [vmem:[%s1802 + $0x54] sm:$0xf] %v1797
  %1825 = vst [vmem:[%s1802 + $0x58] sm:$0xf] %v1798
  %1826 = vst [vmem:[%s1802 + $0x5c] sm:$0xf] %v1799
  %1827 = vst [vmem:[%s1802 + $0x60] sm:$0xf] %v1800
  %1828 = vst [vmem:[%s1802 + $0x64] sm:$0xf] %v1801
  %v1829 = vadd.f32 %v1750, %v1175
  %v1830 = vadd.f32 %v1751, %v1177
  %v1831 = vadd.f32 %v1752, %v1180
  %v1832 = vadd.f32 %v1753, %v1182
  %v1833 = vadd.f32 %v1754, %v1185
  %v1834 = vadd.f32 %v1755, %v1187
  %v1835 = vadd.f32 %v1756, %v1190
  %v1836 = vadd.f32 %v1757, %v1192
  %v1837 = vadd.f32 %v1758, %v1195
  %v1838 = vadd.f32 %v1759, %v1197
  %v1839 = vadd.f32 %v1760, %v1200
  %v1840 = vadd.f32 %v1761, %v1202
  %v1841 = vadd.f32 %v1762, %v1205
  %v1842 = vadd.f32 %v1763, %v1207
  %v1843 = vadd.f32 %v1764, %v1210
  %v1844 = vadd.f32 %v1765, %v1212
  %v1845 = vadd.f32 %v1766, %v1215
  %v1846 = vadd.f32 %v1767, %v1217
  %v1847 = vadd.f32 %v1768, %v1220
  %v1848 = vadd.f32 %v1769, %v1222
  %v1849 = vadd.f32 %v1770, %v1225
  %v1850 = vadd.f32 %v1771, %v1227
  %v1851 = vadd.f32 %v1772, %v1230
  %v1852 = vadd.f32 %v1773, %v1232
  %v1853 = vadd.f32 %v1774, %v1235
  %v1854 = vadd.f32 %v1775, %v1237
  %v1855 = vmax.f32 %v1829, -32.0
  %v1856 = vmax.f32 %v1830, -32.0
  %v1857 = vmax.f32 %v1831, -32.0
  %v1858 = vmax.f32 %v1832, -32.0
  %v1859 = vmax.f32 %v1833, -32.0
  %v1860 = vmax.f32 %v1834, -32.0
  %v1861 = vmax.f32 %v1835, -32.0
  %v1862 = vmax.f32 %v1836, -32.0
  %v1863 = vmax.f32 %v1837, -32.0
  %v1864 = vmax.f32 %v1838, -32.0
  %v1865 = vmax.f32 %v1839, -32.0
  %v1866 = vmax.f32 %v1840, -32.0
  %v1867 = vmax.f32 %v1841, -32.0
  %v1868 = vmax.f32 %v1842, -32.0
  %v1869 = vmax.f32 %v1843, -32.0
  %v1870 = vmax.f32 %v1844, -32.0
  %v1871 = vmax.f32 %v1845, -32.0
  %v1872 = vmax.f32 %v1846, -32.0
  %v1873 = vmax.f32 %v1847, -32.0
  %v1874 = vmax.f32 %v1848, -32.0
  %v1875 = vmax.f32 %v1849, -32.0
  %v1876 = vmax.f32 %v1850, -32.0
  %v1877 = vmax.f32 %v1851, -32.0
  %v1878 = vmax.f32 %v1852, -32.0
  %v1879 = vmax.f32 %v1853, -32.0
  %v1880 = vmax.f32 %v1854, -32.0
  %v1881 = vmin.f32 %v1855, 32.0
  %v1882 = vmin.f32 %v1856, 32.0
  %v1883 = vmin.f32 %v1857, 32.0
  %v1884 = vmin.f32 %v1858, 32.0
  %v1885 = vmin.f32 %v1859, 32.0
  %v1886 = vmin.f32 %v1860, 32.0
  %v1887 = vmin.f32 %v1861, 32.0
  %v1888 = vmin.f32 %v1862, 32.0
  %v1889 = vmin.f32 %v1863, 32.0
  %v1890 = vmin.f32 %v1864, 32.0
  %v1891 = vmin.f32 %v1865, 32.0
  %v1892 = vmin.f32 %v1866, 32.0
  %v1893 = vmin.f32 %v1867, 32.0
  %v1894 = vmin.f32 %v1868, 32.0
  %v1895 = vmin.f32 %v1869, 32.0
  %v1896 = vmin.f32 %v1870, 32.0
  %v1897 = vmin.f32 %v1871, 32.0
  %v1898 = vmin.f32 %v1872, 32.0
  %v1899 = vmin.f32 %v1873, 32.0
  %v1900 = vmin.f32 %v1874, 32.0
  %v1901 = vmin.f32 %v1875, 32.0
  %v1902 = vmin.f32 %v1876, 32.0
  %v1903 = vmin.f32 %v1877, 32.0
  %v1904 = vmin.f32 %v1878, 32.0
  %v1905 = vmin.f32 %v1879, 32.0
  %v1906 = vmin.f32 %v1880, 32.0
  %vm1907 = vcmp.ge.f32.partialorder %v1881, %v1384
  %vm1908 = vcmp.ge.f32.partialorder %v1882, %v1384
  %vm1909 = vcmp.ge.f32.partialorder %v1883, %v1384
  %vm1910 = vcmp.ge.f32.partialorder %v1884, %v1384
  %vm1911 = vcmp.ge.f32.partialorder %v1885, %v1384
  %vm1912 = vcmp.ge.f32.partialorder %v1886, %v1384
  %vm1913 = vcmp.ge.f32.partialorder %v1887, %v1384
  %vm1914 = vcmp.ge.f32.partialorder %v1888, %v1384
  %vm1915 = vcmp.ge.f32.partialorder %v1889, %v1384
  %vm1916 = vcmp.ge.f32.partialorder %v1890, %v1384
  %vm1917 = vcmp.ge.f32.partialorder %v1891, %v1384
  %vm1918 = vcmp.ge.f32.partialorder %v1892, %v1384
  %vm1919 = vcmp.ge.f32.partialorder %v1893, %v1384
  %vm1920 = vcmp.ge.f32.partialorder %v1894, %v1384
  %vm1921 = vcmp.ge.f32.partialorder %v1895, %v1384
  %vm1922 = vcmp.ge.f32.partialorder %v1896, %v1384
  %vm1923 = vcmp.ge.f32.partialorder %v1897, %v1384
  %vm1924 = vcmp.ge.f32.partialorder %v1898, %v1384
  %vm1925 = vcmp.ge.f32.partialorder %v1899, %v1384
  %vm1926 = vcmp.ge.f32.partialorder %v1900, %v1384
  %vm1927 = vcmp.ge.f32.partialorder %v1901, %v1384
  %vm1928 = vcmp.ge.f32.partialorder %v1902, %v1384
  %vm1929 = vcmp.ge.f32.partialorder %v1903, %v1384
  %vm1930 = vcmp.ge.f32.partialorder %v1904, %v1384
  %vm1931 = vcmp.ge.f32.partialorder %v1905, %v1384
  %vm1932 = vcmp.ge.f32.partialorder %v1906, %v1384
  %v1933 = vsel %vm1907, 1, 0
  %v1934 = vsel %vm1908, 1, 0
  %v1935 = vsel %vm1909, 1, 0
  %v1936 = vsel %vm1910, 1, 0
  %v1937 = vsel %vm1911, 1, 0
  %v1938 = vsel %vm1912, 1, 0
  %v1939 = vsel %vm1913, 1, 0
  %v1940 = vsel %vm1914, 1, 0
  %v1941 = vsel %vm1915, 1, 0
  %v1942 = vsel %vm1916, 1, 0
  %v1943 = vsel %vm1917, 1, 0
  %v1944 = vsel %vm1918, 1, 0
  %v1945 = vsel %vm1919, 1, 0
  %v1946 = vsel %vm1920, 1, 0
  %v1947 = vsel %vm1921, 1, 0
  %v1948 = vsel %vm1922, 1, 0
  %v1949 = vsel %vm1923, 1, 0
  %v1950 = vsel %vm1924, 1, 0
  %v1951 = vsel %vm1925, 1, 0
  %v1952 = vsel %vm1926, 1, 0
  %v1953 = vsel %vm1927, 1, 0
  %v1954 = vsel %vm1928, 1, 0
  %v1955 = vsel %vm1929, 1, 0
  %v1956 = vsel %vm1930, 1, 0
  %v1957 = vsel %vm1931, 1, 0
  %v1958 = vsel %vm1932, 1, 0
  %v1959 = vcvt.s32.f32 %v1933
  %v1960 = vcvt.s32.f32 %v1934
  %v1961 = vcvt.s32.f32 %v1935
  %v1962 = vcvt.s32.f32 %v1936
  %v1963 = vcvt.s32.f32 %v1937
  %v1964 = vcvt.s32.f32 %v1938
  %v1965 = vcvt.s32.f32 %v1939
  %v1966 = vcvt.s32.f32 %v1940
  %v1967 = vcvt.s32.f32 %v1941
  %v1968 = vcvt.s32.f32 %v1942
  %v1969 = vcvt.s32.f32 %v1943
  %v1970 = vcvt.s32.f32 %v1944
  %v1971 = vcvt.s32.f32 %v1945
  %v1972 = vcvt.s32.f32 %v1946
  %v1973 = vcvt.s32.f32 %v1947
  %v1974 = vcvt.s32.f32 %v1948
  %v1975 = vcvt.s32.f32 %v1949
  %v1976 = vcvt.s32.f32 %v1950
  %v1977 = vcvt.s32.f32 %v1951
  %v1978 = vcvt.s32.f32 %v1952
  %v1979 = vcvt.s32.f32 %v1953
  %v1980 = vcvt.s32.f32 %v1954
  %v1981 = vcvt.s32.f32 %v1955
  %v1982 = vcvt.s32.f32 %v1956
  %v1983 = vcvt.s32.f32 %v1957
  %v1984 = vcvt.s32.f32 %v1958
  %v1985 = vsub.f32 1.0, %v1959
  %v1986 = vsub.f32 1.0, %v1960
  %v1987 = vsub.f32 1.0, %v1961
  %v1988 = vsub.f32 1.0, %v1962
  %v1989 = vsub.f32 1.0, %v1963
  %v1990 = vsub.f32 1.0, %v1964
  %v1991 = vsub.f32 1.0, %v1965
  %v1992 = vsub.f32 1.0, %v1966
  %v1993 = vsub.f32 1.0, %v1967
  %v1994 = vsub.f32 1.0, %v1968
  %v1995 = vsub.f32 1.0, %v1969
  %v1996 = vsub.f32 1.0, %v1970
  %v1997 = vsub.f32 1.0, %v1971
  %v1998 = vsub.f32 1.0, %v1972
  %v1999 = vsub.f32 1.0, %v1973
  %v2000 = vsub.f32 1.0, %v1974
  %v2001 = vsub.f32 1.0, %v1975
  %v2002 = vsub.f32 1.0, %v1976
  %v2003 = vsub.f32 1.0, %v1977
  %v2004 = vsub.f32 1.0, %v1978
  %v2005 = vsub.f32 1.0, %v1979
  %v2006 = vsub.f32 1.0, %v1980
  %v2007 = vsub.f32 1.0, %v1981
  %v2008 = vsub.f32 1.0, %v1982
  %v2009 = vsub.f32 1.0, %v1983
  %v2010 = vsub.f32 1.0, %v1984
  %v2011 = vmul.f32 %v1881, %v1985
  %v2012 = vmul.f32 %v1882, %v1986
  %v2013 = vmul.f32 %v1883, %v1987
  %v2014 = vmul.f32 %v1884, %v1988
  %v2015 = vmul.f32 %v1885, %v1989
  %v2016 = vmul.f32 %v1886, %v1990
  %v2017 = vmul.f32 %v1887, %v1991
  %v2018 = vmul.f32 %v1888, %v1992
  %v2019 = vmul.f32 %v1889, %v1993
  %v2020 = vmul.f32 %v1890, %v1994
  %v2021 = vmul.f32 %v1891, %v1995
  %v2022 = vmul.f32 %v1892, %v1996
  %v2023 = vmul.f32 %v1893, %v1997
  %v2024 = vmul.f32 %v1894, %v1998
  %v2025 = vmul.f32 %v1895, %v1999
  %v2026 = vmul.f32 %v1896, %v2000
  %v2027 = vmul.f32 %v1897, %v2001
  %v2028 = vmul.f32 %v1898, %v2002
  %v2029 = vmul.f32 %v1899, %v2003
  %v2030 = vmul.f32 %v1900, %v2004
  %v2031 = vmul.f32 %v1901, %v2005
  %v2032 = vmul.f32 %v1902, %v2006
  %v2033 = vmul.f32 %v1903, %v2007
  %v2034 = vmul.f32 %v1904, %v2008
  %v2035 = vmul.f32 %v1905, %v2009
  %v2036 = vmul.f32 %v1906, %v2010
  %v2037 = vpack.c.bf16 %v1959, %v1959
  %v2038 = vpack.c.bf16 %v1960, %v1960
  %v2039 = vpack.c.bf16 %v1961, %v1961
  %v2040 = vpack.c.bf16 %v1962, %v1962
  %v2041 = vpack.c.bf16 %v1963, %v1963
  %v2042 = vpack.c.bf16 %v1964, %v1964
  %v2043 = vpack.c.bf16 %v1965, %v1965
  %v2044 = vpack.c.bf16 %v1966, %v1966
  %v2045 = vpack.c.bf16 %v1967, %v1967
  %v2046 = vpack.c.bf16 %v1968, %v1968
  %v2047 = vpack.c.bf16 %v1969, %v1969
  %v2048 = vpack.c.bf16 %v1970, %v1970
  %v2049 = vpack.c.bf16 %v1971, %v1971
  %v2050 = vpack.c.bf16 %v1972, %v1972
  %v2051 = vpack.c.bf16 %v1973, %v1973
  %v2052 = vpack.c.bf16 %v1974, %v1974
  %v2053 = vpack.c.bf16 %v1975, %v1975
  %v2054 = vpack.c.bf16 %v1976, %v1976
  %v2055 = vpack.c.bf16 %v1977, %v1977
  %v2056 = vpack.c.bf16 %v1978, %v1978
  %v2057 = vpack.c.bf16 %v1979, %v1979
  %v2058 = vpack.c.bf16 %v1980, %v1980
  %v2059 = vpack.c.bf16 %v1981, %v1981
  %v2060 = vpack.c.bf16 %v1982, %v1982
  %v2061 = vpack.c.bf16 %v1983, %v1983
  %v2062 = vpack.c.bf16 %v1984, %v1984
  %s2063 = scalar_lea.vmem %s3, 208
  %2064 = vst [vmem:[%s2063] sm:$0xf] %v2037
  %2065 = vst [vmem:[%s2063 + $0x4] sm:$0xf] %v2038
  %2066 = vst [vmem:[%s2063 + $0x8] sm:$0xf] %v2039
  %2067 = vst [vmem:[%s2063 + $0xc] sm:$0xf] %v2040
  %2068 = vst [vmem:[%s2063 + $0x10] sm:$0xf] %v2041
  %2069 = vst [vmem:[%s2063 + $0x14] sm:$0xf] %v2042
  %2070 = vst [vmem:[%s2063 + $0x18] sm:$0xf] %v2043
  %2071 = vst [vmem:[%s2063 + $0x1c] sm:$0xf] %v2044
  %2072 = vst [vmem:[%s2063 + $0x20] sm:$0xf] %v2045
  %2073 = vst [vmem:[%s2063 + $0x24] sm:$0xf] %v2046
  %2074 = vst [vmem:[%s2063 + $0x28] sm:$0xf] %v2047
  %2075 = vst [vmem:[%s2063 + $0x2c] sm:$0xf] %v2048
  %2076 = vst [vmem:[%s2063 + $0x30] sm:$0xf] %v2049
  %2077 = vst [vmem:[%s2063 + $0x34] sm:$0xf] %v2050
  %2078 = vst [vmem:[%s2063 + $0x38] sm:$0xf] %v2051
  %2079 = vst [vmem:[%s2063 + $0x3c] sm:$0xf] %v2052
  %2080 = vst [vmem:[%s2063 + $0x40] sm:$0xf] %v2053
  %2081 = vst [vmem:[%s2063 + $0x44] sm:$0xf] %v2054
  %2082 = vst [vmem:[%s2063 + $0x48] sm:$0xf] %v2055
  %2083 = vst [vmem:[%s2063 + $0x4c] sm:$0xf] %v2056
  %2084 = vst [vmem:[%s2063 + $0x50] sm:$0xf] %v2057
  %2085 = vst [vmem:[%s2063 + $0x54] sm:$0xf] %v2058
  %2086 = vst [vmem:[%s2063 + $0x58] sm:$0xf] %v2059
  %2087 = vst [vmem:[%s2063 + $0x5c] sm:$0xf] %v2060
  %2088 = vst [vmem:[%s2063 + $0x60] sm:$0xf] %v2061
  %2089 = vst [vmem:[%s2063 + $0x64] sm:$0xf] %v2062
  %v2090 = vadd.f32 %v2011, %v1240
  %v2091 = vadd.f32 %v2012, %v1242
  %v2092 = vadd.f32 %v2013, %v1245
  %v2093 = vadd.f32 %v2014, %v1247
  %v2094 = vadd.f32 %v2015, %v1250
  %v2095 = vadd.f32 %v2016, %v1252
  %v2096 = vadd.f32 %v2017, %v1255
  %v2097 = vadd.f32 %v2018, %v1257
  %v2098 = vadd.f32 %v2019, %v1260
  %v2099 = vadd.f32 %v2020, %v1262
  %v2100 = vadd.f32 %v2021, %v1265
  %v2101 = vadd.f32 %v2022, %v1267
  %v2102 = vadd.f32 %v2023, %v1270
  %v2103 = vadd.f32 %v2024, %v1272
  %v2104 = vadd.f32 %v2025, %v1275
  %v2105 = vadd.f32 %v2026, %v1277
  %v2106 = vadd.f32 %v2027, %v1280
  %v2107 = vadd.f32 %v2028, %v1282
  %v2108 = vadd.f32 %v2029, %v1285
  %v2109 = vadd.f32 %v2030, %v1287
  %v2110 = vadd.f32 %v2031, %v1290
  %v2111 = vadd.f32 %v2032, %v1292
  %v2112 = vadd.f32 %v2033, %v1295
  %v2113 = vadd.f32 %v2034, %v1297
  %v2114 = vadd.f32 %v2035, %v1300
  %v2115 = vadd.f32 %v2036, %v1302
  %v2116 = vmax.f32 %v2090, -32.0
  %v2117 = vmax.f32 %v2091, -32.0
  %v2118 = vmax.f32 %v2092, -32.0
  %v2119 = vmax.f32 %v2093, -32.0
  %v2120 = vmax.f32 %v2094, -32.0
  %v2121 = vmax.f32 %v2095, -32.0
  %v2122 = vmax.f32 %v2096, -32.0
  %v2123 = vmax.f32 %v2097, -32.0
  %v2124 = vmax.f32 %v2098, -32.0
  %v2125 = vmax.f32 %v2099, -32.0
  %v2126 = vmax.f32 %v2100, -32.0
  %v2127 = vmax.f32 %v2101, -32.0
  %v2128 = vmax.f32 %v2102, -32.0
  %v2129 = vmax.f32 %v2103, -32.0
  %v2130 = vmax.f32 %v2104, -32.0
  %v2131 = vmax.f32 %v2105, -32.0
  %v2132 = vmax.f32 %v2106, -32.0
  %v2133 = vmax.f32 %v2107, -32.0
  %v2134 = vmax.f32 %v2108, -32.0
  %v2135 = vmax.f32 %v2109, -32.0
  %v2136 = vmax.f32 %v2110, -32.0
  %v2137 = vmax.f32 %v2111, -32.0
  %v2138 = vmax.f32 %v2112, -32.0
  %v2139 = vmax.f32 %v2113, -32.0
  %v2140 = vmax.f32 %v2114, -32.0
  %v2141 = vmax.f32 %v2115, -32.0
  %v2142 = vmin.f32 %v2116, 32.0
  %v2143 = vmin.f32 %v2117, 32.0
  %v2144 = vmin.f32 %v2118, 32.0
  %v2145 = vmin.f32 %v2119, 32.0
  %v2146 = vmin.f32 %v2120, 32.0
  %v2147 = vmin.f32 %v2121, 32.0
  %v2148 = vmin.f32 %v2122, 32.0
  %v2149 = vmin.f32 %v2123, 32.0
  %v2150 = vmin.f32 %v2124, 32.0
  %v2151 = vmin.f32 %v2125, 32.0
  %v2152 = vmin.f32 %v2126, 32.0
  %v2153 = vmin.f32 %v2127, 32.0
  %v2154 = vmin.f32 %v2128, 32.0
  %v2155 = vmin.f32 %v2129, 32.0
  %v2156 = vmin.f32 %v2130, 32.0
  %v2157 = vmin.f32 %v2131, 32.0
  %v2158 = vmin.f32 %v2132, 32.0
  %v2159 = vmin.f32 %v2133, 32.0
  %v2160 = vmin.f32 %v2134, 32.0
  %v2161 = vmin.f32 %v2135, 32.0
  %v2162 = vmin.f32 %v2136, 32.0
  %v2163 = vmin.f32 %v2137, 32.0
  %v2164 = vmin.f32 %v2138, 32.0
  %v2165 = vmin.f32 %v2139, 32.0
  %v2166 = vmin.f32 %v2140, 32.0
  %v2167 = vmin.f32 %v2141, 32.0
  %vm2168 = vcmp.ge.f32.partialorder %v2142, %v1384
  %vm2169 = vcmp.ge.f32.partialorder %v2143, %v1384
  %vm2170 = vcmp.ge.f32.partialorder %v2144, %v1384
  %vm2171 = vcmp.ge.f32.partialorder %v2145, %v1384
  %vm2172 = vcmp.ge.f32.partialorder %v2146, %v1384
  %vm2173 = vcmp.ge.f32.partialorder %v2147, %v1384
  %vm2174 = vcmp.ge.f32.partialorder %v2148, %v1384
  %vm2175 = vcmp.ge.f32.partialorder %v2149, %v1384
  %vm2176 = vcmp.ge.f32.partialorder %v2150, %v1384
  %vm2177 = vcmp.ge.f32.partialorder %v2151, %v1384
  %vm2178 = vcmp.ge.f32.partialorder %v2152, %v1384
  %vm2179 = vcmp.ge.f32.partialorder %v2153, %v1384
  %vm2180 = vcmp.ge.f32.partialorder %v2154, %v1384
  %vm2181 = vcmp.ge.f32.partialorder %v2155, %v1384
  %vm2182 = vcmp.ge.f32.partialorder %v2156, %v1384
  %vm2183 = vcmp.ge.f32.partialorder %v2157, %v1384
  %vm2184 = vcmp.ge.f32.partialorder %v2158, %v1384
  %vm2185 = vcmp.ge.f32.partialorder %v2159, %v1384
  %vm2186 = vcmp.ge.f32.partialorder %v2160, %v1384
  %vm2187 = vcmp.ge.f32.partialorder %v2161, %v1384
  %vm2188 = vcmp.ge.f32.partialorder %v2162, %v1384
  %vm2189 = vcmp.ge.f32.partialorder %v2163, %v1384
  %vm2190 = vcmp.ge.f32.partialorder %v2164, %v1384
  %vm2191 = vcmp.ge.f32.partialorder %v2165, %v1384
  %vm2192 = vcmp.ge.f32.partialorder %v2166, %v1384
  %vm2193 = vcmp.ge.f32.partialorder %v2167, %v1384
  %v2194 = vsel %vm2168, 1, 0
  %v2195 = vsel %vm2169, 1, 0
  %v2196 = vsel %vm2170, 1, 0
  %v2197 = vsel %vm2171, 1, 0
  %v2198 = vsel %vm2172, 1, 0
  %v2199 = vsel %vm2173, 1, 0
  %v2200 = vsel %vm2174, 1, 0
  %v2201 = vsel %vm2175, 1, 0
  %v2202 = vsel %vm2176, 1, 0
  %v2203 = vsel %vm2177, 1, 0
  %v2204 = vsel %vm2178, 1, 0
  %v2205 = vsel %vm2179, 1, 0
  %v2206 = vsel %vm2180, 1, 0
  %v2207 = vsel %vm2181, 1, 0
  %v2208 = vsel %vm2182, 1, 0
  %v2209 = vsel %vm2183, 1, 0
  %v2210 = vsel %vm2184, 1, 0
  %v2211 = vsel %vm2185, 1, 0
  %v2212 = vsel %vm2186, 1, 0
  %v2213 = vsel %vm2187, 1, 0
  %v2214 = vsel %vm2188, 1, 0
  %v2215 = vsel %vm2189, 1, 0
  %v2216 = vsel %vm2190, 1, 0
  %v2217 = vsel %vm2191, 1, 0
  %v2218 = vsel %vm2192, 1, 0
  %v2219 = vsel %vm2193, 1, 0
  %v2220 = vcvt.s32.f32 %v2194
  %v2221 = vcvt.s32.f32 %v2195
  %v2222 = vcvt.s32.f32 %v2196
  %v2223 = vcvt.s32.f32 %v2197
  %v2224 = vcvt.s32.f32 %v2198
  %v2225 = vcvt.s32.f32 %v2199
  %v2226 = vcvt.s32.f32 %v2200
  %v2227 = vcvt.s32.f32 %v2201
  %v2228 = vcvt.s32.f32 %v2202
  %v2229 = vcvt.s32.f32 %v2203
  %v2230 = vcvt.s32.f32 %v2204
  %v2231 = vcvt.s32.f32 %v2205
  %v2232 = vcvt.s32.f32 %v2206
  %v2233 = vcvt.s32.f32 %v2207
  %v2234 = vcvt.s32.f32 %v2208
  %v2235 = vcvt.s32.f32 %v2209
  %v2236 = vcvt.s32.f32 %v2210
  %v2237 = vcvt.s32.f32 %v2211
  %v2238 = vcvt.s32.f32 %v2212
  %v2239 = vcvt.s32.f32 %v2213
  %v2240 = vcvt.s32.f32 %v2214
  %v2241 = vcvt.s32.f32 %v2215
  %v2242 = vcvt.s32.f32 %v2216
  %v2243 = vcvt.s32.f32 %v2217
  %v2244 = vcvt.s32.f32 %v2218
  %v2245 = vcvt.s32.f32 %v2219
  %v2246 = vpack.c.bf16 %v2220, %v2220
  %v2247 = vpack.c.bf16 %v2221, %v2221
  %v2248 = vpack.c.bf16 %v2222, %v2222
  %v2249 = vpack.c.bf16 %v2223, %v2223
  %v2250 = vpack.c.bf16 %v2224, %v2224
  %v2251 = vpack.c.bf16 %v2225, %v2225
  %v2252 = vpack.c.bf16 %v2226, %v2226
  %v2253 = vpack.c.bf16 %v2227, %v2227
  %v2254 = vpack.c.bf16 %v2228, %v2228
  %v2255 = vpack.c.bf16 %v2229, %v2229
  %v2256 = vpack.c.bf16 %v2230, %v2230
  %v2257 = vpack.c.bf16 %v2231, %v2231
  %v2258 = vpack.c.bf16 %v2232, %v2232
  %v2259 = vpack.c.bf16 %v2233, %v2233
  %v2260 = vpack.c.bf16 %v2234, %v2234
  %v2261 = vpack.c.bf16 %v2235, %v2235
  %v2262 = vpack.c.bf16 %v2236, %v2236
  %v2263 = vpack.c.bf16 %v2237, %v2237
  %v2264 = vpack.c.bf16 %v2238, %v2238
  %v2265 = vpack.c.bf16 %v2239, %v2239
  %v2266 = vpack.c.bf16 %v2240, %v2240
  %v2267 = vpack.c.bf16 %v2241, %v2241
  %v2268 = vpack.c.bf16 %v2242, %v2242
  %v2269 = vpack.c.bf16 %v2243, %v2243
  %v2270 = vpack.c.bf16 %v2244, %v2244
  %v2271 = vpack.c.bf16 %v2245, %v2245
  %s2272 = scalar_lea.vmem %s3, 312
  %2273 = vst [vmem:[%s2272] sm:$0xf] %v2246
  %2274 = vst [vmem:[%s2272 + $0x4] sm:$0xf] %v2247
  %2275 = vst [vmem:[%s2272 + $0x8] sm:$0xf] %v2248
  %2276 = vst [vmem:[%s2272 + $0xc] sm:$0xf] %v2249
  %2277 = vst [vmem:[%s2272 + $0x10] sm:$0xf] %v2250
  %2278 = vst [vmem:[%s2272 + $0x14] sm:$0xf] %v2251
  %2279 = vst [vmem:[%s2272 + $0x18] sm:$0xf] %v2252
  %2280 = vst [vmem:[%s2272 + $0x1c] sm:$0xf] %v2253
  %2281 = vst [vmem:[%s2272 + $0x20] sm:$0xf] %v2254
  %2282 = vst [vmem:[%s2272 + $0x24] sm:$0xf] %v2255
  %2283 = vst [vmem:[%s2272 + $0x28] sm:$0xf] %v2256
  %2284 = vst [vmem:[%s2272 + $0x2c] sm:$0xf] %v2257
  %2285 = vst [vmem:[%s2272 + $0x30] sm:$0xf] %v2258
  %2286 = vst [vmem:[%s2272 + $0x34] sm:$0xf] %v2259
  %2287 = vst [vmem:[%s2272 + $0x38] sm:$0xf] %v2260
  %2288 = vst [vmem:[%s2272 + $0x3c] sm:$0xf] %v2261
  %2289 = vst [vmem:[%s2272 + $0x40] sm:$0xf] %v2262
  %2290 = vst [vmem:[%s2272 + $0x44] sm:$0xf] %v2263
  %2291 = vst [vmem:[%s2272 + $0x48] sm:$0xf] %v2264
  %2292 = vst [vmem:[%s2272 + $0x4c] sm:$0xf] %v2265
  %2293 = vst [vmem:[%s2272 + $0x50] sm:$0xf] %v2266
  %2294 = vst [vmem:[%s2272 + $0x54] sm:$0xf] %v2267
  %2295 = vst [vmem:[%s2272 + $0x58] sm:$0xf] %v2268
  %2296 = vst [vmem:[%s2272 + $0x5c] sm:$0xf] %v2269
  %2297 = vst [vmem:[%s2272 + $0x60] sm:$0xf] %v2270
  %2298 = vst [vmem:[%s2272 + $0x64] sm:$0xf] %v2271
  // Predicated region
  $region14: #{_lambda_.6} parent=0 // pred_check
    _
  $region15: #{_lambda_.6} parent=0 // pred_check_branch
    %2300 = sbr.rel (0) target = $region17
  $region16: #{_lambda_.6} parent=0 // pred_region
    _
  $region17: #{_lambda_.6} parent=0 // pred_fallthru
    _
  // Predicated region
  $region18: #{_lambda_.6} parent=0 // pred_check
    _
  $region19: #{_lambda_.6} parent=0 // pred_check_branch
    %2302 = sbr.rel (0) target = $region21
  $region20: #{_lambda_.6} parent=0 // pred_region
    _
  $region21: #{_lambda_.6} parent=0 // pred_fallthru
    _

// kernel: _lambda_.7
$region0: #{_lambda_.7}
  #allocation0 [shape = 'u32[]', space=smem, size = 0x4, offset = 0x4, fixed_abs, tag = 'smem constant byte address 0x4 - core index']
  #allocation1 [shape = 'u32[72,128]{1,0:T(1,128)}', space=vmem, size = 0x9000, scoped, tag = 'internal scratch']
  %s0 = inlined_call_operand.vmem [shape: bf16[4,112,256], index: 0, kind: input, shape index: {}]
  %s1 = inlined_call_operand.vmem [shape: bf16[256,128], index: 1, kind: input, shape index: {}]
  %s2 = inlined_call_operand.vmem [shape: f32[1,128], index: 2, kind: input, shape index: {}]
  %s3 = inlined_call_operand.vmem [shape: bf16[4,112,128], index: 3, kind: output, shape index: {}]
  %s4 = sld [smem:[#allocation0]]
  $region22: #{_lambda_.7} parent=0
    _
  %s6 = ssub.s32 1, %s4
  %s7 = scalar_select 0, %s6, %s4
  // Predicated region
  $region2: #{_lambda_.7} parent=0 // pred_check
    _
  $region3: #{_lambda_.7} parent=0 // pred_check_branch
    %9 = sbr.rel (0) target = $region5
  $region4: #{_lambda_.7} parent=0 // pred_region
    _
  $region5: #{_lambda_.7} parent=0 // pred_fallthru
    _
  // Predicated region
  $region6: #{_lambda_.7} parent=0 // pred_check
    _
  $region7: #{_lambda_.7} parent=0 // pred_check_branch
    %11 = sbr.rel (0) target = $region9
  $region8: #{_lambda_.7} parent=0 // pred_region
    _
  $region9: #{_lambda_.7} parent=0 // pred_fallthru
    _
  // Predicated region
  $region10: #{_lambda_.7} parent=0 // pred_check
    _
  $region11: #{_lambda_.7} parent=0 // pred_check_branch
    %13 = sbr.rel (0) target = $region13
  $region12: #{_lambda_.7} parent=0 // pred_region
    _
  $region13: #{_lambda_.7} parent=0 // pred_fallthru
    _
  %v14 = vld [vmem:[%s0] sm:$0xff]
  %v15 = vld [vmem:[%s0 + $0x8] sm:$0xff]
  %v16 = vld [vmem:[%s0 + $0x10] sm:$0xff]
  %v17 = vld [vmem:[%s0 + $0x18] sm:$0xff]
  %v18 = vld [vmem:[%s0 + $0x20] sm:$0xff]
  %v19 = vld [vmem:[%s0 + $0x28] sm:$0xff]
  %v20 = vld [vmem:[%s0 + $0x30] sm:$0xff]
  %v21 = vld [vmem:[%s0 + $0x38] sm:$0xff]
  %v22 = vld [vmem:[%s0 + $0x40] sm:$0xff]
  %v23 = vld [vmem:[%s0 + $0x48] sm:$0xff]
  %v24 = vld [vmem:[%s0 + $0x50] sm:$0xff]
  %v25 = vld [vmem:[%s0 + $0x58] sm:$0xff]
  %v26 = vld [vmem:[%s0 + $0x60] sm:$0xff]
  %v27 = vld [vmem:[%s0 + $0x68] sm:$0xff]
  %v28 = vld [vmem:[%s0 + $0x70] sm:$0xff]
  %v29 = vld [vmem:[%s0 + $0x78] sm:$0xff]
  %v30 = vld [vmem:[%s0 + $0x80] sm:$0xff]
  %v31 = vld [vmem:[%s0 + $0x88] sm:$0xff]
  %v32 = vld [vmem:[%s0 + $0x90] sm:$0xff]
  %v33 = vld [vmem:[%s0 + $0x98] sm:$0xff]
  %v34 = vld [vmem:[%s0 + $0xa0] sm:$0xff]
  %v35 = vld [vmem:[%s0 + $0xa8] sm:$0xff]
  %v36 = vld [vmem:[%s0 + $0xb0] sm:$0xff]
  %v37 = vld [vmem:[%s0 + $0xb8] sm:$0xff]
  %v38 = vld [vmem:[%s0 + $0xc0] sm:$0xff]
  %v39 = vld [vmem:[%s0 + $0xc8] sm:$0xff]
  %v40 = vld [vmem:[%s0 + $0xd0] sm:$0xff]
  %v41 = vld [vmem:[%s0 + $0xd8] sm:$0xff]
  %v42 = vld [vmem:[%s0 + $0xe0] sm:$0xff]
  %v43 = vld [vmem:[%s0 + $0xe8] sm:$0xff]
  %v44 = vld [vmem:[%s0 + $0xf0] sm:$0xff]
  %v45 = vld [vmem:[%s0 + $0xf8] sm:$0xff]
  %v46 = vld [vmem:[%s0 + $0x100] sm:$0xff]
  %v47 = vld [vmem:[%s0 + $0x108] sm:$0xff]
  %v48 = vld [vmem:[%s0 + $0x110] sm:$0xff]
  %v49 = vld [vmem:[%s0 + $0x118] sm:$0xff]
  %v50 = vld [vmem:[%s0 + $0x120] sm:$0xff]
  %v51 = vld [vmem:[%s0 + $0x128] sm:$0xff]
  %v52 = vld [vmem:[%s0 + $0x130] sm:$0xff]
  %v53 = vld [vmem:[%s0 + $0x138] sm:$0xff]
  %v54 = vld [vmem:[%s0 + $0x140] sm:$0xff]
  %v55 = vld [vmem:[%s0 + $0x148] sm:$0xff]
  %v56 = vld [vmem:[%s0 + $0x150] sm:$0xff]
  %v57 = vld [vmem:[%s0 + $0x158] sm:$0xff]
  %v58 = vld [vmem:[%s0 + $0x160] sm:$0xff]
  %v59 = vld [vmem:[%s0 + $0x168] sm:$0xff]
  %v60 = vld [vmem:[%s0 + $0x170] sm:$0xff]
  %v61 = vld [vmem:[%s0 + $0x178] sm:$0xff]
  %v62 = vld [vmem:[%s0 + $0x180] sm:$0xff]
  %v63 = vld [vmem:[%s0 + $0x188] sm:$0xff]
  %v64 = vld [vmem:[%s0 + $0x190] sm:$0xff]
  %v65 = vld [vmem:[%s0 + $0x198] sm:$0xff]
  %v66 = vld [vmem:[%s0 + $0x1a0] sm:$0xff]
  %v67 = vld [vmem:[%s0 + $0x1a8] sm:$0xff]
  %v68 = vld [vmem:[%s0 + $0x1b0] sm:$0xff]
  %v69 = vld [vmem:[%s0 + $0x1b8] sm:$0xff]
  %v70 = vld [vmem:[%s1] sm:$0xf]
  %v71 = vld [vmem:[%s1 + $0x4] sm:$0xf]
  %v72 = vld [vmem:[%s1 + $0x8] sm:$0xf]
  %v73 = vld [vmem:[%s1 + $0xc] sm:$0xf]
  %v74 = vld [vmem:[%s1 + $0x10] sm:$0xf]
  %v75 = vld [vmem:[%s1 + $0x14] sm:$0xf]
  %v76 = vld [vmem:[%s1 + $0x18] sm:$0xf]
  %v77 = vld [vmem:[%s1 + $0x1c] sm:$0xf]
  %v78 = vld [vmem:[%s1 + $0x20] sm:$0xf]
  %v79 = vld [vmem:[%s1 + $0x24] sm:$0xf]
  %v80 = vld [vmem:[%s1 + $0x28] sm:$0xf]
  %v81 = vld [vmem:[%s1 + $0x2c] sm:$0xf]
  %v82 = vld [vmem:[%s1 + $0x30] sm:$0xf]
  %v83 = vld [vmem:[%s1 + $0x34] sm:$0xf]
  %v84 = vld [vmem:[%s1 + $0x38] sm:$0xf]
  %v85 = vld [vmem:[%s1 + $0x3c] sm:$0xf]
  %v86 = vld [vmem:[%s1 + $0x40] sm:$0xf]
  %v87 = vld [vmem:[%s1 + $0x44] sm:$0xf]
  %v88 = vld [vmem:[%s1 + $0x48] sm:$0xf]
  %v89 = vld [vmem:[%s1 + $0x4c] sm:$0xf]
  %v90 = vld [vmem:[%s1 + $0x50] sm:$0xf]
  %v91 = vld [vmem:[%s1 + $0x54] sm:$0xf]
  %v92 = vld [vmem:[%s1 + $0x58] sm:$0xf]
  %v93 = vld [vmem:[%s1 + $0x5c] sm:$0xf]
  %v94 = vld [vmem:[%s1 + $0x60] sm:$0xf]
  %v95 = vld [vmem:[%s1 + $0x64] sm:$0xf]
  %v96 = vld [vmem:[%s1 + $0x68] sm:$0xf]
  %v97 = vld [vmem:[%s1 + $0x6c] sm:$0xf]
  %v98 = vld [vmem:[%s1 + $0x70] sm:$0xf]
  %v99 = vld [vmem:[%s1 + $0x74] sm:$0xf]
  %v100 = vld [vmem:[%s1 + $0x78] sm:$0xf]
  %v101 = vld [vmem:[%s1 + $0x7c] sm:$0xf]
  %v158 = vunpack.c.l.b16 %v14
  %v159 = vunpack.c.h.b16 %v14
  %v160 = vunpack.c.l.b16 %v15
  %v161 = vunpack.c.h.b16 %v15
  %v162 = vunpack.c.l.b16 %v16
  %v163 = vunpack.c.h.b16 %v16
  %v164 = vunpack.c.l.b16 %v17
  %v165 = vunpack.c.h.b16 %v17
  %v166 = vunpack.c.l.b16 %v18
  %v167 = vunpack.c.h.b16 %v18
  %v168 = vunpack.c.l.b16 %v19
  %v169 = vunpack.c.h.b16 %v19
  %v170 = vunpack.c.l.b16 %v20
  %v171 = vunpack.c.h.b16 %v20
  %v172 = vunpack.c.l.b16 %v21
  %v173 = vunpack.c.h.b16 %v21
  %v174 = vunpack.c.l.b16 %v22
  %v175 = vunpack.c.h.b16 %v22
  %v176 = vunpack.c.l.b16 %v23
  %v177 = vunpack.c.h.b16 %v23
  %v178 = vunpack.c.l.b16 %v24
  %v179 = vunpack.c.h.b16 %v24
  %v180 = vunpack.c.l.b16 %v25
  %v181 = vunpack.c.h.b16 %v25
  %v182 = vunpack.c.l.b16 %v26
  %v183 = vunpack.c.h.b16 %v26
  %v184 = vunpack.c.l.b16 %v27
  %v185 = vunpack.c.h.b16 %v27
  %v186 = vunpack.c.l.b16 %v28
  %v187 = vunpack.c.h.b16 %v28
  %v188 = vunpack.c.l.b16 %v29
  %v189 = vunpack.c.h.b16 %v29
  %v190 = vunpack.c.l.b16 %v30
  %v191 = vunpack.c.h.b16 %v30
  %v192 = vunpack.c.l.b16 %v31
  %v193 = vunpack.c.h.b16 %v31
  %v194 = vunpack.c.l.b16 %v32
  %v195 = vunpack.c.h.b16 %v32
  %v196 = vunpack.c.l.b16 %v33
  %v197 = vunpack.c.h.b16 %v33
  %v198 = vunpack.c.l.b16 %v34
  %v199 = vunpack.c.h.b16 %v34
  %v200 = vunpack.c.l.b16 %v35
  %v201 = vunpack.c.h.b16 %v35
  %v202 = vunpack.c.l.b16 %v36
  %v203 = vunpack.c.h.b16 %v36
  %v204 = vunpack.c.l.b16 %v37
  %v205 = vunpack.c.h.b16 %v37
  %v206 = vunpack.c.l.b16 %v38
  %v207 = vunpack.c.h.b16 %v38
  %v208 = vunpack.c.l.b16 %v39
  %v209 = vunpack.c.h.b16 %v39
  %v210 = vunpack.c.l.b16 %v40
  %v211 = vunpack.c.h.b16 %v40
  %v212 = vunpack.c.l.b16 %v41
  %v213 = vunpack.c.h.b16 %v41
  %v214 = vunpack.c.l.b16 %v42
  %v215 = vunpack.c.h.b16 %v42
  %v216 = vunpack.c.l.b16 %v43
  %v217 = vunpack.c.h.b16 %v43
  %v218 = vunpack.c.l.b16 %v44
  %v219 = vunpack.c.h.b16 %v44
  %v220 = vunpack.c.l.b16 %v45
  %v221 = vunpack.c.h.b16 %v45
  %v222 = vunpack.c.l.b16 %v46
  %v223 = vunpack.c.h.b16 %v46
  %v224 = vunpack.c.l.b16 %v47
  %v225 = vunpack.c.h.b16 %v47
  %v226 = vunpack.c.l.b16 %v48
  %v227 = vunpack.c.h.b16 %v48
  %v228 = vunpack.c.l.b16 %v49
  %v229 = vunpack.c.h.b16 %v49
  %v230 = vunpack.c.l.b16 %v50
  %v231 = vunpack.c.h.b16 %v50
  %v232 = vunpack.c.l.b16 %v51
  %v233 = vunpack.c.h.b16 %v51
  %v234 = vunpack.c.l.b16 %v52
  %v235 = vunpack.c.h.b16 %v52
  %v236 = vunpack.c.l.b16 %v53
  %v237 = vunpack.c.h.b16 %v53
  %v238 = vunpack.c.l.b16 %v54
  %v239 = vunpack.c.h.b16 %v54
  %v240 = vunpack.c.l.b16 %v55
  %v241 = vunpack.c.h.b16 %v55
  %v242 = vunpack.c.l.b16 %v56
  %v243 = vunpack.c.h.b16 %v56
  %v244 = vunpack.c.l.b16 %v57
  %v245 = vunpack.c.h.b16 %v57
  %v246 = vunpack.c.l.b16 %v58
  %v247 = vunpack.c.h.b16 %v58
  %v248 = vunpack.c.l.b16 %v59
  %v249 = vunpack.c.h.b16 %v59
  %v250 = vunpack.c.l.b16 %v60
  %v251 = vunpack.c.h.b16 %v60
  %v252 = vunpack.c.l.b16 %v61
  %v253 = vunpack.c.h.b16 %v61
  %v254 = vunpack.c.l.b16 %v62
  %v255 = vunpack.c.h.b16 %v62
  %v256 = vunpack.c.l.b16 %v63
  %v257 = vunpack.c.h.b16 %v63
  %v258 = vunpack.c.l.b16 %v64
  %v259 = vunpack.c.h.b16 %v64
  %v260 = vunpack.c.l.b16 %v65
  %v261 = vunpack.c.h.b16 %v65
  %v262 = vunpack.c.l.b16 %v66
  %v263 = vunpack.c.h.b16 %v66
  %v264 = vunpack.c.l.b16 %v67
  %v265 = vunpack.c.h.b16 %v67
  %v266 = vunpack.c.l.b16 %v68
  %v267 = vunpack.c.h.b16 %v68
  %v268 = vunpack.c.l.b16 %v69
  %v269 = vunpack.c.h.b16 %v69
  %v270 = vpack.c.b16 %v160, %v158
  %v271 = vpack.c.b16 %v161, %v159
  %v272 = vpack.c.b16 %v164, %v162
  %v273 = vpack.c.b16 %v165, %v163
  %v274 = vpack.c.b16 %v168, %v166
  %v275 = vpack.c.b16 %v169, %v167
  %v276 = vpack.c.b16 %v172, %v170
  %v277 = vpack.c.b16 %v173, %v171
  %v278 = vpack.c.b16 %v176, %v174
  %v279 = vpack.c.b16 %v177, %v175
  %v280 = vpack.c.b16 %v180, %v178
  %v281 = vpack.c.b16 %v181, %v179
  %v282 = vpack.c.b16 %v184, %v182
  %v283 = vpack.c.b16 %v185, %v183
  %v284 = vpack.c.b16 %v188, %v186
  %v285 = vpack.c.b16 %v189, %v187
  %v286 = vpack.c.b16 %v192, %v190
  %v287 = vpack.c.b16 %v193, %v191
  %v288 = vpack.c.b16 %v196, %v194
  %v289 = vpack.c.b16 %v197, %v195
  %v290 = vpack.c.b16 %v200, %v198
  %v291 = vpack.c.b16 %v201, %v199
  %v292 = vpack.c.b16 %v204, %v202
  %v293 = vpack.c.b16 %v205, %v203
  %v294 = vpack.c.b16 %v208, %v206
  %v295 = vpack.c.b16 %v209, %v207
  %v296 = vpack.c.b16 %v212, %v210
  %v297 = vpack.c.b16 %v213, %v211
  %v298 = vpack.c.b16 %v216, %v214
  %v299 = vpack.c.b16 %v217, %v215
  %v300 = vpack.c.b16 %v220, %v218
  %v301 = vpack.c.b16 %v221, %v219
  %v302 = vpack.c.b16 %v224, %v222
  %v303 = vpack.c.b16 %v225, %v223
  %v304 = vpack.c.b16 %v228, %v226
  %v305 = vpack.c.b16 %v229, %v227
  %v306 = vpack.c.b16 %v232, %v230
  %v307 = vpack.c.b16 %v233, %v231
  %v308 = vpack.c.b16 %v236, %v234
  %v309 = vpack.c.b16 %v237, %v235
  %v310 = vpack.c.b16 %v240, %v238
  %v311 = vpack.c.b16 %v241, %v239
  %v312 = vpack.c.b16 %v244, %v242
  %v313 = vpack.c.b16 %v245, %v243
  %v314 = vpack.c.b16 %v248, %v246
  %v315 = vpack.c.b16 %v249, %v247
  %v316 = vpack.c.b16 %v252, %v250
  %v317 = vpack.c.b16 %v253, %v251
  %v318 = vpack.c.b16 %v256, %v254
  %v319 = vpack.c.b16 %v257, %v255
  %v320 = vpack.c.b16 %v260, %v258
  %v321 = vpack.c.b16 %v261, %v259
  %v322 = vpack.c.b16 %v264, %v262
  %v323 = vpack.c.b16 %v265, %v263
  %v324 = vpack.c.b16 %v268, %v266
  %v325 = vpack.c.b16 %v269, %v267
  %v414 = vunpack.c.l.b16 %v70
  %v415 = vunpack.c.l.b16 %v71
  %v416 = vunpack.c.l.b16 %v72
  %v417 = vunpack.c.l.b16 %v73
  %v418 = vunpack.c.l.b16 %v74
  %v419 = vunpack.c.l.b16 %v75
  %v420 = vunpack.c.l.b16 %v76
  %v421 = vunpack.c.l.b16 %v77
  %v422 = vunpack.c.l.b16 %v78
  %v423 = vunpack.c.l.b16 %v79
  %v424 = vunpack.c.l.b16 %v80
  %v425 = vunpack.c.l.b16 %v81
  %v426 = vunpack.c.l.b16 %v82
  %v427 = vunpack.c.l.b16 %v83
  %v428 = vunpack.c.l.b16 %v84
  %v429 = vunpack.c.l.b16 %v85
  %v430 = vunpack.c.l.b16 %v86
  %v431 = vunpack.c.l.b16 %v87
  %v432 = vunpack.c.l.b16 %v88
  %v433 = vunpack.c.l.b16 %v89
  %v434 = vunpack.c.l.b16 %v90
  %v435 = vunpack.c.l.b16 %v91
  %v436 = vunpack.c.l.b16 %v92
  %v437 = vunpack.c.l.b16 %v93
  %v438 = vunpack.c.l.b16 %v94
  %v439 = vunpack.c.l.b16 %v95
  %v440 = vunpack.c.l.b16 %v96
  %v441 = vunpack.c.l.b16 %v97
  %v442 = vunpack.c.l.b16 %v98
  %v443 = vunpack.c.l.b16 %v99
  %v444 = vunpack.c.l.b16 %v100
  %v445 = vunpack.c.l.b16 %v101
  %v446 = vpack.c.b16 %v415, %v414
  %v447 = vpack.c.b16 %v417, %v416
  %v448 = vpack.c.b16 %v419, %v418
  %v449 = vpack.c.b16 %v421, %v420
  %v450 = vpack.c.b16 %v423, %v422
  %v451 = vpack.c.b16 %v425, %v424
  %v452 = vpack.c.b16 %v427, %v426
  %v453 = vpack.c.b16 %v429, %v428
  %v454 = vpack.c.b16 %v431, %v430
  %v455 = vpack.c.b16 %v433, %v432
  %v456 = vpack.c.b16 %v435, %v434
  %v457 = vpack.c.b16 %v437, %v436
  %v458 = vpack.c.b16 %v439, %v438
  %v459 = vpack.c.b16 %v441, %v440
  %v460 = vpack.c.b16 %v443, %v442
  %v461 = vpack.c.b16 %v445, %v444
  %478 = vmatpush.bf16.msra.mxu0 %v453
  %479 = vmatpush.bf16.msra.mxu0 %v452
  %480 = vmatpush.bf16.msra.mxu0 %v451
  %481 = vmatpush.bf16.msra.mxu0 %v450
  %482 = vmatpush.bf16.msra.mxu0 %v449
  %483 = vmatpush.bf16.msra.mxu0 %v448
  %484 = vmatpush.bf16.msra.mxu0 %v447
  %485 = vmatpush.bf16.msra.mxu0 %v446
  %486 = vmatmul.bf16.gmra.mxu0 %v270
  %v487 = vpop.f32.mrf.mxu0
  %v488 = vadd.f32 0.0, %v487
  %v489 = vpop.f32.mrf.mxu0
  %v490 = vadd.f32 0.0, %v489
  %491 = vmatmul.bf16.gmra.mxu0 %v272
  %v492 = vpop.f32.mrf.mxu0
  %v493 = vadd.f32 0.0, %v492
  %v494 = vpop.f32.mrf.mxu0
  %v495 = vadd.f32 0.0, %v494
  %496 = vmatmul.bf16.gmra.mxu0 %v274
  %v497 = vpop.f32.mrf.mxu0
  %v498 = vadd.f32 0.0, %v497
  %v499 = vpop.f32.mrf.mxu0
  %v500 = vadd.f32 0.0, %v499
  %501 = vmatmul.bf16.gmra.mxu0 %v276
  %v502 = vpop.f32.mrf.mxu0
  %v503 = vadd.f32 0.0, %v502
  %v504 = vpop.f32.mrf.mxu0
  %v505 = vadd.f32 0.0, %v504
  %506 = vmatmul.bf16.gmra.mxu0 %v278
  %v507 = vpop.f32.mrf.mxu0
  %v508 = vadd.f32 0.0, %v507
  %v509 = vpop.f32.mrf.mxu0
  %v510 = vadd.f32 0.0, %v509
  %511 = vmatmul.bf16.gmra.mxu0 %v280
  %v512 = vpop.f32.mrf.mxu0
  %v513 = vadd.f32 0.0, %v512
  %v514 = vpop.f32.mrf.mxu0
  %v515 = vadd.f32 0.0, %v514
  %516 = vmatmul.bf16.gmra.mxu0 %v282
  %v517 = vpop.f32.mrf.mxu0
  %v518 = vadd.f32 0.0, %v517
  %v519 = vpop.f32.mrf.mxu0
  %v520 = vadd.f32 0.0, %v519
  %521 = vmatmul.bf16.gmra.mxu0 %v284
  %v522 = vpop.f32.mrf.mxu0
  %v523 = vadd.f32 0.0, %v522
  %v524 = vpop.f32.mrf.mxu0
  %v525 = vadd.f32 0.0, %v524
  %526 = vmatmul.bf16.gmra.mxu0 %v286
  %v527 = vpop.f32.mrf.mxu0
  %v528 = vadd.f32 0.0, %v527
  %v529 = vpop.f32.mrf.mxu0
  %v530 = vadd.f32 0.0, %v529
  %531 = vmatmul.bf16.gmra.mxu0 %v288
  %v532 = vpop.f32.mrf.mxu0
  %v533 = vadd.f32 0.0, %v532
  %v534 = vpop.f32.mrf.mxu0
  %v535 = vadd.f32 0.0, %v534
  %536 = vmatmul.bf16.gmra.mxu0 %v290
  %v537 = vpop.f32.mrf.mxu0
  %v538 = vadd.f32 0.0, %v537
  %v539 = vpop.f32.mrf.mxu0
  %v540 = vadd.f32 0.0, %v539
  %541 = vmatmul.bf16.gmra.mxu0 %v292
  %v542 = vpop.f32.mrf.mxu0
  %v543 = vadd.f32 0.0, %v542
  %v544 = vpop.f32.mrf.mxu0
  %v545 = vadd.f32 0.0, %v544
  %546 = vmatmul.bf16.gmra.mxu0 %v294
  %v547 = vpop.f32.mrf.mxu0
  %v548 = vadd.f32 0.0, %v547
  %v549 = vpop.f32.mrf.mxu0
  %v550 = vadd.f32 0.0, %v549
  %551 = vmatmul.bf16.gmra.mxu0 %v296
  %v552 = vpop.f32.mrf.mxu0
  %v553 = vadd.f32 0.0, %v552
  %v554 = vpop.f32.mrf.mxu0
  %v555 = vadd.f32 0.0, %v554
  %556 = vmatmul.bf16.gmra.mxu0 %v298
  %v557 = vpop.f32.mrf.mxu0
  %v558 = vadd.f32 0.0, %v557
  %v559 = vpop.f32.mrf.mxu0
  %v560 = vadd.f32 0.0, %v559
  %561 = vmatmul.bf16.gmra.mxu0 %v300
  %v562 = vpop.f32.mrf.mxu0
  %v563 = vadd.f32 0.0, %v562
  %v564 = vpop.f32.mrf.mxu0
  %v565 = vadd.f32 0.0, %v564
  %566 = vmatmul.bf16.gmra.mxu0 %v302
  %v567 = vpop.f32.mrf.mxu0
  %v568 = vadd.f32 0.0, %v567
  %v569 = vpop.f32.mrf.mxu0
  %v570 = vadd.f32 0.0, %v569
  %571 = vmatmul.bf16.gmra.mxu0 %v304
  %v572 = vpop.f32.mrf.mxu0
  %v573 = vadd.f32 0.0, %v572
  %v574 = vpop.f32.mrf.mxu0
  %v575 = vadd.f32 0.0, %v574
  %576 = vmatmul.bf16.gmra.mxu0 %v306
  %v577 = vpop.f32.mrf.mxu0
  %v578 = vadd.f32 0.0, %v577
  %v579 = vpop.f32.mrf.mxu0
  %v580 = vadd.f32 0.0, %v579
  %581 = vmatmul.bf16.gmra.mxu0 %v308
  %v582 = vpop.f32.mrf.mxu0
  %v583 = vadd.f32 0.0, %v582
  %v584 = vpop.f32.mrf.mxu0
  %v585 = vadd.f32 0.0, %v584
  %586 = vmatmul.bf16.gmra.mxu0 %v310
  %v587 = vpop.f32.mrf.mxu0
  %v588 = vadd.f32 0.0, %v587
  %v589 = vpop.f32.mrf.mxu0
  %v590 = vadd.f32 0.0, %v589
  %591 = vmatmul.bf16.gmra.mxu0 %v312
  %v592 = vpop.f32.mrf.mxu0
  %v593 = vadd.f32 0.0, %v592
  %v594 = vpop.f32.mrf.mxu0
  %v595 = vadd.f32 0.0, %v594
  %596 = vmatmul.bf16.gmra.mxu0 %v314
  %v597 = vpop.f32.mrf.mxu0
  %v598 = vadd.f32 0.0, %v597
  %v599 = vpop.f32.mrf.mxu0
  %v600 = vadd.f32 0.0, %v599
  %601 = vmatmul.bf16.gmra.mxu0 %v316
  %v602 = vpop.f32.mrf.mxu0
  %v603 = vadd.f32 0.0, %v602
  %v604 = vpop.f32.mrf.mxu0
  %v605 = vadd.f32 0.0, %v604
  %606 = vmatmul.bf16.gmra.mxu0 %v318
  %v607 = vpop.f32.mrf.mxu0
  %v608 = vadd.f32 0.0, %v607
  %v609 = vpop.f32.mrf.mxu0
  %v610 = vadd.f32 0.0, %v609
  %611 = vmatmul.bf16.gmra.mxu0 %v320
  %v612 = vpop.f32.mrf.mxu0
  %v613 = vadd.f32 0.0, %v612
  %v614 = vpop.f32.mrf.mxu0
  %v615 = vadd.f32 0.0, %v614
  %616 = vmatmul.bf16.gmra.mxu0 %v322
  %v617 = vpop.f32.mrf.mxu0
  %v618 = vadd.f32 0.0, %v617
  %v619 = vpop.f32.mrf.mxu0
  %v620 = vadd.f32 0.0, %v619
  %621 = vmatmul.bf16.gmra.mxu0 %v324
  %v622 = vpop.f32.mrf.mxu0
  %v623 = vadd.f32 0.0, %v622
  %v624 = vpop.f32.mrf.mxu0
  %v625 = vadd.f32 0.0, %v624
  %626 = vdwg.mxu0
  %627 = vmatpush.bf16.msra.mxu0 %v461
  %628 = vmatpush.bf16.msra.mxu0 %v460
  %629 = vmatpush.bf16.msra.mxu0 %v459
  %630 = vmatpush.bf16.msra.mxu0 %v458
  %631 = vmatpush.bf16.msra.mxu0 %v457
  %632 = vmatpush.bf16.msra.mxu0 %v456
  %633 = vmatpush.bf16.msra.mxu0 %v455
  %634 = vmatpush.bf16.msra.mxu0 %v454
  %635 = vmatmul.bf16.gmra.mxu0 %v271
  %v636 = vpop.f32.mrf.mxu0
  %v637 = vadd.f32 %v488, %v636
  %v638 = vpop.f32.mrf.mxu0
  %v639 = vadd.f32 %v490, %v638
  %640 = vmatmul.bf16.gmra.mxu0 %v273
  %v641 = vpop.f32.mrf.mxu0
  %v642 = vadd.f32 %v493, %v641
  %v643 = vpop.f32.mrf.mxu0
  %v644 = vadd.f32 %v495, %v643
  %645 = vmatmul.bf16.gmra.mxu0 %v275
  %v646 = vpop.f32.mrf.mxu0
  %v647 = vadd.f32 %v498, %v646
  %v648 = vpop.f32.mrf.mxu0
  %v649 = vadd.f32 %v500, %v648
  %650 = vmatmul.bf16.gmra.mxu0 %v277
  %v651 = vpop.f32.mrf.mxu0
  %v652 = vadd.f32 %v503, %v651
  %v653 = vpop.f32.mrf.mxu0
  %v654 = vadd.f32 %v505, %v653
  %655 = vmatmul.bf16.gmra.mxu0 %v279
  %v656 = vpop.f32.mrf.mxu0
  %v657 = vadd.f32 %v508, %v656
  %v658 = vpop.f32.mrf.mxu0
  %v659 = vadd.f32 %v510, %v658
  %660 = vmatmul.bf16.gmra.mxu0 %v281
  %v661 = vpop.f32.mrf.mxu0
  %v662 = vadd.f32 %v513, %v661
  %v663 = vpop.f32.mrf.mxu0
  %v664 = vadd.f32 %v515, %v663
  %665 = vmatmul.bf16.gmra.mxu0 %v283
  %v666 = vpop.f32.mrf.mxu0
  %v667 = vadd.f32 %v518, %v666
  %v668 = vpop.f32.mrf.mxu0
  %v669 = vadd.f32 %v520, %v668
  %670 = vmatmul.bf16.gmra.mxu0 %v285
  %v671 = vpop.f32.mrf.mxu0
  %v672 = vadd.f32 %v523, %v671
  %v673 = vpop.f32.mrf.mxu0
  %v674 = vadd.f32 %v525, %v673
  %675 = vmatmul.bf16.gmra.mxu0 %v287
  %v676 = vpop.f32.mrf.mxu0
  %v677 = vadd.f32 %v528, %v676
  %v678 = vpop.f32.mrf.mxu0
  %v679 = vadd.f32 %v530, %v678
  %680 = vmatmul.bf16.gmra.mxu0 %v289
  %v681 = vpop.f32.mrf.mxu0
  %v682 = vadd.f32 %v533, %v681
  %v683 = vpop.f32.mrf.mxu0
  %v684 = vadd.f32 %v535, %v683
  %685 = vmatmul.bf16.gmra.mxu0 %v291
  %v686 = vpop.f32.mrf.mxu0
  %v687 = vadd.f32 %v538, %v686
  %v688 = vpop.f32.mrf.mxu0
  %v689 = vadd.f32 %v540, %v688
  %690 = vmatmul.bf16.gmra.mxu0 %v293
  %v691 = vpop.f32.mrf.mxu0
  %v692 = vadd.f32 %v543, %v691
  %v693 = vpop.f32.mrf.mxu0
  %v694 = vadd.f32 %v545, %v693
  %695 = vmatmul.bf16.gmra.mxu0 %v295
  %v696 = vpop.f32.mrf.mxu0
  %v697 = vadd.f32 %v548, %v696
  %v698 = vpop.f32.mrf.mxu0
  %v699 = vadd.f32 %v550, %v698
  %700 = vmatmul.bf16.gmra.mxu0 %v297
  %v701 = vpop.f32.mrf.mxu0
  %v702 = vadd.f32 %v553, %v701
  %v703 = vpop.f32.mrf.mxu0
  %v704 = vadd.f32 %v555, %v703
  %705 = vmatmul.bf16.gmra.mxu0 %v299
  %v706 = vpop.f32.mrf.mxu0
  %v707 = vadd.f32 %v558, %v706
  %v708 = vpop.f32.mrf.mxu0
  %v709 = vadd.f32 %v560, %v708
  %710 = vmatmul.bf16.gmra.mxu0 %v301
  %v711 = vpop.f32.mrf.mxu0
  %v712 = vadd.f32 %v563, %v711
  %v713 = vpop.f32.mrf.mxu0
  %v714 = vadd.f32 %v565, %v713
  %715 = vmatmul.bf16.gmra.mxu0 %v303
  %v716 = vpop.f32.mrf.mxu0
  %v717 = vadd.f32 %v568, %v716
  %v718 = vpop.f32.mrf.mxu0
  %v719 = vadd.f32 %v570, %v718
  %720 = vmatmul.bf16.gmra.mxu0 %v305
  %v721 = vpop.f32.mrf.mxu0
  %v722 = vadd.f32 %v573, %v721
  %v723 = vpop.f32.mrf.mxu0
  %v724 = vadd.f32 %v575, %v723
  %725 = vmatmul.bf16.gmra.mxu0 %v307
  %v726 = vpop.f32.mrf.mxu0
  %v727 = vadd.f32 %v578, %v726
  %v728 = vpop.f32.mrf.mxu0
  %v729 = vadd.f32 %v580, %v728
  %730 = vmatmul.bf16.gmra.mxu0 %v309
  %v731 = vpop.f32.mrf.mxu0
  %v732 = vadd.f32 %v583, %v731
  %v733 = vpop.f32.mrf.mxu0
  %v734 = vadd.f32 %v585, %v733
  %735 = vmatmul.bf16.gmra.mxu0 %v311
  %v736 = vpop.f32.mrf.mxu0
  %v737 = vadd.f32 %v588, %v736
  %v738 = vpop.f32.mrf.mxu0
  %v739 = vadd.f32 %v590, %v738
  %740 = vmatmul.bf16.gmra.mxu0 %v313
  %v741 = vpop.f32.mrf.mxu0
  %v742 = vadd.f32 %v593, %v741
  %v743 = vpop.f32.mrf.mxu0
  %v744 = vadd.f32 %v595, %v743
  %745 = vmatmul.bf16.gmra.mxu0 %v315
  %v746 = vpop.f32.mrf.mxu0
  %v747 = vadd.f32 %v598, %v746
  %v748 = vpop.f32.mrf.mxu0
  %v749 = vadd.f32 %v600, %v748
  %750 = vmatmul.bf16.gmra.mxu0 %v317
  %v751 = vpop.f32.mrf.mxu0
  %v752 = vadd.f32 %v603, %v751
  %v753 = vpop.f32.mrf.mxu0
  %v754 = vadd.f32 %v605, %v753
  %755 = vmatmul.bf16.gmra.mxu0 %v319
  %v756 = vpop.f32.mrf.mxu0
  %v757 = vadd.f32 %v608, %v756
  %v758 = vpop.f32.mrf.mxu0
  %v759 = vadd.f32 %v610, %v758
  %760 = vmatmul.bf16.gmra.mxu0 %v321
  %v761 = vpop.f32.mrf.mxu0
  %v762 = vadd.f32 %v613, %v761
  %v763 = vpop.f32.mrf.mxu0
  %v764 = vadd.f32 %v615, %v763
  %765 = vmatmul.bf16.gmra.mxu0 %v323
  %v766 = vpop.f32.mrf.mxu0
  %v767 = vadd.f32 %v618, %v766
  %v768 = vpop.f32.mrf.mxu0
  %v769 = vadd.f32 %v620, %v768
  %770 = vmatmul.bf16.gmra.mxu0 %v325
  %v771 = vpop.f32.mrf.mxu0
  %v772 = vadd.f32 %v623, %v771
  %v773 = vpop.f32.mrf.mxu0
  %v774 = vadd.f32 %v625, %v773
  %775 = vdwg.mxu0
  %v776 = vld [vmem:[%s2] sm:$0x1]
  %v777 = vadd.f32 %v637, 0.0
  %v778 = vadd.f32 %v639, 0.0
  %v779 = vadd.f32 %v642, 0.0
  %v780 = vadd.f32 %v644, 0.0
  %v781 = vadd.f32 %v647, 0.0
  %v782 = vadd.f32 %v649, 0.0
  %v783 = vadd.f32 %v652, 0.0
  %v784 = vadd.f32 %v654, 0.0
  %v785 = vadd.f32 %v657, 0.0
  %v786 = vadd.f32 %v659, 0.0
  %v787 = vadd.f32 %v662, 0.0
  %v788 = vadd.f32 %v664, 0.0
  %v789 = vadd.f32 %v667, 0.0
  %v790 = vadd.f32 %v669, 0.0
  %v791 = vmax.f32 %v777, -32.0
  %v792 = vmax.f32 %v778, -32.0
  %v793 = vmax.f32 %v779, -32.0
  %v794 = vmax.f32 %v780, -32.0
  %v795 = vmax.f32 %v781, -32.0
  %v796 = vmax.f32 %v782, -32.0
  %v797 = vmax.f32 %v783, -32.0
  %v798 = vmax.f32 %v784, -32.0
  %v799 = vmax.f32 %v785, -32.0
  %v800 = vmax.f32 %v786, -32.0
  %v801 = vmax.f32 %v787, -32.0
  %v802 = vmax.f32 %v788, -32.0
  %v803 = vmax.f32 %v789, -32.0
  %v804 = vmax.f32 %v790, -32.0
  %v805 = vmin.f32 %v791, 32.0
  %v806 = vmin.f32 %v792, 32.0
  %v807 = vmin.f32 %v793, 32.0
  %v808 = vmin.f32 %v794, 32.0
  %v809 = vmin.f32 %v795, 32.0
  %v810 = vmin.f32 %v796, 32.0
  %v811 = vmin.f32 %v797, 32.0
  %v812 = vmin.f32 %v798, 32.0
  %v813 = vmin.f32 %v799, 32.0
  %v814 = vmin.f32 %v800, 32.0
  %v815 = vmin.f32 %v801, 32.0
  %v816 = vmin.f32 %v802, 32.0
  %v817 = vmin.f32 %v803, 32.0
  %v818 = vmin.f32 %v804, 32.0
  %v820 = vperm.slane %v776, 0
  %vm822 = vcmp.ge.f32.partialorder %v805, %v820
  %vm823 = vcmp.ge.f32.partialorder %v806, %v820
  %vm824 = vcmp.ge.f32.partialorder %v807, %v820
  %vm825 = vcmp.ge.f32.partialorder %v808, %v820
  %vm826 = vcmp.ge.f32.partialorder %v809, %v820
  %vm827 = vcmp.ge.f32.partialorder %v810, %v820
  %vm828 = vcmp.ge.f32.partialorder %v811, %v820
  %vm829 = vcmp.ge.f32.partialorder %v812, %v820
  %vm830 = vcmp.ge.f32.partialorder %v813, %v820
  %vm831 = vcmp.ge.f32.partialorder %v814, %v820
  %vm832 = vcmp.ge.f32.partialorder %v815, %v820
  %vm833 = vcmp.ge.f32.partialorder %v816, %v820
  %vm834 = vcmp.ge.f32.partialorder %v817, %v820
  %vm835 = vcmp.ge.f32.partialorder %v818, %v820
  %v836 = vsel %vm822, 1, 0
  %v837 = vsel %vm823, 1, 0
  %v838 = vsel %vm824, 1, 0
  %v839 = vsel %vm825, 1, 0
  %v840 = vsel %vm826, 1, 0
  %v841 = vsel %vm827, 1, 0
  %v842 = vsel %vm828, 1, 0
  %v843 = vsel %vm829, 1, 0
  %v844 = vsel %vm830, 1, 0
  %v845 = vsel %vm831, 1, 0
  %v846 = vsel %vm832, 1, 0
  %v847 = vsel %vm833, 1, 0
  %v848 = vsel %vm834, 1, 0
  %v849 = vsel %vm835, 1, 0
  %v850 = vcvt.s32.f32 %v836
  %v851 = vcvt.s32.f32 %v837
  %v852 = vcvt.s32.f32 %v838
  %v853 = vcvt.s32.f32 %v839
  %v854 = vcvt.s32.f32 %v840
  %v855 = vcvt.s32.f32 %v841
  %v856 = vcvt.s32.f32 %v842
  %v857 = vcvt.s32.f32 %v843
  %v858 = vcvt.s32.f32 %v844
  %v859 = vcvt.s32.f32 %v845
  %v860 = vcvt.s32.f32 %v846
  %v861 = vcvt.s32.f32 %v847
  %v862 = vcvt.s32.f32 %v848
  %v863 = vcvt.s32.f32 %v849
  %v864 = vsub.f32 1.0, %v850
  %v865 = vsub.f32 1.0, %v851
  %v866 = vsub.f32 1.0, %v852
  %v867 = vsub.f32 1.0, %v853
  %v868 = vsub.f32 1.0, %v854
  %v869 = vsub.f32 1.0, %v855
  %v870 = vsub.f32 1.0, %v856
  %v871 = vsub.f32 1.0, %v857
  %v872 = vsub.f32 1.0, %v858
  %v873 = vsub.f32 1.0, %v859
  %v874 = vsub.f32 1.0, %v860
  %v875 = vsub.f32 1.0, %v861
  %v876 = vsub.f32 1.0, %v862
  %v877 = vsub.f32 1.0, %v863
  %v878 = vmul.f32 %v805, %v864
  %v879 = vmul.f32 %v806, %v865
  %v880 = vmul.f32 %v807, %v866
  %v881 = vmul.f32 %v808, %v867
  %v882 = vmul.f32 %v809, %v868
  %v883 = vmul.f32 %v810, %v869
  %v884 = vmul.f32 %v811, %v870
  %v885 = vmul.f32 %v812, %v871
  %v886 = vmul.f32 %v813, %v872
  %v887 = vmul.f32 %v814, %v873
  %v888 = vmul.f32 %v815, %v874
  %v889 = vmul.f32 %v816, %v875
  %v890 = vmul.f32 %v817, %v876
  %v891 = vmul.f32 %v818, %v877
  %v892 = vpack.c.bf16 %v850, %v850
  %v893 = vpack.c.bf16 %v851, %v851
  %v894 = vpack.c.bf16 %v852, %v852
  %v895 = vpack.c.bf16 %v853, %v853
  %v896 = vpack.c.bf16 %v854, %v854
  %v897 = vpack.c.bf16 %v855, %v855
  %v898 = vpack.c.bf16 %v856, %v856
  %v899 = vpack.c.bf16 %v857, %v857
  %v900 = vpack.c.bf16 %v858, %v858
  %v901 = vpack.c.bf16 %v859, %v859
  %v902 = vpack.c.bf16 %v860, %v860
  %v903 = vpack.c.bf16 %v861, %v861
  %v904 = vpack.c.bf16 %v862, %v862
  %v905 = vpack.c.bf16 %v863, %v863
  %906 = vst [vmem:[%s3] sm:$0xf] %v892
  %907 = vst [vmem:[%s3 + $0x4] sm:$0xf] %v893
  %908 = vst [vmem:[%s3 + $0x8] sm:$0xf] %v894
  %909 = vst [vmem:[%s3 + $0xc] sm:$0xf] %v895
  %910 = vst [vmem:[%s3 + $0x10] sm:$0xf] %v896
  %911 = vst [vmem:[%s3 + $0x14] sm:$0xf] %v897
  %912 = vst [vmem:[%s3 + $0x18] sm:$0xf] %v898
  %913 = vst [vmem:[%s3 + $0x1c] sm:$0xf] %v899
  %914 = vst [vmem:[%s3 + $0x20] sm:$0xf] %v900
  %915 = vst [vmem:[%s3 + $0x24] sm:$0xf] %v901
  %916 = vst [vmem:[%s3 + $0x28] sm:$0xf] %v902
  %917 = vst [vmem:[%s3 + $0x2c] sm:$0xf] %v903
  %918 = vst [vmem:[%s3 + $0x30] sm:$0xf] %v904
  %919 = vst [vmem:[%s3 + $0x34] sm:$0xf] %v905
  %v920 = vadd.f32 %v878, %v672
  %v921 = vadd.f32 %v879, %v674
  %v922 = vadd.f32 %v880, %v677
  %v923 = vadd.f32 %v881, %v679
  %v924 = vadd.f32 %v882, %v682
  %v925 = vadd.f32 %v883, %v684
  %v926 = vadd.f32 %v884, %v687
  %v927 = vadd.f32 %v885, %v689
  %v928 = vadd.f32 %v886, %v692
  %v929 = vadd.f32 %v887, %v694
  %v930 = vadd.f32 %v888, %v697
  %v931 = vadd.f32 %v889, %v699
  %v932 = vadd.f32 %v890, %v702
  %v933 = vadd.f32 %v891, %v704
  %v934 = vmax.f32 %v920, -32.0
  %v935 = vmax.f32 %v921, -32.0
  %v936 = vmax.f32 %v922, -32.0
  %v937 = vmax.f32 %v923, -32.0
  %v938 = vmax.f32 %v924, -32.0
  %v939 = vmax.f32 %v925, -32.0
  %v940 = vmax.f32 %v926, -32.0
  %v941 = vmax.f32 %v927, -32.0
  %v942 = vmax.f32 %v928, -32.0
  %v943 = vmax.f32 %v929, -32.0
  %v944 = vmax.f32 %v930, -32.0
  %v945 = vmax.f32 %v931, -32.0
  %v946 = vmax.f32 %v932, -32.0
  %v947 = vmax.f32 %v933, -32.0
  %v948 = vmin.f32 %v934, 32.0
  %v949 = vmin.f32 %v935, 32.0
  %v950 = vmin.f32 %v936, 32.0
  %v951 = vmin.f32 %v937, 32.0
  %v952 = vmin.f32 %v938, 32.0
  %v953 = vmin.f32 %v939, 32.0
  %v954 = vmin.f32 %v940, 32.0
  %v955 = vmin.f32 %v941, 32.0
  %v956 = vmin.f32 %v942, 32.0
  %v957 = vmin.f32 %v943, 32.0
  %v958 = vmin.f32 %v944, 32.0
  %v959 = vmin.f32 %v945, 32.0
  %v960 = vmin.f32 %v946, 32.0
  %v961 = vmin.f32 %v947, 32.0
  %vm962 = vcmp.ge.f32.partialorder %v948, %v820
  %vm963 = vcmp.ge.f32.partialorder %v949, %v820
  %vm964 = vcmp.ge.f32.partialorder %v950, %v820
  %vm965 = vcmp.ge.f32.partialorder %v951, %v820
  %vm966 = vcmp.ge.f32.partialorder %v952, %v820
  %vm967 = vcmp.ge.f32.partialorder %v953, %v820
  %vm968 = vcmp.ge.f32.partialorder %v954, %v820
  %vm969 = vcmp.ge.f32.partialorder %v955, %v820
  %vm970 = vcmp.ge.f32.partialorder %v956, %v820
  %vm971 = vcmp.ge.f32.partialorder %v957, %v820
  %vm972 = vcmp.ge.f32.partialorder %v958, %v820
  %vm973 = vcmp.ge.f32.partialorder %v959, %v820
  %vm974 = vcmp.ge.f32.partialorder %v960, %v820
  %vm975 = vcmp.ge.f32.partialorder %v961, %v820
  %v976 = vsel %vm962, 1, 0
  %v977 = vsel %vm963, 1, 0
  %v978 = vsel %vm964, 1, 0
  %v979 = vsel %vm965, 1, 0
  %v980 = vsel %vm966, 1, 0
  %v981 = vsel %vm967, 1, 0
  %v982 = vsel %vm968, 1, 0
  %v983 = vsel %vm969, 1, 0
  %v984 = vsel %vm970, 1, 0
  %v985 = vsel %vm971, 1, 0
  %v986 = vsel %vm972, 1, 0
  %v987 = vsel %vm973, 1, 0
  %v988 = vsel %vm974, 1, 0
  %v989 = vsel %vm975, 1, 0
  %v990 = vcvt.s32.f32 %v976
  %v991 = vcvt.s32.f32 %v977
  %v992 = vcvt.s32.f32 %v978
  %v993 = vcvt.s32.f32 %v979
  %v994 = vcvt.s32.f32 %v980
  %v995 = vcvt.s32.f32 %v981
  %v996 = vcvt.s32.f32 %v982
  %v997 = vcvt.s32.f32 %v983
  %v998 = vcvt.s32.f32 %v984
  %v999 = vcvt.s32.f32 %v985
  %v1000 = vcvt.s32.f32 %v986
  %v1001 = vcvt.s32.f32 %v987
  %v1002 = vcvt.s32.f32 %v988
  %v1003 = vcvt.s32.f32 %v989
  %v1004 = vsub.f32 1.0, %v990
  %v1005 = vsub.f32 1.0, %v991
  %v1006 = vsub.f32 1.0, %v992
  %v1007 = vsub.f32 1.0, %v993
  %v1008 = vsub.f32 1.0, %v994
  %v1009 = vsub.f32 1.0, %v995
  %v1010 = vsub.f32 1.0, %v996
  %v1011 = vsub.f32 1.0, %v997
  %v1012 = vsub.f32 1.0, %v998
  %v1013 = vsub.f32 1.0, %v999
  %v1014 = vsub.f32 1.0, %v1000
  %v1015 = vsub.f32 1.0, %v1001
  %v1016 = vsub.f32 1.0, %v1002
  %v1017 = vsub.f32 1.0, %v1003
  %v1018 = vmul.f32 %v948, %v1004
  %v1019 = vmul.f32 %v949, %v1005
  %v1020 = vmul.f32 %v950, %v1006
  %v1021 = vmul.f32 %v951, %v1007
  %v1022 = vmul.f32 %v952, %v1008
  %v1023 = vmul.f32 %v953, %v1009
  %v1024 = vmul.f32 %v954, %v1010
  %v1025 = vmul.f32 %v955, %v1011
  %v1026 = vmul.f32 %v956, %v1012
  %v1027 = vmul.f32 %v957, %v1013
  %v1028 = vmul.f32 %v958, %v1014
  %v1029 = vmul.f32 %v959, %v1015
  %v1030 = vmul.f32 %v960, %v1016
  %v1031 = vmul.f32 %v961, %v1017
  %v1032 = vpack.c.bf16 %v990, %v990
  %v1033 = vpack.c.bf16 %v991, %v991
  %v1034 = vpack.c.bf16 %v992, %v992
  %v1035 = vpack.c.bf16 %v993, %v993
  %v1036 = vpack.c.bf16 %v994, %v994
  %v1037 = vpack.c.bf16 %v995, %v995
  %v1038 = vpack.c.bf16 %v996, %v996
  %v1039 = vpack.c.bf16 %v997, %v997
  %v1040 = vpack.c.bf16 %v998, %v998
  %v1041 = vpack.c.bf16 %v999, %v999
  %v1042 = vpack.c.bf16 %v1000, %v1000
  %v1043 = vpack.c.bf16 %v1001, %v1001
  %v1044 = vpack.c.bf16 %v1002, %v1002
  %v1045 = vpack.c.bf16 %v1003, %v1003
  %s1046 = scalar_lea.vmem %s3, 56
  %1047 = vst [vmem:[%s1046] sm:$0xf] %v1032
  %1048 = vst [vmem:[%s1046 + $0x4] sm:$0xf] %v1033
  %1049 = vst [vmem:[%s1046 + $0x8] sm:$0xf] %v1034
  %1050 = vst [vmem:[%s1046 + $0xc] sm:$0xf] %v1035
  %1051 = vst [vmem:[%s1046 + $0x10] sm:$0xf] %v1036
  %1052 = vst [vmem:[%s1046 + $0x14] sm:$0xf] %v1037
  %1053 = vst [vmem:[%s1046 + $0x18] sm:$0xf] %v1038
  %1054 = vst [vmem:[%s1046 + $0x1c] sm:$0xf] %v1039
  %1055 = vst [vmem:[%s1046 + $0x20] sm:$0xf] %v1040
  %1056 = vst [vmem:[%s1046 + $0x24] sm:$0xf] %v1041
  %1057 = vst [vmem:[%s1046 + $0x28] sm:$0xf] %v1042
  %1058 = vst [vmem:[%s1046 + $0x2c] sm:$0xf] %v1043
  %1059 = vst [vmem:[%s1046 + $0x30] sm:$0xf] %v1044
  %1060 = vst [vmem:[%s1046 + $0x34] sm:$0xf] %v1045
  %v1061 = vadd.f32 %v1018, %v707
  %v1062 = vadd.f32 %v1019, %v709
  %v1063 = vadd.f32 %v1020, %v712
  %v1064 = vadd.f32 %v1021, %v714
  %v1065 = vadd.f32 %v1022, %v717
  %v1066 = vadd.f32 %v1023, %v719
  %v1067 = vadd.f32 %v1024, %v722
  %v1068 = vadd.f32 %v1025, %v724
  %v1069 = vadd.f32 %v1026, %v727
  %v1070 = vadd.f32 %v1027, %v729
  %v1071 = vadd.f32 %v1028, %v732
  %v1072 = vadd.f32 %v1029, %v734
  %v1073 = vadd.f32 %v1030, %v737
  %v1074 = vadd.f32 %v1031, %v739
  %v1075 = vmax.f32 %v1061, -32.0
  %v1076 = vmax.f32 %v1062, -32.0
  %v1077 = vmax.f32 %v1063, -32.0
  %v1078 = vmax.f32 %v1064, -32.0
  %v1079 = vmax.f32 %v1065, -32.0
  %v1080 = vmax.f32 %v1066, -32.0
  %v1081 = vmax.f32 %v1067, -32.0
  %v1082 = vmax.f32 %v1068, -32.0
  %v1083 = vmax.f32 %v1069, -32.0
  %v1084 = vmax.f32 %v1070, -32.0
  %v1085 = vmax.f32 %v1071, -32.0
  %v1086 = vmax.f32 %v1072, -32.0
  %v1087 = vmax.f32 %v1073, -32.0
  %v1088 = vmax.f32 %v1074, -32.0
  %v1089 = vmin.f32 %v1075, 32.0
  %v1090 = vmin.f32 %v1076, 32.0
  %v1091 = vmin.f32 %v1077, 32.0
  %v1092 = vmin.f32 %v1078, 32.0
  %v1093 = vmin.f32 %v1079, 32.0
  %v1094 = vmin.f32 %v1080, 32.0
  %v1095 = vmin.f32 %v1081, 32.0
  %v1096 = vmin.f32 %v1082, 32.0
  %v1097 = vmin.f32 %v1083, 32.0
  %v1098 = vmin.f32 %v1084, 32.0
  %v1099 = vmin.f32 %v1085, 32.0
  %v1100 = vmin.f32 %v1086, 32.0
  %v1101 = vmin.f32 %v1087, 32.0
  %v1102 = vmin.f32 %v1088, 32.0
  %vm1103 = vcmp.ge.f32.partialorder %v1089, %v820
  %vm1104 = vcmp.ge.f32.partialorder %v1090, %v820
  %vm1105 = vcmp.ge.f32.partialorder %v1091, %v820
  %vm1106 = vcmp.ge.f32.partialorder %v1092, %v820
  %vm1107 = vcmp.ge.f32.partialorder %v1093, %v820
  %vm1108 = vcmp.ge.f32.partialorder %v1094, %v820
  %vm1109 = vcmp.ge.f32.partialorder %v1095, %v820
  %vm1110 = vcmp.ge.f32.partialorder %v1096, %v820
  %vm1111 = vcmp.ge.f32.partialorder %v1097, %v820
  %vm1112 = vcmp.ge.f32.partialorder %v1098, %v820
  %vm1113 = vcmp.ge.f32.partialorder %v1099, %v820
  %vm1114 = vcmp.ge.f32.partialorder %v1100, %v820
  %vm1115 = vcmp.ge.f32.partialorder %v1101, %v820
  %vm1116 = vcmp.ge.f32.partialorder %v1102, %v820
  %v1117 = vsel %vm1103, 1, 0
  %v1118 = vsel %vm1104, 1, 0
  %v1119 = vsel %vm1105, 1, 0
  %v1120 = vsel %vm1106, 1, 0
  %v1121 = vsel %vm1107, 1, 0
  %v1122 = vsel %vm1108, 1, 0
  %v1123 = vsel %vm1109, 1, 0
  %v1124 = vsel %vm1110, 1, 0
  %v1125 = vsel %vm1111, 1, 0
  %v1126 = vsel %vm1112, 1, 0
  %v1127 = vsel %vm1113, 1, 0
  %v1128 = vsel %vm1114, 1, 0
  %v1129 = vsel %vm1115, 1, 0
  %v1130 = vsel %vm1116, 1, 0
  %v1131 = vcvt.s32.f32 %v1117
  %v1132 = vcvt.s32.f32 %v1118
  %v1133 = vcvt.s32.f32 %v1119
  %v1134 = vcvt.s32.f32 %v1120
  %v1135 = vcvt.s32.f32 %v1121
  %v1136 = vcvt.s32.f32 %v1122
  %v1137 = vcvt.s32.f32 %v1123
  %v1138 = vcvt.s32.f32 %v1124
  %v1139 = vcvt.s32.f32 %v1125
  %v1140 = vcvt.s32.f32 %v1126
  %v1141 = vcvt.s32.f32 %v1127
  %v1142 = vcvt.s32.f32 %v1128
  %v1143 = vcvt.s32.f32 %v1129
  %v1144 = vcvt.s32.f32 %v1130
  %v1145 = vsub.f32 1.0, %v1131
  %v1146 = vsub.f32 1.0, %v1132
  %v1147 = vsub.f32 1.0, %v1133
  %v1148 = vsub.f32 1.0, %v1134
  %v1149 = vsub.f32 1.0, %v1135
  %v1150 = vsub.f32 1.0, %v1136
  %v1151 = vsub.f32 1.0, %v1137
  %v1152 = vsub.f32 1.0, %v1138
  %v1153 = vsub.f32 1.0, %v1139
  %v1154 = vsub.f32 1.0, %v1140
  %v1155 = vsub.f32 1.0, %v1141
  %v1156 = vsub.f32 1.0, %v1142
  %v1157 = vsub.f32 1.0, %v1143
  %v1158 = vsub.f32 1.0, %v1144
  %v1159 = vmul.f32 %v1089, %v1145
  %v1160 = vmul.f32 %v1090, %v1146
  %v1161 = vmul.f32 %v1091, %v1147
  %v1162 = vmul.f32 %v1092, %v1148
  %v1163 = vmul.f32 %v1093, %v1149
  %v1164 = vmul.f32 %v1094, %v1150
  %v1165 = vmul.f32 %v1095, %v1151
  %v1166 = vmul.f32 %v1096, %v1152
  %v1167 = vmul.f32 %v1097, %v1153
  %v1168 = vmul.f32 %v1098, %v1154
  %v1169 = vmul.f32 %v1099, %v1155
  %v1170 = vmul.f32 %v1100, %v1156
  %v1171 = vmul.f32 %v1101, %v1157
  %v1172 = vmul.f32 %v1102, %v1158
  %v1173 = vpack.c.bf16 %v1131, %v1131
  %v1174 = vpack.c.bf16 %v1132, %v1132
  %v1175 = vpack.c.bf16 %v1133, %v1133
  %v1176 = vpack.c.bf16 %v1134, %v1134
  %v1177 = vpack.c.bf16 %v1135, %v1135
  %v1178 = vpack.c.bf16 %v1136, %v1136
  %v1179 = vpack.c.bf16 %v1137, %v1137
  %v1180 = vpack.c.bf16 %v1138, %v1138
  %v1181 = vpack.c.bf16 %v1139, %v1139
  %v1182 = vpack.c.bf16 %v1140, %v1140
  %v1183 = vpack.c.bf16 %v1141, %v1141
  %v1184 = vpack.c.bf16 %v1142, %v1142
  %v1185 = vpack.c.bf16 %v1143, %v1143
  %v1186 = vpack.c.bf16 %v1144, %v1144
  %s1187 = scalar_lea.vmem %s3, 112
  %1188 = vst [vmem:[%s1187] sm:$0xf] %v1173
  %1189 = vst [vmem:[%s1187 + $0x4] sm:$0xf] %v1174
  %1190 = vst [vmem:[%s1187 + $0x8] sm:$0xf] %v1175
  %1191 = vst [vmem:[%s1187 + $0xc] sm:$0xf] %v1176
  %1192 = vst [vmem:[%s1187 + $0x10] sm:$0xf] %v1177
  %1193 = vst [vmem:[%s1187 + $0x14] sm:$0xf] %v1178
  %1194 = vst [vmem:[%s1187 + $0x18] sm:$0xf] %v1179
  %1195 = vst [vmem:[%s1187 + $0x1c] sm:$0xf] %v1180
  %1196 = vst [vmem:[%s1187 + $0x20] sm:$0xf] %v1181
  %1197 = vst [vmem:[%s1187 + $0x24] sm:$0xf] %v1182
  %1198 = vst [vmem:[%s1187 + $0x28] sm:$0xf] %v1183
  %1199 = vst [vmem:[%s1187 + $0x2c] sm:$0xf] %v1184
  %1200 = vst [vmem:[%s1187 + $0x30] sm:$0xf] %v1185
  %1201 = vst [vmem:[%s1187 + $0x34] sm:$0xf] %v1186
  %v1202 = vadd.f32 %v1159, %v742
  %v1203 = vadd.f32 %v1160, %v744
  %v1204 = vadd.f32 %v1161, %v747
  %v1205 = vadd.f32 %v1162, %v749
  %v1206 = vadd.f32 %v1163, %v752
  %v1207 = vadd.f32 %v1164, %v754
  %v1208 = vadd.f32 %v1165, %v757
  %v1209 = vadd.f32 %v1166, %v759
  %v1210 = vadd.f32 %v1167, %v762
  %v1211 = vadd.f32 %v1168, %v764
  %v1212 = vadd.f32 %v1169, %v767
  %v1213 = vadd.f32 %v1170, %v769
  %v1214 = vadd.f32 %v1171, %v772
  %v1215 = vadd.f32 %v1172, %v774
  %v1216 = vmax.f32 %v1202, -32.0
  %v1217 = vmax.f32 %v1203, -32.0
  %v1218 = vmax.f32 %v1204, -32.0
  %v1219 = vmax.f32 %v1205, -32.0
  %v1220 = vmax.f32 %v1206, -32.0
  %v1221 = vmax.f32 %v1207, -32.0
  %v1222 = vmax.f32 %v1208, -32.0
  %v1223 = vmax.f32 %v1209, -32.0
  %v1224 = vmax.f32 %v1210, -32.0
  %v1225 = vmax.f32 %v1211, -32.0
  %v1226 = vmax.f32 %v1212, -32.0
  %v1227 = vmax.f32 %v1213, -32.0
  %v1228 = vmax.f32 %v1214, -32.0
  %v1229 = vmax.f32 %v1215, -32.0
  %v1230 = vmin.f32 %v1216, 32.0
  %v1231 = vmin.f32 %v1217, 32.0
  %v1232 = vmin.f32 %v1218, 32.0
  %v1233 = vmin.f32 %v1219, 32.0
  %v1234 = vmin.f32 %v1220, 32.0
  %v1235 = vmin.f32 %v1221, 32.0
  %v1236 = vmin.f32 %v1222, 32.0
  %v1237 = vmin.f32 %v1223, 32.0
  %v1238 = vmin.f32 %v1224, 32.0
  %v1239 = vmin.f32 %v1225, 32.0
  %v1240 = vmin.f32 %v1226, 32.0
  %v1241 = vmin.f32 %v1227, 32.0
  %v1242 = vmin.f32 %v1228, 32.0
  %v1243 = vmin.f32 %v1229, 32.0
  %vm1244 = vcmp.ge.f32.partialorder %v1230, %v820
  %vm1245 = vcmp.ge.f32.partialorder %v1231, %v820
  %vm1246 = vcmp.ge.f32.partialorder %v1232, %v820
  %vm1247 = vcmp.ge.f32.partialorder %v1233, %v820
  %vm1248 = vcmp.ge.f32.partialorder %v1234, %v820
  %vm1249 = vcmp.ge.f32.partialorder %v1235, %v820
  %vm1250 = vcmp.ge.f32.partialorder %v1236, %v820
  %vm1251 = vcmp.ge.f32.partialorder %v1237, %v820
  %vm1252 = vcmp.ge.f32.partialorder %v1238, %v820
  %vm1253 = vcmp.ge.f32.partialorder %v1239, %v820
  %vm1254 = vcmp.ge.f32.partialorder %v1240, %v820
  %vm1255 = vcmp.ge.f32.partialorder %v1241, %v820
  %vm1256 = vcmp.ge.f32.partialorder %v1242, %v820
  %vm1257 = vcmp.ge.f32.partialorder %v1243, %v820
  %v1258 = vsel %vm1244, 1, 0
  %v1259 = vsel %vm1245, 1, 0
  %v1260 = vsel %vm1246, 1, 0
  %v1261 = vsel %vm1247, 1, 0
  %v1262 = vsel %vm1248, 1, 0
  %v1263 = vsel %vm1249, 1, 0
  %v1264 = vsel %vm1250, 1, 0
  %v1265 = vsel %vm1251, 1, 0
  %v1266 = vsel %vm1252, 1, 0
  %v1267 = vsel %vm1253, 1, 0
  %v1268 = vsel %vm1254, 1, 0
  %v1269 = vsel %vm1255, 1, 0
  %v1270 = vsel %vm1256, 1, 0
  %v1271 = vsel %vm1257, 1, 0
  %v1272 = vcvt.s32.f32 %v1258
  %v1273 = vcvt.s32.f32 %v1259
  %v1274 = vcvt.s32.f32 %v1260
  %v1275 = vcvt.s32.f32 %v1261
  %v1276 = vcvt.s32.f32 %v1262
  %v1277 = vcvt.s32.f32 %v1263
  %v1278 = vcvt.s32.f32 %v1264
  %v1279 = vcvt.s32.f32 %v1265
  %v1280 = vcvt.s32.f32 %v1266
  %v1281 = vcvt.s32.f32 %v1267
  %v1282 = vcvt.s32.f32 %v1268
  %v1283 = vcvt.s32.f32 %v1269
  %v1284 = vcvt.s32.f32 %v1270
  %v1285 = vcvt.s32.f32 %v1271
  %v1286 = vpack.c.bf16 %v1272, %v1272
  %v1287 = vpack.c.bf16 %v1273, %v1273
  %v1288 = vpack.c.bf16 %v1274, %v1274
  %v1289 = vpack.c.bf16 %v1275, %v1275
  %v1290 = vpack.c.bf16 %v1276, %v1276
  %v1291 = vpack.c.bf16 %v1277, %v1277
  %v1292 = vpack.c.bf16 %v1278, %v1278
  %v1293 = vpack.c.bf16 %v1279, %v1279
  %v1294 = vpack.c.bf16 %v1280, %v1280
  %v1295 = vpack.c.bf16 %v1281, %v1281
  %v1296 = vpack.c.bf16 %v1282, %v1282
  %v1297 = vpack.c.bf16 %v1283, %v1283
  %v1298 = vpack.c.bf16 %v1284, %v1284
  %v1299 = vpack.c.bf16 %v1285, %v1285
  %s1300 = scalar_lea.vmem %s3, 168
  %1301 = vst [vmem:[%s1300] sm:$0xf] %v1286
  %1302 = vst [vmem:[%s1300 + $0x4] sm:$0xf] %v1287
  %1303 = vst [vmem:[%s1300 + $0x8] sm:$0xf] %v1288
  %1304 = vst [vmem:[%s1300 + $0xc] sm:$0xf] %v1289
  %1305 = vst [vmem:[%s1300 + $0x10] sm:$0xf] %v1290
  %1306 = vst [vmem:[%s1300 + $0x14] sm:$0xf] %v1291
  %1307 = vst [vmem:[%s1300 + $0x18] sm:$0xf] %v1292
  %1308 = vst [vmem:[%s1300 + $0x1c] sm:$0xf] %v1293
  %1309 = vst [vmem:[%s1300 + $0x20] sm:$0xf] %v1294
  %1310 = vst [vmem:[%s1300 + $0x24] sm:$0xf] %v1295
  %1311 = vst [vmem:[%s1300 + $0x28] sm:$0xf] %v1296
  %1312 = vst [vmem:[%s1300 + $0x2c] sm:$0xf] %v1297
  %1313 = vst [vmem:[%s1300 + $0x30] sm:$0xf] %v1298
  %1314 = vst [vmem:[%s1300 + $0x34] sm:$0xf] %v1299
  // Predicated region
  $region14: #{_lambda_.7} parent=0 // pred_check
    _
  $region15: #{_lambda_.7} parent=0 // pred_check_branch
    %1316 = sbr.rel (0) target = $region17
  $region16: #{_lambda_.7} parent=0 // pred_region
    _
  $region17: #{_lambda_.7} parent=0 // pred_fallthru
    _
  // Predicated region
  $region18: #{_lambda_.7} parent=0 // pred_check
    _
  $region19: #{_lambda_.7} parent=0 // pred_check_branch
    %1318 = sbr.rel (0) target = $region21
  $region20: #{_lambda_.7} parent=0 // pred_region
    _
  $region21: #{_lambda_.7} parent=0 // pred_fallthru
    _

// kernel: _lambda_.8
$region0: #{_lambda_.8}
  #allocation0 [shape = 'u32[]', space=smem, size = 0x4, offset = 0x4, fixed_abs, tag = 'smem constant byte address 0x4 - core index']
  #allocation1 [shape = 'u32[72,128]{1,0:T(1,128)}', space=vmem, size = 0x9000, scoped, tag = 'internal scratch']
  %s0 = inlined_call_operand.vmem [shape: bf16[4,32,256], index: 0, kind: input, shape index: {}]
  %s1 = inlined_call_operand.vmem [shape: bf16[256,128], index: 1, kind: input, shape index: {}]
  %s2 = inlined_call_operand.vmem [shape: f32[1,128], index: 2, kind: input, shape index: {}]
  %s3 = inlined_call_operand.vmem [shape: bf16[4,32,128], index: 3, kind: output, shape index: {}]
  %s4 = sld [smem:[#allocation0]]
  $region22: #{_lambda_.8} parent=0
    _
  %s6 = ssub.s32 1, %s4
  %s7 = scalar_select 0, %s6, %s4
  // Predicated region
  $region2: #{_lambda_.8} parent=0 // pred_check
    _
  $region3: #{_lambda_.8} parent=0 // pred_check_branch
    %9 = sbr.rel (0) target = $region5
  $region4: #{_lambda_.8} parent=0 // pred_region
    _
  $region5: #{_lambda_.8} parent=0 // pred_fallthru
    _
  // Predicated region
  $region6: #{_lambda_.8} parent=0 // pred_check
    _
  $region7: #{_lambda_.8} parent=0 // pred_check_branch
    %11 = sbr.rel (0) target = $region9
  $region8: #{_lambda_.8} parent=0 // pred_region
    _
  $region9: #{_lambda_.8} parent=0 // pred_fallthru
    _
  // Predicated region
  $region10: #{_lambda_.8} parent=0 // pred_check
    _
  $region11: #{_lambda_.8} parent=0 // pred_check_branch
    %13 = sbr.rel (0) target = $region13
  $region12: #{_lambda_.8} parent=0 // pred_region
    _
  $region13: #{_lambda_.8} parent=0 // pred_fallthru
    _
  %v14 = vld [vmem:[%s0] sm:$0xff]
  %v15 = vld [vmem:[%s0 + $0x8] sm:$0xff]
  %v16 = vld [vmem:[%s0 + $0x10] sm:$0xff]
  %v17 = vld [vmem:[%s0 + $0x18] sm:$0xff]
  %v18 = vld [vmem:[%s0 + $0x20] sm:$0xff]
  %v19 = vld [vmem:[%s0 + $0x28] sm:$0xff]
  %v20 = vld [vmem:[%s0 + $0x30] sm:$0xff]
  %v21 = vld [vmem:[%s0 + $0x38] sm:$0xff]
  %v22 = vld [vmem:[%s0 + $0x40] sm:$0xff]
  %v23 = vld [vmem:[%s0 + $0x48] sm:$0xff]
  %v24 = vld [vmem:[%s0 + $0x50] sm:$0xff]
  %v25 = vld [vmem:[%s0 + $0x58] sm:$0xff]
  %v26 = vld [vmem:[%s0 + $0x60] sm:$0xff]
  %v27 = vld [vmem:[%s0 + $0x68] sm:$0xff]
  %v28 = vld [vmem:[%s0 + $0x70] sm:$0xff]
  %v29 = vld [vmem:[%s0 + $0x78] sm:$0xff]
  %v30 = vld [vmem:[%s1] sm:$0xf]
  %v31 = vld [vmem:[%s1 + $0x4] sm:$0xf]
  %v32 = vld [vmem:[%s1 + $0x8] sm:$0xf]
  %v33 = vld [vmem:[%s1 + $0xc] sm:$0xf]
  %v34 = vld [vmem:[%s1 + $0x10] sm:$0xf]
  %v35 = vld [vmem:[%s1 + $0x14] sm:$0xf]
  %v36 = vld [vmem:[%s1 + $0x18] sm:$0xf]
  %v37 = vld [vmem:[%s1 + $0x1c] sm:$0xf]
  %v38 = vld [vmem:[%s1 + $0x20] sm:$0xf]
  %v39 = vld [vmem:[%s1 + $0x24] sm:$0xf]
  %v40 = vld [vmem:[%s1 + $0x28] sm:$0xf]
  %v41 = vld [vmem:[%s1 + $0x2c] sm:$0xf]
  %v42 = vld [vmem:[%s1 + $0x30] sm:$0xf]
  %v43 = vld [vmem:[%s1 + $0x34] sm:$0xf]
  %v44 = vld [vmem:[%s1 + $0x38] sm:$0xf]
  %v45 = vld [vmem:[%s1 + $0x3c] sm:$0xf]
  %v46 = vld [vmem:[%s1 + $0x40] sm:$0xf]
  %v47 = vld [vmem:[%s1 + $0x44] sm:$0xf]
  %v48 = vld [vmem:[%s1 + $0x48] sm:$0xf]
  %v49 = vld [vmem:[%s1 + $0x4c] sm:$0xf]
  %v50 = vld [vmem:[%s1 + $0x50] sm:$0xf]
  %v51 = vld [vmem:[%s1 + $0x54] sm:$0xf]
  %v52 = vld [vmem:[%s1 + $0x58] sm:$0xf]
  %v53 = vld [vmem:[%s1 + $0x5c] sm:$0xf]
  %v54 = vld [vmem:[%s1 + $0x60] sm:$0xf]
  %v55 = vld [vmem:[%s1 + $0x64] sm:$0xf]
  %v56 = vld [vmem:[%s1 + $0x68] sm:$0xf]
  %v57 = vld [vmem:[%s1 + $0x6c] sm:$0xf]
  %v58 = vld [vmem:[%s1 + $0x70] sm:$0xf]
  %v59 = vld [vmem:[%s1 + $0x74] sm:$0xf]
  %v60 = vld [vmem:[%s1 + $0x78] sm:$0xf]
  %v61 = vld [vmem:[%s1 + $0x7c] sm:$0xf]
  %v78 = vunpack.c.l.b16 %v14
  %v79 = vunpack.c.h.b16 %v14
  %v80 = vunpack.c.l.b16 %v15
  %v81 = vunpack.c.h.b16 %v15
  %v82 = vunpack.c.l.b16 %v16
  %v83 = vunpack.c.h.b16 %v16
  %v84 = vunpack.c.l.b16 %v17
  %v85 = vunpack.c.h.b16 %v17
  %v86 = vunpack.c.l.b16 %v18
  %v87 = vunpack.c.h.b16 %v18
  %v88 = vunpack.c.l.b16 %v19
  %v89 = vunpack.c.h.b16 %v19
  %v90 = vunpack.c.l.b16 %v20
  %v91 = vunpack.c.h.b16 %v20
  %v92 = vunpack.c.l.b16 %v21
  %v93 = vunpack.c.h.b16 %v21
  %v94 = vunpack.c.l.b16 %v22
  %v95 = vunpack.c.h.b16 %v22
  %v96 = vunpack.c.l.b16 %v23
  %v97 = vunpack.c.h.b16 %v23
  %v98 = vunpack.c.l.b16 %v24
  %v99 = vunpack.c.h.b16 %v24
  %v100 = vunpack.c.l.b16 %v25
  %v101 = vunpack.c.h.b16 %v25
  %v102 = vunpack.c.l.b16 %v26
  %v103 = vunpack.c.h.b16 %v26
  %v104 = vunpack.c.l.b16 %v27
  %v105 = vunpack.c.h.b16 %v27
  %v106 = vunpack.c.l.b16 %v28
  %v107 = vunpack.c.h.b16 %v28
  %v108 = vunpack.c.l.b16 %v29
  %v109 = vunpack.c.h.b16 %v29
  %v110 = vpack.c.b16 %v80, %v78
  %v111 = vpack.c.b16 %v81, %v79
  %v112 = vpack.c.b16 %v84, %v82
  %v113 = vpack.c.b16 %v85, %v83
  %v114 = vpack.c.b16 %v88, %v86
  %v115 = vpack.c.b16 %v89, %v87
  %v116 = vpack.c.b16 %v92, %v90
  %v117 = vpack.c.b16 %v93, %v91
  %v118 = vpack.c.b16 %v96, %v94
  %v119 = vpack.c.b16 %v97, %v95
  %v120 = vpack.c.b16 %v100, %v98
  %v121 = vpack.c.b16 %v101, %v99
  %v122 = vpack.c.b16 %v104, %v102
  %v123 = vpack.c.b16 %v105, %v103
  %v124 = vpack.c.b16 %v108, %v106
  %v125 = vpack.c.b16 %v109, %v107
  %v174 = vunpack.c.l.b16 %v30
  %v175 = vunpack.c.l.b16 %v31
  %v176 = vunpack.c.l.b16 %v32
  %v177 = vunpack.c.l.b16 %v33
  %v178 = vunpack.c.l.b16 %v34
  %v179 = vunpack.c.l.b16 %v35
  %v180 = vunpack.c.l.b16 %v36
  %v181 = vunpack.c.l.b16 %v37
  %v182 = vunpack.c.l.b16 %v38
  %v183 = vunpack.c.l.b16 %v39
  %v184 = vunpack.c.l.b16 %v40
  %v185 = vunpack.c.l.b16 %v41
  %v186 = vunpack.c.l.b16 %v42
  %v187 = vunpack.c.l.b16 %v43
  %v188 = vunpack.c.l.b16 %v44
  %v189 = vunpack.c.l.b16 %v45
  %v190 = vunpack.c.l.b16 %v46
  %v191 = vunpack.c.l.b16 %v47
  %v192 = vunpack.c.l.b16 %v48
  %v193 = vunpack.c.l.b16 %v49
  %v194 = vunpack.c.l.b16 %v50
  %v195 = vunpack.c.l.b16 %v51
  %v196 = vunpack.c.l.b16 %v52
  %v197 = vunpack.c.l.b16 %v53
  %v198 = vunpack.c.l.b16 %v54
  %v199 = vunpack.c.l.b16 %v55
  %v200 = vunpack.c.l.b16 %v56
  %v201 = vunpack.c.l.b16 %v57
  %v202 = vunpack.c.l.b16 %v58
  %v203 = vunpack.c.l.b16 %v59
  %v204 = vunpack.c.l.b16 %v60
  %v205 = vunpack.c.l.b16 %v61
  %v206 = vpack.c.b16 %v175, %v174
  %v207 = vpack.c.b16 %v177, %v176
  %v208 = vpack.c.b16 %v179, %v178
  %v209 = vpack.c.b16 %v181, %v180
  %v210 = vpack.c.b16 %v183, %v182
  %v211 = vpack.c.b16 %v185, %v184
  %v212 = vpack.c.b16 %v187, %v186
  %v213 = vpack.c.b16 %v189, %v188
  %v214 = vpack.c.b16 %v191, %v190
  %v215 = vpack.c.b16 %v193, %v192
  %v216 = vpack.c.b16 %v195, %v194
  %v217 = vpack.c.b16 %v197, %v196
  %v218 = vpack.c.b16 %v199, %v198
  %v219 = vpack.c.b16 %v201, %v200
  %v220 = vpack.c.b16 %v203, %v202
  %v221 = vpack.c.b16 %v205, %v204
  %238 = vmatpush.bf16.msra.mxu0 %v213
  %239 = vmatpush.bf16.msra.mxu0 %v212
  %240 = vmatpush.bf16.msra.mxu0 %v211
  %241 = vmatpush.bf16.msra.mxu0 %v210
  %242 = vmatpush.bf16.msra.mxu0 %v209
  %243 = vmatpush.bf16.msra.mxu0 %v208
  %244 = vmatpush.bf16.msra.mxu0 %v207
  %245 = vmatpush.bf16.msra.mxu0 %v206
  %246 = vmatmul.bf16.gmra.mxu0 %v110
  %v247 = vpop.f32.mrf.mxu0
  %v248 = vadd.f32 0.0, %v247
  %v249 = vpop.f32.mrf.mxu0
  %v250 = vadd.f32 0.0, %v249
  %251 = vmatmul.bf16.gmra.mxu0 %v112
  %v252 = vpop.f32.mrf.mxu0
  %v253 = vadd.f32 0.0, %v252
  %v254 = vpop.f32.mrf.mxu0
  %v255 = vadd.f32 0.0, %v254
  %256 = vmatmul.bf16.gmra.mxu0 %v114
  %v257 = vpop.f32.mrf.mxu0
  %v258 = vadd.f32 0.0, %v257
  %v259 = vpop.f32.mrf.mxu0
  %v260 = vadd.f32 0.0, %v259
  %261 = vmatmul.bf16.gmra.mxu0 %v116
  %v262 = vpop.f32.mrf.mxu0
  %v263 = vadd.f32 0.0, %v262
  %v264 = vpop.f32.mrf.mxu0
  %v265 = vadd.f32 0.0, %v264
  %266 = vmatmul.bf16.gmra.mxu0 %v118
  %v267 = vpop.f32.mrf.mxu0
  %v268 = vadd.f32 0.0, %v267
  %v269 = vpop.f32.mrf.mxu0
  %v270 = vadd.f32 0.0, %v269
  %271 = vmatmul.bf16.gmra.mxu0 %v120
  %v272 = vpop.f32.mrf.mxu0
  %v273 = vadd.f32 0.0, %v272
  %v274 = vpop.f32.mrf.mxu0
  %v275 = vadd.f32 0.0, %v274
  %276 = vmatmul.bf16.gmra.mxu0 %v122
  %v277 = vpop.f32.mrf.mxu0
  %v278 = vadd.f32 0.0, %v277
  %v279 = vpop.f32.mrf.mxu0
  %v280 = vadd.f32 0.0, %v279
  %281 = vmatmul.bf16.gmra.mxu0 %v124
  %v282 = vpop.f32.mrf.mxu0
  %v283 = vadd.f32 0.0, %v282
  %v284 = vpop.f32.mrf.mxu0
  %v285 = vadd.f32 0.0, %v284
  %286 = vdwg.mxu0
  %287 = vmatpush.bf16.msra.mxu0 %v221
  %288 = vmatpush.bf16.msra.mxu0 %v220
  %289 = vmatpush.bf16.msra.mxu0 %v219
  %290 = vmatpush.bf16.msra.mxu0 %v218
  %291 = vmatpush.bf16.msra.mxu0 %v217
  %292 = vmatpush.bf16.msra.mxu0 %v216
  %293 = vmatpush.bf16.msra.mxu0 %v215
  %294 = vmatpush.bf16.msra.mxu0 %v214
  %295 = vmatmul.bf16.gmra.mxu0 %v111
  %v296 = vpop.f32.mrf.mxu0
  %v297 = vadd.f32 %v248, %v296
  %v298 = vpop.f32.mrf.mxu0
  %v299 = vadd.f32 %v250, %v298
  %300 = vmatmul.bf16.gmra.mxu0 %v113
  %v301 = vpop.f32.mrf.mxu0
  %v302 = vadd.f32 %v253, %v301
  %v303 = vpop.f32.mrf.mxu0
  %v304 = vadd.f32 %v255, %v303
  %305 = vmatmul.bf16.gmra.mxu0 %v115
  %v306 = vpop.f32.mrf.mxu0
  %v307 = vadd.f32 %v258, %v306
  %v308 = vpop.f32.mrf.mxu0
  %v309 = vadd.f32 %v260, %v308
  %310 = vmatmul.bf16.gmra.mxu0 %v117
  %v311 = vpop.f32.mrf.mxu0
  %v312 = vadd.f32 %v263, %v311
  %v313 = vpop.f32.mrf.mxu0
  %v314 = vadd.f32 %v265, %v313
  %315 = vmatmul.bf16.gmra.mxu0 %v119
  %v316 = vpop.f32.mrf.mxu0
  %v317 = vadd.f32 %v268, %v316
  %v318 = vpop.f32.mrf.mxu0
  %v319 = vadd.f32 %v270, %v318
  %320 = vmatmul.bf16.gmra.mxu0 %v121
  %v321 = vpop.f32.mrf.mxu0
  %v322 = vadd.f32 %v273, %v321
  %v323 = vpop.f32.mrf.mxu0
  %v324 = vadd.f32 %v275, %v323
  %325 = vmatmul.bf16.gmra.mxu0 %v123
  %v326 = vpop.f32.mrf.mxu0
  %v327 = vadd.f32 %v278, %v326
  %v328 = vpop.f32.mrf.mxu0
  %v329 = vadd.f32 %v280, %v328
  %330 = vmatmul.bf16.gmra.mxu0 %v125
  %v331 = vpop.f32.mrf.mxu0
  %v332 = vadd.f32 %v283, %v331
  %v333 = vpop.f32.mrf.mxu0
  %v334 = vadd.f32 %v285, %v333
  %335 = vdwg.mxu0
  %v336 = vld [vmem:[%s2] sm:$0x1]
  %v337 = vadd.f32 %v297, 0.0
  %v338 = vadd.f32 %v299, 0.0
  %v339 = vadd.f32 %v302, 0.0
  %v340 = vadd.f32 %v304, 0.0
  %v341 = vmax.f32 %v337, -32.0
  %v342 = vmax.f32 %v338, -32.0
  %v343 = vmax.f32 %v339, -32.0
  %v344 = vmax.f32 %v340, -32.0
  %v345 = vmin.f32 %v341, 32.0
  %v346 = vmin.f32 %v342, 32.0
  %v347 = vmin.f32 %v343, 32.0
  %v348 = vmin.f32 %v344, 32.0
  %v350 = vperm.slane %v336, 0
  %vm352 = vcmp.ge.f32.partialorder %v345, %v350
  %vm353 = vcmp.ge.f32.partialorder %v346, %v350
  %vm354 = vcmp.ge.f32.partialorder %v347, %v350
  %vm355 = vcmp.ge.f32.partialorder %v348, %v350
  %v356 = vsel %vm352, 1, 0
  %v357 = vsel %vm353, 1, 0
  %v358 = vsel %vm354, 1, 0
  %v359 = vsel %vm355, 1, 0
  %v360 = vcvt.s32.f32 %v356
  %v361 = vcvt.s32.f32 %v357
  %v362 = vcvt.s32.f32 %v358
  %v363 = vcvt.s32.f32 %v359
  %v364 = vsub.f32 1.0, %v360
  %v365 = vsub.f32 1.0, %v361
  %v366 = vsub.f32 1.0, %v362
  %v367 = vsub.f32 1.0, %v363
  %v368 = vmul.f32 %v345, %v364
  %v369 = vmul.f32 %v346, %v365
  %v370 = vmul.f32 %v347, %v366
  %v371 = vmul.f32 %v348, %v367
  %v372 = vpack.c.bf16 %v360, %v360
  %v373 = vpack.c.bf16 %v361, %v361
  %v374 = vpack.c.bf16 %v362, %v362
  %v375 = vpack.c.bf16 %v363, %v363
  %376 = vst [vmem:[%s3] sm:$0xf] %v372
  %377 = vst [vmem:[%s3 + $0x4] sm:$0xf] %v373
  %378 = vst [vmem:[%s3 + $0x8] sm:$0xf] %v374
  %379 = vst [vmem:[%s3 + $0xc] sm:$0xf] %v375
  %v380 = vadd.f32 %v368, %v307
  %v381 = vadd.f32 %v369, %v309
  %v382 = vadd.f32 %v370, %v312
  %v383 = vadd.f32 %v371, %v314
  %v384 = vmax.f32 %v380, -32.0
  %v385 = vmax.f32 %v381, -32.0
  %v386 = vmax.f32 %v382, -32.0
  %v387 = vmax.f32 %v383, -32.0
  %v388 = vmin.f32 %v384, 32.0
  %v389 = vmin.f32 %v385, 32.0
  %v390 = vmin.f32 %v386, 32.0
  %v391 = vmin.f32 %v387, 32.0
  %vm392 = vcmp.ge.f32.partialorder %v388, %v350
  %vm393 = vcmp.ge.f32.partialorder %v389, %v350
  %vm394 = vcmp.ge.f32.partialorder %v390, %v350
  %vm395 = vcmp.ge.f32.partialorder %v391, %v350
  %v396 = vsel %vm392, 1, 0
  %v397 = vsel %vm393, 1, 0
  %v398 = vsel %vm394, 1, 0
  %v399 = vsel %vm395, 1, 0
  %v400 = vcvt.s32.f32 %v396
  %v401 = vcvt.s32.f32 %v397
  %v402 = vcvt.s32.f32 %v398
  %v403 = vcvt.s32.f32 %v399
  %v404 = vsub.f32 1.0, %v400
  %v405 = vsub.f32 1.0, %v401
  %v406 = vsub.f32 1.0, %v402
  %v407 = vsub.f32 1.0, %v403
  %v408 = vmul.f32 %v388, %v404
  %v409 = vmul.f32 %v389, %v405
  %v410 = vmul.f32 %v390, %v406
  %v411 = vmul.f32 %v391, %v407
  %v412 = vpack.c.bf16 %v400, %v400
  %v413 = vpack.c.bf16 %v401, %v401
  %v414 = vpack.c.bf16 %v402, %v402
  %v415 = vpack.c.bf16 %v403, %v403
  %s416 = scalar_lea.vmem %s3, 16
  %417 = vst [vmem:[%s416] sm:$0xf] %v412
  %418 = vst [vmem:[%s416 + $0x4] sm:$0xf] %v413
  %419 = vst [vmem:[%s416 + $0x8] sm:$0xf] %v414
  %420 = vst [vmem:[%s416 + $0xc] sm:$0xf] %v415
  %v421 = vadd.f32 %v408, %v317
  %v422 = vadd.f32 %v409, %v319
  %v423 = vadd.f32 %v410, %v322
  %v424 = vadd.f32 %v411, %v324
  %v425 = vmax.f32 %v421, -32.0
  %v426 = vmax.f32 %v422, -32.0
  %v427 = vmax.f32 %v423, -32.0
  %v428 = vmax.f32 %v424, -32.0
  %v429 = vmin.f32 %v425, 32.0
  %v430 = vmin.f32 %v426, 32.0
  %v431 = vmin.f32 %v427, 32.0
  %v432 = vmin.f32 %v428, 32.0
  %vm433 = vcmp.ge.f32.partialorder %v429, %v350
  %vm434 = vcmp.ge.f32.partialorder %v430, %v350
  %vm435 = vcmp.ge.f32.partialorder %v431, %v350
  %vm436 = vcmp.ge.f32.partialorder %v432, %v350
  %v437 = vsel %vm433, 1, 0
  %v438 = vsel %vm434, 1, 0
  %v439 = vsel %vm435, 1, 0
  %v440 = vsel %vm436, 1, 0
  %v441 = vcvt.s32.f32 %v437
  %v442 = vcvt.s32.f32 %v438
  %v443 = vcvt.s32.f32 %v439
  %v444 = vcvt.s32.f32 %v440
  %v445 = vsub.f32 1.0, %v441
  %v446 = vsub.f32 1.0, %v442
  %v447 = vsub.f32 1.0, %v443
  %v448 = vsub.f32 1.0, %v444
  %v449 = vmul.f32 %v429, %v445
  %v450 = vmul.f32 %v430, %v446
  %v451 = vmul.f32 %v431, %v447
  %v452 = vmul.f32 %v432, %v448
  %v453 = vpack.c.bf16 %v441, %v441
  %v454 = vpack.c.bf16 %v442, %v442
  %v455 = vpack.c.bf16 %v443, %v443
  %v456 = vpack.c.bf16 %v444, %v444
  %s457 = scalar_lea.vmem %s3, 32
  %458 = vst [vmem:[%s457] sm:$0xf] %v453
  %459 = vst [vmem:[%s457 + $0x4] sm:$0xf] %v454
  %460 = vst [vmem:[%s457 + $0x8] sm:$0xf] %v455
  %461 = vst [vmem:[%s457 + $0xc] sm:$0xf] %v456
  %v462 = vadd.f32 %v449, %v327
  %v463 = vadd.f32 %v450, %v329
  %v464 = vadd.f32 %v451, %v332
  %v465 = vadd.f32 %v452, %v334
  %v466 = vmax.f32 %v462, -32.0
  %v467 = vmax.f32 %v463, -32.0
  %v468 = vmax.f32 %v464, -32.0
  %v469 = vmax.f32 %v465, -32.0
  %v470 = vmin.f32 %v466, 32.0
  %v471 = vmin.f32 %v467, 32.0
  %v472 = vmin.f32 %v468, 32.0
  %v473 = vmin.f32 %v469, 32.0
  %vm474 = vcmp.ge.f32.partialorder %v470, %v350
  %vm475 = vcmp.ge.f32.partialorder %v471, %v350
  %vm476 = vcmp.ge.f32.partialorder %v472, %v350
  %vm477 = vcmp.ge.f32.partialorder %v473, %v350
  %v478 = vsel %vm474, 1, 0
  %v479 = vsel %vm475, 1, 0
  %v480 = vsel %vm476, 1, 0
  %v481 = vsel %vm477, 1, 0
  %v482 = vcvt.s32.f32 %v478
  %v483 = vcvt.s32.f32 %v479
  %v484 = vcvt.s32.f32 %v480
  %v485 = vcvt.s32.f32 %v481
  %v486 = vpack.c.bf16 %v482, %v482
  %v487 = vpack.c.bf16 %v483, %v483
  %v488 = vpack.c.bf16 %v484, %v484
  %v489 = vpack.c.bf16 %v485, %v485
  %s490 = scalar_lea.vmem %s3, 48
  %491 = vst [vmem:[%s490] sm:$0xf] %v486
  %492 = vst [vmem:[%s490 + $0x4] sm:$0xf] %v487
  %493 = vst [vmem:[%s490 + $0x8] sm:$0xf] %v488
  %494 = vst [vmem:[%s490 + $0xc] sm:$0xf] %v489
  // Predicated region
  $region14: #{_lambda_.8} parent=0 // pred_check
    _
  $region15: #{_lambda_.8} parent=0 // pred_check_branch
    %496 = sbr.rel (0) target = $region17
  $region16: #{_lambda_.8} parent=0 // pred_region
    _
  $region17: #{_lambda_.8} parent=0 // pred_fallthru
    _
  // Predicated region
  $region18: #{_lambda_.8} parent=0 // pred_check
    _
  $region19: #{_lambda_.8} parent=0 // pred_check_branch
    %498 = sbr.rel (0) target = $region21
  $region20: #{_lambda_.8} parent=0 // pred_region
    _
  $region21: #{_lambda_.8} parent=0 // pred_fallthru
    _

// kernel: _lambda_.9
$region0: #{_lambda_.9}
  #allocation0 [shape = 'u32[]', space=smem, size = 0x4, offset = 0x4, fixed_abs, tag = 'smem constant byte address 0x4 - core index']
  #allocation1 [shape = 'u32[72,128]{1,0:T(1,128)}', space=vmem, size = 0x9000, scoped, tag = 'internal scratch']
  %s0 = inlined_call_operand.vmem [shape: bf16[4,16,256], index: 0, kind: input, shape index: {}]
  %s1 = inlined_call_operand.vmem [shape: bf16[256,128], index: 1, kind: input, shape index: {}]
  %s2 = inlined_call_operand.vmem [shape: f32[1,128], index: 2, kind: input, shape index: {}]
  %s3 = inlined_call_operand.vmem [shape: bf16[4,16,128], index: 3, kind: output, shape index: {}]
  %s4 = sld [smem:[#allocation0]]
  $region22: #{_lambda_.9} parent=0
    _
  %s6 = ssub.s32 1, %s4
  %s7 = scalar_select 0, %s6, %s4
  // Predicated region
  $region2: #{_lambda_.9} parent=0 // pred_check
    _
  $region3: #{_lambda_.9} parent=0 // pred_check_branch
    %9 = sbr.rel (0) target = $region5
  $region4: #{_lambda_.9} parent=0 // pred_region
    _
  $region5: #{_lambda_.9} parent=0 // pred_fallthru
    _
  // Predicated region
  $region6: #{_lambda_.9} parent=0 // pred_check
    _
  $region7: #{_lambda_.9} parent=0 // pred_check_branch
    %11 = sbr.rel (0) target = $region9
  $region8: #{_lambda_.9} parent=0 // pred_region
    _
  $region9: #{_lambda_.9} parent=0 // pred_fallthru
    _
  // Predicated region
  $region10: #{_lambda_.9} parent=0 // pred_check
    _
  $region11: #{_lambda_.9} parent=0 // pred_check_branch
    %13 = sbr.rel (0) target = $region13
  $region12: #{_lambda_.9} parent=0 // pred_region
    _
  $region13: #{_lambda_.9} parent=0 // pred_fallthru
    _
  %v14 = vld [vmem:[%s0] sm:$0xff]
  %v15 = vld [vmem:[%s0 + $0x8] sm:$0xff]
  %v16 = vld [vmem:[%s0 + $0x10] sm:$0xff]
  %v17 = vld [vmem:[%s0 + $0x18] sm:$0xff]
  %v18 = vld [vmem:[%s0 + $0x20] sm:$0xff]
  %v19 = vld [vmem:[%s0 + $0x28] sm:$0xff]
  %v20 = vld [vmem:[%s0 + $0x30] sm:$0xff]
  %v21 = vld [vmem:[%s0 + $0x38] sm:$0xff]
  %v22 = vld [vmem:[%s1] sm:$0xf]
  %v23 = vld [vmem:[%s1 + $0x4] sm:$0xf]
  %v24 = vld [vmem:[%s1 + $0x8] sm:$0xf]
  %v25 = vld [vmem:[%s1 + $0xc] sm:$0xf]
  %v26 = vld [vmem:[%s1 + $0x10] sm:$0xf]
  %v27 = vld [vmem:[%s1 + $0x14] sm:$0xf]
  %v28 = vld [vmem:[%s1 + $0x18] sm:$0xf]
  %v29 = vld [vmem:[%s1 + $0x1c] sm:$0xf]
  %v30 = vld [vmem:[%s1 + $0x20] sm:$0xf]
  %v31 = vld [vmem:[%s1 + $0x24] sm:$0xf]
  %v32 = vld [vmem:[%s1 + $0x28] sm:$0xf]
  %v33 = vld [vmem:[%s1 + $0x2c] sm:$0xf]
  %v34 = vld [vmem:[%s1 + $0x30] sm:$0xf]
  %v35 = vld [vmem:[%s1 + $0x34] sm:$0xf]
  %v36 = vld [vmem:[%s1 + $0x38] sm:$0xf]
  %v37 = vld [vmem:[%s1 + $0x3c] sm:$0xf]
  %v38 = vld [vmem:[%s1 + $0x40] sm:$0xf]
  %v39 = vld [vmem:[%s1 + $0x44] sm:$0xf]
  %v40 = vld [vmem:[%s1 + $0x48] sm:$0xf]
  %v41 = vld [vmem:[%s1 + $0x4c] sm:$0xf]
  %v42 = vld [vmem:[%s1 + $0x50] sm:$0xf]
  %v43 = vld [vmem:[%s1 + $0x54] sm:$0xf]
  %v44 = vld [vmem:[%s1 + $0x58] sm:$0xf]
  %v45 = vld [vmem:[%s1 + $0x5c] sm:$0xf]
  %v46 = vld [vmem:[%s1 + $0x60] sm:$0xf]
  %v47 = vld [vmem:[%s1 + $0x64] sm:$0xf]
  %v48 = vld [vmem:[%s1 + $0x68] sm:$0xf]
  %v49 = vld [vmem:[%s1 + $0x6c] sm:$0xf]
  %v50 = vld [vmem:[%s1 + $0x70] sm:$0xf]
  %v51 = vld [vmem:[%s1 + $0x74] sm:$0xf]
  %v52 = vld [vmem:[%s1 + $0x78] sm:$0xf]
  %v53 = vld [vmem:[%s1 + $0x7c] sm:$0xf]
  %v62 = vunpack.c.l.b16 %v14
  %v63 = vunpack.c.h.b16 %v14
  %v64 = vunpack.c.l.b16 %v15
  %v65 = vunpack.c.h.b16 %v15
  %v66 = vunpack.c.l.b16 %v16
  %v67 = vunpack.c.h.b16 %v16
  %v68 = vunpack.c.l.b16 %v17
  %v69 = vunpack.c.h.b16 %v17
  %v70 = vunpack.c.l.b16 %v18
  %v71 = vunpack.c.h.b16 %v18
  %v72 = vunpack.c.l.b16 %v19
  %v73 = vunpack.c.h.b16 %v19
  %v74 = vunpack.c.l.b16 %v20
  %v75 = vunpack.c.h.b16 %v20
  %v76 = vunpack.c.l.b16 %v21
  %v77 = vunpack.c.h.b16 %v21
  %v78 = vpack.c.b16 %v64, %v62
  %v79 = vpack.c.b16 %v65, %v63
  %v80 = vpack.c.b16 %v68, %v66
  %v81 = vpack.c.b16 %v69, %v67
  %v82 = vpack.c.b16 %v72, %v70
  %v83 = vpack.c.b16 %v73, %v71
  %v84 = vpack.c.b16 %v76, %v74
  %v85 = vpack.c.b16 %v77, %v75
  %v126 = vunpack.c.l.b16 %v22
  %v127 = vunpack.c.l.b16 %v23
  %v128 = vunpack.c.l.b16 %v24
  %v129 = vunpack.c.l.b16 %v25
  %v130 = vunpack.c.l.b16 %v26
  %v131 = vunpack.c.l.b16 %v27
  %v132 = vunpack.c.l.b16 %v28
  %v133 = vunpack.c.l.b16 %v29
  %v134 = vunpack.c.l.b16 %v30
  %v135 = vunpack.c.l.b16 %v31
  %v136 = vunpack.c.l.b16 %v32
  %v137 = vunpack.c.l.b16 %v33
  %v138 = vunpack.c.l.b16 %v34
  %v139 = vunpack.c.l.b16 %v35
  %v140 = vunpack.c.l.b16 %v36
  %v141 = vunpack.c.l.b16 %v37
  %v142 = vunpack.c.l.b16 %v38
  %v143 = vunpack.c.l.b16 %v39
  %v144 = vunpack.c.l.b16 %v40
  %v145 = vunpack.c.l.b16 %v41
  %v146 = vunpack.c.l.b16 %v42
  %v147 = vunpack.c.l.b16 %v43
  %v148 = vunpack.c.l.b16 %v44
  %v149 = vunpack.c.l.b16 %v45
  %v150 = vunpack.c.l.b16 %v46
  %v151 = vunpack.c.l.b16 %v47
  %v152 = vunpack.c.l.b16 %v48
  %v153 = vunpack.c.l.b16 %v49
  %v154 = vunpack.c.l.b16 %v50
  %v155 = vunpack.c.l.b16 %v51
  %v156 = vunpack.c.l.b16 %v52
  %v157 = vunpack.c.l.b16 %v53
  %v158 = vpack.c.b16 %v127, %v126
  %v159 = vpack.c.b16 %v129, %v128
  %v160 = vpack.c.b16 %v131, %v130
  %v161 = vpack.c.b16 %v133, %v132
  %v162 = vpack.c.b16 %v135, %v134
  %v163 = vpack.c.b16 %v137, %v136
  %v164 = vpack.c.b16 %v139, %v138
  %v165 = vpack.c.b16 %v141, %v140
  %v166 = vpack.c.b16 %v143, %v142
  %v167 = vpack.c.b16 %v145, %v144
  %v168 = vpack.c.b16 %v147, %v146
  %v169 = vpack.c.b16 %v149, %v148
  %v170 = vpack.c.b16 %v151, %v150
  %v171 = vpack.c.b16 %v153, %v152
  %v172 = vpack.c.b16 %v155, %v154
  %v173 = vpack.c.b16 %v157, %v156
  %190 = vmatpush.bf16.msra.mxu0 %v165
  %191 = vmatpush.bf16.msra.mxu0 %v164
  %192 = vmatpush.bf16.msra.mxu0 %v163
  %193 = vmatpush.bf16.msra.mxu0 %v162
  %194 = vmatpush.bf16.msra.mxu0 %v161
  %195 = vmatpush.bf16.msra.mxu0 %v160
  %196 = vmatpush.bf16.msra.mxu0 %v159
  %197 = vmatpush.bf16.msra.mxu0 %v158
  %198 = vmatmul.bf16.gmra.mxu0 %v78
  %v199 = vpop.f32.mrf.mxu0
  %v200 = vadd.f32 0.0, %v199
  %v201 = vpop.f32.mrf.mxu0
  %v202 = vadd.f32 0.0, %v201
  %203 = vmatmul.bf16.gmra.mxu0 %v80
  %v204 = vpop.f32.mrf.mxu0
  %v205 = vadd.f32 0.0, %v204
  %v206 = vpop.f32.mrf.mxu0
  %v207 = vadd.f32 0.0, %v206
  %208 = vmatmul.bf16.gmra.mxu0 %v82
  %v209 = vpop.f32.mrf.mxu0
  %v210 = vadd.f32 0.0, %v209
  %v211 = vpop.f32.mrf.mxu0
  %v212 = vadd.f32 0.0, %v211
  %213 = vmatmul.bf16.gmra.mxu0 %v84
  %v214 = vpop.f32.mrf.mxu0
  %v215 = vadd.f32 0.0, %v214
  %v216 = vpop.f32.mrf.mxu0
  %v217 = vadd.f32 0.0, %v216
  %218 = vdwg.mxu0
  %219 = vmatpush.bf16.msra.mxu0 %v173
  %220 = vmatpush.bf16.msra.mxu0 %v172
  %221 = vmatpush.bf16.msra.mxu0 %v171
  %222 = vmatpush.bf16.msra.mxu0 %v170
  %223 = vmatpush.bf16.msra.mxu0 %v169
  %224 = vmatpush.bf16.msra.mxu0 %v168
  %225 = vmatpush.bf16.msra.mxu0 %v167
  %226 = vmatpush.bf16.msra.mxu0 %v166
  %227 = vmatmul.bf16.gmra.mxu0 %v79
  %v228 = vpop.f32.mrf.mxu0
  %v229 = vadd.f32 %v200, %v228
  %v230 = vpop.f32.mrf.mxu0
  %v231 = vadd.f32 %v202, %v230
  %232 = vmatmul.bf16.gmra.mxu0 %v81
  %v233 = vpop.f32.mrf.mxu0
  %v234 = vadd.f32 %v205, %v233
  %v235 = vpop.f32.mrf.mxu0
  %v236 = vadd.f32 %v207, %v235
  %237 = vmatmul.bf16.gmra.mxu0 %v83
  %v238 = vpop.f32.mrf.mxu0
  %v239 = vadd.f32 %v210, %v238
  %v240 = vpop.f32.mrf.mxu0
  %v241 = vadd.f32 %v212, %v240
  %242 = vmatmul.bf16.gmra.mxu0 %v85
  %v243 = vpop.f32.mrf.mxu0
  %v244 = vadd.f32 %v215, %v243
  %v245 = vpop.f32.mrf.mxu0
  %v246 = vadd.f32 %v217, %v245
  %247 = vdwg.mxu0
  %v248 = vld [vmem:[%s2] sm:$0x1]
  %v249 = vadd.f32 %v229, 0.0
  %v250 = vadd.f32 %v231, 0.0
  %v251 = vmax.f32 %v249, -32.0
  %v252 = vmax.f32 %v250, -32.0
  %v253 = vmin.f32 %v251, 32.0
  %v254 = vmin.f32 %v252, 32.0
  %v256 = vperm.slane %v248, 0
  %vm258 = vcmp.ge.f32.partialorder %v253, %v256
  %vm259 = vcmp.ge.f32.partialorder %v254, %v256
  %v260 = vsel %vm258, 1, 0
  %v261 = vsel %vm259, 1, 0
  %v262 = vcvt.s32.f32 %v260
  %v263 = vcvt.s32.f32 %v261
  %v264 = vsub.f32 1.0, %v262
  %v265 = vsub.f32 1.0, %v263
  %v266 = vmul.f32 %v253, %v264
  %v267 = vmul.f32 %v254, %v265
  %v268 = vpack.c.bf16 %v262, %v262
  %v269 = vpack.c.bf16 %v263, %v263
  %270 = vst [vmem:[%s3] sm:$0xf] %v268
  %271 = vst [vmem:[%s3 + $0x4] sm:$0xf] %v269
  %v272 = vadd.f32 %v266, %v234
  %v273 = vadd.f32 %v267, %v236
  %v274 = vmax.f32 %v272, -32.0
  %v275 = vmax.f32 %v273, -32.0
  %v276 = vmin.f32 %v274, 32.0
  %v277 = vmin.f32 %v275, 32.0
  %vm278 = vcmp.ge.f32.partialorder %v276, %v256
  %vm279 = vcmp.ge.f32.partialorder %v277, %v256
  %v280 = vsel %vm278, 1, 0
  %v281 = vsel %vm279, 1, 0
  %v282 = vcvt.s32.f32 %v280
  %v283 = vcvt.s32.f32 %v281
  %v284 = vsub.f32 1.0, %v282
  %v285 = vsub.f32 1.0, %v283
  %v286 = vmul.f32 %v276, %v284
  %v287 = vmul.f32 %v277, %v285
  %v288 = vpack.c.bf16 %v282, %v282
  %v289 = vpack.c.bf16 %v283, %v283
  %s290 = scalar_lea.vmem %s3, 8
  %291 = vst [vmem:[%s290] sm:$0xf] %v288
  %292 = vst [vmem:[%s290 + $0x4] sm:$0xf] %v289
  %v293 = vadd.f32 %v286, %v239
  %v294 = vadd.f32 %v287, %v241
  %v295 = vmax.f32 %v293, -32.0
  %v296 = vmax.f32 %v294, -32.0
  %v297 = vmin.f32 %v295, 32.0
  %v298 = vmin.f32 %v296, 32.0
  %vm299 = vcmp.ge.f32.partialorder %v297, %v256
  %vm300 = vcmp.ge.f32.partialorder %v298, %v256
  %v301 = vsel %vm299, 1, 0
  %v302 = vsel %vm300, 1, 0
  %v303 = vcvt.s32.f32 %v301
  %v304 = vcvt.s32.f32 %v302
  %v305 = vsub.f32 1.0, %v303
  %v306 = vsub.f32 1.0, %v304
  %v307 = vmul.f32 %v297, %v305
  %v308 = vmul.f32 %v298, %v306
  %v309 = vpack.c.bf16 %v303, %v303
  %v310 = vpack.c.bf16 %v304, %v304
  %s311 = scalar_lea.vmem %s3, 16
  %312 = vst [vmem:[%s311] sm:$0xf] %v309
  %313 = vst [vmem:[%s311 + $0x4] sm:$0xf] %v310
  %v314 = vadd.f32 %v307, %v244
  %v315 = vadd.f32 %v308, %v246
  %v316 = vmax.f32 %v314, -32.0
  %v317 = vmax.f32 %v315, -32.0
  %v318 = vmin.f32 %v316, 32.0
  %v319 = vmin.f32 %v317, 32.0
  %vm320 = vcmp.ge.f32.partialorder %v318, %v256
  %vm321 = vcmp.ge.f32.partialorder %v319, %v256
  %v322 = vsel %vm320, 1, 0
  %v323 = vsel %vm321, 1, 0
  %v324 = vcvt.s32.f32 %v322
  %v325 = vcvt.s32.f32 %v323
  %v326 = vpack.c.bf16 %v324, %v324
  %v327 = vpack.c.bf16 %v325, %v325
  %s328 = scalar_lea.vmem %s3, 24
  %329 = vst [vmem:[%s328] sm:$0xf] %v326
  %330 = vst [vmem:[%s328 + $0x4] sm:$0xf] %v327
  // Predicated region
  $region14: #{_lambda_.9} parent=0 // pred_check
    _
  $region15: #{_lambda_.9} parent=0 // pred_check_branch
    %332 = sbr.rel (0) target = $region17
  $region16: #{_lambda_.9} parent=0 // pred_region
    _
  $region17: #{_lambda_.9} parent=0 // pred_fallthru
    _
  // Predicated region
  $region18: #{_lambda_.9} parent=0 // pred_check
    _
  $region19: #{_lambda_.9} parent=0 // pred_check_branch
    %334 = sbr.rel (0) target = $region21
  $region20: #{_lambda_.9} parent=0 // pred_region
    _
  $region21: #{_lambda_.9} parent=0 // pred_fallthru
    _

</llo_original>
